<compile_context>
chip_gen: v5e
topology: v5e:2x2
jax: 0.10.0
libtpu: 0.0.40
codegen_flags: <defaults>
</compile_context>

<pallas_src>
import jax
import jax.numpy as jnp
from jax.experimental import pallas as pl
from jax.experimental.pallas import tpu as pltpu

_EPS = 1e-5
_VMEM_LIMIT = 32 * 1024 * 1024


def _round_up(x, m):
    return (x + m - 1) // m * m


# ----------------------------- Pallas kernels ------------------------------ #

def _gemm_stats_kernel(a_ref, w_ref, y_ref, ssum_ref, ssq_ref):
    """Pass 1: bf16 GEMM (f32 accumulate) + per-channel Sum(y), Sum(y^2)."""
    i = pl.program_id(0)
    y = jnp.dot(a_ref[...], w_ref[...], preferred_element_type=jnp.float32)
    y_ref[...] = y

    @pl.when(i == 0)
    def _():
        ssum_ref[...] = jnp.zeros_like(ssum_ref)
        ssq_ref[...] = jnp.zeros_like(ssq_ref)

    ssum_ref[...] += jnp.sum(y, axis=0, keepdims=True)
    ssq_ref[...] += jnp.sum(y * y, axis=0, keepdims=True)


def _bn_relu_kernel(y_ref, scale_ref, shift_ref, o_ref):
    """Pass 2: fused (global-stat) BatchNorm affine + ReLU, f32 math, bf16 out."""
    o_ref[...] = jnp.maximum(
        y_ref[...] * scale_ref[...] + shift_ref[...], 0.0
    ).astype(o_ref.dtype)


# ------------------------- Conv + BN + ReLU wrapper ------------------------- #

def conv_bn_relu(cols, w, gamma, beta):
    """cols: (M, K) im2col matrix. w: (K, C). gamma/beta: (1, C). Returns (M, C) bf16."""
    M, K = cols.shape
    Kw, C = w.shape
    assert K == Kw

    # Lane-dense K (multiple of 128); M padded to a tile multiple with zero rows.
    Kp = _round_up(K, 128)
    tm = min(512, _round_up(M, 8))
    Mp = _round_up(M, tm)
    a = jnp.pad(cols, ((0, Mp - M), (0, Kp - K))).astype(jnp.bfloat16)
    wp = jnp.pad(w, ((0, Kp - K), (0, 0))).astype(jnp.bfloat16)

    grid = (Mp // tm,)

    # ---- Pass 1: tiled GEMM + global Sum / Sum^2 accumulation ----
    y, ssum, ssq = pl.pallas_call(
        _gemm_stats_kernel,
        out_shape=(
            jax.ShapeDtypeStruct((Mp, C), jnp.float32),
            jax.ShapeDtypeStruct((1, C), jnp.float32),
            jax.ShapeDtypeStruct((1, C), jnp.float32),
        ),
        grid=grid,
        in_specs=[
            pl.BlockSpec((tm, Kp), lambda i: (i, 0)),
            pl.BlockSpec((Kp, C), lambda i: (0, 0)),
        ],
        out_specs=(
            pl.BlockSpec((tm, C), lambda i: (i, 0)),
            pl.BlockSpec((1, C), lambda i: (0, 0)),   # resident accumulator
            pl.BlockSpec((1, C), lambda i: (0, 0)),   # resident accumulator
        ),
        compiler_params=pltpu.CompilerParams(
            dimension_semantics=("arbitrary",),        # stats accumulate across M tiles
            vmem_limit_bytes=_VMEM_LIMIT,
        ),
    )(a, wp)

    # Fold global batch-norm (biased variance, train mode) into scale/shift (tiny (1,C) math).
    inv_m = 1.0 / float(M)                              # true row count (padded rows are zero)
    mean = ssum * inv_m
    var = jnp.maximum(ssq * inv_m - mean * mean, 0.0)   # guard cancellation
    scale = gamma * jax.lax.rsqrt(var + _EPS)
    shift = beta - mean * scale

    # ---- Pass 2: tiled normalize + ReLU ----
    out = pl.pallas_call(
        _bn_relu_kernel,
        out_shape=jax.ShapeDtypeStruct((Mp, C), jnp.bfloat16),
        grid=grid,
        in_specs=[
            pl.BlockSpec((tm, C), lambda i: (i, 0)),
            pl.BlockSpec((1, C), lambda i: (0, 0)),
            pl.BlockSpec((1, C), lambda i: (0, 0)),
        ],
        out_specs=pl.BlockSpec((tm, C), lambda i: (i, 0)),
        compiler_params=pltpu.CompilerParams(
            dimension_semantics=("parallel",),
            vmem_limit_bytes=_VMEM_LIMIT,
        ),
    )(y, scale, shift)

    return out[:M]


# ----------------------- Global mean + Linear + Sigmoid --------------------- #

def head(feat, w, b):
    """feat: (N, HW, C) bf16. w: (C, 1), b: (1, 1). Returns (N, 1) f32 in [0, 1]."""
    N, HW, C = feat.shape
    t = min(256, _round_up(HW, 8))
    HWp = _round_up(HW, t)
    f = jnp.pad(feat, ((0, 0), (0, HWp - HW), (0, 0)))   # zero rows -> no effect on sum
    inv_hw = 1.0 / float(HW)
    w_row = w.T.astype(jnp.float32)                      # (1, C) — VPU mul + lane reduce
    b2 = b.astype(jnp.float32)                           # (1, 1)

    def kernel(f_ref, w_ref, b_ref, o_ref, acc_ref):
        i = pl.program_id(0)

        @pl.when(i == 0)
        def _():
            acc_ref[...] = jnp.zeros_like(acc_ref)

        acc_ref[...] += jnp.sum(f_ref[...].astype(jnp.float32), axis=1)   # (N, C)

        @pl.when(i == pl.num_programs(0) - 1)
        def _():
            pooled = acc_ref[...] * inv_hw                                 # spatial mean
            logits = jnp.sum(pooled * w_ref[...], axis=-1, keepdims=True) + b_ref[...]
            o_ref[...] = 1.0 / (1.0 + jnp.exp(-logits))                    # sigmoid

    return pl.pallas_call(
        kernel,
        out_shape=jax.ShapeDtypeStruct((N, 1), jnp.float32),
        grid=(HWp // t,),
        in_specs=[
            pl.BlockSpec((N, t, C), lambda i: (0, i, 0)),
            pl.BlockSpec((1, C), lambda i: (0, 0)),
            pl.BlockSpec((1, 1), lambda i: (0, 0)),
        ],
        out_specs=pl.BlockSpec((N, 1), lambda i: (0, 0)),
        scratch_shapes=[pltpu.VMEM((N, C), jnp.float32)],
        compiler_params=pltpu.CompilerParams(
            dimension_semantics=("arbitrary",),
            vmem_limit_bytes=_VMEM_LIMIT,
        ),
    )(f, w_row, b2)


# ------------------------------- JAX glue ---------------------------------- #

def _im2col(x, k, stride):
    """x: (N, H, W, C) already padded. Returns ((N*Ho*Wo, k*k*C), (N, Ho, Wo))."""
    N, H, W, C = x.shape
    Ho = (H - k) // stride + 1
    Wo = (W - k) // stride + 1
    cols = []
    for ky in range(k):
        for kx in range(k):
            cols.append(x[:, ky:ky + stride * Ho:stride,
                            kx:kx + stride * Wo:stride, :])
    patches = jnp.stack(cols, axis=3)                 # (N, Ho, Wo, k*k, C)
    return patches.reshape(N * Ho * Wo, k * k * C), (N, Ho, Wo)


def init_params(input_nc, key):
    ndf = 64
    chans = [input_nc, ndf, ndf * 2, ndf * 4, ndf * 8]   # 3 -> 64 -> 128 -> 256 -> 512
    ks = [7, 3, 3, 3]
    keys = jax.random.split(key, 6)
    params = {"convs": [], "gammas": [], "betas": []}
    for li in range(4):
        cin, cout, k = chans[li], chans[li + 1], ks[li]
        # weight laid out (ky, kx, cin, cout) to match im2col column ordering.
        w = jax.random.normal(keys[li], (k, k, cin, cout), jnp.float32) * 0.05
        params["convs"].append(w.reshape(k * k * cin, cout))
        params["gammas"].append(jnp.ones((1, cout), jnp.float32))   # BN gamma
        params["betas"].append(jnp.zeros((1, cout), jnp.float32))   # BN beta
    params["lin_w"] = jax.random.normal(keys[4], (chans[-1], 1), jnp.float32) * 0.05
    params["lin_b"] = jax.random.normal(keys[5], (1, 1), jnp.float32) * 0.05
    return params


def common_discriminator(x_nchw, params):
    # NCHW -> NHWC, bf16 activations feeding the bf16 MXU GEMMs.
    x = jnp.transpose(x_nchw, (0, 2, 3, 1)).astype(jnp.bfloat16)

    # Layer 1: ReflectionPad2d(3) + Conv(k7, s1, p0, no bias) + BN + ReLU
    xp = jnp.pad(x, ((0, 0), (3, 3), (3, 3), (0, 0)), mode="reflect")
    cols, (N, Ho, Wo) = _im2col(xp, 7, 1)
    y = conv_bn_relu(cols, params["convs"][0], params["gammas"][0], params["betas"][0])
    x = y.reshape(N, Ho, Wo, -1)

    # 3 downsampling layers: Conv(k3, s2, p1, no bias) + BN + ReLU
    for li in range(1, 4):
        xp = jnp.pad(x, ((0, 0), (1, 1), (1, 1), (0, 0)))
        cols, (N, Ho, Wo) = _im2col(xp, 3, 2)
        y = conv_bn_relu(cols, params["convs"][li],
                         params["gammas"][li], params["betas"][li])
        x = y.reshape(N, Ho, Wo, -1)

    # torch.mean(torch.mean(out, 3), 2) + Linear(512, 1) + Sigmoid
    feat = x.reshape(N, Ho * Wo, x.shape[-1])
    return head(feat, params["lin_w"], params["lin_b"])


if __name__ == "__main__":
    input_nc = 3
    key = jax.random.PRNGKey(0)
    kx, kp = jax.random.split(key)
    x = jax.random.normal(kx, (2, input_nc, 16, 16), jnp.float32)   # NCHW like PyTorch
    params = init_params(input_nc, kp)

    out = jax.jit(common_discriminator)(x, params)
    out = jax.block_until_ready(out)
    assert out.shape == (2, 1), out.shape
    assert bool(jnp.all((out >= 0.0) & (out <= 1.0)))
    print("KERNEL_OK")
</pallas_src>

<mosaic_0001>
module attributes {stable_mosaic.version = 11 : i64} {
  func.func @_gemm_stats_kernel(%arg0: i32, %arg1: memref<512x256xbf16, #tpu.memory_space<vmem>>, %arg2: memref<256x64xbf16, #tpu.memory_space<vmem>>, %arg3: memref<512x64xf32, #tpu.memory_space<vmem>>, %arg4: memref<1x64xf32, #tpu.memory_space<vmem>>, %arg5: memref<1x64xf32, #tpu.memory_space<vmem>>) attributes {dimension_semantics = [#tpu.dimension_semantics<arbitrary>], iteration_bounds = array<i64: 1>, scalar_prefetch = 0 : i64, scratch_operands = 0 : i64, tpu.core_type = #tpu.core_type<tc>, window_params = [{transform_indices = @transform_0, window_bounds = array<i64: 512, 256>}, {pipeline_mode = #tpu.pipeline_mode<synchronous>, transform_indices = @transform_1, window_bounds = array<i64: 256, 64>}, {transform_indices = @transform_2, window_bounds = array<i64: 512, 64>}, {pipeline_mode = #tpu.pipeline_mode<synchronous>, transform_indices = @transform_3, window_bounds = array<i64: 1, 64>}, {pipeline_mode = #tpu.pipeline_mode<synchronous>, transform_indices = @transform_4, window_bounds = array<i64: 1, 64>}]} {
    %c0 = arith.constant 0 : index
    %c0_0 = arith.constant 0 : index
    %0 = vector.load %arg1[%c0, %c0_0] : memref<512x256xbf16, #tpu.memory_space<vmem>>, vector<512x256xbf16>
    %c0_1 = arith.constant 0 : index
    %c0_2 = arith.constant 0 : index
    %1 = vector.load %arg2[%c0_1, %c0_2] : memref<256x64xbf16, #tpu.memory_space<vmem>>, vector<256x64xbf16>
    %cst = arith.constant dense<0.000000e+00> : vector<512x64xf32>
    %2 = tpu.matmul %0, %1, %cst {dimension_numbers = #tpu.dot_dimension_numbers<[1], [0], [0], [1], [0, 0, 1, 1], [], []>} : vector<512x256xbf16>, vector<256x64xbf16>, vector<512x64xf32> -> vector<512x64xf32>
    %c0_3 = arith.constant 0 : index
    %c0_4 = arith.constant 0 : index
    %3 = vector.load %arg3[%c0_3, %c0_4] : memref<512x64xf32, #tpu.memory_space<vmem>>, vector<512x64xf32>
    tpu.vector_store %arg3[%c0_3, %c0_4], %2 {strides = array<i32>} : memref<512x64xf32, #tpu.memory_space<vmem>>, vector<512x64xf32>,
    %c0_i32 = arith.constant 0 : i32
    %4 = arith.cmpi eq, %arg0, %c0_i32 : i32
    %5 = arith.extui %4 : i1 to i32
    %c0_i32_5 = arith.constant 0 : i32
    %6 = arith.cmpi ne, %5, %c0_i32_5 : i32
    scf.if %6 {
      %cst_16 = arith.constant 0.000000e+00 : f32
      %18 = vector.broadcast %cst_16 : f32 to vector<1x64xf32>
      %c0_17 = arith.constant 0 : index
      %c0_18 = arith.constant 0 : index
      %19 = vector.load %arg4[%c0_17, %c0_18] : memref<1x64xf32, #tpu.memory_space<vmem>>, vector<1x64xf32>
      tpu.vector_store %arg4[%c0_17, %c0_18], %18 {strides = array<i32>} : memref<1x64xf32, #tpu.memory_space<vmem>>, vector<1x64xf32>,
      %cst_19 = arith.constant 0.000000e+00 : f32
      %20 = vector.broadcast %cst_19 : f32 to vector<1x64xf32>
      %c0_20 = arith.constant 0 : index
      %c0_21 = arith.constant 0 : index
      %21 = vector.load %arg5[%c0_20, %c0_21] : memref<1x64xf32, #tpu.memory_space<vmem>>, vector<1x64xf32>
      tpu.vector_store %arg5[%c0_20, %c0_21], %20 {strides = array<i32>} : memref<1x64xf32, #tpu.memory_space<vmem>>, vector<1x64xf32>,
    } else {
    }
    %c0_6 = arith.constant 0 : index
    %c0_7 = arith.constant 0 : index
    %7 = vector.load %arg4[%c0_6, %c0_7] : memref<1x64xf32, #tpu.memory_space<vmem>>, vector<1x64xf32>
    %cst_8 = arith.constant dense<0.000000e+00> : vector<64xf32>
    %8 = vector.multi_reduction <add>, %2, %cst_8 [0] : vector<512x64xf32> to vector<64xf32>
    %9 = vector.shape_cast %8 : vector<64xf32> to vector<1x64xf32>
    %10 = arith.addf %7, %9 : vector<1x64xf32>
    %c0_9 = arith.constant 0 : index
    %c0_10 = arith.constant 0 : index
    %11 = vector.load %arg4[%c0_9, %c0_10] : memref<1x64xf32, #tpu.memory_space<vmem>>, vector<1x64xf32>
    tpu.vector_store %arg4[%c0_9, %c0_10], %10 {strides = array<i32>} : memref<1x64xf32, #tpu.memory_space<vmem>>, vector<1x64xf32>,
    %c0_11 = arith.constant 0 : index
    %c0_12 = arith.constant 0 : index
    %12 = vector.load %arg5[%c0_11, %c0_12] : memref<1x64xf32, #tpu.memory_space<vmem>>, vector<1x64xf32>
    %13 = arith.mulf %2, %2 : vector<512x64xf32>
    %cst_13 = arith.constant dense<0.000000e+00> : vector<64xf32>
    %14 = vector.multi_reduction <add>, %13, %cst_13 [0] : vector<512x64xf32> to vector<64xf32>
    %15 = vector.shape_cast %14 : vector<64xf32> to vector<1x64xf32>
    %16 = arith.addf %12, %15 : vector<1x64xf32>
    %c0_14 = arith.constant 0 : index
    %c0_15 = arith.constant 0 : index
    %17 = vector.load %arg5[%c0_14, %c0_15] : memref<1x64xf32, #tpu.memory_space<vmem>>, vector<1x64xf32>
    tpu.vector_store %arg5[%c0_14, %c0_15], %16 {strides = array<i32>} : memref<1x64xf32, #tpu.memory_space<vmem>>, vector<1x64xf32>,
    return
  }
  func.func @transform_0(%arg0: i32) -> (i32, i32) {
    %c0_i32 = arith.constant 0 : i32
    %c0_i32_0 = arith.constant 0 : i32
    return %arg0, %c0_i32 : i32, i32
  }
  func.func @transform_1(%arg0: i32) -> (i32, i32) {
    %c0_i32 = arith.constant 0 : i32
    %c0_i32_0 = arith.constant 0 : i32
    %c0_i32_1 = arith.constant 0 : i32
    return %c0_i32, %c0_i32_0 : i32, i32
  }
  func.func @transform_2(%arg0: i32) -> (i32, i32) {
    %c0_i32 = arith.constant 0 : i32
    %c0_i32_0 = arith.constant 0 : i32
    return %arg0, %c0_i32 : i32, i32
  }
  func.func @transform_3(%arg0: i32) -> (i32, i32) {
    %c0_i32 = arith.constant 0 : i32
    %c0_i32_0 = arith.constant 0 : i32
    %c0_i32_1 = arith.constant 0 : i32
    return %c0_i32, %c0_i32_0 : i32, i32
  }
  func.func @transform_4(%arg0: i32) -> (i32, i32) {
    %c0_i32 = arith.constant 0 : i32
    %c0_i32_0 = arith.constant 0 : i32
    %c0_i32_1 = arith.constant 0 : i32
    return %c0_i32, %c0_i32_0 : i32, i32
  }
}

module attributes {stable_mosaic.version = 11 : i64} {
  func.func @_bn_relu_kernel(%arg0: i32, %arg1: memref<512x64xf32, #tpu.memory_space<vmem>>, %arg2: memref<1x64xf32, #tpu.memory_space<vmem>>, %arg3: memref<1x64xf32, #tpu.memory_space<vmem>>, %arg4: memref<512x64xbf16, #tpu.memory_space<vmem>>) attributes {dimension_semantics = [#tpu.dimension_semantics<parallel>], iteration_bounds = array<i64: 1>, scalar_prefetch = 0 : i64, scratch_operands = 0 : i64, tpu.core_type = #tpu.core_type<tc>, window_params = [{transform_indices = @transform_0, window_bounds = array<i64: 512, 64>}, {pipeline_mode = #tpu.pipeline_mode<synchronous>, transform_indices = @transform_1, window_bounds = array<i64: 1, 64>}, {pipeline_mode = #tpu.pipeline_mode<synchronous>, transform_indices = @transform_2, window_bounds = array<i64: 1, 64>}, {transform_indices = @transform_3, window_bounds = array<i64: 512, 64>}]} {
    %c0 = arith.constant 0 : index
    %c0_0 = arith.constant 0 : index
    %0 = vector.load %arg1[%c0, %c0_0] : memref<512x64xf32, #tpu.memory_space<vmem>>, vector<512x64xf32>
    %c0_1 = arith.constant 0 : index
    %c0_2 = arith.constant 0 : index
    %1 = vector.load %arg2[%c0_1, %c0_2] : memref<1x64xf32, #tpu.memory_space<vmem>>, vector<1x64xf32>
    %2 = vector.broadcast %1 : vector<1x64xf32> to vector<512x64xf32>
    %3 = arith.mulf %0, %2 : vector<512x64xf32>
    %c0_3 = arith.constant 0 : index
    %c0_4 = arith.constant 0 : index
    %4 = vector.load %arg3[%c0_3, %c0_4] : memref<1x64xf32, #tpu.memory_space<vmem>>, vector<1x64xf32>
    %5 = vector.broadcast %4 : vector<1x64xf32> to vector<512x64xf32>
    %6 = arith.addf %3, %5 : vector<512x64xf32>
    %cst = arith.constant 0.000000e+00 : f32
    %7 = vector.broadcast %cst : f32 to vector<512x64xf32>
    %8 = arith.maximumf %6, %7 : vector<512x64xf32>
    %9 = arith.truncf %8 : vector<512x64xf32> to vector<512x64xbf16>
    %c0_5 = arith.constant 0 : index
    %c0_6 = arith.constant 0 : index
    %10 = vector.load %arg4[%c0_5, %c0_6] : memref<512x64xbf16, #tpu.memory_space<vmem>>, vector<512x64xbf16>
    tpu.vector_store %arg4[%c0_5, %c0_6], %9 {strides = array<i32>} : memref<512x64xbf16, #tpu.memory_space<vmem>>, vector<512x64xbf16>,
    return
  }
  func.func @transform_0(%arg0: i32) -> (i32, i32) {
    %c0_i32 = arith.constant 0 : i32
    %c0_i32_0 = arith.constant 0 : i32
    return %arg0, %c0_i32 : i32, i32
  }
  func.func @transform_1(%arg0: i32) -> (i32, i32) {
    %c0_i32 = arith.constant 0 : i32
    %c0_i32_0 = arith.constant 0 : i32
    %c0_i32_1 = arith.constant 0 : i32
    return %c0_i32, %c0_i32_0 : i32, i32
  }
  func.func @transform_2(%arg0: i32) -> (i32, i32) {
    %c0_i32 = arith.constant 0 : i32
    %c0_i32_0 = arith.constant 0 : i32
    %c0_i32_1 = arith.constant 0 : i32
    return %c0_i32, %c0_i32_0 : i32, i32
  }
  func.func @transform_3(%arg0: i32) -> (i32, i32) {
    %c0_i32 = arith.constant 0 : i32
    %c0_i32_0 = arith.constant 0 : i32
    return %arg0, %c0_i32 : i32, i32
  }
}

module attributes {stable_mosaic.version = 11 : i64} {
  func.func @_gemm_stats_kernel(%arg0: i32, %arg1: memref<128x640xbf16, #tpu.memory_space<vmem>>, %arg2: memref<640x128xbf16, #tpu.memory_space<vmem>>, %arg3: memref<128x128xf32, #tpu.memory_space<vmem>>, %arg4: memref<1x128xf32, #tpu.memory_space<vmem>>, %arg5: memref<1x128xf32, #tpu.memory_space<vmem>>) attributes {dimension_semantics = [#tpu.dimension_semantics<arbitrary>], iteration_bounds = array<i64: 1>, scalar_prefetch = 0 : i64, scratch_operands = 0 : i64, tpu.core_type = #tpu.core_type<tc>, window_params = [{transform_indices = @transform_0, window_bounds = array<i64: 128, 640>}, {pipeline_mode = #tpu.pipeline_mode<synchronous>, transform_indices = @transform_1, window_bounds = array<i64: 640, 128>}, {transform_indices = @transform_2, window_bounds = array<i64: 128, 128>}, {pipeline_mode = #tpu.pipeline_mode<synchronous>, transform_indices = @transform_3, window_bounds = array<i64: 1, 128>}, {pipeline_mode = #tpu.pipeline_mode<synchronous>, transform_indices = @transform_4, window_bounds = array<i64: 1, 128>}]} {
    %c0 = arith.constant 0 : index
    %c0_0 = arith.constant 0 : index
    %0 = vector.load %arg1[%c0, %c0_0] : memref<128x640xbf16, #tpu.memory_space<vmem>>, vector<128x640xbf16>
    %c0_1 = arith.constant 0 : index
    %c0_2 = arith.constant 0 : index
    %1 = vector.load %arg2[%c0_1, %c0_2] : memref<640x128xbf16, #tpu.memory_space<vmem>>, vector<640x128xbf16>
    %cst = arith.constant dense<0.000000e+00> : vector<128x128xf32>
    %2 = tpu.matmul %0, %1, %cst {dimension_numbers = #tpu.dot_dimension_numbers<[1], [0], [0], [1], [0, 0, 1, 1], [], []>} : vector<128x640xbf16>, vector<640x128xbf16>, vector<128x128xf32> -> vector<128x128xf32>
    %c0_3 = arith.constant 0 : index
    %c0_4 = arith.constant 0 : index
    %3 = vector.load %arg3[%c0_3, %c0_4] : memref<128x128xf32, #tpu.memory_space<vmem>>, vector<128x128xf32>
    tpu.vector_store %arg3[%c0_3, %c0_4], %2 {strides = array<i32>} : memref<128x128xf32, #tpu.memory_space<vmem>>, vector<128x128xf32>,
    %c0_i32 = arith.constant 0 : i32
    %4 = arith.cmpi eq, %arg0, %c0_i32 : i32
    %5 = arith.extui %4 : i1 to i32
    %c0_i32_5 = arith.constant 0 : i32
    %6 = arith.cmpi ne, %5, %c0_i32_5 : i32
    scf.if %6 {
      %cst_16 = arith.constant 0.000000e+00 : f32
      %18 = vector.broadcast %cst_16 : f32 to vector<1x128xf32>
      %c0_17 = arith.constant 0 : index
      %c0_18 = arith.constant 0 : index
      %19 = vector.load %arg4[%c0_17, %c0_18] : memref<1x128xf32, #tpu.memory_space<vmem>>, vector<1x128xf32>
      tpu.vector_store %arg4[%c0_17, %c0_18], %18 {strides = array<i32>} : memref<1x128xf32, #tpu.memory_space<vmem>>, vector<1x128xf32>,
      %cst_19 = arith.constant 0.000000e+00 : f32
      %20 = vector.broadcast %cst_19 : f32 to vector<1x128xf32>
      %c0_20 = arith.constant 0 : index
      %c0_21 = arith.constant 0 : index
      %21 = vector.load %arg5[%c0_20, %c0_21] : memref<1x128xf32, #tpu.memory_space<vmem>>, vector<1x128xf32>
      tpu.vector_store %arg5[%c0_20, %c0_21], %20 {strides = array<i32>} : memref<1x128xf32, #tpu.memory_space<vmem>>, vector<1x128xf32>,
    } else {
    }
    %c0_6 = arith.constant 0 : index
    %c0_7 = arith.constant 0 : index
    %7 = vector.load %arg4[%c0_6, %c0_7] : memref<1x128xf32, #tpu.memory_space<vmem>>, vector<1x128xf32>
    %cst_8 = arith.constant dense<0.000000e+00> : vector<128xf32>
    %8 = vector.multi_reduction <add>, %2, %cst_8 [0] : vector<128x128xf32> to vector<128xf32>
    %9 = vector.shape_cast %8 : vector<128xf32> to vector<1x128xf32>
    %10 = arith.addf %7, %9 : vector<1x128xf32>
    %c0_9 = arith.constant 0 : index
    %c0_10 = arith.constant 0 : index
    %11 = vector.load %arg4[%c0_9, %c0_10] : memref<1x128xf32, #tpu.memory_space<vmem>>, vector<1x128xf32>
    tpu.vector_store %arg4[%c0_9, %c0_10], %10 {strides = array<i32>} : memref<1x128xf32, #tpu.memory_space<vmem>>, vector<1x128xf32>,
    %c0_11 = arith.constant 0 : index
    %c0_12 = arith.constant 0 : index
    %12 = vector.load %arg5[%c0_11, %c0_12] : memref<1x128xf32, #tpu.memory_space<vmem>>, vector<1x128xf32>
    %13 = arith.mulf %2, %2 : vector<128x128xf32>
    %cst_13 = arith.constant dense<0.000000e+00> : vector<128xf32>
    %14 = vector.multi_reduction <add>, %13, %cst_13 [0] : vector<128x128xf32> to vector<128xf32>
    %15 = vector.shape_cast %14 : vector<128xf32> to vector<1x128xf32>
    %16 = arith.addf %12, %15 : vector<1x128xf32>
    %c0_14 = arith.constant 0 : index
    %c0_15 = arith.constant 0 : index
    %17 = vector.load %arg5[%c0_14, %c0_15] : memref<1x128xf32, #tpu.memory_space<vmem>>, vector<1x128xf32>
    tpu.vector_store %arg5[%c0_14, %c0_15], %16 {strides = array<i32>} : memref<1x128xf32, #tpu.memory_space<vmem>>, vector<1x128xf32>,
    return
  }
  func.func @transform_0(%arg0: i32) -> (i32, i32) {
    %c0_i32 = arith.constant 0 : i32
    %c0_i32_0 = arith.constant 0 : i32
    return %arg0, %c0_i32 : i32, i32
  }
  func.func @transform_1(%arg0: i32) -> (i32, i32) {
    %c0_i32 = arith.constant 0 : i32
    %c0_i32_0 = arith.constant 0 : i32
    %c0_i32_1 = arith.constant 0 : i32
    return %c0_i32, %c0_i32_0 : i32, i32
  }
  func.func @transform_2(%arg0: i32) -> (i32, i32) {
    %c0_i32 = arith.constant 0 : i32
    %c0_i32_0 = arith.constant 0 : i32
    return %arg0, %c0_i32 : i32, i32
  }
  func.func @transform_3(%arg0: i32) -> (i32, i32) {
    %c0_i32 = arith.constant 0 : i32
    %c0_i32_0 = arith.constant 0 : i32
    %c0_i32_1 = arith.constant 0 : i32
    return %c0_i32, %c0_i32_0 : i32, i32
  }
  func.func @transform_4(%arg0: i32) -> (i32, i32) {
    %c0_i32 = arith.constant 0 : i32
    %c0_i32_0 = arith.constant 0 : i32
    %c0_i32_1 = arith.constant 0 : i32
    return %c0_i32, %c0_i32_0 : i32, i32
  }
}

module attributes {stable_mosaic.version = 11 : i64} {
  func.func @_bn_relu_kernel(%arg0: i32, %arg1: memref<128x128xf32, #tpu.memory_space<vmem>>, %arg2: memref<1x128xf32, #tpu.memory_space<vmem>>, %arg3: memref<1x128xf32, #tpu.memory_space<vmem>>, %arg4: memref<128x128xbf16, #tpu.memory_space<vmem>>) attributes {dimension_semantics = [#tpu.dimension_semantics<parallel>], iteration_bounds = array<i64: 1>, scalar_prefetch = 0 : i64, scratch_operands = 0 : i64, tpu.core_type = #tpu.core_type<tc>, window_params = [{transform_indices = @transform_0, window_bounds = array<i64: 128, 128>}, {pipeline_mode = #tpu.pipeline_mode<synchronous>, transform_indices = @transform_1, window_bounds = array<i64: 1, 128>}, {pipeline_mode = #tpu.pipeline_mode<synchronous>, transform_indices = @transform_2, window_bounds = array<i64: 1, 128>}, {transform_indices = @transform_3, window_bounds = array<i64: 128, 128>}]} {
    %c0 = arith.constant 0 : index
    %c0_0 = arith.constant 0 : index
    %0 = vector.load %arg1[%c0, %c0_0] : memref<128x128xf32, #tpu.memory_space<vmem>>, vector<128x128xf32>
    %c0_1 = arith.constant 0 : index
    %c0_2 = arith.constant 0 : index
    %1 = vector.load %arg2[%c0_1, %c0_2] : memref<1x128xf32, #tpu.memory_space<vmem>>, vector<1x128xf32>
    %2 = vector.broadcast %1 : vector<1x128xf32> to vector<128x128xf32>
    %3 = arith.mulf %0, %2 : vector<128x128xf32>
    %c0_3 = arith.constant 0 : index
    %c0_4 = arith.constant 0 : index
    %4 = vector.load %arg3[%c0_3, %c0_4] : memref<1x128xf32, #tpu.memory_space<vmem>>, vector<1x128xf32>
    %5 = vector.broadcast %4 : vector<1x128xf32> to vector<128x128xf32>
    %6 = arith.addf %3, %5 : vector<128x128xf32>
    %cst = arith.constant 0.000000e+00 : f32
    %7 = vector.broadcast %cst : f32 to vector<128x128xf32>
    %8 = arith.maximumf %6, %7 : vector<128x128xf32>
    %9 = arith.truncf %8 : vector<128x128xf32> to vector<128x128xbf16>
    %c0_5 = arith.constant 0 : index
    %c0_6 = arith.constant 0 : index
    %10 = vector.load %arg4[%c0_5, %c0_6] : memref<128x128xbf16, #tpu.memory_space<vmem>>, vector<128x128xbf16>
    tpu.vector_store %arg4[%c0_5, %c0_6], %9 {strides = array<i32>} : memref<128x128xbf16, #tpu.memory_space<vmem>>, vector<128x128xbf16>,
    return
  }
  func.func @transform_0(%arg0: i32) -> (i32, i32) {
    %c0_i32 = arith.constant 0 : i32
    %c0_i32_0 = arith.constant 0 : i32
    return %arg0, %c0_i32 : i32, i32
  }
  func.func @transform_1(%arg0: i32) -> (i32, i32) {
    %c0_i32 = arith.constant 0 : i32
    %c0_i32_0 = arith.constant 0 : i32
    %c0_i32_1 = arith.constant 0 : i32
    return %c0_i32, %c0_i32_0 : i32, i32
  }
  func.func @transform_2(%arg0: i32) -> (i32, i32) {
    %c0_i32 = arith.constant 0 : i32
    %c0_i32_0 = arith.constant 0 : i32
    %c0_i32_1 = arith.constant 0 : i32
    return %c0_i32, %c0_i32_0 : i32, i32
  }
  func.func @transform_3(%arg0: i32) -> (i32, i32) {
    %c0_i32 = arith.constant 0 : i32
    %c0_i32_0 = arith.constant 0 : i32
    return %arg0, %c0_i32 : i32, i32
  }
}

module attributes {stable_mosaic.version = 11 : i64} {
  func.func @_bn_relu_kernel(%arg0: i32, %arg1: memref<32x256xf32, #tpu.memory_space<vmem>>, %arg2: memref<1x256xf32, #tpu.memory_space<vmem>>, %arg3: memref<1x256xf32, #tpu.memory_space<vmem>>, %arg4: memref<32x256xbf16, #tpu.memory_space<vmem>>) attributes {dimension_semantics = [#tpu.dimension_semantics<parallel>], iteration_bounds = array<i64: 1>, scalar_prefetch = 0 : i64, scratch_operands = 0 : i64, tpu.core_type = #tpu.core_type<tc>, window_params = [{transform_indices = @transform_0, window_bounds = array<i64: 32, 256>}, {pipeline_mode = #tpu.pipeline_mode<synchronous>, transform_indices = @transform_1, window_bounds = array<i64: 1, 256>}, {pipeline_mode = #tpu.pipeline_mode<synchronous>, transform_indices = @transform_2, window_bounds = array<i64: 1, 256>}, {transform_indices = @transform_3, window_bounds = array<i64: 32, 256>}]} {
    %c0 = arith.constant 0 : index
    %c0_0 = arith.constant 0 : index
    %0 = vector.load %arg1[%c0, %c0_0] : memref<32x256xf32, #tpu.memory_space<vmem>>, vector<32x256xf32>
    %c0_1 = arith.constant 0 : index
    %c0_2 = arith.constant 0 : index
    %1 = vector.load %arg2[%c0_1, %c0_2] : memref<1x256xf32, #tpu.memory_space<vmem>>, vector<1x256xf32>
    %2 = vector.broadcast %1 : vector<1x256xf32> to vector<32x256xf32>
    %3 = arith.mulf %0, %2 : vector<32x256xf32>
    %c0_3 = arith.constant 0 : index
    %c0_4 = arith.constant 0 : index
    %4 = vector.load %arg3[%c0_3, %c0_4] : memref<1x256xf32, #tpu.memory_space<vmem>>, vector<1x256xf32>
    %5 = vector.broadcast %4 : vector<1x256xf32> to vector<32x256xf32>
    %6 = arith.addf %3, %5 : vector<32x256xf32>
    %cst = arith.constant 0.000000e+00 : f32
    %7 = vector.broadcast %cst : f32 to vector<32x256xf32>
    %8 = arith.maximumf %6, %7 : vector<32x256xf32>
    %9 = arith.truncf %8 : vector<32x256xf32> to vector<32x256xbf16>
    %c0_5 = arith.constant 0 : index
    %c0_6 = arith.constant 0 : index
    %10 = vector.load %arg4[%c0_5, %c0_6] : memref<32x256xbf16, #tpu.memory_space<vmem>>, vector<32x256xbf16>
    tpu.vector_store %arg4[%c0_5, %c0_6], %9 {strides = array<i32>} : memref<32x256xbf16, #tpu.memory_space<vmem>>, vector<32x256xbf16>,
    return
  }
  func.func @transform_0(%arg0: i32) -> (i32, i32) {
    %c0_i32 = arith.constant 0 : i32
    %c0_i32_0 = arith.constant 0 : i32
    return %arg0, %c0_i32 : i32, i32
  }
  func.func @transform_1(%arg0: i32) -> (i32, i32) {
    %c0_i32 = arith.constant 0 : i32
    %c0_i32_0 = arith.constant 0 : i32
    %c0_i32_1 = arith.constant 0 : i32
    return %c0_i32, %c0_i32_0 : i32, i32
  }
  func.func @transform_2(%arg0: i32) -> (i32, i32) {
    %c0_i32 = arith.constant 0 : i32
    %c0_i32_0 = arith.constant 0 : i32
    %c0_i32_1 = arith.constant 0 : i32
    return %c0_i32, %c0_i32_0 : i32, i32
  }
  func.func @transform_3(%arg0: i32) -> (i32, i32) {
    %c0_i32 = arith.constant 0 : i32
    %c0_i32_0 = arith.constant 0 : i32
    return %arg0, %c0_i32 : i32, i32
  }
}

module attributes {stable_mosaic.version = 11 : i64} {
  func.func @_gemm_stats_kernel(%arg0: i32, %arg1: memref<32x1152xbf16, #tpu.memory_space<vmem>>, %arg2: memref<1152x256xbf16, #tpu.memory_space<vmem>>, %arg3: memref<32x256xf32, #tpu.memory_space<vmem>>, %arg4: memref<1x256xf32, #tpu.memory_space<vmem>>, %arg5: memref<1x256xf32, #tpu.memory_space<vmem>>) attributes {dimension_semantics = [#tpu.dimension_semantics<arbitrary>], iteration_bounds = array<i64: 1>, scalar_prefetch = 0 : i64, scratch_operands = 0 : i64, tpu.core_type = #tpu.core_type<tc>, window_params = [{transform_indices = @transform_0, window_bounds = array<i64: 32, 1152>}, {pipeline_mode = #tpu.pipeline_mode<synchronous>, transform_indices = @transform_1, window_bounds = array<i64: 1152, 256>}, {transform_indices = @transform_2, window_bounds = array<i64: 32, 256>}, {pipeline_mode = #tpu.pipeline_mode<synchronous>, transform_indices = @transform_3, window_bounds = array<i64: 1, 256>}, {pipeline_mode = #tpu.pipeline_mode<synchronous>, transform_indices = @transform_4, window_bounds = array<i64: 1, 256>}]} {
    %c0 = arith.constant 0 : index
    %c0_0 = arith.constant 0 : index
    %0 = vector.load %arg1[%c0, %c0_0] : memref<32x1152xbf16, #tpu.memory_space<vmem>>, vector<32x1152xbf16>
    %c0_1 = arith.constant 0 : index
    %c0_2 = arith.constant 0 : index
    %1 = vector.load %arg2[%c0_1, %c0_2] : memref<1152x256xbf16, #tpu.memory_space<vmem>>, vector<1152x256xbf16>
    %cst = arith.constant dense<0.000000e+00> : vector<32x256xf32>
    %2 = tpu.matmul %0, %1, %cst {dimension_numbers = #tpu.dot_dimension_numbers<[1], [0], [0], [1], [0, 0, 1, 1], [], []>} : vector<32x1152xbf16>, vector<1152x256xbf16>, vector<32x256xf32> -> vector<32x256xf32>
    %c0_3 = arith.constant 0 : index
    %c0_4 = arith.constant 0 : index
    %3 = vector.load %arg3[%c0_3, %c0_4] : memref<32x256xf32, #tpu.memory_space<vmem>>, vector<32x256xf32>
    tpu.vector_store %arg3[%c0_3, %c0_4], %2 {strides = array<i32>} : memref<32x256xf32, #tpu.memory_space<vmem>>, vector<32x256xf32>,
    %c0_i32 = arith.constant 0 : i32
    %4 = arith.cmpi eq, %arg0, %c0_i32 : i32
    %5 = arith.extui %4 : i1 to i32
    %c0_i32_5 = arith.constant 0 : i32
    %6 = arith.cmpi ne, %5, %c0_i32_5 : i32
    scf.if %6 {
      %cst_16 = arith.constant 0.000000e+00 : f32
      %18 = vector.broadcast %cst_16 : f32 to vector<1x256xf32>
      %c0_17 = arith.constant 0 : index
      %c0_18 = arith.constant 0 : index
      %19 = vector.load %arg4[%c0_17, %c0_18] : memref<1x256xf32, #tpu.memory_space<vmem>>, vector<1x256xf32>
      tpu.vector_store %arg4[%c0_17, %c0_18], %18 {strides = array<i32>} : memref<1x256xf32, #tpu.memory_space<vmem>>, vector<1x256xf32>,
      %cst_19 = arith.constant 0.000000e+00 : f32
      %20 = vector.broadcast %cst_19 : f32 to vector<1x256xf32>
      %c0_20 = arith.constant 0 : index
      %c0_21 = arith.constant 0 : index
      %21 = vector.load %arg5[%c0_20, %c0_21] : memref<1x256xf32, #tpu.memory_space<vmem>>, vector<1x256xf32>
      tpu.vector_store %arg5[%c0_20, %c0_21], %20 {strides = array<i32>} : memref<1x256xf32, #tpu.memory_space<vmem>>, vector<1x256xf32>,
    } else {
    }
    %c0_6 = arith.constant 0 : index
    %c0_7 = arith.constant 0 : index
    %7 = vector.load %arg4[%c0_6, %c0_7] : memref<1x256xf32, #tpu.memory_space<vmem>>, vector<1x256xf32>
    %cst_8 = arith.constant dense<0.000000e+00> : vector<256xf32>
    %8 = vector.multi_reduction <add>, %2, %cst_8 [0] : vector<32x256xf32> to vector<256xf32>
    %9 = vector.shape_cast %8 : vector<256xf32> to vector<1x256xf32>
    %10 = arith.addf %7, %9 : vector<1x256xf32>
    %c0_9 = arith.constant 0 : index
    %c0_10 = arith.constant 0 : index
    %11 = vector.load %arg4[%c0_9, %c0_10] : memref<1x256xf32, #tpu.memory_space<vmem>>, vector<1x256xf32>
    tpu.vector_store %arg4[%c0_9, %c0_10], %10 {strides = array<i32>} : memref<1x256xf32, #tpu.memory_space<vmem>>, vector<1x256xf32>,
    %c0_11 = arith.constant 0 : index
    %c0_12 = arith.constant 0 : index
    %12 = vector.load %arg5[%c0_11, %c0_12] : memref<1x256xf32, #tpu.memory_space<vmem>>, vector<1x256xf32>
    %13 = arith.mulf %2, %2 : vector<32x256xf32>
    %cst_13 = arith.constant dense<0.000000e+00> : vector<256xf32>
    %14 = vector.multi_reduction <add>, %13, %cst_13 [0] : vector<32x256xf32> to vector<256xf32>
    %15 = vector.shape_cast %14 : vector<256xf32> to vector<1x256xf32>
    %16 = arith.addf %12, %15 : vector<1x256xf32>
    %c0_14 = arith.constant 0 : index
    %c0_15 = arith.constant 0 : index
    %17 = vector.load %arg5[%c0_14, %c0_15] : memref<1x256xf32, #tpu.memory_space<vmem>>, vector<1x256xf32>
    tpu.vector_store %arg5[%c0_14, %c0_15], %16 {strides = array<i32>} : memref<1x256xf32, #tpu.memory_space<vmem>>, vector<1x256xf32>,
    return
  }
  func.func @transform_0(%arg0: i32) -> (i32, i32) {
    %c0_i32 = arith.constant 0 : i32
    %c0_i32_0 = arith.constant 0 : i32
    return %arg0, %c0_i32 : i32, i32
  }
  func.func @transform_1(%arg0: i32) -> (i32, i32) {
    %c0_i32 = arith.constant 0 : i32
    %c0_i32_0 = arith.constant 0 : i32
    %c0_i32_1 = arith.constant 0 : i32
    return %c0_i32, %c0_i32_0 : i32, i32
  }
  func.func @transform_2(%arg0: i32) -> (i32, i32) {
    %c0_i32 = arith.constant 0 : i32
    %c0_i32_0 = arith.constant 0 : i32
    return %arg0, %c0_i32 : i32, i32
  }
  func.func @transform_3(%arg0: i32) -> (i32, i32) {
    %c0_i32 = arith.constant 0 : i32
    %c0_i32_0 = arith.constant 0 : i32
    %c0_i32_1 = arith.constant 0 : i32
    return %c0_i32, %c0_i32_0 : i32, i32
  }
  func.func @transform_4(%arg0: i32) -> (i32, i32) {
    %c0_i32 = arith.constant 0 : i32
    %c0_i32_0 = arith.constant 0 : i32
    %c0_i32_1 = arith.constant 0 : i32
    return %c0_i32, %c0_i32_0 : i32, i32
  }
}

module attributes {stable_mosaic.version = 11 : i64} {
  func.func @_gemm_stats_kernel(%arg0: i32, %arg1: memref<8x2304xbf16, #tpu.memory_space<vmem>>, %arg2: memref<2304x512xbf16, #tpu.memory_space<vmem>>, %arg3: memref<8x512xf32, #tpu.memory_space<vmem>>, %arg4: memref<1x512xf32, #tpu.memory_space<vmem>>, %arg5: memref<1x512xf32, #tpu.memory_space<vmem>>) attributes {dimension_semantics = [#tpu.dimension_semantics<arbitrary>], iteration_bounds = array<i64: 1>, scalar_prefetch = 0 : i64, scratch_operands = 0 : i64, tpu.core_type = #tpu.core_type<tc>, window_params = [{transform_indices = @transform_0, window_bounds = array<i64: 8, 2304>}, {pipeline_mode = #tpu.pipeline_mode<synchronous>, transform_indices = @transform_1, window_bounds = array<i64: 2304, 512>}, {transform_indices = @transform_2, window_bounds = array<i64: 8, 512>}, {pipeline_mode = #tpu.pipeline_mode<synchronous>, transform_indices = @transform_3, window_bounds = array<i64: 1, 512>}, {pipeline_mode = #tpu.pipeline_mode<synchronous>, transform_indices = @transform_4, window_bounds = array<i64: 1, 512>}]} {
    %c0 = arith.constant 0 : index
    %c0_0 = arith.constant 0 : index
    %0 = vector.load %arg1[%c0, %c0_0] : memref<8x2304xbf16, #tpu.memory_space<vmem>>, vector<8x2304xbf16>
    %c0_1 = arith.constant 0 : index
    %c0_2 = arith.constant 0 : index
    %1 = vector.load %arg2[%c0_1, %c0_2] : memref<2304x512xbf16, #tpu.memory_space<vmem>>, vector<2304x512xbf16>
    %cst = arith.constant dense<0.000000e+00> : vector<8x512xf32>
    %2 = tpu.matmul %0, %1, %cst {dimension_numbers = #tpu.dot_dimension_numbers<[1], [0], [0], [1], [0, 0, 1, 1], [], []>} : vector<8x2304xbf16>, vector<2304x512xbf16>, vector<8x512xf32> -> vector<8x512xf32>
    %c0_3 = arith.constant 0 : index
    %c0_4 = arith.constant 0 : index
    %3 = vector.load %arg3[%c0_3, %c0_4] : memref<8x512xf32, #tpu.memory_space<vmem>>, vector<8x512xf32>
    tpu.vector_store %arg3[%c0_3, %c0_4], %2 {strides = array<i32>} : memref<8x512xf32, #tpu.memory_space<vmem>>, vector<8x512xf32>,
    %c0_i32 = arith.constant 0 : i32
    %4 = arith.cmpi eq, %arg0, %c0_i32 : i32
    %5 = arith.extui %4 : i1 to i32
    %c0_i32_5 = arith.constant 0 : i32
    %6 = arith.cmpi ne, %5, %c0_i32_5 : i32
    scf.if %6 {
      %cst_16 = arith.constant 0.000000e+00 : f32
      %18 = vector.broadcast %cst_16 : f32 to vector<1x512xf32>
      %c0_17 = arith.constant 0 : index
      %c0_18 = arith.constant 0 : index
      %19 = vector.load %arg4[%c0_17, %c0_18] : memref<1x512xf32, #tpu.memory_space<vmem>>, vector<1x512xf32>
      tpu.vector_store %arg4[%c0_17, %c0_18], %18 {strides = array<i32>} : memref<1x512xf32, #tpu.memory_space<vmem>>, vector<1x512xf32>,
      %cst_19 = arith.constant 0.000000e+00 : f32
      %20 = vector.broadcast %cst_19 : f32 to vector<1x512xf32>
      %c0_20 = arith.constant 0 : index
      %c0_21 = arith.constant 0 : index
      %21 = vector.load %arg5[%c0_20, %c0_21] : memref<1x512xf32, #tpu.memory_space<vmem>>, vector<1x512xf32>
      tpu.vector_store %arg5[%c0_20, %c0_21], %20 {strides = array<i32>} : memref<1x512xf32, #tpu.memory_space<vmem>>, vector<1x512xf32>,
    } else {
    }
    %c0_6 = arith.constant 0 : index
    %c0_7 = arith.constant 0 : index
    %7 = vector.load %arg4[%c0_6, %c0_7] : memref<1x512xf32, #tpu.memory_space<vmem>>, vector<1x512xf32>
    %cst_8 = arith.constant dense<0.000000e+00> : vector<512xf32>
    %8 = vector.multi_reduction <add>, %2, %cst_8 [0] : vector<8x512xf32> to vector<512xf32>
    %9 = vector.shape_cast %8 : vector<512xf32> to vector<1x512xf32>
    %10 = arith.addf %7, %9 : vector<1x512xf32>
    %c0_9 = arith.constant 0 : index
    %c0_10 = arith.constant 0 : index
    %11 = vector.load %arg4[%c0_9, %c0_10] : memref<1x512xf32, #tpu.memory_space<vmem>>, vector<1x512xf32>
    tpu.vector_store %arg4[%c0_9, %c0_10], %10 {strides = array<i32>} : memref<1x512xf32, #tpu.memory_space<vmem>>, vector<1x512xf32>,
    %c0_11 = arith.constant 0 : index
    %c0_12 = arith.constant 0 : index
    %12 = vector.load %arg5[%c0_11, %c0_12] : memref<1x512xf32, #tpu.memory_space<vmem>>, vector<1x512xf32>
    %13 = arith.mulf %2, %2 : vector<8x512xf32>
    %cst_13 = arith.constant dense<0.000000e+00> : vector<512xf32>
    %14 = vector.multi_reduction <add>, %13, %cst_13 [0] : vector<8x512xf32> to vector<512xf32>
    %15 = vector.shape_cast %14 : vector<512xf32> to vector<1x512xf32>
    %16 = arith.addf %12, %15 : vector<1x512xf32>
    %c0_14 = arith.constant 0 : index
    %c0_15 = arith.constant 0 : index
    %17 = vector.load %arg5[%c0_14, %c0_15] : memref<1x512xf32, #tpu.memory_space<vmem>>, vector<1x512xf32>
    tpu.vector_store %arg5[%c0_14, %c0_15], %16 {strides = array<i32>} : memref<1x512xf32, #tpu.memory_space<vmem>>, vector<1x512xf32>,
    return
  }
  func.func @transform_0(%arg0: i32) -> (i32, i32) {
    %c0_i32 = arith.constant 0 : i32
    %c0_i32_0 = arith.constant 0 : i32
    return %arg0, %c0_i32 : i32, i32
  }
  func.func @transform_1(%arg0: i32) -> (i32, i32) {
    %c0_i32 = arith.constant 0 : i32
    %c0_i32_0 = arith.constant 0 : i32
    %c0_i32_1 = arith.constant 0 : i32
    return %c0_i32, %c0_i32_0 : i32, i32
  }
  func.func @transform_2(%arg0: i32) -> (i32, i32) {
    %c0_i32 = arith.constant 0 : i32
    %c0_i32_0 = arith.constant 0 : i32
    return %arg0, %c0_i32 : i32, i32
  }
  func.func @transform_3(%arg0: i32) -> (i32, i32) {
    %c0_i32 = arith.constant 0 : i32
    %c0_i32_0 = arith.constant 0 : i32
    %c0_i32_1 = arith.constant 0 : i32
    return %c0_i32, %c0_i32_0 : i32, i32
  }
  func.func @transform_4(%arg0: i32) -> (i32, i32) {
    %c0_i32 = arith.constant 0 : i32
    %c0_i32_0 = arith.constant 0 : i32
    %c0_i32_1 = arith.constant 0 : i32
    return %c0_i32, %c0_i32_0 : i32, i32
  }
}

module attributes {stable_mosaic.version = 11 : i64} {
  func.func @kernel(%arg0: i32, %arg1: memref<2x8x512xbf16, #tpu.memory_space<vmem>>, %arg2: memref<1x512xf32, #tpu.memory_space<vmem>>, %arg3: memref<1x1xf32, #tpu.memory_space<vmem>>, %arg4: memref<2x1xf32, #tpu.memory_space<vmem>>, %arg5: memref<2x512xf32, #tpu.memory_space<vmem>>) attributes {dimension_semantics = [#tpu.dimension_semantics<arbitrary>], iteration_bounds = array<i64: 1>, scalar_prefetch = 0 : i64, scratch_operands = 1 : i64, tpu.core_type = #tpu.core_type<tc>, window_params = [{transform_indices = @transform_0, window_bounds = array<i64: 2, 8, 512>}, {pipeline_mode = #tpu.pipeline_mode<synchronous>, transform_indices = @transform_1, window_bounds = array<i64: 1, 512>}, {pipeline_mode = #tpu.pipeline_mode<synchronous>, transform_indices = @transform_2, window_bounds = array<i64: 1, 1>}, {pipeline_mode = #tpu.pipeline_mode<synchronous>, transform_indices = @transform_3, window_bounds = array<i64: 2, 1>}]} {
    %c0_i32 = arith.constant 0 : i32
    %0 = arith.cmpi eq, %arg0, %c0_i32 : i32
    %1 = arith.extui %0 : i1 to i32
    %c0_i32_0 = arith.constant 0 : i32
    %2 = arith.cmpi ne, %1, %c0_i32_0 : i32
    scf.if %2 {
      %cst_9 = arith.constant 0.000000e+00 : f32
      %12 = vector.broadcast %cst_9 : f32 to vector<2x512xf32>
      %c0_10 = arith.constant 0 : index
      %c0_11 = arith.constant 0 : index
      %13 = vector.load %arg5[%c0_10, %c0_11] : memref<2x512xf32, #tpu.memory_space<vmem>>, vector<2x512xf32>
      tpu.vector_store %arg5[%c0_10, %c0_11], %12 {strides = array<i32>} : memref<2x512xf32, #tpu.memory_space<vmem>>, vector<2x512xf32>,
    } else {
    }
    %c0 = arith.constant 0 : index
    %c0_1 = arith.constant 0 : index
    %3 = vector.load %arg5[%c0, %c0_1] : memref<2x512xf32, #tpu.memory_space<vmem>>, vector<2x512xf32>
    %c0_2 = arith.constant 0 : index
    %c0_3 = arith.constant 0 : index
    %c0_4 = arith.constant 0 : index
    %4 = vector.load %arg1[%c0_2, %c0_3, %c0_4] : memref<2x8x512xbf16, #tpu.memory_space<vmem>>, vector<2x8x512xbf16>
    %5 = arith.extf %4 : vector<2x8x512xbf16> to vector<2x8x512xf32>
    %cst = arith.constant dense<0.000000e+00> : vector<2x512xf32>
    %6 = vector.multi_reduction <add>, %5, %cst [1] : vector<2x8x512xf32> to vector<2x512xf32>
    %7 = arith.addf %3, %6 : vector<2x512xf32>
    %c0_5 = arith.constant 0 : index
    %c0_6 = arith.constant 0 : index
    %8 = vector.load %arg5[%c0_5, %c0_6] : memref<2x512xf32, #tpu.memory_space<vmem>>, vector<2x512xf32>
    tpu.vector_store %arg5[%c0_5, %c0_6], %7 {strides = array<i32>} : memref<2x512xf32, #tpu.memory_space<vmem>>, vector<2x512xf32>,
    %c0_i32_7 = arith.constant 0 : i32
    %9 = arith.cmpi eq, %arg0, %c0_i32_7 : i32
    %10 = arith.extui %9 : i1 to i32
    %c0_i32_8 = arith.constant 0 : i32
    %11 = arith.cmpi ne, %10, %c0_i32_8 : i32
    scf.if %11 {
      %c0_9 = arith.constant 0 : index
      %c0_10 = arith.constant 0 : index
      %12 = vector.load %arg5[%c0_9, %c0_10] : memref<2x512xf32, #tpu.memory_space<vmem>>, vector<2x512xf32>
      %cst_11 = arith.constant 2.500000e-01 : f32
      %13 = vector.broadcast %cst_11 : f32 to vector<2x512xf32>
      %14 = arith.mulf %12, %13 : vector<2x512xf32>
      %c0_12 = arith.constant 0 : index
      %c0_13 = arith.constant 0 : index
      %15 = vector.load %arg2[%c0_12, %c0_13] : memref<1x512xf32, #tpu.memory_space<vmem>>, vector<1x512xf32>
      %16 = vector.broadcast %15 : vector<1x512xf32> to vector<2x512xf32>
      %17 = arith.mulf %14, %16 : vector<2x512xf32>
      %cst_14 = arith.constant dense<0.000000e+00> : vector<2xf32>
      %18 = vector.multi_reduction <add>, %17, %cst_14 [1] : vector<2x512xf32> to vector<2xf32>
      %19 = vector.shape_cast %18 : vector<2xf32> to vector<2x1xf32>
      %c0_15 = arith.constant 0 : index
      %c0_16 = arith.constant 0 : index
      %20 = vector.load %arg3[%c0_15, %c0_16] : memref<1x1xf32, #tpu.memory_space<vmem>>, vector<1x1xf32>
      %21 = vector.broadcast %20 : vector<1x1xf32> to vector<2x1xf32>
      %22 = arith.addf %19, %21 : vector<2x1xf32>
      %cst_17 = arith.constant 0.000000e+00 : f32
      %23 = vector.broadcast %cst_17 : f32 to vector<2x1xf32>
      %24 = arith.subf %23, %22 : vector<2x1xf32>
      %25 = math.exp %24 : vector<2x1xf32>
      %cst_18 = arith.constant 1.000000e+00 : f32
      %26 = vector.broadcast %cst_18 : f32 to vector<2x1xf32>
      %27 = arith.addf %26, %25 : vector<2x1xf32>
      %cst_19 = arith.constant 1.000000e+00 : f32
      %28 = vector.broadcast %cst_19 : f32 to vector<2x1xf32>
      %29 = arith.divf %28, %27 : vector<2x1xf32>
      %c0_20 = arith.constant 0 : index
      %c0_21 = arith.constant 0 : index
      %30 = vector.load %arg4[%c0_20, %c0_21] : memref<2x1xf32, #tpu.memory_space<vmem>>, vector<2x1xf32>
      tpu.vector_store %arg4[%c0_20, %c0_21], %29 {strides = array<i32>} : memref<2x1xf32, #tpu.memory_space<vmem>>, vector<2x1xf32>,
    } else {
    }
    return
  }
  func.func @transform_0(%arg0: i32) -> (i32, i32, i32) {
    %c0_i32 = arith.constant 0 : i32
    %c0_i32_0 = arith.constant 0 : i32
    %c0_i32_1 = arith.constant 0 : i32
    return %c0_i32, %arg0, %c0_i32_0 : i32, i32, i32
  }
  func.func @transform_1(%arg0: i32) -> (i32, i32) {
    %c0_i32 = arith.constant 0 : i32
    %c0_i32_0 = arith.constant 0 : i32
    %c0_i32_1 = arith.constant 0 : i32
    return %c0_i32, %c0_i32_0 : i32, i32
  }
  func.func @transform_2(%arg0: i32) -> (i32, i32) {
    %c0_i32 = arith.constant 0 : i32
    %c0_i32_0 = arith.constant 0 : i32
    %c0_i32_1 = arith.constant 0 : i32
    return %c0_i32, %c0_i32_0 : i32, i32
  }
  func.func @transform_3(%arg0: i32) -> (i32, i32) {
    %c0_i32 = arith.constant 0 : i32
    %c0_i32_0 = arith.constant 0 : i32
    %c0_i32_1 = arith.constant 0 : i32
    return %c0_i32, %c0_i32_0 : i32, i32
  }
}

module attributes {stable_mosaic.version = 11 : i64} {
  func.func @_bn_relu_kernel(%arg0: i32, %arg1: memref<8x512xf32, #tpu.memory_space<vmem>>, %arg2: memref<1x512xf32, #tpu.memory_space<vmem>>, %arg3: memref<1x512xf32, #tpu.memory_space<vmem>>, %arg4: memref<8x512xbf16, #tpu.memory_space<vmem>>) attributes {dimension_semantics = [#tpu.dimension_semantics<parallel>], iteration_bounds = array<i64: 1>, scalar_prefetch = 0 : i64, scratch_operands = 0 : i64, tpu.core_type = #tpu.core_type<tc>, window_params = [{transform_indices = @transform_0, window_bounds = array<i64: 8, 512>}, {pipeline_mode = #tpu.pipeline_mode<synchronous>, transform_indices = @transform_1, window_bounds = array<i64: 1, 512>}, {pipeline_mode = #tpu.pipeline_mode<synchronous>, transform_indices = @transform_2, window_bounds = array<i64: 1, 512>}, {transform_indices = @transform_3, window_bounds = array<i64: 8, 512>}]} {
    %c0 = arith.constant 0 : index
    %c0_0 = arith.constant 0 : index
    %0 = vector.load %arg1[%c0, %c0_0] : memref<8x512xf32, #tpu.memory_space<vmem>>, vector<8x512xf32>
    %c0_1 = arith.constant 0 : index
    %c0_2 = arith.constant 0 : index
    %1 = vector.load %arg2[%c0_1, %c0_2] : memref<1x512xf32, #tpu.memory_space<vmem>>, vector<1x512xf32>
    %2 = vector.broadcast %1 : vector<1x512xf32> to vector<8x512xf32>
    %3 = arith.mulf %0, %2 : vector<8x512xf32>
    %c0_3 = arith.constant 0 : index
    %c0_4 = arith.constant 0 : index
    %4 = vector.load %arg3[%c0_3, %c0_4] : memref<1x512xf32, #tpu.memory_space<vmem>>, vector<1x512xf32>
    %5 = vector.broadcast %4 : vector<1x512xf32> to vector<8x512xf32>
    %6 = arith.addf %3, %5 : vector<8x512xf32>
    %cst = arith.constant 0.000000e+00 : f32
    %7 = vector.broadcast %cst : f32 to vector<8x512xf32>
    %8 = arith.maximumf %6, %7 : vector<8x512xf32>
    %9 = arith.truncf %8 : vector<8x512xf32> to vector<8x512xbf16>
    %c0_5 = arith.constant 0 : index
    %c0_6 = arith.constant 0 : index
    %10 = vector.load %arg4[%c0_5, %c0_6] : memref<8x512xbf16, #tpu.memory_space<vmem>>, vector<8x512xbf16>
    tpu.vector_store %arg4[%c0_5, %c0_6], %9 {strides = array<i32>} : memref<8x512xbf16, #tpu.memory_space<vmem>>, vector<8x512xbf16>,
    return
  }
  func.func @transform_0(%arg0: i32) -> (i32, i32) {
    %c0_i32 = arith.constant 0 : i32
    %c0_i32_0 = arith.constant 0 : i32
    return %arg0, %c0_i32 : i32, i32
  }
  func.func @transform_1(%arg0: i32) -> (i32, i32) {
    %c0_i32 = arith.constant 0 : i32
    %c0_i32_0 = arith.constant 0 : i32
    %c0_i32_1 = arith.constant 0 : i32
    return %c0_i32, %c0_i32_0 : i32, i32
  }
  func.func @transform_2(%arg0: i32) -> (i32, i32) {
    %c0_i32 = arith.constant 0 : i32
    %c0_i32_0 = arith.constant 0 : i32
    %c0_i32_1 = arith.constant 0 : i32
    return %c0_i32, %c0_i32_0 : i32, i32
  }
  func.func @transform_3(%arg0: i32) -> (i32, i32) {
    %c0_i32 = arith.constant 0 : i32
    %c0_i32_0 = arith.constant 0 : i32
    return %arg0, %c0_i32 : i32, i32
  }
}

</mosaic_0001>

<llo_original>
// kernel: common_discriminator.10
$region0: #{common_discriminator.10}
  #allocation0 [shape = 'u32[]', space=smem, size = 0x4, offset = 0x4, fixed_abs, tag = 'smem constant byte address 0x4 - core index']
  #allocation1 [shape = 'u32[72,128]{1,0:T(1,128)}', space=vmem, size = 0x9000, scoped, tag = 'internal scratch']
  %s0 = inlined_call_operand.vmem [shape: f32[512,64], index: 0, kind: input, shape index: {}]
  %s1 = inlined_call_operand.vmem [shape: f32[1,64], index: 1, kind: input, shape index: {}]
  %s2 = inlined_call_operand.vmem [shape: f32[1,64], index: 2, kind: input, shape index: {}]
  %s3 = inlined_call_operand.vmem [shape: bf16[512,64], index: 3, kind: output, shape index: {}]
  %s4 = sld [smem:[#allocation0]]
  $region22: #{common_discriminator.10} parent=0
    _
  %s6 = ssub.s32 1, %s4
  %s7 = scalar_select 0, %s6, %s4
  // Predicated region
  $region2: #{common_discriminator.10} parent=0 // pred_check
    _
  $region3: #{common_discriminator.10} parent=0 // pred_check_branch
    %9 = sbr.rel (0) target = $region5
  $region4: #{common_discriminator.10} parent=0 // pred_region
    _
  $region5: #{common_discriminator.10} parent=0 // pred_fallthru
    _
  // Predicated region
  $region6: #{common_discriminator.10} parent=0 // pred_check
    _
  $region7: #{common_discriminator.10} parent=0 // pred_check_branch
    %11 = sbr.rel (0) target = $region9
  $region8: #{common_discriminator.10} parent=0 // pred_region
    _
  $region9: #{common_discriminator.10} parent=0 // pred_fallthru
    _
  // Predicated region
  $region10: #{common_discriminator.10} parent=0 // pred_check
    _
  $region11: #{common_discriminator.10} parent=0 // pred_check_branch
    %13 = sbr.rel (0) target = $region13
  $region12: #{common_discriminator.10} parent=0 // pred_region
    _
  $region13: #{common_discriminator.10} parent=0 // pred_fallthru
    _
  %v14 = vld [vmem:[%s0] sm:$0xff]
  %v15 = vld [vmem:[%s0 + $0x8] sm:$0xff]
  %v16 = vld [vmem:[%s0 + $0x10] sm:$0xff]
  %v17 = vld [vmem:[%s0 + $0x18] sm:$0xff]
  %v18 = vld [vmem:[%s0 + $0x20] sm:$0xff]
  %v19 = vld [vmem:[%s0 + $0x28] sm:$0xff]
  %v20 = vld [vmem:[%s0 + $0x30] sm:$0xff]
  %v21 = vld [vmem:[%s0 + $0x38] sm:$0xff]
  %v22 = vld [vmem:[%s0 + $0x40] sm:$0xff]
  %v23 = vld [vmem:[%s0 + $0x48] sm:$0xff]
  %v24 = vld [vmem:[%s0 + $0x50] sm:$0xff]
  %v25 = vld [vmem:[%s0 + $0x58] sm:$0xff]
  %v26 = vld [vmem:[%s0 + $0x60] sm:$0xff]
  %v27 = vld [vmem:[%s0 + $0x68] sm:$0xff]
  %v28 = vld [vmem:[%s0 + $0x70] sm:$0xff]
  %v29 = vld [vmem:[%s0 + $0x78] sm:$0xff]
  %v30 = vld [vmem:[%s0 + $0x80] sm:$0xff]
  %v31 = vld [vmem:[%s0 + $0x88] sm:$0xff]
  %v32 = vld [vmem:[%s0 + $0x90] sm:$0xff]
  %v33 = vld [vmem:[%s0 + $0x98] sm:$0xff]
  %v34 = vld [vmem:[%s0 + $0xa0] sm:$0xff]
  %v35 = vld [vmem:[%s0 + $0xa8] sm:$0xff]
  %v36 = vld [vmem:[%s0 + $0xb0] sm:$0xff]
  %v37 = vld [vmem:[%s0 + $0xb8] sm:$0xff]
  %v38 = vld [vmem:[%s0 + $0xc0] sm:$0xff]
  %v39 = vld [vmem:[%s0 + $0xc8] sm:$0xff]
  %v40 = vld [vmem:[%s0 + $0xd0] sm:$0xff]
  %v41 = vld [vmem:[%s0 + $0xd8] sm:$0xff]
  %v42 = vld [vmem:[%s0 + $0xe0] sm:$0xff]
  %v43 = vld [vmem:[%s0 + $0xe8] sm:$0xff]
  %v44 = vld [vmem:[%s0 + $0xf0] sm:$0xff]
  %v45 = vld [vmem:[%s0 + $0xf8] sm:$0xff]
  %v46 = vld [vmem:[%s0 + $0x100] sm:$0xff]
  %v47 = vld [vmem:[%s0 + $0x108] sm:$0xff]
  %v48 = vld [vmem:[%s0 + $0x110] sm:$0xff]
  %v49 = vld [vmem:[%s0 + $0x118] sm:$0xff]
  %v50 = vld [vmem:[%s0 + $0x120] sm:$0xff]
  %v51 = vld [vmem:[%s0 + $0x128] sm:$0xff]
  %v52 = vld [vmem:[%s0 + $0x130] sm:$0xff]
  %v53 = vld [vmem:[%s0 + $0x138] sm:$0xff]
  %v54 = vld [vmem:[%s0 + $0x140] sm:$0xff]
  %v55 = vld [vmem:[%s0 + $0x148] sm:$0xff]
  %v56 = vld [vmem:[%s0 + $0x150] sm:$0xff]
  %v57 = vld [vmem:[%s0 + $0x158] sm:$0xff]
  %v58 = vld [vmem:[%s0 + $0x160] sm:$0xff]
  %v59 = vld [vmem:[%s0 + $0x168] sm:$0xff]
  %v60 = vld [vmem:[%s0 + $0x170] sm:$0xff]
  %v61 = vld [vmem:[%s0 + $0x178] sm:$0xff]
  %v62 = vld [vmem:[%s0 + $0x180] sm:$0xff]
  %v63 = vld [vmem:[%s0 + $0x188] sm:$0xff]
  %v64 = vld [vmem:[%s0 + $0x190] sm:$0xff]
  %v65 = vld [vmem:[%s0 + $0x198] sm:$0xff]
  %v66 = vld [vmem:[%s0 + $0x1a0] sm:$0xff]
  %v67 = vld [vmem:[%s0 + $0x1a8] sm:$0xff]
  %v68 = vld [vmem:[%s0 + $0x1b0] sm:$0xff]
  %v69 = vld [vmem:[%s0 + $0x1b8] sm:$0xff]
  %v70 = vld [vmem:[%s0 + $0x1c0] sm:$0xff]
  %v71 = vld [vmem:[%s0 + $0x1c8] sm:$0xff]
  %v72 = vld [vmem:[%s0 + $0x1d0] sm:$0xff]
  %v73 = vld [vmem:[%s0 + $0x1d8] sm:$0xff]
  %v74 = vld [vmem:[%s0 + $0x1e0] sm:$0xff]
  %v75 = vld [vmem:[%s0 + $0x1e8] sm:$0xff]
  %v76 = vld [vmem:[%s0 + $0x1f0] sm:$0xff]
  %v77 = vld [vmem:[%s0 + $0x1f8] sm:$0xff]
  %v78 = vld [vmem:[%s1] sm:$0x1]
  %v80 = vperm.slane %v78, 0
  %v82 = vmul.f32 %v14, %v80
  %v83 = vmul.f32 %v15, %v80
  %v84 = vmul.f32 %v16, %v80
  %v85 = vmul.f32 %v17, %v80
  %v86 = vmul.f32 %v18, %v80
  %v87 = vmul.f32 %v19, %v80
  %v88 = vmul.f32 %v20, %v80
  %v89 = vmul.f32 %v21, %v80
  %v90 = vmul.f32 %v22, %v80
  %v91 = vmul.f32 %v23, %v80
  %v92 = vmul.f32 %v24, %v80
  %v93 = vmul.f32 %v25, %v80
  %v94 = vmul.f32 %v26, %v80
  %v95 = vmul.f32 %v27, %v80
  %v96 = vmul.f32 %v28, %v80
  %v97 = vmul.f32 %v29, %v80
  %v98 = vmul.f32 %v30, %v80
  %v99 = vmul.f32 %v31, %v80
  %v100 = vmul.f32 %v32, %v80
  %v101 = vmul.f32 %v33, %v80
  %v102 = vmul.f32 %v34, %v80
  %v103 = vmul.f32 %v35, %v80
  %v104 = vmul.f32 %v36, %v80
  %v105 = vmul.f32 %v37, %v80
  %v106 = vmul.f32 %v38, %v80
  %v107 = vmul.f32 %v39, %v80
  %v108 = vmul.f32 %v40, %v80
  %v109 = vmul.f32 %v41, %v80
  %v110 = vmul.f32 %v42, %v80
  %v111 = vmul.f32 %v43, %v80
  %v112 = vmul.f32 %v44, %v80
  %v113 = vmul.f32 %v45, %v80
  %v114 = vmul.f32 %v46, %v80
  %v115 = vmul.f32 %v47, %v80
  %v116 = vmul.f32 %v48, %v80
  %v117 = vmul.f32 %v49, %v80
  %v118 = vmul.f32 %v50, %v80
  %v119 = vmul.f32 %v51, %v80
  %v120 = vmul.f32 %v52, %v80
  %v121 = vmul.f32 %v53, %v80
  %v122 = vmul.f32 %v54, %v80
  %v123 = vmul.f32 %v55, %v80
  %v124 = vmul.f32 %v56, %v80
  %v125 = vmul.f32 %v57, %v80
  %v126 = vmul.f32 %v58, %v80
  %v127 = vmul.f32 %v59, %v80
  %v128 = vmul.f32 %v60, %v80
  %v129 = vmul.f32 %v61, %v80
  %v130 = vmul.f32 %v62, %v80
  %v131 = vmul.f32 %v63, %v80
  %v132 = vmul.f32 %v64, %v80
  %v133 = vmul.f32 %v65, %v80
  %v134 = vmul.f32 %v66, %v80
  %v135 = vmul.f32 %v67, %v80
  %v136 = vmul.f32 %v68, %v80
  %v137 = vmul.f32 %v69, %v80
  %v138 = vmul.f32 %v70, %v80
  %v139 = vmul.f32 %v71, %v80
  %v140 = vmul.f32 %v72, %v80
  %v141 = vmul.f32 %v73, %v80
  %v142 = vmul.f32 %v74, %v80
  %v143 = vmul.f32 %v75, %v80
  %v144 = vmul.f32 %v76, %v80
  %v145 = vmul.f32 %v77, %v80
  %v146 = vld [vmem:[%s2] sm:$0x1]
  %v148 = vperm.slane %v146, 0
  %v150 = vadd.f32 %v82, %v148
  %v151 = vadd.f32 %v83, %v148
  %v152 = vadd.f32 %v84, %v148
  %v153 = vadd.f32 %v85, %v148
  %v154 = vadd.f32 %v86, %v148
  %v155 = vadd.f32 %v87, %v148
  %v156 = vadd.f32 %v88, %v148
  %v157 = vadd.f32 %v89, %v148
  %v158 = vadd.f32 %v90, %v148
  %v159 = vadd.f32 %v91, %v148
  %v160 = vadd.f32 %v92, %v148
  %v161 = vadd.f32 %v93, %v148
  %v162 = vadd.f32 %v94, %v148
  %v163 = vadd.f32 %v95, %v148
  %v164 = vadd.f32 %v96, %v148
  %v165 = vadd.f32 %v97, %v148
  %v166 = vadd.f32 %v98, %v148
  %v167 = vadd.f32 %v99, %v148
  %v168 = vadd.f32 %v100, %v148
  %v169 = vadd.f32 %v101, %v148
  %v170 = vadd.f32 %v102, %v148
  %v171 = vadd.f32 %v103, %v148
  %v172 = vadd.f32 %v104, %v148
  %v173 = vadd.f32 %v105, %v148
  %v174 = vadd.f32 %v106, %v148
  %v175 = vadd.f32 %v107, %v148
  %v176 = vadd.f32 %v108, %v148
  %v177 = vadd.f32 %v109, %v148
  %v178 = vadd.f32 %v110, %v148
  %v179 = vadd.f32 %v111, %v148
  %v180 = vadd.f32 %v112, %v148
  %v181 = vadd.f32 %v113, %v148
  %v182 = vadd.f32 %v114, %v148
  %v183 = vadd.f32 %v115, %v148
  %v184 = vadd.f32 %v116, %v148
  %v185 = vadd.f32 %v117, %v148
  %v186 = vadd.f32 %v118, %v148
  %v187 = vadd.f32 %v119, %v148
  %v188 = vadd.f32 %v120, %v148
  %v189 = vadd.f32 %v121, %v148
  %v190 = vadd.f32 %v122, %v148
  %v191 = vadd.f32 %v123, %v148
  %v192 = vadd.f32 %v124, %v148
  %v193 = vadd.f32 %v125, %v148
  %v194 = vadd.f32 %v126, %v148
  %v195 = vadd.f32 %v127, %v148
  %v196 = vadd.f32 %v128, %v148
  %v197 = vadd.f32 %v129, %v148
  %v198 = vadd.f32 %v130, %v148
  %v199 = vadd.f32 %v131, %v148
  %v200 = vadd.f32 %v132, %v148
  %v201 = vadd.f32 %v133, %v148
  %v202 = vadd.f32 %v134, %v148
  %v203 = vadd.f32 %v135, %v148
  %v204 = vadd.f32 %v136, %v148
  %v205 = vadd.f32 %v137, %v148
  %v206 = vadd.f32 %v138, %v148
  %v207 = vadd.f32 %v139, %v148
  %v208 = vadd.f32 %v140, %v148
  %v209 = vadd.f32 %v141, %v148
  %v210 = vadd.f32 %v142, %v148
  %v211 = vadd.f32 %v143, %v148
  %v212 = vadd.f32 %v144, %v148
  %v213 = vadd.f32 %v145, %v148
  %v214 = vmax.f32 %v150, 0.0
  %v215 = vmax.f32 %v151, 0.0
  %v216 = vmax.f32 %v152, 0.0
  %v217 = vmax.f32 %v153, 0.0
  %v218 = vmax.f32 %v154, 0.0
  %v219 = vmax.f32 %v155, 0.0
  %v220 = vmax.f32 %v156, 0.0
  %v221 = vmax.f32 %v157, 0.0
  %v222 = vmax.f32 %v158, 0.0
  %v223 = vmax.f32 %v159, 0.0
  %v224 = vmax.f32 %v160, 0.0
  %v225 = vmax.f32 %v161, 0.0
  %v226 = vmax.f32 %v162, 0.0
  %v227 = vmax.f32 %v163, 0.0
  %v228 = vmax.f32 %v164, 0.0
  %v229 = vmax.f32 %v165, 0.0
  %v230 = vmax.f32 %v166, 0.0
  %v231 = vmax.f32 %v167, 0.0
  %v232 = vmax.f32 %v168, 0.0
  %v233 = vmax.f32 %v169, 0.0
  %v234 = vmax.f32 %v170, 0.0
  %v235 = vmax.f32 %v171, 0.0
  %v236 = vmax.f32 %v172, 0.0
  %v237 = vmax.f32 %v173, 0.0
  %v238 = vmax.f32 %v174, 0.0
  %v239 = vmax.f32 %v175, 0.0
  %v240 = vmax.f32 %v176, 0.0
  %v241 = vmax.f32 %v177, 0.0
  %v242 = vmax.f32 %v178, 0.0
  %v243 = vmax.f32 %v179, 0.0
  %v244 = vmax.f32 %v180, 0.0
  %v245 = vmax.f32 %v181, 0.0
  %v246 = vmax.f32 %v182, 0.0
  %v247 = vmax.f32 %v183, 0.0
  %v248 = vmax.f32 %v184, 0.0
  %v249 = vmax.f32 %v185, 0.0
  %v250 = vmax.f32 %v186, 0.0
  %v251 = vmax.f32 %v187, 0.0
  %v252 = vmax.f32 %v188, 0.0
  %v253 = vmax.f32 %v189, 0.0
  %v254 = vmax.f32 %v190, 0.0
  %v255 = vmax.f32 %v191, 0.0
  %v256 = vmax.f32 %v192, 0.0
  %v257 = vmax.f32 %v193, 0.0
  %v258 = vmax.f32 %v194, 0.0
  %v259 = vmax.f32 %v195, 0.0
  %v260 = vmax.f32 %v196, 0.0
  %v261 = vmax.f32 %v197, 0.0
  %v262 = vmax.f32 %v198, 0.0
  %v263 = vmax.f32 %v199, 0.0
  %v264 = vmax.f32 %v200, 0.0
  %v265 = vmax.f32 %v201, 0.0
  %v266 = vmax.f32 %v202, 0.0
  %v267 = vmax.f32 %v203, 0.0
  %v268 = vmax.f32 %v204, 0.0
  %v269 = vmax.f32 %v205, 0.0
  %v270 = vmax.f32 %v206, 0.0
  %v271 = vmax.f32 %v207, 0.0
  %v272 = vmax.f32 %v208, 0.0
  %v273 = vmax.f32 %v209, 0.0
  %v274 = vmax.f32 %v210, 0.0
  %v275 = vmax.f32 %v211, 0.0
  %v276 = vmax.f32 %v212, 0.0
  %v277 = vmax.f32 %v213, 0.0
  %v278 = vpack.c.bf16 %v214, %v214
  %v279 = vpack.c.bf16 %v215, %v215
  %v280 = vpack.c.bf16 %v216, %v216
  %v281 = vpack.c.bf16 %v217, %v217
  %v282 = vpack.c.bf16 %v218, %v218
  %v283 = vpack.c.bf16 %v219, %v219
  %v284 = vpack.c.bf16 %v220, %v220
  %v285 = vpack.c.bf16 %v221, %v221
  %v286 = vpack.c.bf16 %v222, %v222
  %v287 = vpack.c.bf16 %v223, %v223
  %v288 = vpack.c.bf16 %v224, %v224
  %v289 = vpack.c.bf16 %v225, %v225
  %v290 = vpack.c.bf16 %v226, %v226
  %v291 = vpack.c.bf16 %v227, %v227
  %v292 = vpack.c.bf16 %v228, %v228
  %v293 = vpack.c.bf16 %v229, %v229
  %v294 = vpack.c.bf16 %v230, %v230
  %v295 = vpack.c.bf16 %v231, %v231
  %v296 = vpack.c.bf16 %v232, %v232
  %v297 = vpack.c.bf16 %v233, %v233
  %v298 = vpack.c.bf16 %v234, %v234
  %v299 = vpack.c.bf16 %v235, %v235
  %v300 = vpack.c.bf16 %v236, %v236
  %v301 = vpack.c.bf16 %v237, %v237
  %v302 = vpack.c.bf16 %v238, %v238
  %v303 = vpack.c.bf16 %v239, %v239
  %v304 = vpack.c.bf16 %v240, %v240
  %v305 = vpack.c.bf16 %v241, %v241
  %v306 = vpack.c.bf16 %v242, %v242
  %v307 = vpack.c.bf16 %v243, %v243
  %v308 = vpack.c.bf16 %v244, %v244
  %v309 = vpack.c.bf16 %v245, %v245
  %v310 = vpack.c.bf16 %v246, %v246
  %v311 = vpack.c.bf16 %v247, %v247
  %v312 = vpack.c.bf16 %v248, %v248
  %v313 = vpack.c.bf16 %v249, %v249
  %v314 = vpack.c.bf16 %v250, %v250
  %v315 = vpack.c.bf16 %v251, %v251
  %v316 = vpack.c.bf16 %v252, %v252
  %v317 = vpack.c.bf16 %v253, %v253
  %v318 = vpack.c.bf16 %v254, %v254
  %v319 = vpack.c.bf16 %v255, %v255
  %v320 = vpack.c.bf16 %v256, %v256
  %v321 = vpack.c.bf16 %v257, %v257
  %v322 = vpack.c.bf16 %v258, %v258
  %v323 = vpack.c.bf16 %v259, %v259
  %v324 = vpack.c.bf16 %v260, %v260
  %v325 = vpack.c.bf16 %v261, %v261
  %v326 = vpack.c.bf16 %v262, %v262
  %v327 = vpack.c.bf16 %v263, %v263
  %v328 = vpack.c.bf16 %v264, %v264
  %v329 = vpack.c.bf16 %v265, %v265
  %v330 = vpack.c.bf16 %v266, %v266
  %v331 = vpack.c.bf16 %v267, %v267
  %v332 = vpack.c.bf16 %v268, %v268
  %v333 = vpack.c.bf16 %v269, %v269
  %v334 = vpack.c.bf16 %v270, %v270
  %v335 = vpack.c.bf16 %v271, %v271
  %v336 = vpack.c.bf16 %v272, %v272
  %v337 = vpack.c.bf16 %v273, %v273
  %v338 = vpack.c.bf16 %v274, %v274
  %v339 = vpack.c.bf16 %v275, %v275
  %v340 = vpack.c.bf16 %v276, %v276
  %v341 = vpack.c.bf16 %v277, %v277
  %vm342 = vcmask 519168
  %343 = vst.msk [vmem:[%s3] sm:$0xf] %vm342, %v278
  %344 = vst.msk [vmem:[%s3 + $0x4] sm:$0xf] %vm342, %v279
  %345 = vst.msk [vmem:[%s3 + $0x8] sm:$0xf] %vm342, %v280
  %346 = vst.msk [vmem:[%s3 + $0xc] sm:$0xf] %vm342, %v281
  %347 = vst.msk [vmem:[%s3 + $0x10] sm:$0xf] %vm342, %v282
  %348 = vst.msk [vmem:[%s3 + $0x14] sm:$0xf] %vm342, %v283
  %349 = vst.msk [vmem:[%s3 + $0x18] sm:$0xf] %vm342, %v284
  %350 = vst.msk [vmem:[%s3 + $0x1c] sm:$0xf] %vm342, %v285
  %351 = vst.msk [vmem:[%s3 + $0x20] sm:$0xf] %vm342, %v286
  %352 = vst.msk [vmem:[%s3 + $0x24] sm:$0xf] %vm342, %v287
  %353 = vst.msk [vmem:[%s3 + $0x28] sm:$0xf] %vm342, %v288
  %354 = vst.msk [vmem:[%s3 + $0x2c] sm:$0xf] %vm342, %v289
  %355 = vst.msk [vmem:[%s3 + $0x30] sm:$0xf] %vm342, %v290
  %356 = vst.msk [vmem:[%s3 + $0x34] sm:$0xf] %vm342, %v291
  %357 = vst.msk [vmem:[%s3 + $0x38] sm:$0xf] %vm342, %v292
  %358 = vst.msk [vmem:[%s3 + $0x3c] sm:$0xf] %vm342, %v293
  %359 = vst.msk [vmem:[%s3 + $0x40] sm:$0xf] %vm342, %v294
  %360 = vst.msk [vmem:[%s3 + $0x44] sm:$0xf] %vm342, %v295
  %361 = vst.msk [vmem:[%s3 + $0x48] sm:$0xf] %vm342, %v296
  %362 = vst.msk [vmem:[%s3 + $0x4c] sm:$0xf] %vm342, %v297
  %363 = vst.msk [vmem:[%s3 + $0x50] sm:$0xf] %vm342, %v298
  %364 = vst.msk [vmem:[%s3 + $0x54] sm:$0xf] %vm342, %v299
  %365 = vst.msk [vmem:[%s3 + $0x58] sm:$0xf] %vm342, %v300
  %366 = vst.msk [vmem:[%s3 + $0x5c] sm:$0xf] %vm342, %v301
  %367 = vst.msk [vmem:[%s3 + $0x60] sm:$0xf] %vm342, %v302
  %368 = vst.msk [vmem:[%s3 + $0x64] sm:$0xf] %vm342, %v303
  %369 = vst.msk [vmem:[%s3 + $0x68] sm:$0xf] %vm342, %v304
  %370 = vst.msk [vmem:[%s3 + $0x6c] sm:$0xf] %vm342, %v305
  %371 = vst.msk [vmem:[%s3 + $0x70] sm:$0xf] %vm342, %v306
  %372 = vst.msk [vmem:[%s3 + $0x74] sm:$0xf] %vm342, %v307
  %373 = vst.msk [vmem:[%s3 + $0x78] sm:$0xf] %vm342, %v308
  %374 = vst.msk [vmem:[%s3 + $0x7c] sm:$0xf] %vm342, %v309
  %375 = vst.msk [vmem:[%s3 + $0x80] sm:$0xf] %vm342, %v310
  %376 = vst.msk [vmem:[%s3 + $0x84] sm:$0xf] %vm342, %v311
  %377 = vst.msk [vmem:[%s3 + $0x88] sm:$0xf] %vm342, %v312
  %378 = vst.msk [vmem:[%s3 + $0x8c] sm:$0xf] %vm342, %v313
  %379 = vst.msk [vmem:[%s3 + $0x90] sm:$0xf] %vm342, %v314
  %380 = vst.msk [vmem:[%s3 + $0x94] sm:$0xf] %vm342, %v315
  %381 = vst.msk [vmem:[%s3 + $0x98] sm:$0xf] %vm342, %v316
  %382 = vst.msk [vmem:[%s3 + $0x9c] sm:$0xf] %vm342, %v317
  %383 = vst.msk [vmem:[%s3 + $0xa0] sm:$0xf] %vm342, %v318
  %384 = vst.msk [vmem:[%s3 + $0xa4] sm:$0xf] %vm342, %v319
  %385 = vst.msk [vmem:[%s3 + $0xa8] sm:$0xf] %vm342, %v320
  %386 = vst.msk [vmem:[%s3 + $0xac] sm:$0xf] %vm342, %v321
  %387 = vst.msk [vmem:[%s3 + $0xb0] sm:$0xf] %vm342, %v322
  %388 = vst.msk [vmem:[%s3 + $0xb4] sm:$0xf] %vm342, %v323
  %389 = vst.msk [vmem:[%s3 + $0xb8] sm:$0xf] %vm342, %v324
  %390 = vst.msk [vmem:[%s3 + $0xbc] sm:$0xf] %vm342, %v325
  %391 = vst.msk [vmem:[%s3 + $0xc0] sm:$0xf] %vm342, %v326
  %392 = vst.msk [vmem:[%s3 + $0xc4] sm:$0xf] %vm342, %v327
  %393 = vst.msk [vmem:[%s3 + $0xc8] sm:$0xf] %vm342, %v328
  %394 = vst.msk [vmem:[%s3 + $0xcc] sm:$0xf] %vm342, %v329
  %395 = vst.msk [vmem:[%s3 + $0xd0] sm:$0xf] %vm342, %v330
  %396 = vst.msk [vmem:[%s3 + $0xd4] sm:$0xf] %vm342, %v331
  %397 = vst.msk [vmem:[%s3 + $0xd8] sm:$0xf] %vm342, %v332
  %398 = vst.msk [vmem:[%s3 + $0xdc] sm:$0xf] %vm342, %v333
  %399 = vst.msk [vmem:[%s3 + $0xe0] sm:$0xf] %vm342, %v334
  %400 = vst.msk [vmem:[%s3 + $0xe4] sm:$0xf] %vm342, %v335
  %401 = vst.msk [vmem:[%s3 + $0xe8] sm:$0xf] %vm342, %v336
  %402 = vst.msk [vmem:[%s3 + $0xec] sm:$0xf] %vm342, %v337
  %403 = vst.msk [vmem:[%s3 + $0xf0] sm:$0xf] %vm342, %v338
  %404 = vst.msk [vmem:[%s3 + $0xf4] sm:$0xf] %vm342, %v339
  %405 = vst.msk [vmem:[%s3 + $0xf8] sm:$0xf] %vm342, %v340
  %406 = vst.msk [vmem:[%s3 + $0xfc] sm:$0xf] %vm342, %v341
  // Predicated region
  $region14: #{common_discriminator.10} parent=0 // pred_check
    _
  $region15: #{common_discriminator.10} parent=0 // pred_check_branch
    %408 = sbr.rel (0) target = $region17
  $region16: #{common_discriminator.10} parent=0 // pred_region
    _
  $region17: #{common_discriminator.10} parent=0 // pred_fallthru
    _
  // Predicated region
  $region18: #{common_discriminator.10} parent=0 // pred_check
    _
  $region19: #{common_discriminator.10} parent=0 // pred_check_branch
    %410 = sbr.rel (0) target = $region21
  $region20: #{common_discriminator.10} parent=0 // pred_region
    _
  $region21: #{common_discriminator.10} parent=0 // pred_fallthru
    _

// kernel: common_discriminator.9
$region0: #{common_discriminator.9}
  #allocation0 [shape = 'u32[]', space=smem, size = 0x4, offset = 0x4, fixed_abs, tag = 'smem constant byte address 0x4 - core index']
  #allocation1 [shape = 'u32[72,128]{1,0:T(1,128)}', space=vmem, size = 0x9000, scoped, tag = 'internal scratch']
  %s0 = inlined_call_operand.vmem [shape: bf16[512,256], index: 0, kind: input, shape index: {}]
  %s1 = inlined_call_operand.vmem [shape: bf16[256,64], index: 1, kind: input, shape index: {}]
  %s2 = inlined_call_operand.vmem [shape: f32[512,64], index: 2, kind: output, shape index: {0}]
  %s3 = inlined_call_operand.vmem [shape: f32[1,64], index: 3, kind: output, shape index: {1}]
  %s4 = inlined_call_operand.vmem [shape: f32[1,64], index: 4, kind: output, shape index: {2}]
  %5 = xla_tuple %s2, %s3, %s4
  %s6 = sld [smem:[#allocation0]]
  $region38: #{common_discriminator.9} parent=0
    _
  %s8 = ssub.s32 1, %s6
  %s9 = scalar_select 0, %s8, %s6
  // Predicated region
  $region2: #{common_discriminator.9} parent=0 // pred_check
    _
  $region3: #{common_discriminator.9} parent=0 // pred_check_branch
    %11 = sbr.rel (0) target = $region5
  $region4: #{common_discriminator.9} parent=0 // pred_region
    _
  $region5: #{common_discriminator.9} parent=0 // pred_fallthru
    _
  // Predicated region
  $region6: #{common_discriminator.9} parent=0 // pred_check
    _
  $region7: #{common_discriminator.9} parent=0 // pred_check_branch
    %13 = sbr.rel (0) target = $region9
  $region8: #{common_discriminator.9} parent=0 // pred_region
    _
  $region9: #{common_discriminator.9} parent=0 // pred_fallthru
    _
  %v14 = vld [vmem:[%s0] sm:$0xff]
  %v15 = vld [vmem:[%s0 + $0x8] sm:$0xff]
  %v16 = vld [vmem:[%s0 + $0x10] sm:$0xff]
  %v17 = vld [vmem:[%s0 + $0x18] sm:$0xff]
  %v18 = vld [vmem:[%s0 + $0x20] sm:$0xff]
  %v19 = vld [vmem:[%s0 + $0x28] sm:$0xff]
  %v20 = vld [vmem:[%s0 + $0x30] sm:$0xff]
  %v21 = vld [vmem:[%s0 + $0x38] sm:$0xff]
  %v22 = vld [vmem:[%s0 + $0x40] sm:$0xff]
  %v23 = vld [vmem:[%s0 + $0x48] sm:$0xff]
  %v24 = vld [vmem:[%s0 + $0x50] sm:$0xff]
  %v25 = vld [vmem:[%s0 + $0x58] sm:$0xff]
  %v26 = vld [vmem:[%s0 + $0x60] sm:$0xff]
  %v27 = vld [vmem:[%s0 + $0x68] sm:$0xff]
  %v28 = vld [vmem:[%s0 + $0x70] sm:$0xff]
  %v29 = vld [vmem:[%s0 + $0x78] sm:$0xff]
  %v30 = vld [vmem:[%s0 + $0x80] sm:$0xff]
  %v31 = vld [vmem:[%s0 + $0x88] sm:$0xff]
  %v32 = vld [vmem:[%s0 + $0x90] sm:$0xff]
  %v33 = vld [vmem:[%s0 + $0x98] sm:$0xff]
  %v34 = vld [vmem:[%s0 + $0xa0] sm:$0xff]
  %v35 = vld [vmem:[%s0 + $0xa8] sm:$0xff]
  %v36 = vld [vmem:[%s0 + $0xb0] sm:$0xff]
  %v37 = vld [vmem:[%s0 + $0xb8] sm:$0xff]
  %v38 = vld [vmem:[%s0 + $0xc0] sm:$0xff]
  %v39 = vld [vmem:[%s0 + $0xc8] sm:$0xff]
  %v40 = vld [vmem:[%s0 + $0xd0] sm:$0xff]
  %v41 = vld [vmem:[%s0 + $0xd8] sm:$0xff]
  %v42 = vld [vmem:[%s0 + $0xe0] sm:$0xff]
  %v43 = vld [vmem:[%s0 + $0xe8] sm:$0xff]
  %v44 = vld [vmem:[%s0 + $0xf0] sm:$0xff]
  %v45 = vld [vmem:[%s0 + $0xf8] sm:$0xff]
  %v46 = vld [vmem:[%s0 + $0x100] sm:$0xff]
  %v47 = vld [vmem:[%s0 + $0x108] sm:$0xff]
  %v48 = vld [vmem:[%s0 + $0x110] sm:$0xff]
  %v49 = vld [vmem:[%s0 + $0x118] sm:$0xff]
  %v50 = vld [vmem:[%s0 + $0x120] sm:$0xff]
  %v51 = vld [vmem:[%s0 + $0x128] sm:$0xff]
  %v52 = vld [vmem:[%s0 + $0x130] sm:$0xff]
  %v53 = vld [vmem:[%s0 + $0x138] sm:$0xff]
  %v54 = vld [vmem:[%s0 + $0x140] sm:$0xff]
  %v55 = vld [vmem:[%s0 + $0x148] sm:$0xff]
  %v56 = vld [vmem:[%s0 + $0x150] sm:$0xff]
  %v57 = vld [vmem:[%s0 + $0x158] sm:$0xff]
  %v58 = vld [vmem:[%s0 + $0x160] sm:$0xff]
  %v59 = vld [vmem:[%s0 + $0x168] sm:$0xff]
  %v60 = vld [vmem:[%s0 + $0x170] sm:$0xff]
  %v61 = vld [vmem:[%s0 + $0x178] sm:$0xff]
  %v62 = vld [vmem:[%s0 + $0x180] sm:$0xff]
  %v63 = vld [vmem:[%s0 + $0x188] sm:$0xff]
  %v64 = vld [vmem:[%s0 + $0x190] sm:$0xff]
  %v65 = vld [vmem:[%s0 + $0x198] sm:$0xff]
  %v66 = vld [vmem:[%s0 + $0x1a0] sm:$0xff]
  %v67 = vld [vmem:[%s0 + $0x1a8] sm:$0xff]
  %v68 = vld [vmem:[%s0 + $0x1b0] sm:$0xff]
  %v69 = vld [vmem:[%s0 + $0x1b8] sm:$0xff]
  %v70 = vld [vmem:[%s0 + $0x1c0] sm:$0xff]
  %v71 = vld [vmem:[%s0 + $0x1c8] sm:$0xff]
  %v72 = vld [vmem:[%s0 + $0x1d0] sm:$0xff]
  %v73 = vld [vmem:[%s0 + $0x1d8] sm:$0xff]
  %v74 = vld [vmem:[%s0 + $0x1e0] sm:$0xff]
  %v75 = vld [vmem:[%s0 + $0x1e8] sm:$0xff]
  %v76 = vld [vmem:[%s0 + $0x1f0] sm:$0xff]
  %v77 = vld [vmem:[%s0 + $0x1f8] sm:$0xff]
  %v78 = vld [vmem:[%s1] sm:$0xf]
  %v79 = vld [vmem:[%s1 + $0x4] sm:$0xf]
  %v80 = vld [vmem:[%s1 + $0x8] sm:$0xf]
  %v81 = vld [vmem:[%s1 + $0xc] sm:$0xf]
  %v82 = vld [vmem:[%s1 + $0x10] sm:$0xf]
  %v83 = vld [vmem:[%s1 + $0x14] sm:$0xf]
  %v84 = vld [vmem:[%s1 + $0x18] sm:$0xf]
  %v85 = vld [vmem:[%s1 + $0x1c] sm:$0xf]
  %v86 = vld [vmem:[%s1 + $0x20] sm:$0xf]
  %v87 = vld [vmem:[%s1 + $0x24] sm:$0xf]
  %v88 = vld [vmem:[%s1 + $0x28] sm:$0xf]
  %v89 = vld [vmem:[%s1 + $0x2c] sm:$0xf]
  %v90 = vld [vmem:[%s1 + $0x30] sm:$0xf]
  %v91 = vld [vmem:[%s1 + $0x34] sm:$0xf]
  %v92 = vld [vmem:[%s1 + $0x38] sm:$0xf]
  %v93 = vld [vmem:[%s1 + $0x3c] sm:$0xf]
  %v94 = vld [vmem:[%s1 + $0x40] sm:$0xf]
  %v95 = vld [vmem:[%s1 + $0x44] sm:$0xf]
  %v96 = vld [vmem:[%s1 + $0x48] sm:$0xf]
  %v97 = vld [vmem:[%s1 + $0x4c] sm:$0xf]
  %v98 = vld [vmem:[%s1 + $0x50] sm:$0xf]
  %v99 = vld [vmem:[%s1 + $0x54] sm:$0xf]
  %v100 = vld [vmem:[%s1 + $0x58] sm:$0xf]
  %v101 = vld [vmem:[%s1 + $0x5c] sm:$0xf]
  %v102 = vld [vmem:[%s1 + $0x60] sm:$0xf]
  %v103 = vld [vmem:[%s1 + $0x64] sm:$0xf]
  %v104 = vld [vmem:[%s1 + $0x68] sm:$0xf]
  %v105 = vld [vmem:[%s1 + $0x6c] sm:$0xf]
  %v106 = vld [vmem:[%s1 + $0x70] sm:$0xf]
  %v107 = vld [vmem:[%s1 + $0x74] sm:$0xf]
  %v108 = vld [vmem:[%s1 + $0x78] sm:$0xf]
  %v109 = vld [vmem:[%s1 + $0x7c] sm:$0xf]
  %v174 = vunpack.c.l.b16 %v14
  %v175 = vunpack.c.h.b16 %v14
  %v176 = vunpack.c.l.b16 %v15
  %v177 = vunpack.c.h.b16 %v15
  %v178 = vunpack.c.l.b16 %v16
  %v179 = vunpack.c.h.b16 %v16
  %v180 = vunpack.c.l.b16 %v17
  %v181 = vunpack.c.h.b16 %v17
  %v182 = vunpack.c.l.b16 %v18
  %v183 = vunpack.c.h.b16 %v18
  %v184 = vunpack.c.l.b16 %v19
  %v185 = vunpack.c.h.b16 %v19
  %v186 = vunpack.c.l.b16 %v20
  %v187 = vunpack.c.h.b16 %v20
  %v188 = vunpack.c.l.b16 %v21
  %v189 = vunpack.c.h.b16 %v21
  %v190 = vunpack.c.l.b16 %v22
  %v191 = vunpack.c.h.b16 %v22
  %v192 = vunpack.c.l.b16 %v23
  %v193 = vunpack.c.h.b16 %v23
  %v194 = vunpack.c.l.b16 %v24
  %v195 = vunpack.c.h.b16 %v24
  %v196 = vunpack.c.l.b16 %v25
  %v197 = vunpack.c.h.b16 %v25
  %v198 = vunpack.c.l.b16 %v26
  %v199 = vunpack.c.h.b16 %v26
  %v200 = vunpack.c.l.b16 %v27
  %v201 = vunpack.c.h.b16 %v27
  %v202 = vunpack.c.l.b16 %v28
  %v203 = vunpack.c.h.b16 %v28
  %v204 = vunpack.c.l.b16 %v29
  %v205 = vunpack.c.h.b16 %v29
  %v206 = vunpack.c.l.b16 %v30
  %v207 = vunpack.c.h.b16 %v30
  %v208 = vunpack.c.l.b16 %v31
  %v209 = vunpack.c.h.b16 %v31
  %v210 = vunpack.c.l.b16 %v32
  %v211 = vunpack.c.h.b16 %v32
  %v212 = vunpack.c.l.b16 %v33
  %v213 = vunpack.c.h.b16 %v33
  %v214 = vunpack.c.l.b16 %v34
  %v215 = vunpack.c.h.b16 %v34
  %v216 = vunpack.c.l.b16 %v35
  %v217 = vunpack.c.h.b16 %v35
  %v218 = vunpack.c.l.b16 %v36
  %v219 = vunpack.c.h.b16 %v36
  %v220 = vunpack.c.l.b16 %v37
  %v221 = vunpack.c.h.b16 %v37
  %v222 = vunpack.c.l.b16 %v38
  %v223 = vunpack.c.h.b16 %v38
  %v224 = vunpack.c.l.b16 %v39
  %v225 = vunpack.c.h.b16 %v39
  %v226 = vunpack.c.l.b16 %v40
  %v227 = vunpack.c.h.b16 %v40
  %v228 = vunpack.c.l.b16 %v41
  %v229 = vunpack.c.h.b16 %v41
  %v230 = vunpack.c.l.b16 %v42
  %v231 = vunpack.c.h.b16 %v42
  %v232 = vunpack.c.l.b16 %v43
  %v233 = vunpack.c.h.b16 %v43
  %v234 = vunpack.c.l.b16 %v44
  %v235 = vunpack.c.h.b16 %v44
  %v236 = vunpack.c.l.b16 %v45
  %v237 = vunpack.c.h.b16 %v45
  %v238 = vunpack.c.l.b16 %v46
  %v239 = vunpack.c.h.b16 %v46
  %v240 = vunpack.c.l.b16 %v47
  %v241 = vunpack.c.h.b16 %v47
  %v242 = vunpack.c.l.b16 %v48
  %v243 = vunpack.c.h.b16 %v48
  %v244 = vunpack.c.l.b16 %v49
  %v245 = vunpack.c.h.b16 %v49
  %v246 = vunpack.c.l.b16 %v50
  %v247 = vunpack.c.h.b16 %v50
  %v248 = vunpack.c.l.b16 %v51
  %v249 = vunpack.c.h.b16 %v51
  %v250 = vunpack.c.l.b16 %v52
  %v251 = vunpack.c.h.b16 %v52
  %v252 = vunpack.c.l.b16 %v53
  %v253 = vunpack.c.h.b16 %v53
  %v254 = vunpack.c.l.b16 %v54
  %v255 = vunpack.c.h.b16 %v54
  %v256 = vunpack.c.l.b16 %v55
  %v257 = vunpack.c.h.b16 %v55
  %v258 = vunpack.c.l.b16 %v56
  %v259 = vunpack.c.h.b16 %v56
  %v260 = vunpack.c.l.b16 %v57
  %v261 = vunpack.c.h.b16 %v57
  %v262 = vunpack.c.l.b16 %v58
  %v263 = vunpack.c.h.b16 %v58
  %v264 = vunpack.c.l.b16 %v59
  %v265 = vunpack.c.h.b16 %v59
  %v266 = vunpack.c.l.b16 %v60
  %v267 = vunpack.c.h.b16 %v60
  %v268 = vunpack.c.l.b16 %v61
  %v269 = vunpack.c.h.b16 %v61
  %v270 = vunpack.c.l.b16 %v62
  %v271 = vunpack.c.h.b16 %v62
  %v272 = vunpack.c.l.b16 %v63
  %v273 = vunpack.c.h.b16 %v63
  %v274 = vunpack.c.l.b16 %v64
  %v275 = vunpack.c.h.b16 %v64
  %v276 = vunpack.c.l.b16 %v65
  %v277 = vunpack.c.h.b16 %v65
  %v278 = vunpack.c.l.b16 %v66
  %v279 = vunpack.c.h.b16 %v66
  %v280 = vunpack.c.l.b16 %v67
  %v281 = vunpack.c.h.b16 %v67
  %v282 = vunpack.c.l.b16 %v68
  %v283 = vunpack.c.h.b16 %v68
  %v284 = vunpack.c.l.b16 %v69
  %v285 = vunpack.c.h.b16 %v69
  %v286 = vunpack.c.l.b16 %v70
  %v287 = vunpack.c.h.b16 %v70
  %v288 = vunpack.c.l.b16 %v71
  %v289 = vunpack.c.h.b16 %v71
  %v290 = vunpack.c.l.b16 %v72
  %v291 = vunpack.c.h.b16 %v72
  %v292 = vunpack.c.l.b16 %v73
  %v293 = vunpack.c.h.b16 %v73
  %v294 = vunpack.c.l.b16 %v74
  %v295 = vunpack.c.h.b16 %v74
  %v296 = vunpack.c.l.b16 %v75
  %v297 = vunpack.c.h.b16 %v75
  %v298 = vunpack.c.l.b16 %v76
  %v299 = vunpack.c.h.b16 %v76
  %v300 = vunpack.c.l.b16 %v77
  %v301 = vunpack.c.h.b16 %v77
  %v302 = vpack.c.b16 %v176, %v174
  %v303 = vpack.c.b16 %v177, %v175
  %v304 = vpack.c.b16 %v180, %v178
  %v305 = vpack.c.b16 %v181, %v179
  %v306 = vpack.c.b16 %v184, %v182
  %v307 = vpack.c.b16 %v185, %v183
  %v308 = vpack.c.b16 %v188, %v186
  %v309 = vpack.c.b16 %v189, %v187
  %v310 = vpack.c.b16 %v192, %v190
  %v311 = vpack.c.b16 %v193, %v191
  %v312 = vpack.c.b16 %v196, %v194
  %v313 = vpack.c.b16 %v197, %v195
  %v314 = vpack.c.b16 %v200, %v198
  %v315 = vpack.c.b16 %v201, %v199
  %v316 = vpack.c.b16 %v204, %v202
  %v317 = vpack.c.b16 %v205, %v203
  %v318 = vpack.c.b16 %v208, %v206
  %v319 = vpack.c.b16 %v209, %v207
  %v320 = vpack.c.b16 %v212, %v210
  %v321 = vpack.c.b16 %v213, %v211
  %v322 = vpack.c.b16 %v216, %v214
  %v323 = vpack.c.b16 %v217, %v215
  %v324 = vpack.c.b16 %v220, %v218
  %v325 = vpack.c.b16 %v221, %v219
  %v326 = vpack.c.b16 %v224, %v222
  %v327 = vpack.c.b16 %v225, %v223
  %v328 = vpack.c.b16 %v228, %v226
  %v329 = vpack.c.b16 %v229, %v227
  %v330 = vpack.c.b16 %v232, %v230
  %v331 = vpack.c.b16 %v233, %v231
  %v332 = vpack.c.b16 %v236, %v234
  %v333 = vpack.c.b16 %v237, %v235
  %v334 = vpack.c.b16 %v240, %v238
  %v335 = vpack.c.b16 %v241, %v239
  %v336 = vpack.c.b16 %v244, %v242
  %v337 = vpack.c.b16 %v245, %v243
  %v338 = vpack.c.b16 %v248, %v246
  %v339 = vpack.c.b16 %v249, %v247
  %v340 = vpack.c.b16 %v252, %v250
  %v341 = vpack.c.b16 %v253, %v251
  %v342 = vpack.c.b16 %v256, %v254
  %v343 = vpack.c.b16 %v257, %v255
  %v344 = vpack.c.b16 %v260, %v258
  %v345 = vpack.c.b16 %v261, %v259
  %v346 = vpack.c.b16 %v264, %v262
  %v347 = vpack.c.b16 %v265, %v263
  %v348 = vpack.c.b16 %v268, %v266
  %v349 = vpack.c.b16 %v269, %v267
  %v350 = vpack.c.b16 %v272, %v270
  %v351 = vpack.c.b16 %v273, %v271
  %v352 = vpack.c.b16 %v276, %v274
  %v353 = vpack.c.b16 %v277, %v275
  %v354 = vpack.c.b16 %v280, %v278
  %v355 = vpack.c.b16 %v281, %v279
  %v356 = vpack.c.b16 %v284, %v282
  %v357 = vpack.c.b16 %v285, %v283
  %v358 = vpack.c.b16 %v288, %v286
  %v359 = vpack.c.b16 %v289, %v287
  %v360 = vpack.c.b16 %v292, %v290
  %v361 = vpack.c.b16 %v293, %v291
  %v362 = vpack.c.b16 %v296, %v294
  %v363 = vpack.c.b16 %v297, %v295
  %v364 = vpack.c.b16 %v300, %v298
  %v365 = vpack.c.b16 %v301, %v299
  %v462 = vunpack.c.l.b16 %v78
  %v463 = vunpack.c.l.b16 %v79
  %v464 = vunpack.c.l.b16 %v80
  %v465 = vunpack.c.l.b16 %v81
  %v466 = vunpack.c.l.b16 %v82
  %v467 = vunpack.c.l.b16 %v83
  %v468 = vunpack.c.l.b16 %v84
  %v469 = vunpack.c.l.b16 %v85
  %v470 = vunpack.c.l.b16 %v86
  %v471 = vunpack.c.l.b16 %v87
  %v472 = vunpack.c.l.b16 %v88
  %v473 = vunpack.c.l.b16 %v89
  %v474 = vunpack.c.l.b16 %v90
  %v475 = vunpack.c.l.b16 %v91
  %v476 = vunpack.c.l.b16 %v92
  %v477 = vunpack.c.l.b16 %v93
  %v478 = vunpack.c.l.b16 %v94
  %v479 = vunpack.c.l.b16 %v95
  %v480 = vunpack.c.l.b16 %v96
  %v481 = vunpack.c.l.b16 %v97
  %v482 = vunpack.c.l.b16 %v98
  %v483 = vunpack.c.l.b16 %v99
  %v484 = vunpack.c.l.b16 %v100
  %v485 = vunpack.c.l.b16 %v101
  %v486 = vunpack.c.l.b16 %v102
  %v487 = vunpack.c.l.b16 %v103
  %v488 = vunpack.c.l.b16 %v104
  %v489 = vunpack.c.l.b16 %v105
  %v490 = vunpack.c.l.b16 %v106
  %v491 = vunpack.c.l.b16 %v107
  %v492 = vunpack.c.l.b16 %v108
  %v493 = vunpack.c.l.b16 %v109
  %v494 = vpack.c.b16 %v463, %v462
  %v495 = vpack.c.b16 %v465, %v464
  %v496 = vpack.c.b16 %v467, %v466
  %v497 = vpack.c.b16 %v469, %v468
  %v498 = vpack.c.b16 %v471, %v470
  %v499 = vpack.c.b16 %v473, %v472
  %v500 = vpack.c.b16 %v475, %v474
  %v501 = vpack.c.b16 %v477, %v476
  %v502 = vpack.c.b16 %v479, %v478
  %v503 = vpack.c.b16 %v481, %v480
  %v504 = vpack.c.b16 %v483, %v482
  %v505 = vpack.c.b16 %v485, %v484
  %v506 = vpack.c.b16 %v487, %v486
  %v507 = vpack.c.b16 %v489, %v488
  %v508 = vpack.c.b16 %v491, %v490
  %v509 = vpack.c.b16 %v493, %v492
  %526 = vmatpush.bf16.msra.mxu0 %v501
  %527 = vmatpush.bf16.msra.mxu0 %v500
  %528 = vmatpush.bf16.msra.mxu0 %v499
  %529 = vmatpush.bf16.msra.mxu0 %v498
  %530 = vmatpush.bf16.msra.mxu0 %v497
  %531 = vmatpush.bf16.msra.mxu0 %v496
  %532 = vmatpush.bf16.msra.mxu0 %v495
  %533 = vmatpush.bf16.msra.mxu0 %v494
  %534 = vmatmul.bf16.gmra.mxu0 %v302
  %v535 = vpop.f32.mrf.mxu0
  %v536 = vadd.f32 0.0, %v535
  %v537 = vpop.f32.mrf.mxu0
  %v538 = vadd.f32 0.0, %v537
  %539 = vmatmul.bf16.gmra.mxu0 %v304
  %v540 = vpop.f32.mrf.mxu0
  %v541 = vadd.f32 0.0, %v540
  %v542 = vpop.f32.mrf.mxu0
  %v543 = vadd.f32 0.0, %v542
  %544 = vmatmul.bf16.gmra.mxu0 %v306
  %v545 = vpop.f32.mrf.mxu0
  %v546 = vadd.f32 0.0, %v545
  %v547 = vpop.f32.mrf.mxu0
  %v548 = vadd.f32 0.0, %v547
  %549 = vmatmul.bf16.gmra.mxu0 %v308
  %v550 = vpop.f32.mrf.mxu0
  %v551 = vadd.f32 0.0, %v550
  %v552 = vpop.f32.mrf.mxu0
  %v553 = vadd.f32 0.0, %v552
  %554 = vmatmul.bf16.gmra.mxu0 %v310
  %v555 = vpop.f32.mrf.mxu0
  %v556 = vadd.f32 0.0, %v555
  %v557 = vpop.f32.mrf.mxu0
  %v558 = vadd.f32 0.0, %v557
  %559 = vmatmul.bf16.gmra.mxu0 %v312
  %v560 = vpop.f32.mrf.mxu0
  %v561 = vadd.f32 0.0, %v560
  %v562 = vpop.f32.mrf.mxu0
  %v563 = vadd.f32 0.0, %v562
  %564 = vmatmul.bf16.gmra.mxu0 %v314
  %v565 = vpop.f32.mrf.mxu0
  %v566 = vadd.f32 0.0, %v565
  %v567 = vpop.f32.mrf.mxu0
  %v568 = vadd.f32 0.0, %v567
  %569 = vmatmul.bf16.gmra.mxu0 %v316
  %v570 = vpop.f32.mrf.mxu0
  %v571 = vadd.f32 0.0, %v570
  %v572 = vpop.f32.mrf.mxu0
  %v573 = vadd.f32 0.0, %v572
  %574 = vmatmul.bf16.gmra.mxu0 %v318
  %v575 = vpop.f32.mrf.mxu0
  %v576 = vadd.f32 0.0, %v575
  %v577 = vpop.f32.mrf.mxu0
  %v578 = vadd.f32 0.0, %v577
  %579 = vmatmul.bf16.gmra.mxu0 %v320
  %v580 = vpop.f32.mrf.mxu0
  %v581 = vadd.f32 0.0, %v580
  %v582 = vpop.f32.mrf.mxu0
  %v583 = vadd.f32 0.0, %v582
  %584 = vmatmul.bf16.gmra.mxu0 %v322
  %v585 = vpop.f32.mrf.mxu0
  %v586 = vadd.f32 0.0, %v585
  %v587 = vpop.f32.mrf.mxu0
  %v588 = vadd.f32 0.0, %v587
  %589 = vmatmul.bf16.gmra.mxu0 %v324
  %v590 = vpop.f32.mrf.mxu0
  %v591 = vadd.f32 0.0, %v590
  %v592 = vpop.f32.mrf.mxu0
  %v593 = vadd.f32 0.0, %v592
  %594 = vmatmul.bf16.gmra.mxu0 %v326
  %v595 = vpop.f32.mrf.mxu0
  %v596 = vadd.f32 0.0, %v595
  %v597 = vpop.f32.mrf.mxu0
  %v598 = vadd.f32 0.0, %v597
  %599 = vmatmul.bf16.gmra.mxu0 %v328
  %v600 = vpop.f32.mrf.mxu0
  %v601 = vadd.f32 0.0, %v600
  %v602 = vpop.f32.mrf.mxu0
  %v603 = vadd.f32 0.0, %v602
  %604 = vmatmul.bf16.gmra.mxu0 %v330
  %v605 = vpop.f32.mrf.mxu0
  %v606 = vadd.f32 0.0, %v605
  %v607 = vpop.f32.mrf.mxu0
  %v608 = vadd.f32 0.0, %v607
  %609 = vmatmul.bf16.gmra.mxu0 %v332
  %v610 = vpop.f32.mrf.mxu0
  %v611 = vadd.f32 0.0, %v610
  %v612 = vpop.f32.mrf.mxu0
  %v613 = vadd.f32 0.0, %v612
  %614 = vmatmul.bf16.gmra.mxu0 %v334
  %v615 = vpop.f32.mrf.mxu0
  %v616 = vadd.f32 0.0, %v615
  %v617 = vpop.f32.mrf.mxu0
  %v618 = vadd.f32 0.0, %v617
  %619 = vmatmul.bf16.gmra.mxu0 %v336
  %v620 = vpop.f32.mrf.mxu0
  %v621 = vadd.f32 0.0, %v620
  %v622 = vpop.f32.mrf.mxu0
  %v623 = vadd.f32 0.0, %v622
  %624 = vmatmul.bf16.gmra.mxu0 %v338
  %v625 = vpop.f32.mrf.mxu0
  %v626 = vadd.f32 0.0, %v625
  %v627 = vpop.f32.mrf.mxu0
  %v628 = vadd.f32 0.0, %v627
  %629 = vmatmul.bf16.gmra.mxu0 %v340
  %v630 = vpop.f32.mrf.mxu0
  %v631 = vadd.f32 0.0, %v630
  %v632 = vpop.f32.mrf.mxu0
  %v633 = vadd.f32 0.0, %v632
  %634 = vmatmul.bf16.gmra.mxu0 %v342
  %v635 = vpop.f32.mrf.mxu0
  %v636 = vadd.f32 0.0, %v635
  %v637 = vpop.f32.mrf.mxu0
  %v638 = vadd.f32 0.0, %v637
  %639 = vmatmul.bf16.gmra.mxu0 %v344
  %v640 = vpop.f32.mrf.mxu0
  %v641 = vadd.f32 0.0, %v640
  %v642 = vpop.f32.mrf.mxu0
  %v643 = vadd.f32 0.0, %v642
  %644 = vmatmul.bf16.gmra.mxu0 %v346
  %v645 = vpop.f32.mrf.mxu0
  %v646 = vadd.f32 0.0, %v645
  %v647 = vpop.f32.mrf.mxu0
  %v648 = vadd.f32 0.0, %v647
  %649 = vmatmul.bf16.gmra.mxu0 %v348
  %v650 = vpop.f32.mrf.mxu0
  %v651 = vadd.f32 0.0, %v650
  %v652 = vpop.f32.mrf.mxu0
  %v653 = vadd.f32 0.0, %v652
  %654 = vmatmul.bf16.gmra.mxu0 %v350
  %v655 = vpop.f32.mrf.mxu0
  %v656 = vadd.f32 0.0, %v655
  %v657 = vpop.f32.mrf.mxu0
  %v658 = vadd.f32 0.0, %v657
  %659 = vmatmul.bf16.gmra.mxu0 %v352
  %v660 = vpop.f32.mrf.mxu0
  %v661 = vadd.f32 0.0, %v660
  %v662 = vpop.f32.mrf.mxu0
  %v663 = vadd.f32 0.0, %v662
  %664 = vmatmul.bf16.gmra.mxu0 %v354
  %v665 = vpop.f32.mrf.mxu0
  %v666 = vadd.f32 0.0, %v665
  %v667 = vpop.f32.mrf.mxu0
  %v668 = vadd.f32 0.0, %v667
  %669 = vmatmul.bf16.gmra.mxu0 %v356
  %v670 = vpop.f32.mrf.mxu0
  %v671 = vadd.f32 0.0, %v670
  %v672 = vpop.f32.mrf.mxu0
  %v673 = vadd.f32 0.0, %v672
  %674 = vmatmul.bf16.gmra.mxu0 %v358
  %v675 = vpop.f32.mrf.mxu0
  %v676 = vadd.f32 0.0, %v675
  %v677 = vpop.f32.mrf.mxu0
  %v678 = vadd.f32 0.0, %v677
  %679 = vmatmul.bf16.gmra.mxu0 %v360
  %v680 = vpop.f32.mrf.mxu0
  %v681 = vadd.f32 0.0, %v680
  %v682 = vpop.f32.mrf.mxu0
  %v683 = vadd.f32 0.0, %v682
  %684 = vmatmul.bf16.gmra.mxu0 %v362
  %v685 = vpop.f32.mrf.mxu0
  %v686 = vadd.f32 0.0, %v685
  %v687 = vpop.f32.mrf.mxu0
  %v688 = vadd.f32 0.0, %v687
  %689 = vmatmul.bf16.gmra.mxu0 %v364
  %v690 = vpop.f32.mrf.mxu0
  %v691 = vadd.f32 0.0, %v690
  %v692 = vpop.f32.mrf.mxu0
  %v693 = vadd.f32 0.0, %v692
  %694 = vdwg.mxu0
  %695 = vmatpush.bf16.msra.mxu0 %v509
  %696 = vmatpush.bf16.msra.mxu0 %v508
  %697 = vmatpush.bf16.msra.mxu0 %v507
  %698 = vmatpush.bf16.msra.mxu0 %v506
  %699 = vmatpush.bf16.msra.mxu0 %v505
  %700 = vmatpush.bf16.msra.mxu0 %v504
  %701 = vmatpush.bf16.msra.mxu0 %v503
  %702 = vmatpush.bf16.msra.mxu0 %v502
  %703 = vmatmul.bf16.gmra.mxu0 %v303
  %v704 = vpop.f32.mrf.mxu0
  %v705 = vadd.f32 %v536, %v704
  %v706 = vpop.f32.mrf.mxu0
  %v707 = vadd.f32 %v538, %v706
  %708 = vmatmul.bf16.gmra.mxu0 %v305
  %v709 = vpop.f32.mrf.mxu0
  %v710 = vadd.f32 %v541, %v709
  %v711 = vpop.f32.mrf.mxu0
  %v712 = vadd.f32 %v543, %v711
  %713 = vmatmul.bf16.gmra.mxu0 %v307
  %v714 = vpop.f32.mrf.mxu0
  %v715 = vadd.f32 %v546, %v714
  %v716 = vpop.f32.mrf.mxu0
  %v717 = vadd.f32 %v548, %v716
  %718 = vmatmul.bf16.gmra.mxu0 %v309
  %v719 = vpop.f32.mrf.mxu0
  %v720 = vadd.f32 %v551, %v719
  %v721 = vpop.f32.mrf.mxu0
  %v722 = vadd.f32 %v553, %v721
  %723 = vmatmul.bf16.gmra.mxu0 %v311
  %v724 = vpop.f32.mrf.mxu0
  %v725 = vadd.f32 %v556, %v724
  %v726 = vpop.f32.mrf.mxu0
  %v727 = vadd.f32 %v558, %v726
  %728 = vmatmul.bf16.gmra.mxu0 %v313
  %v729 = vpop.f32.mrf.mxu0
  %v730 = vadd.f32 %v561, %v729
  %v731 = vpop.f32.mrf.mxu0
  %v732 = vadd.f32 %v563, %v731
  %733 = vmatmul.bf16.gmra.mxu0 %v315
  %v734 = vpop.f32.mrf.mxu0
  %v735 = vadd.f32 %v566, %v734
  %v736 = vpop.f32.mrf.mxu0
  %v737 = vadd.f32 %v568, %v736
  %738 = vmatmul.bf16.gmra.mxu0 %v317
  %v739 = vpop.f32.mrf.mxu0
  %v740 = vadd.f32 %v571, %v739
  %v741 = vpop.f32.mrf.mxu0
  %v742 = vadd.f32 %v573, %v741
  %743 = vmatmul.bf16.gmra.mxu0 %v319
  %v744 = vpop.f32.mrf.mxu0
  %v745 = vadd.f32 %v576, %v744
  %v746 = vpop.f32.mrf.mxu0
  %v747 = vadd.f32 %v578, %v746
  %748 = vmatmul.bf16.gmra.mxu0 %v321
  %v749 = vpop.f32.mrf.mxu0
  %v750 = vadd.f32 %v581, %v749
  %v751 = vpop.f32.mrf.mxu0
  %v752 = vadd.f32 %v583, %v751
  %753 = vmatmul.bf16.gmra.mxu0 %v323
  %v754 = vpop.f32.mrf.mxu0
  %v755 = vadd.f32 %v586, %v754
  %v756 = vpop.f32.mrf.mxu0
  %v757 = vadd.f32 %v588, %v756
  %758 = vmatmul.bf16.gmra.mxu0 %v325
  %v759 = vpop.f32.mrf.mxu0
  %v760 = vadd.f32 %v591, %v759
  %v761 = vpop.f32.mrf.mxu0
  %v762 = vadd.f32 %v593, %v761
  %763 = vmatmul.bf16.gmra.mxu0 %v327
  %v764 = vpop.f32.mrf.mxu0
  %v765 = vadd.f32 %v596, %v764
  %v766 = vpop.f32.mrf.mxu0
  %v767 = vadd.f32 %v598, %v766
  %768 = vmatmul.bf16.gmra.mxu0 %v329
  %v769 = vpop.f32.mrf.mxu0
  %v770 = vadd.f32 %v601, %v769
  %v771 = vpop.f32.mrf.mxu0
  %v772 = vadd.f32 %v603, %v771
  %773 = vmatmul.bf16.gmra.mxu0 %v331
  %v774 = vpop.f32.mrf.mxu0
  %v775 = vadd.f32 %v606, %v774
  %v776 = vpop.f32.mrf.mxu0
  %v777 = vadd.f32 %v608, %v776
  %778 = vmatmul.bf16.gmra.mxu0 %v333
  %v779 = vpop.f32.mrf.mxu0
  %v780 = vadd.f32 %v611, %v779
  %v781 = vpop.f32.mrf.mxu0
  %v782 = vadd.f32 %v613, %v781
  %783 = vmatmul.bf16.gmra.mxu0 %v335
  %v784 = vpop.f32.mrf.mxu0
  %v785 = vadd.f32 %v616, %v784
  %v786 = vpop.f32.mrf.mxu0
  %v787 = vadd.f32 %v618, %v786
  %788 = vmatmul.bf16.gmra.mxu0 %v337
  %v789 = vpop.f32.mrf.mxu0
  %v790 = vadd.f32 %v621, %v789
  %v791 = vpop.f32.mrf.mxu0
  %v792 = vadd.f32 %v623, %v791
  %793 = vmatmul.bf16.gmra.mxu0 %v339
  %v794 = vpop.f32.mrf.mxu0
  %v795 = vadd.f32 %v626, %v794
  %v796 = vpop.f32.mrf.mxu0
  %v797 = vadd.f32 %v628, %v796
  %798 = vmatmul.bf16.gmra.mxu0 %v341
  %v799 = vpop.f32.mrf.mxu0
  %v800 = vadd.f32 %v631, %v799
  %v801 = vpop.f32.mrf.mxu0
  %v802 = vadd.f32 %v633, %v801
  %803 = vmatmul.bf16.gmra.mxu0 %v343
  %v804 = vpop.f32.mrf.mxu0
  %v805 = vadd.f32 %v636, %v804
  %v806 = vpop.f32.mrf.mxu0
  %v807 = vadd.f32 %v638, %v806
  %808 = vmatmul.bf16.gmra.mxu0 %v345
  %v809 = vpop.f32.mrf.mxu0
  %v810 = vadd.f32 %v641, %v809
  %v811 = vpop.f32.mrf.mxu0
  %v812 = vadd.f32 %v643, %v811
  %813 = vmatmul.bf16.gmra.mxu0 %v347
  %v814 = vpop.f32.mrf.mxu0
  %v815 = vadd.f32 %v646, %v814
  %v816 = vpop.f32.mrf.mxu0
  %v817 = vadd.f32 %v648, %v816
  %818 = vmatmul.bf16.gmra.mxu0 %v349
  %v819 = vpop.f32.mrf.mxu0
  %v820 = vadd.f32 %v651, %v819
  %v821 = vpop.f32.mrf.mxu0
  %v822 = vadd.f32 %v653, %v821
  %823 = vmatmul.bf16.gmra.mxu0 %v351
  %v824 = vpop.f32.mrf.mxu0
  %v825 = vadd.f32 %v656, %v824
  %v826 = vpop.f32.mrf.mxu0
  %v827 = vadd.f32 %v658, %v826
  %828 = vmatmul.bf16.gmra.mxu0 %v353
  %v829 = vpop.f32.mrf.mxu0
  %v830 = vadd.f32 %v661, %v829
  %v831 = vpop.f32.mrf.mxu0
  %v832 = vadd.f32 %v663, %v831
  %833 = vmatmul.bf16.gmra.mxu0 %v355
  %v834 = vpop.f32.mrf.mxu0
  %v835 = vadd.f32 %v666, %v834
  %v836 = vpop.f32.mrf.mxu0
  %v837 = vadd.f32 %v668, %v836
  %838 = vmatmul.bf16.gmra.mxu0 %v357
  %v839 = vpop.f32.mrf.mxu0
  %v840 = vadd.f32 %v671, %v839
  %v841 = vpop.f32.mrf.mxu0
  %v842 = vadd.f32 %v673, %v841
  %843 = vmatmul.bf16.gmra.mxu0 %v359
  %v844 = vpop.f32.mrf.mxu0
  %v845 = vadd.f32 %v676, %v844
  %v846 = vpop.f32.mrf.mxu0
  %v847 = vadd.f32 %v678, %v846
  %848 = vmatmul.bf16.gmra.mxu0 %v361
  %v849 = vpop.f32.mrf.mxu0
  %v850 = vadd.f32 %v681, %v849
  %v851 = vpop.f32.mrf.mxu0
  %v852 = vadd.f32 %v683, %v851
  %853 = vmatmul.bf16.gmra.mxu0 %v363
  %v854 = vpop.f32.mrf.mxu0
  %v855 = vadd.f32 %v686, %v854
  %v856 = vpop.f32.mrf.mxu0
  %v857 = vadd.f32 %v688, %v856
  %858 = vmatmul.bf16.gmra.mxu0 %v365
  %v859 = vpop.f32.mrf.mxu0
  %v860 = vadd.f32 %v691, %v859
  %v861 = vpop.f32.mrf.mxu0
  %v862 = vadd.f32 %v693, %v861
  %863 = vdwg.mxu0
  %vm864 = vcmask 523264
  %865 = vst.msk [vmem:[%s2] sm:$0xff] %vm864, %v705
  %866 = vst.msk [vmem:[%s2 + $0x8] sm:$0xff] %vm864, %v707
  %867 = vst.msk [vmem:[%s2 + $0x10] sm:$0xff] %vm864, %v710
  %868 = vst.msk [vmem:[%s2 + $0x18] sm:$0xff] %vm864, %v712
  %869 = vst.msk [vmem:[%s2 + $0x20] sm:$0xff] %vm864, %v715
  %870 = vst.msk [vmem:[%s2 + $0x28] sm:$0xff] %vm864, %v717
  %871 = vst.msk [vmem:[%s2 + $0x30] sm:$0xff] %vm864, %v720
  %872 = vst.msk [vmem:[%s2 + $0x38] sm:$0xff] %vm864, %v722
  %873 = vst.msk [vmem:[%s2 + $0x40] sm:$0xff] %vm864, %v725
  %874 = vst.msk [vmem:[%s2 + $0x48] sm:$0xff] %vm864, %v727
  %875 = vst.msk [vmem:[%s2 + $0x50] sm:$0xff] %vm864, %v730
  %876 = vst.msk [vmem:[%s2 + $0x58] sm:$0xff] %vm864, %v732
  %877 = vst.msk [vmem:[%s2 + $0x60] sm:$0xff] %vm864, %v735
  %878 = vst.msk [vmem:[%s2 + $0x68] sm:$0xff] %vm864, %v737
  %879 = vst.msk [vmem:[%s2 + $0x70] sm:$0xff] %vm864, %v740
  %880 = vst.msk [vmem:[%s2 + $0x78] sm:$0xff] %vm864, %v742
  %881 = vst.msk [vmem:[%s2 + $0x80] sm:$0xff] %vm864, %v745
  %882 = vst.msk [vmem:[%s2 + $0x88] sm:$0xff] %vm864, %v747
  %883 = vst.msk [vmem:[%s2 + $0x90] sm:$0xff] %vm864, %v750
  %884 = vst.msk [vmem:[%s2 + $0x98] sm:$0xff] %vm864, %v752
  %885 = vst.msk [vmem:[%s2 + $0xa0] sm:$0xff] %vm864, %v755
  %886 = vst.msk [vmem:[%s2 + $0xa8] sm:$0xff] %vm864, %v757
  %887 = vst.msk [vmem:[%s2 + $0xb0] sm:$0xff] %vm864, %v760
  %888 = vst.msk [vmem:[%s2 + $0xb8] sm:$0xff] %vm864, %v762
  %889 = vst.msk [vmem:[%s2 + $0xc0] sm:$0xff] %vm864, %v765
  %890 = vst.msk [vmem:[%s2 + $0xc8] sm:$0xff] %vm864, %v767
  %891 = vst.msk [vmem:[%s2 + $0xd0] sm:$0xff] %vm864, %v770
  %892 = vst.msk [vmem:[%s2 + $0xd8] sm:$0xff] %vm864, %v772
  %893 = vst.msk [vmem:[%s2 + $0xe0] sm:$0xff] %vm864, %v775
  %894 = vst.msk [vmem:[%s2 + $0xe8] sm:$0xff] %vm864, %v777
  %895 = vst.msk [vmem:[%s2 + $0xf0] sm:$0xff] %vm864, %v780
  %896 = vst.msk [vmem:[%s2 + $0xf8] sm:$0xff] %vm864, %v782
  %897 = vst.msk [vmem:[%s2 + $0x100] sm:$0xff] %vm864, %v785
  %898 = vst.msk [vmem:[%s2 + $0x108] sm:$0xff] %vm864, %v787
  %899 = vst.msk [vmem:[%s2 + $0x110] sm:$0xff] %vm864, %v790
  %900 = vst.msk [vmem:[%s2 + $0x118] sm:$0xff] %vm864, %v792
  %901 = vst.msk [vmem:[%s2 + $0x120] sm:$0xff] %vm864, %v795
  %902 = vst.msk [vmem:[%s2 + $0x128] sm:$0xff] %vm864, %v797
  %903 = vst.msk [vmem:[%s2 + $0x130] sm:$0xff] %vm864, %v800
  %904 = vst.msk [vmem:[%s2 + $0x138] sm:$0xff] %vm864, %v802
  %905 = vst.msk [vmem:[%s2 + $0x140] sm:$0xff] %vm864, %v805
  %906 = vst.msk [vmem:[%s2 + $0x148] sm:$0xff] %vm864, %v807
  %907 = vst.msk [vmem:[%s2 + $0x150] sm:$0xff] %vm864, %v810
  %908 = vst.msk [vmem:[%s2 + $0x158] sm:$0xff] %vm864, %v812
  %909 = vst.msk [vmem:[%s2 + $0x160] sm:$0xff] %vm864, %v815
  %910 = vst.msk [vmem:[%s2 + $0x168] sm:$0xff] %vm864, %v817
  %911 = vst.msk [vmem:[%s2 + $0x170] sm:$0xff] %vm864, %v820
  %912 = vst.msk [vmem:[%s2 + $0x178] sm:$0xff] %vm864, %v822
  %913 = vst.msk [vmem:[%s2 + $0x180] sm:$0xff] %vm864, %v825
  %914 = vst.msk [vmem:[%s2 + $0x188] sm:$0xff] %vm864, %v827
  %915 = vst.msk [vmem:[%s2 + $0x190] sm:$0xff] %vm864, %v830
  %916 = vst.msk [vmem:[%s2 + $0x198] sm:$0xff] %vm864, %v832
  %917 = vst.msk [vmem:[%s2 + $0x1a0] sm:$0xff] %vm864, %v835
  %918 = vst.msk [vmem:[%s2 + $0x1a8] sm:$0xff] %vm864, %v837
  %919 = vst.msk [vmem:[%s2 + $0x1b0] sm:$0xff] %vm864, %v840
  %920 = vst.msk [vmem:[%s2 + $0x1b8] sm:$0xff] %vm864, %v842
  %921 = vst.msk [vmem:[%s2 + $0x1c0] sm:$0xff] %vm864, %v845
  %922 = vst.msk [vmem:[%s2 + $0x1c8] sm:$0xff] %vm864, %v847
  %923 = vst.msk [vmem:[%s2 + $0x1d0] sm:$0xff] %vm864, %v850
  %924 = vst.msk [vmem:[%s2 + $0x1d8] sm:$0xff] %vm864, %v852
  %925 = vst.msk [vmem:[%s2 + $0x1e0] sm:$0xff] %vm864, %v855
  %926 = vst.msk [vmem:[%s2 + $0x1e8] sm:$0xff] %vm864, %v857
  %927 = vst.msk [vmem:[%s2 + $0x1f0] sm:$0xff] %vm864, %v860
  %928 = vst.msk [vmem:[%s2 + $0x1f8] sm:$0xff] %vm864, %v862
  %p929 = scmp.eq.s32.totalorder 0, 0
  // Predicated region
  $region10: #{common_discriminator.9} parent=0 // pred_check
    %p930 = pneg %p929
  $region11: #{common_discriminator.9} parent=0 // pred_check_branch
    %932 = sbr.rel (%p930) target = $region13
  $region12: #{common_discriminator.9} parent=0 // pred_region
    %vm933 = vcmask 516096
    %934 = vst.msk [vmem:[%s3] sm:$0x1] %vm933, 0.0
    %935 = vst.msk [vmem:[%s4] sm:$0x1] %vm933, 0.0
  $region13: #{common_discriminator.9} parent=0 // pred_fallthru
    _
  %v936 = vld [vmem:[%s3] sm:$0x1]
  %v937 = vsel %vm864, %v705, 0.0
  %v938 = vsel %vm864, %v707, 0.0
  %v939 = vadd.f32 %v937, %v938
  %v940 = vsel %vm864, %v710, 0.0
  %v941 = vadd.f32 %v939, %v940
  %v942 = vsel %vm864, %v712, 0.0
  %v943 = vadd.f32 %v941, %v942
  %v944 = vsel %vm864, %v715, 0.0
  %v945 = vadd.f32 %v943, %v944
  %v946 = vsel %vm864, %v717, 0.0
  %v947 = vadd.f32 %v945, %v946
  %v948 = vsel %vm864, %v720, 0.0
  %v949 = vadd.f32 %v947, %v948
  %v950 = vsel %vm864, %v722, 0.0
  %v951 = vadd.f32 %v949, %v950
  %v952 = vsel %vm864, %v725, 0.0
  %v953 = vadd.f32 %v951, %v952
  %v954 = vsel %vm864, %v727, 0.0
  %v955 = vadd.f32 %v953, %v954
  %v956 = vsel %vm864, %v730, 0.0
  %v957 = vadd.f32 %v955, %v956
  %v958 = vsel %vm864, %v732, 0.0
  %v959 = vadd.f32 %v957, %v958
  %v960 = vsel %vm864, %v735, 0.0
  %v961 = vadd.f32 %v959, %v960
  %v962 = vsel %vm864, %v737, 0.0
  %v963 = vadd.f32 %v961, %v962
  %v964 = vsel %vm864, %v740, 0.0
  %v965 = vadd.f32 %v963, %v964
  %v966 = vsel %vm864, %v742, 0.0
  %v967 = vadd.f32 %v965, %v966
  %v968 = vsel %vm864, %v745, 0.0
  %v969 = vadd.f32 %v967, %v968
  %v970 = vsel %vm864, %v747, 0.0
  %v971 = vadd.f32 %v969, %v970
  %v972 = vsel %vm864, %v750, 0.0
  %v973 = vadd.f32 %v971, %v972
  %v974 = vsel %vm864, %v752, 0.0
  %v975 = vadd.f32 %v973, %v974
  %v976 = vsel %vm864, %v755, 0.0
  %v977 = vadd.f32 %v975, %v976
  %v978 = vsel %vm864, %v757, 0.0
  %v979 = vadd.f32 %v977, %v978
  %v980 = vsel %vm864, %v760, 0.0
  %v981 = vadd.f32 %v979, %v980
  %v982 = vsel %vm864, %v762, 0.0
  %v983 = vadd.f32 %v981, %v982
  %v984 = vsel %vm864, %v765, 0.0
  %v985 = vadd.f32 %v983, %v984
  %v986 = vsel %vm864, %v767, 0.0
  %v987 = vadd.f32 %v985, %v986
  %v988 = vsel %vm864, %v770, 0.0
  %v989 = vadd.f32 %v987, %v988
  %v990 = vsel %vm864, %v772, 0.0
  %v991 = vadd.f32 %v989, %v990
  %v992 = vsel %vm864, %v775, 0.0
  %v993 = vadd.f32 %v991, %v992
  %v994 = vsel %vm864, %v777, 0.0
  %v995 = vadd.f32 %v993, %v994
  %v996 = vsel %vm864, %v780, 0.0
  %v997 = vadd.f32 %v995, %v996
  %v998 = vsel %vm864, %v782, 0.0
  %v999 = vadd.f32 %v997, %v998
  %v1000 = vsel %vm864, %v785, 0.0
  %v1001 = vadd.f32 %v999, %v1000
  %v1002 = vsel %vm864, %v787, 0.0
  %v1003 = vadd.f32 %v1001, %v1002
  %v1004 = vsel %vm864, %v790, 0.0
  %v1005 = vadd.f32 %v1003, %v1004
  %v1006 = vsel %vm864, %v792, 0.0
  %v1007 = vadd.f32 %v1005, %v1006
  %v1008 = vsel %vm864, %v795, 0.0
  %v1009 = vadd.f32 %v1007, %v1008
  %v1010 = vsel %vm864, %v797, 0.0
  %v1011 = vadd.f32 %v1009, %v1010
  %v1012 = vsel %vm864, %v800, 0.0
  %v1013 = vadd.f32 %v1011, %v1012
  %v1014 = vsel %vm864, %v802, 0.0
  %v1015 = vadd.f32 %v1013, %v1014
  %v1016 = vsel %vm864, %v805, 0.0
  %v1017 = vadd.f32 %v1015, %v1016
  %v1018 = vsel %vm864, %v807, 0.0
  %v1019 = vadd.f32 %v1017, %v1018
  %v1020 = vsel %vm864, %v810, 0.0
  %v1021 = vadd.f32 %v1019, %v1020
  %v1022 = vsel %vm864, %v812, 0.0
  %v1023 = vadd.f32 %v1021, %v1022
  %v1024 = vsel %vm864, %v815, 0.0
  %v1025 = vadd.f32 %v1023, %v1024
  %v1026 = vsel %vm864, %v817, 0.0
  %v1027 = vadd.f32 %v1025, %v1026
  %v1028 = vsel %vm864, %v820, 0.0
  %v1029 = vadd.f32 %v1027, %v1028
  %v1030 = vsel %vm864, %v822, 0.0
  %v1031 = vadd.f32 %v1029, %v1030
  %v1032 = vsel %vm864, %v825, 0.0
  %v1033 = vadd.f32 %v1031, %v1032
  %v1034 = vsel %vm864, %v827, 0.0
  %v1035 = vadd.f32 %v1033, %v1034
  %v1036 = vsel %vm864, %v830, 0.0
  %v1037 = vadd.f32 %v1035, %v1036
  %v1038 = vsel %vm864, %v832, 0.0
  %v1039 = vadd.f32 %v1037, %v1038
  %v1040 = vsel %vm864, %v835, 0.0
  %v1041 = vadd.f32 %v1039, %v1040
  %v1042 = vsel %vm864, %v837, 0.0
  %v1043 = vadd.f32 %v1041, %v1042
  %v1044 = vsel %vm864, %v840, 0.0
  %v1045 = vadd.f32 %v1043, %v1044
  %v1046 = vsel %vm864, %v842, 0.0
  %v1047 = vadd.f32 %v1045, %v1046
  %v1048 = vsel %vm864, %v845, 0.0
  %v1049 = vadd.f32 %v1047, %v1048
  %v1050 = vsel %vm864, %v847, 0.0
  %v1051 = vadd.f32 %v1049, %v1050
  %v1052 = vsel %vm864, %v850, 0.0
  %v1053 = vadd.f32 %v1051, %v1052
  %v1054 = vsel %vm864, %v852, 0.0
  %v1055 = vadd.f32 %v1053, %v1054
  %v1056 = vsel %vm864, %v855, 0.0
  %v1057 = vadd.f32 %v1055, %v1056
  %v1058 = vsel %vm864, %v857, 0.0
  %v1059 = vadd.f32 %v1057, %v1058
  %v1060 = vsel %vm864, %v860, 0.0
  %v1061 = vadd.f32 %v1059, %v1060
  %v1062 = vsel %vm864, %v862, 0.0
  %v1063 = vadd.f32 %v1061, %v1062
  %v1064 = vrot.slane %v1063, 4
  %v1065 = vadd.f32 %v1063, %v1064
  %v1066 = vrot.slane %v1065, 2
  %v1067 = vadd.f32 %v1065, %v1066
  %v1068 = vrot.slane %v1067, 1
  %v1069 = vadd.f32 %v1067, %v1068
  %v1070 = vadd.f32 %v936, %v1069
  %vm1071 = vcmask 516096
  %1072 = vst.msk [vmem:[%s3] sm:$0x1] %vm1071, %v1070
  %v1073 = vld [vmem:[%s4] sm:$0x1]
  %v1074 = vmul.f32 %v705, %v705
  %v1075 = vmul.f32 %v707, %v707
  %v1076 = vmul.f32 %v710, %v710
  %v1077 = vmul.f32 %v712, %v712
  %v1078 = vmul.f32 %v715, %v715
  %v1079 = vmul.f32 %v717, %v717
  %v1080 = vmul.f32 %v720, %v720
  %v1081 = vmul.f32 %v722, %v722
  %v1082 = vmul.f32 %v725, %v725
  %v1083 = vmul.f32 %v727, %v727
  %v1084 = vmul.f32 %v730, %v730
  %v1085 = vmul.f32 %v732, %v732
  %v1086 = vmul.f32 %v735, %v735
  %v1087 = vmul.f32 %v737, %v737
  %v1088 = vmul.f32 %v740, %v740
  %v1089 = vmul.f32 %v742, %v742
  %v1090 = vmul.f32 %v745, %v745
  %v1091 = vmul.f32 %v747, %v747
  %v1092 = vmul.f32 %v750, %v750
  %v1093 = vmul.f32 %v752, %v752
  %v1094 = vmul.f32 %v755, %v755
  %v1095 = vmul.f32 %v757, %v757
  %v1096 = vmul.f32 %v760, %v760
  %v1097 = vmul.f32 %v762, %v762
  %v1098 = vmul.f32 %v765, %v765
  %v1099 = vmul.f32 %v767, %v767
  %v1100 = vmul.f32 %v770, %v770
  %v1101 = vmul.f32 %v772, %v772
  %v1102 = vmul.f32 %v775, %v775
  %v1103 = vmul.f32 %v777, %v777
  %v1104 = vmul.f32 %v780, %v780
  %v1105 = vmul.f32 %v782, %v782
  %v1106 = vmul.f32 %v785, %v785
  %v1107 = vmul.f32 %v787, %v787
  %v1108 = vmul.f32 %v790, %v790
  %v1109 = vmul.f32 %v792, %v792
  %v1110 = vmul.f32 %v795, %v795
  %v1111 = vmul.f32 %v797, %v797
  %v1112 = vmul.f32 %v800, %v800
  %v1113 = vmul.f32 %v802, %v802
  %v1114 = vmul.f32 %v805, %v805
  %v1115 = vmul.f32 %v807, %v807
  %v1116 = vmul.f32 %v810, %v810
  %v1117 = vmul.f32 %v812, %v812
  %v1118 = vmul.f32 %v815, %v815
  %v1119 = vmul.f32 %v817, %v817
  %v1120 = vmul.f32 %v820, %v820
  %v1121 = vmul.f32 %v822, %v822
  %v1122 = vmul.f32 %v825, %v825
  %v1123 = vmul.f32 %v827, %v827
  %v1124 = vmul.f32 %v830, %v830
  %v1125 = vmul.f32 %v832, %v832
  %v1126 = vmul.f32 %v835, %v835
  %v1127 = vmul.f32 %v837, %v837
  %v1128 = vmul.f32 %v840, %v840
  %v1129 = vmul.f32 %v842, %v842
  %v1130 = vmul.f32 %v845, %v845
  %v1131 = vmul.f32 %v847, %v847
  %v1132 = vmul.f32 %v850, %v850
  %v1133 = vmul.f32 %v852, %v852
  %v1134 = vmul.f32 %v855, %v855
  %v1135 = vmul.f32 %v857, %v857
  %v1136 = vmul.f32 %v860, %v860
  %v1137 = vmul.f32 %v862, %v862
  %v1138 = vsel %vm864, %v1074, 0.0
  %v1139 = vsel %vm864, %v1075, 0.0
  %v1140 = vadd.f32 %v1138, %v1139
  %v1141 = vsel %vm864, %v1076, 0.0
  %v1142 = vadd.f32 %v1140, %v1141
  %v1143 = vsel %vm864, %v1077, 0.0
  %v1144 = vadd.f32 %v1142, %v1143
  %v1145 = vsel %vm864, %v1078, 0.0
  %v1146 = vadd.f32 %v1144, %v1145
  %v1147 = vsel %vm864, %v1079, 0.0
  %v1148 = vadd.f32 %v1146, %v1147
  %v1149 = vsel %vm864, %v1080, 0.0
  %v1150 = vadd.f32 %v1148, %v1149
  %v1151 = vsel %vm864, %v1081, 0.0
  %v1152 = vadd.f32 %v1150, %v1151
  %v1153 = vsel %vm864, %v1082, 0.0
  %v1154 = vadd.f32 %v1152, %v1153
  %v1155 = vsel %vm864, %v1083, 0.0
  %v1156 = vadd.f32 %v1154, %v1155
  %v1157 = vsel %vm864, %v1084, 0.0
  %v1158 = vadd.f32 %v1156, %v1157
  %v1159 = vsel %vm864, %v1085, 0.0
  %v1160 = vadd.f32 %v1158, %v1159
  %v1161 = vsel %vm864, %v1086, 0.0
  %v1162 = vadd.f32 %v1160, %v1161
  %v1163 = vsel %vm864, %v1087, 0.0
  %v1164 = vadd.f32 %v1162, %v1163
  %v1165 = vsel %vm864, %v1088, 0.0
  %v1166 = vadd.f32 %v1164, %v1165
  %v1167 = vsel %vm864, %v1089, 0.0
  %v1168 = vadd.f32 %v1166, %v1167
  %v1169 = vsel %vm864, %v1090, 0.0
  %v1170 = vadd.f32 %v1168, %v1169
  %v1171 = vsel %vm864, %v1091, 0.0
  %v1172 = vadd.f32 %v1170, %v1171
  %v1173 = vsel %vm864, %v1092, 0.0
  %v1174 = vadd.f32 %v1172, %v1173
  %v1175 = vsel %vm864, %v1093, 0.0
  %v1176 = vadd.f32 %v1174, %v1175
  %v1177 = vsel %vm864, %v1094, 0.0
  %v1178 = vadd.f32 %v1176, %v1177
  %v1179 = vsel %vm864, %v1095, 0.0
  %v1180 = vadd.f32 %v1178, %v1179
  %v1181 = vsel %vm864, %v1096, 0.0
  %v1182 = vadd.f32 %v1180, %v1181
  %v1183 = vsel %vm864, %v1097, 0.0
  %v1184 = vadd.f32 %v1182, %v1183
  %v1185 = vsel %vm864, %v1098, 0.0
  %v1186 = vadd.f32 %v1184, %v1185
  %v1187 = vsel %vm864, %v1099, 0.0
  %v1188 = vadd.f32 %v1186, %v1187
  %v1189 = vsel %vm864, %v1100, 0.0
  %v1190 = vadd.f32 %v1188, %v1189
  %v1191 = vsel %vm864, %v1101, 0.0
  %v1192 = vadd.f32 %v1190, %v1191
  %v1193 = vsel %vm864, %v1102, 0.0
  %v1194 = vadd.f32 %v1192, %v1193
  %v1195 = vsel %vm864, %v1103, 0.0
  %v1196 = vadd.f32 %v1194, %v1195
  %v1197 = vsel %vm864, %v1104, 0.0
  %v1198 = vadd.f32 %v1196, %v1197
  %v1199 = vsel %vm864, %v1105, 0.0
  %v1200 = vadd.f32 %v1198, %v1199
  %v1201 = vsel %vm864, %v1106, 0.0
  %v1202 = vadd.f32 %v1200, %v1201
  %v1203 = vsel %vm864, %v1107, 0.0
  %v1204 = vadd.f32 %v1202, %v1203
  %v1205 = vsel %vm864, %v1108, 0.0
  %v1206 = vadd.f32 %v1204, %v1205
  %v1207 = vsel %vm864, %v1109, 0.0
  %v1208 = vadd.f32 %v1206, %v1207
  %v1209 = vsel %vm864, %v1110, 0.0
  %v1210 = vadd.f32 %v1208, %v1209
  %v1211 = vsel %vm864, %v1111, 0.0
  %v1212 = vadd.f32 %v1210, %v1211
  %v1213 = vsel %vm864, %v1112, 0.0
  %v1214 = vadd.f32 %v1212, %v1213
  %v1215 = vsel %vm864, %v1113, 0.0
  %v1216 = vadd.f32 %v1214, %v1215
  %v1217 = vsel %vm864, %v1114, 0.0
  %v1218 = vadd.f32 %v1216, %v1217
  %v1219 = vsel %vm864, %v1115, 0.0
  %v1220 = vadd.f32 %v1218, %v1219
  %v1221 = vsel %vm864, %v1116, 0.0
  %v1222 = vadd.f32 %v1220, %v1221
  %v1223 = vsel %vm864, %v1117, 0.0
  %v1224 = vadd.f32 %v1222, %v1223
  %v1225 = vsel %vm864, %v1118, 0.0
  %v1226 = vadd.f32 %v1224, %v1225
  %v1227 = vsel %vm864, %v1119, 0.0
  %v1228 = vadd.f32 %v1226, %v1227
  %v1229 = vsel %vm864, %v1120, 0.0
  %v1230 = vadd.f32 %v1228, %v1229
  %v1231 = vsel %vm864, %v1121, 0.0
  %v1232 = vadd.f32 %v1230, %v1231
  %v1233 = vsel %vm864, %v1122, 0.0
  %v1234 = vadd.f32 %v1232, %v1233
  %v1235 = vsel %vm864, %v1123, 0.0
  %v1236 = vadd.f32 %v1234, %v1235
  %v1237 = vsel %vm864, %v1124, 0.0
  %v1238 = vadd.f32 %v1236, %v1237
  %v1239 = vsel %vm864, %v1125, 0.0
  %v1240 = vadd.f32 %v1238, %v1239
  %v1241 = vsel %vm864, %v1126, 0.0
  %v1242 = vadd.f32 %v1240, %v1241
  %v1243 = vsel %vm864, %v1127, 0.0
  %v1244 = vadd.f32 %v1242, %v1243
  %v1245 = vsel %vm864, %v1128, 0.0
  %v1246 = vadd.f32 %v1244, %v1245
  %v1247 = vsel %vm864, %v1129, 0.0
  %v1248 = vadd.f32 %v1246, %v1247
  %v1249 = vsel %vm864, %v1130, 0.0
  %v1250 = vadd.f32 %v1248, %v1249
  %v1251 = vsel %vm864, %v1131, 0.0
  %v1252 = vadd.f32 %v1250, %v1251
  %v1253 = vsel %vm864, %v1132, 0.0
  %v1254 = vadd.f32 %v1252, %v1253
  %v1255 = vsel %vm864, %v1133, 0.0
  %v1256 = vadd.f32 %v1254, %v1255
  %v1257 = vsel %vm864, %v1134, 0.0
  %v1258 = vadd.f32 %v1256, %v1257
  %v1259 = vsel %vm864, %v1135, 0.0
  %v1260 = vadd.f32 %v1258, %v1259
  %v1261 = vsel %vm864, %v1136, 0.0
  %v1262 = vadd.f32 %v1260, %v1261
  %v1263 = vsel %vm864, %v1137, 0.0
  %v1264 = vadd.f32 %v1262, %v1263
  %v1265 = vrot.slane %v1264, 4
  %v1266 = vadd.f32 %v1264, %v1265
  %v1267 = vrot.slane %v1266, 2
  %v1268 = vadd.f32 %v1266, %v1267
  %v1269 = vrot.slane %v1268, 1
  %v1270 = vadd.f32 %v1268, %v1269
  %v1271 = vadd.f32 %v1073, %v1270
  %1272 = vst.msk [vmem:[%s4] sm:$0x1] %vm1071, %v1271
  // Predicated region
  $region14: #{common_discriminator.9} parent=0 // pred_check
    _
  $region15: #{common_discriminator.9} parent=0 // pred_check_branch
    %1274 = sbr.rel (0) target = $region17
  $region16: #{common_discriminator.9} parent=0 // pred_region
    _
  $region17: #{common_discriminator.9} parent=0 // pred_fallthru
    _
  // Predicated region
  $region18: #{common_discriminator.9} parent=0 // pred_check
    _
  $region19: #{common_discriminator.9} parent=0 // pred_check_branch
    %1276 = sbr.rel (0) target = $region21
  $region20: #{common_discriminator.9} parent=0 // pred_region
    _
  $region21: #{common_discriminator.9} parent=0 // pred_fallthru
    _
  // Predicated region
  $region22: #{common_discriminator.9} parent=0 // pred_check
    _
  $region23: #{common_discriminator.9} parent=0 // pred_check_branch
    %1278 = sbr.rel (0) target = $region25
  $region24: #{common_discriminator.9} parent=0 // pred_region
    _
  $region25: #{common_discriminator.9} parent=0 // pred_fallthru
    _
  // Predicated region
  $region26: #{common_discriminator.9} parent=0 // pred_check
    _
  $region27: #{common_discriminator.9} parent=0 // pred_check_branch
    %1280 = sbr.rel (0) target = $region29
  $region28: #{common_discriminator.9} parent=0 // pred_region
    _
  $region29: #{common_discriminator.9} parent=0 // pred_fallthru
    _
  // Predicated region
  $region30: #{common_discriminator.9} parent=0 // pred_check
    _
  $region31: #{common_discriminator.9} parent=0 // pred_check_branch
    %1282 = sbr.rel (0) target = $region33
  $region32: #{common_discriminator.9} parent=0 // pred_region
    _
  $region33: #{common_discriminator.9} parent=0 // pred_fallthru
    _
  // Predicated region
  $region34: #{common_discriminator.9} parent=0 // pred_check
    _
  $region35: #{common_discriminator.9} parent=0 // pred_check_branch
    %1284 = sbr.rel (0) target = $region37
  $region36: #{common_discriminator.9} parent=0 // pred_region
    _
  $region37: #{common_discriminator.9} parent=0 // pred_fallthru
    _

// kernel: common_discriminator.11
$region0: #{common_discriminator.11}
  #allocation0 [shape = 'u32[]', space=smem, size = 0x4, offset = 0x4, fixed_abs, tag = 'smem constant byte address 0x4 - core index']
  #allocation1 [shape = 'u32[72,128]{1,0:T(1,128)}', space=vmem, size = 0x9000, scoped, tag = 'internal scratch']
  %s0 = inlined_call_operand.vmem [shape: bf16[128,640], index: 0, kind: input, shape index: {}]
  %s1 = inlined_call_operand.vmem [shape: bf16[640,128], index: 1, kind: input, shape index: {}]
  %s2 = inlined_call_operand.vmem [shape: f32[128,128], index: 2, kind: output, shape index: {0}]
  %s3 = inlined_call_operand.vmem [shape: f32[1,128], index: 3, kind: output, shape index: {1}]
  %s4 = inlined_call_operand.vmem [shape: f32[1,128], index: 4, kind: output, shape index: {2}]
  %5 = xla_tuple %s2, %s3, %s4
  %s6 = sld [smem:[#allocation0]]
  $region38: #{common_discriminator.11} parent=0
    _
  %s8 = ssub.s32 1, %s6
  %s9 = scalar_select 0, %s8, %s6
  // Predicated region
  $region2: #{common_discriminator.11} parent=0 // pred_check
    _
  $region3: #{common_discriminator.11} parent=0 // pred_check_branch
    %11 = sbr.rel (0) target = $region5
  $region4: #{common_discriminator.11} parent=0 // pred_region
    _
  $region5: #{common_discriminator.11} parent=0 // pred_fallthru
    _
  // Predicated region
  $region6: #{common_discriminator.11} parent=0 // pred_check
    _
  $region7: #{common_discriminator.11} parent=0 // pred_check_branch
    %13 = sbr.rel (0) target = $region9
  $region8: #{common_discriminator.11} parent=0 // pred_region
    _
  $region9: #{common_discriminator.11} parent=0 // pred_fallthru
    _
  %v14 = vld [vmem:[%s0] sm:$0xff]
  %v15 = vld [vmem:[%s0 + $0x8] sm:$0xff]
  %v16 = vld [vmem:[%s0 + $0x10] sm:$0xf]
  %v17 = vld [vmem:[%s0 + $0x14] sm:$0xff]
  %v18 = vld [vmem:[%s0 + $0x1c] sm:$0xff]
  %v19 = vld [vmem:[%s0 + $0x24] sm:$0xf]
  %v20 = vld [vmem:[%s0 + $0x28] sm:$0xff]
  %v21 = vld [vmem:[%s0 + $0x30] sm:$0xff]
  %v22 = vld [vmem:[%s0 + $0x38] sm:$0xf]
  %v23 = vld [vmem:[%s0 + $0x3c] sm:$0xff]
  %v24 = vld [vmem:[%s0 + $0x44] sm:$0xff]
  %v25 = vld [vmem:[%s0 + $0x4c] sm:$0xf]
  %v26 = vld [vmem:[%s0 + $0x50] sm:$0xff]
  %v27 = vld [vmem:[%s0 + $0x58] sm:$0xff]
  %v28 = vld [vmem:[%s0 + $0x60] sm:$0xf]
  %v29 = vld [vmem:[%s0 + $0x64] sm:$0xff]
  %v30 = vld [vmem:[%s0 + $0x6c] sm:$0xff]
  %v31 = vld [vmem:[%s0 + $0x74] sm:$0xf]
  %v32 = vld [vmem:[%s0 + $0x78] sm:$0xff]
  %v33 = vld [vmem:[%s0 + $0x80] sm:$0xff]
  %v34 = vld [vmem:[%s0 + $0x88] sm:$0xf]
  %v35 = vld [vmem:[%s0 + $0x8c] sm:$0xff]
  %v36 = vld [vmem:[%s0 + $0x94] sm:$0xff]
  %v37 = vld [vmem:[%s0 + $0x9c] sm:$0xf]
  %v38 = vld [vmem:[%s0 + $0xa0] sm:$0xff]
  %v39 = vld [vmem:[%s0 + $0xa8] sm:$0xff]
  %v40 = vld [vmem:[%s0 + $0xb0] sm:$0xf]
  %v41 = vld [vmem:[%s0 + $0xb4] sm:$0xff]
  %v42 = vld [vmem:[%s0 + $0xbc] sm:$0xff]
  %v43 = vld [vmem:[%s0 + $0xc4] sm:$0xf]
  %v44 = vld [vmem:[%s0 + $0xc8] sm:$0xff]
  %v45 = vld [vmem:[%s0 + $0xd0] sm:$0xff]
  %v46 = vld [vmem:[%s0 + $0xd8] sm:$0xf]
  %v47 = vld [vmem:[%s0 + $0xdc] sm:$0xff]
  %v48 = vld [vmem:[%s0 + $0xe4] sm:$0xff]
  %v49 = vld [vmem:[%s0 + $0xec] sm:$0xf]
  %v50 = vld [vmem:[%s0 + $0xf0] sm:$0xff]
  %v51 = vld [vmem:[%s0 + $0xf8] sm:$0xff]
  %v52 = vld [vmem:[%s0 + $0x100] sm:$0xf]
  %v53 = vld [vmem:[%s0 + $0x104] sm:$0xff]
  %v54 = vld [vmem:[%s0 + $0x10c] sm:$0xff]
  %v55 = vld [vmem:[%s0 + $0x114] sm:$0xf]
  %v56 = vld [vmem:[%s0 + $0x118] sm:$0xff]
  %v57 = vld [vmem:[%s0 + $0x120] sm:$0xff]
  %v58 = vld [vmem:[%s0 + $0x128] sm:$0xf]
  %v59 = vld [vmem:[%s0 + $0x12c] sm:$0xff]
  %v60 = vld [vmem:[%s0 + $0x134] sm:$0xff]
  %v61 = vld [vmem:[%s0 + $0x13c] sm:$0xf]
  %v62 = vld [vmem:[%s1] sm:$0xf]
  %v63 = vld [vmem:[%s1 + $0x4] sm:$0xf]
  %v64 = vld [vmem:[%s1 + $0x8] sm:$0xf]
  %v65 = vld [vmem:[%s1 + $0xc] sm:$0xf]
  %v66 = vld [vmem:[%s1 + $0x10] sm:$0xf]
  %v67 = vld [vmem:[%s1 + $0x14] sm:$0xf]
  %v68 = vld [vmem:[%s1 + $0x18] sm:$0xf]
  %v69 = vld [vmem:[%s1 + $0x1c] sm:$0xf]
  %v70 = vld [vmem:[%s1 + $0x20] sm:$0xf]
  %v71 = vld [vmem:[%s1 + $0x24] sm:$0xf]
  %v72 = vld [vmem:[%s1 + $0x28] sm:$0xf]
  %v73 = vld [vmem:[%s1 + $0x2c] sm:$0xf]
  %v74 = vld [vmem:[%s1 + $0x30] sm:$0xf]
  %v75 = vld [vmem:[%s1 + $0x34] sm:$0xf]
  %v76 = vld [vmem:[%s1 + $0x38] sm:$0xf]
  %v77 = vld [vmem:[%s1 + $0x3c] sm:$0xf]
  %v78 = vld [vmem:[%s1 + $0x40] sm:$0xf]
  %v79 = vld [vmem:[%s1 + $0x44] sm:$0xf]
  %v80 = vld [vmem:[%s1 + $0x48] sm:$0xf]
  %v81 = vld [vmem:[%s1 + $0x4c] sm:$0xf]
  %v82 = vld [vmem:[%s1 + $0x50] sm:$0xf]
  %v83 = vld [vmem:[%s1 + $0x54] sm:$0xf]
  %v84 = vld [vmem:[%s1 + $0x58] sm:$0xf]
  %v85 = vld [vmem:[%s1 + $0x5c] sm:$0xf]
  %v86 = vld [vmem:[%s1 + $0x60] sm:$0xf]
  %v87 = vld [vmem:[%s1 + $0x64] sm:$0xf]
  %v88 = vld [vmem:[%s1 + $0x68] sm:$0xf]
  %v89 = vld [vmem:[%s1 + $0x6c] sm:$0xf]
  %v90 = vld [vmem:[%s1 + $0x70] sm:$0xf]
  %v91 = vld [vmem:[%s1 + $0x74] sm:$0xf]
  %v92 = vld [vmem:[%s1 + $0x78] sm:$0xf]
  %v93 = vld [vmem:[%s1 + $0x7c] sm:$0xf]
  %v94 = vld [vmem:[%s1 + $0x80] sm:$0xf]
  %v95 = vld [vmem:[%s1 + $0x84] sm:$0xf]
  %v96 = vld [vmem:[%s1 + $0x88] sm:$0xf]
  %v97 = vld [vmem:[%s1 + $0x8c] sm:$0xf]
  %v98 = vld [vmem:[%s1 + $0x90] sm:$0xf]
  %v99 = vld [vmem:[%s1 + $0x94] sm:$0xf]
  %v100 = vld [vmem:[%s1 + $0x98] sm:$0xf]
  %v101 = vld [vmem:[%s1 + $0x9c] sm:$0xf]
  %v102 = vld [vmem:[%s1 + $0xa0] sm:$0xf]
  %v103 = vld [vmem:[%s1 + $0xa4] sm:$0xf]
  %v104 = vld [vmem:[%s1 + $0xa8] sm:$0xf]
  %v105 = vld [vmem:[%s1 + $0xac] sm:$0xf]
  %v106 = vld [vmem:[%s1 + $0xb0] sm:$0xf]
  %v107 = vld [vmem:[%s1 + $0xb4] sm:$0xf]
  %v108 = vld [vmem:[%s1 + $0xb8] sm:$0xf]
  %v109 = vld [vmem:[%s1 + $0xbc] sm:$0xf]
  %v110 = vld [vmem:[%s1 + $0xc0] sm:$0xf]
  %v111 = vld [vmem:[%s1 + $0xc4] sm:$0xf]
  %v112 = vld [vmem:[%s1 + $0xc8] sm:$0xf]
  %v113 = vld [vmem:[%s1 + $0xcc] sm:$0xf]
  %v114 = vld [vmem:[%s1 + $0xd0] sm:$0xf]
  %v115 = vld [vmem:[%s1 + $0xd4] sm:$0xf]
  %v116 = vld [vmem:[%s1 + $0xd8] sm:$0xf]
  %v117 = vld [vmem:[%s1 + $0xdc] sm:$0xf]
  %v118 = vld [vmem:[%s1 + $0xe0] sm:$0xf]
  %v119 = vld [vmem:[%s1 + $0xe4] sm:$0xf]
  %v120 = vld [vmem:[%s1 + $0xe8] sm:$0xf]
  %v121 = vld [vmem:[%s1 + $0xec] sm:$0xf]
  %v122 = vld [vmem:[%s1 + $0xf0] sm:$0xf]
  %v123 = vld [vmem:[%s1 + $0xf4] sm:$0xf]
  %v124 = vld [vmem:[%s1 + $0xf8] sm:$0xf]
  %v125 = vld [vmem:[%s1 + $0xfc] sm:$0xf]
  %v126 = vld [vmem:[%s1 + $0x100] sm:$0xf]
  %v127 = vld [vmem:[%s1 + $0x104] sm:$0xf]
  %v128 = vld [vmem:[%s1 + $0x108] sm:$0xf]
  %v129 = vld [vmem:[%s1 + $0x10c] sm:$0xf]
  %v130 = vld [vmem:[%s1 + $0x110] sm:$0xf]
  %v131 = vld [vmem:[%s1 + $0x114] sm:$0xf]
  %v132 = vld [vmem:[%s1 + $0x118] sm:$0xf]
  %v133 = vld [vmem:[%s1 + $0x11c] sm:$0xf]
  %v134 = vld [vmem:[%s1 + $0x120] sm:$0xf]
  %v135 = vld [vmem:[%s1 + $0x124] sm:$0xf]
  %v136 = vld [vmem:[%s1 + $0x128] sm:$0xf]
  %v137 = vld [vmem:[%s1 + $0x12c] sm:$0xf]
  %v138 = vld [vmem:[%s1 + $0x130] sm:$0xf]
  %v139 = vld [vmem:[%s1 + $0x134] sm:$0xf]
  %v140 = vld [vmem:[%s1 + $0x138] sm:$0xf]
  %v141 = vld [vmem:[%s1 + $0x13c] sm:$0xf]
  %v190 = vunpack.c.l.b16 %v14
  %v191 = vunpack.c.h.b16 %v14
  %v192 = vunpack.c.l.b16 %v15
  %v193 = vunpack.c.h.b16 %v15
  %v194 = vunpack.c.l.b16 %v16
  %v195 = vunpack.c.l.b16 %v17
  %v196 = vunpack.c.h.b16 %v17
  %v197 = vunpack.c.l.b16 %v18
  %v198 = vunpack.c.h.b16 %v18
  %v199 = vunpack.c.l.b16 %v19
  %v200 = vunpack.c.l.b16 %v20
  %v201 = vunpack.c.h.b16 %v20
  %v202 = vunpack.c.l.b16 %v21
  %v203 = vunpack.c.h.b16 %v21
  %v204 = vunpack.c.l.b16 %v22
  %v205 = vunpack.c.l.b16 %v23
  %v206 = vunpack.c.h.b16 %v23
  %v207 = vunpack.c.l.b16 %v24
  %v208 = vunpack.c.h.b16 %v24
  %v209 = vunpack.c.l.b16 %v25
  %v210 = vunpack.c.l.b16 %v26
  %v211 = vunpack.c.h.b16 %v26
  %v212 = vunpack.c.l.b16 %v27
  %v213 = vunpack.c.h.b16 %v27
  %v214 = vunpack.c.l.b16 %v28
  %v215 = vunpack.c.l.b16 %v29
  %v216 = vunpack.c.h.b16 %v29
  %v217 = vunpack.c.l.b16 %v30
  %v218 = vunpack.c.h.b16 %v30
  %v219 = vunpack.c.l.b16 %v31
  %v220 = vunpack.c.l.b16 %v32
  %v221 = vunpack.c.h.b16 %v32
  %v222 = vunpack.c.l.b16 %v33
  %v223 = vunpack.c.h.b16 %v33
  %v224 = vunpack.c.l.b16 %v34
  %v225 = vunpack.c.l.b16 %v35
  %v226 = vunpack.c.h.b16 %v35
  %v227 = vunpack.c.l.b16 %v36
  %v228 = vunpack.c.h.b16 %v36
  %v229 = vunpack.c.l.b16 %v37
  %v230 = vunpack.c.l.b16 %v38
  %v231 = vunpack.c.h.b16 %v38
  %v232 = vunpack.c.l.b16 %v39
  %v233 = vunpack.c.h.b16 %v39
  %v234 = vunpack.c.l.b16 %v40
  %v235 = vunpack.c.l.b16 %v41
  %v236 = vunpack.c.h.b16 %v41
  %v237 = vunpack.c.l.b16 %v42
  %v238 = vunpack.c.h.b16 %v42
  %v239 = vunpack.c.l.b16 %v43
  %v240 = vunpack.c.l.b16 %v44
  %v241 = vunpack.c.h.b16 %v44
  %v242 = vunpack.c.l.b16 %v45
  %v243 = vunpack.c.h.b16 %v45
  %v244 = vunpack.c.l.b16 %v46
  %v245 = vunpack.c.l.b16 %v47
  %v246 = vunpack.c.h.b16 %v47
  %v247 = vunpack.c.l.b16 %v48
  %v248 = vunpack.c.h.b16 %v48
  %v249 = vunpack.c.l.b16 %v49
  %v250 = vunpack.c.l.b16 %v50
  %v251 = vunpack.c.h.b16 %v50
  %v252 = vunpack.c.l.b16 %v51
  %v253 = vunpack.c.h.b16 %v51
  %v254 = vunpack.c.l.b16 %v52
  %v255 = vunpack.c.l.b16 %v53
  %v256 = vunpack.c.h.b16 %v53
  %v257 = vunpack.c.l.b16 %v54
  %v258 = vunpack.c.h.b16 %v54
  %v259 = vunpack.c.l.b16 %v55
  %v260 = vunpack.c.l.b16 %v56
  %v261 = vunpack.c.h.b16 %v56
  %v262 = vunpack.c.l.b16 %v57
  %v263 = vunpack.c.h.b16 %v57
  %v264 = vunpack.c.l.b16 %v58
  %v265 = vunpack.c.l.b16 %v59
  %v266 = vunpack.c.h.b16 %v59
  %v267 = vunpack.c.l.b16 %v60
  %v268 = vunpack.c.h.b16 %v60
  %v269 = vunpack.c.l.b16 %v61
  %v270 = vpack.c.b16 %v195, %v190
  %v271 = vpack.c.b16 %v196, %v191
  %v272 = vpack.c.b16 %v197, %v192
  %v273 = vpack.c.b16 %v198, %v193
  %v274 = vpack.c.b16 %v199, %v194
  %v275 = vpack.c.b16 %v205, %v200
  %v276 = vpack.c.b16 %v206, %v201
  %v277 = vpack.c.b16 %v207, %v202
  %v278 = vpack.c.b16 %v208, %v203
  %v279 = vpack.c.b16 %v209, %v204
  %v280 = vpack.c.b16 %v215, %v210
  %v281 = vpack.c.b16 %v216, %v211
  %v282 = vpack.c.b16 %v217, %v212
  %v283 = vpack.c.b16 %v218, %v213
  %v284 = vpack.c.b16 %v219, %v214
  %v285 = vpack.c.b16 %v225, %v220
  %v286 = vpack.c.b16 %v226, %v221
  %v287 = vpack.c.b16 %v227, %v222
  %v288 = vpack.c.b16 %v228, %v223
  %v289 = vpack.c.b16 %v229, %v224
  %v290 = vpack.c.b16 %v235, %v230
  %v291 = vpack.c.b16 %v236, %v231
  %v292 = vpack.c.b16 %v237, %v232
  %v293 = vpack.c.b16 %v238, %v233
  %v294 = vpack.c.b16 %v239, %v234
  %v295 = vpack.c.b16 %v245, %v240
  %v296 = vpack.c.b16 %v246, %v241
  %v297 = vpack.c.b16 %v247, %v242
  %v298 = vpack.c.b16 %v248, %v243
  %v299 = vpack.c.b16 %v249, %v244
  %v300 = vpack.c.b16 %v255, %v250
  %v301 = vpack.c.b16 %v256, %v251
  %v302 = vpack.c.b16 %v257, %v252
  %v303 = vpack.c.b16 %v258, %v253
  %v304 = vpack.c.b16 %v259, %v254
  %v305 = vpack.c.b16 %v265, %v260
  %v306 = vpack.c.b16 %v266, %v261
  %v307 = vpack.c.b16 %v267, %v262
  %v308 = vpack.c.b16 %v268, %v263
  %v309 = vpack.c.b16 %v269, %v264
  %v430 = vunpack.c.l.b16 %v62
  %v431 = vunpack.c.l.b16 %v63
  %v432 = vunpack.c.l.b16 %v64
  %v433 = vunpack.c.l.b16 %v65
  %v434 = vunpack.c.l.b16 %v66
  %v435 = vunpack.c.l.b16 %v67
  %v436 = vunpack.c.l.b16 %v68
  %v437 = vunpack.c.l.b16 %v69
  %v438 = vunpack.c.l.b16 %v70
  %v439 = vunpack.c.l.b16 %v71
  %v440 = vunpack.c.l.b16 %v72
  %v441 = vunpack.c.l.b16 %v73
  %v442 = vunpack.c.l.b16 %v74
  %v443 = vunpack.c.l.b16 %v75
  %v444 = vunpack.c.l.b16 %v76
  %v445 = vunpack.c.l.b16 %v77
  %v446 = vunpack.c.l.b16 %v78
  %v447 = vunpack.c.l.b16 %v79
  %v448 = vunpack.c.l.b16 %v80
  %v449 = vunpack.c.l.b16 %v81
  %v450 = vunpack.c.l.b16 %v82
  %v451 = vunpack.c.l.b16 %v83
  %v452 = vunpack.c.l.b16 %v84
  %v453 = vunpack.c.l.b16 %v85
  %v454 = vunpack.c.l.b16 %v86
  %v455 = vunpack.c.l.b16 %v87
  %v456 = vunpack.c.l.b16 %v88
  %v457 = vunpack.c.l.b16 %v89
  %v458 = vunpack.c.l.b16 %v90
  %v459 = vunpack.c.l.b16 %v91
  %v460 = vunpack.c.l.b16 %v92
  %v461 = vunpack.c.l.b16 %v93
  %v462 = vunpack.c.l.b16 %v94
  %v463 = vunpack.c.l.b16 %v95
  %v464 = vunpack.c.l.b16 %v96
  %v465 = vunpack.c.l.b16 %v97
  %v466 = vunpack.c.l.b16 %v98
  %v467 = vunpack.c.l.b16 %v99
  %v468 = vunpack.c.l.b16 %v100
  %v469 = vunpack.c.l.b16 %v101
  %v470 = vunpack.c.l.b16 %v102
  %v471 = vunpack.c.l.b16 %v103
  %v472 = vunpack.c.l.b16 %v104
  %v473 = vunpack.c.l.b16 %v105
  %v474 = vunpack.c.l.b16 %v106
  %v475 = vunpack.c.l.b16 %v107
  %v476 = vunpack.c.l.b16 %v108
  %v477 = vunpack.c.l.b16 %v109
  %v478 = vunpack.c.l.b16 %v110
  %v479 = vunpack.c.l.b16 %v111
  %v480 = vunpack.c.l.b16 %v112
  %v481 = vunpack.c.l.b16 %v113
  %v482 = vunpack.c.l.b16 %v114
  %v483 = vunpack.c.l.b16 %v115
  %v484 = vunpack.c.l.b16 %v116
  %v485 = vunpack.c.l.b16 %v117
  %v486 = vunpack.c.l.b16 %v118
  %v487 = vunpack.c.l.b16 %v119
  %v488 = vunpack.c.l.b16 %v120
  %v489 = vunpack.c.l.b16 %v121
  %v490 = vunpack.c.l.b16 %v122
  %v491 = vunpack.c.l.b16 %v123
  %v492 = vunpack.c.l.b16 %v124
  %v493 = vunpack.c.l.b16 %v125
  %v494 = vunpack.c.l.b16 %v126
  %v495 = vunpack.c.l.b16 %v127
  %v496 = vunpack.c.l.b16 %v128
  %v497 = vunpack.c.l.b16 %v129
  %v498 = vunpack.c.l.b16 %v130
  %v499 = vunpack.c.l.b16 %v131
  %v500 = vunpack.c.l.b16 %v132
  %v501 = vunpack.c.l.b16 %v133
  %v502 = vunpack.c.l.b16 %v134
  %v503 = vunpack.c.l.b16 %v135
  %v504 = vunpack.c.l.b16 %v136
  %v505 = vunpack.c.l.b16 %v137
  %v506 = vunpack.c.l.b16 %v138
  %v507 = vunpack.c.l.b16 %v139
  %v508 = vunpack.c.l.b16 %v140
  %v509 = vunpack.c.l.b16 %v141
  %v510 = vpack.c.b16 %v431, %v430
  %v511 = vpack.c.b16 %v433, %v432
  %v512 = vpack.c.b16 %v435, %v434
  %v513 = vpack.c.b16 %v437, %v436
  %v514 = vpack.c.b16 %v439, %v438
  %v515 = vpack.c.b16 %v441, %v440
  %v516 = vpack.c.b16 %v443, %v442
  %v517 = vpack.c.b16 %v445, %v444
  %v518 = vpack.c.b16 %v447, %v446
  %v519 = vpack.c.b16 %v449, %v448
  %v520 = vpack.c.b16 %v451, %v450
  %v521 = vpack.c.b16 %v453, %v452
  %v522 = vpack.c.b16 %v455, %v454
  %v523 = vpack.c.b16 %v457, %v456
  %v524 = vpack.c.b16 %v459, %v458
  %v525 = vpack.c.b16 %v461, %v460
  %v526 = vpack.c.b16 %v463, %v462
  %v527 = vpack.c.b16 %v465, %v464
  %v528 = vpack.c.b16 %v467, %v466
  %v529 = vpack.c.b16 %v469, %v468
  %v530 = vpack.c.b16 %v471, %v470
  %v531 = vpack.c.b16 %v473, %v472
  %v532 = vpack.c.b16 %v475, %v474
  %v533 = vpack.c.b16 %v477, %v476
  %v534 = vpack.c.b16 %v479, %v478
  %v535 = vpack.c.b16 %v481, %v480
  %v536 = vpack.c.b16 %v483, %v482
  %v537 = vpack.c.b16 %v485, %v484
  %v538 = vpack.c.b16 %v487, %v486
  %v539 = vpack.c.b16 %v489, %v488
  %v540 = vpack.c.b16 %v491, %v490
  %v541 = vpack.c.b16 %v493, %v492
  %v542 = vpack.c.b16 %v495, %v494
  %v543 = vpack.c.b16 %v497, %v496
  %v544 = vpack.c.b16 %v499, %v498
  %v545 = vpack.c.b16 %v501, %v500
  %v546 = vpack.c.b16 %v503, %v502
  %v547 = vpack.c.b16 %v505, %v504
  %v548 = vpack.c.b16 %v507, %v506
  %v549 = vpack.c.b16 %v509, %v508
  %590 = vmatpush.bf16.msra.mxu0 %v517
  %591 = vmatpush.bf16.msra.mxu0 %v516
  %592 = vmatpush.bf16.msra.mxu0 %v515
  %593 = vmatpush.bf16.msra.mxu0 %v514
  %594 = vmatpush.bf16.msra.mxu0 %v513
  %595 = vmatpush.bf16.msra.mxu0 %v512
  %596 = vmatpush.bf16.msra.mxu0 %v511
  %597 = vmatpush.bf16.msra.mxu0 %v510
  %598 = vmatmul.bf16.gmra.mxu0 %v270
  %v599 = vpop.f32.mrf.mxu0
  %v600 = vadd.f32 0.0, %v599
  %v601 = vpop.f32.mrf.mxu0
  %v602 = vadd.f32 0.0, %v601
  %603 = vmatmul.bf16.gmra.mxu0 %v275
  %v604 = vpop.f32.mrf.mxu0
  %v605 = vadd.f32 0.0, %v604
  %v606 = vpop.f32.mrf.mxu0
  %v607 = vadd.f32 0.0, %v606
  %608 = vmatmul.bf16.gmra.mxu0 %v280
  %v609 = vpop.f32.mrf.mxu0
  %v610 = vadd.f32 0.0, %v609
  %v611 = vpop.f32.mrf.mxu0
  %v612 = vadd.f32 0.0, %v611
  %613 = vmatmul.bf16.gmra.mxu0 %v285
  %v614 = vpop.f32.mrf.mxu0
  %v615 = vadd.f32 0.0, %v614
  %v616 = vpop.f32.mrf.mxu0
  %v617 = vadd.f32 0.0, %v616
  %618 = vmatmul.bf16.gmra.mxu0 %v290
  %v619 = vpop.f32.mrf.mxu0
  %v620 = vadd.f32 0.0, %v619
  %v621 = vpop.f32.mrf.mxu0
  %v622 = vadd.f32 0.0, %v621
  %623 = vmatmul.bf16.gmra.mxu0 %v295
  %v624 = vpop.f32.mrf.mxu0
  %v625 = vadd.f32 0.0, %v624
  %v626 = vpop.f32.mrf.mxu0
  %v627 = vadd.f32 0.0, %v626
  %628 = vmatmul.bf16.gmra.mxu0 %v300
  %v629 = vpop.f32.mrf.mxu0
  %v630 = vadd.f32 0.0, %v629
  %v631 = vpop.f32.mrf.mxu0
  %v632 = vadd.f32 0.0, %v631
  %633 = vmatmul.bf16.gmra.mxu0 %v305
  %v634 = vpop.f32.mrf.mxu0
  %v635 = vadd.f32 0.0, %v634
  %v636 = vpop.f32.mrf.mxu0
  %v637 = vadd.f32 0.0, %v636
  %638 = vdwg.mxu0
  %639 = vmatpush.bf16.msra.mxu0 %v525
  %640 = vmatpush.bf16.msra.mxu0 %v524
  %641 = vmatpush.bf16.msra.mxu0 %v523
  %642 = vmatpush.bf16.msra.mxu0 %v522
  %643 = vmatpush.bf16.msra.mxu0 %v521
  %644 = vmatpush.bf16.msra.mxu0 %v520
  %645 = vmatpush.bf16.msra.mxu0 %v519
  %646 = vmatpush.bf16.msra.mxu0 %v518
  %647 = vmatmul.bf16.gmra.mxu0 %v271
  %v648 = vpop.f32.mrf.mxu0
  %v649 = vadd.f32 %v600, %v648
  %v650 = vpop.f32.mrf.mxu0
  %v651 = vadd.f32 %v602, %v650
  %652 = vmatmul.bf16.gmra.mxu0 %v276
  %v653 = vpop.f32.mrf.mxu0
  %v654 = vadd.f32 %v605, %v653
  %v655 = vpop.f32.mrf.mxu0
  %v656 = vadd.f32 %v607, %v655
  %657 = vmatmul.bf16.gmra.mxu0 %v281
  %v658 = vpop.f32.mrf.mxu0
  %v659 = vadd.f32 %v610, %v658
  %v660 = vpop.f32.mrf.mxu0
  %v661 = vadd.f32 %v612, %v660
  %662 = vmatmul.bf16.gmra.mxu0 %v286
  %v663 = vpop.f32.mrf.mxu0
  %v664 = vadd.f32 %v615, %v663
  %v665 = vpop.f32.mrf.mxu0
  %v666 = vadd.f32 %v617, %v665
  %667 = vmatmul.bf16.gmra.mxu0 %v291
  %v668 = vpop.f32.mrf.mxu0
  %v669 = vadd.f32 %v620, %v668
  %v670 = vpop.f32.mrf.mxu0
  %v671 = vadd.f32 %v622, %v670
  %672 = vmatmul.bf16.gmra.mxu0 %v296
  %v673 = vpop.f32.mrf.mxu0
  %v674 = vadd.f32 %v625, %v673
  %v675 = vpop.f32.mrf.mxu0
  %v676 = vadd.f32 %v627, %v675
  %677 = vmatmul.bf16.gmra.mxu0 %v301
  %v678 = vpop.f32.mrf.mxu0
  %v679 = vadd.f32 %v630, %v678
  %v680 = vpop.f32.mrf.mxu0
  %v681 = vadd.f32 %v632, %v680
  %682 = vmatmul.bf16.gmra.mxu0 %v306
  %v683 = vpop.f32.mrf.mxu0
  %v684 = vadd.f32 %v635, %v683
  %v685 = vpop.f32.mrf.mxu0
  %v686 = vadd.f32 %v637, %v685
  %687 = vdwg.mxu0
  %688 = vmatpush.bf16.msra.mxu0 %v533
  %689 = vmatpush.bf16.msra.mxu0 %v532
  %690 = vmatpush.bf16.msra.mxu0 %v531
  %691 = vmatpush.bf16.msra.mxu0 %v530
  %692 = vmatpush.bf16.msra.mxu0 %v529
  %693 = vmatpush.bf16.msra.mxu0 %v528
  %694 = vmatpush.bf16.msra.mxu0 %v527
  %695 = vmatpush.bf16.msra.mxu0 %v526
  %696 = vmatmul.bf16.gmra.mxu0 %v272
  %v697 = vpop.f32.mrf.mxu0
  %v698 = vadd.f32 %v649, %v697
  %v699 = vpop.f32.mrf.mxu0
  %v700 = vadd.f32 %v651, %v699
  %701 = vmatmul.bf16.gmra.mxu0 %v277
  %v702 = vpop.f32.mrf.mxu0
  %v703 = vadd.f32 %v654, %v702
  %v704 = vpop.f32.mrf.mxu0
  %v705 = vadd.f32 %v656, %v704
  %706 = vmatmul.bf16.gmra.mxu0 %v282
  %v707 = vpop.f32.mrf.mxu0
  %v708 = vadd.f32 %v659, %v707
  %v709 = vpop.f32.mrf.mxu0
  %v710 = vadd.f32 %v661, %v709
  %711 = vmatmul.bf16.gmra.mxu0 %v287
  %v712 = vpop.f32.mrf.mxu0
  %v713 = vadd.f32 %v664, %v712
  %v714 = vpop.f32.mrf.mxu0
  %v715 = vadd.f32 %v666, %v714
  %716 = vmatmul.bf16.gmra.mxu0 %v292
  %v717 = vpop.f32.mrf.mxu0
  %v718 = vadd.f32 %v669, %v717
  %v719 = vpop.f32.mrf.mxu0
  %v720 = vadd.f32 %v671, %v719
  %721 = vmatmul.bf16.gmra.mxu0 %v297
  %v722 = vpop.f32.mrf.mxu0
  %v723 = vadd.f32 %v674, %v722
  %v724 = vpop.f32.mrf.mxu0
  %v725 = vadd.f32 %v676, %v724
  %726 = vmatmul.bf16.gmra.mxu0 %v302
  %v727 = vpop.f32.mrf.mxu0
  %v728 = vadd.f32 %v679, %v727
  %v729 = vpop.f32.mrf.mxu0
  %v730 = vadd.f32 %v681, %v729
  %731 = vmatmul.bf16.gmra.mxu0 %v307
  %v732 = vpop.f32.mrf.mxu0
  %v733 = vadd.f32 %v684, %v732
  %v734 = vpop.f32.mrf.mxu0
  %v735 = vadd.f32 %v686, %v734
  %736 = vdwg.mxu0
  %737 = vmatpush.bf16.msra.mxu0 %v541
  %738 = vmatpush.bf16.msra.mxu0 %v540
  %739 = vmatpush.bf16.msra.mxu0 %v539
  %740 = vmatpush.bf16.msra.mxu0 %v538
  %741 = vmatpush.bf16.msra.mxu0 %v537
  %742 = vmatpush.bf16.msra.mxu0 %v536
  %743 = vmatpush.bf16.msra.mxu0 %v535
  %744 = vmatpush.bf16.msra.mxu0 %v534
  %745 = vmatmul.bf16.gmra.mxu0 %v273
  %v746 = vpop.f32.mrf.mxu0
  %v747 = vadd.f32 %v698, %v746
  %v748 = vpop.f32.mrf.mxu0
  %v749 = vadd.f32 %v700, %v748
  %750 = vmatmul.bf16.gmra.mxu0 %v278
  %v751 = vpop.f32.mrf.mxu0
  %v752 = vadd.f32 %v703, %v751
  %v753 = vpop.f32.mrf.mxu0
  %v754 = vadd.f32 %v705, %v753
  %755 = vmatmul.bf16.gmra.mxu0 %v283
  %v756 = vpop.f32.mrf.mxu0
  %v757 = vadd.f32 %v708, %v756
  %v758 = vpop.f32.mrf.mxu0
  %v759 = vadd.f32 %v710, %v758
  %760 = vmatmul.bf16.gmra.mxu0 %v288
  %v761 = vpop.f32.mrf.mxu0
  %v762 = vadd.f32 %v713, %v761
  %v763 = vpop.f32.mrf.mxu0
  %v764 = vadd.f32 %v715, %v763
  %765 = vmatmul.bf16.gmra.mxu0 %v293
  %v766 = vpop.f32.mrf.mxu0
  %v767 = vadd.f32 %v718, %v766
  %v768 = vpop.f32.mrf.mxu0
  %v769 = vadd.f32 %v720, %v768
  %770 = vmatmul.bf16.gmra.mxu0 %v298
  %v771 = vpop.f32.mrf.mxu0
  %v772 = vadd.f32 %v723, %v771
  %v773 = vpop.f32.mrf.mxu0
  %v774 = vadd.f32 %v725, %v773
  %775 = vmatmul.bf16.gmra.mxu0 %v303
  %v776 = vpop.f32.mrf.mxu0
  %v777 = vadd.f32 %v728, %v776
  %v778 = vpop.f32.mrf.mxu0
  %v779 = vadd.f32 %v730, %v778
  %780 = vmatmul.bf16.gmra.mxu0 %v308
  %v781 = vpop.f32.mrf.mxu0
  %v782 = vadd.f32 %v733, %v781
  %v783 = vpop.f32.mrf.mxu0
  %v784 = vadd.f32 %v735, %v783
  %785 = vdwg.mxu0
  %786 = vmatpush.bf16.msra.mxu0 %v549
  %787 = vmatpush.bf16.msra.mxu0 %v548
  %788 = vmatpush.bf16.msra.mxu0 %v547
  %789 = vmatpush.bf16.msra.mxu0 %v546
  %790 = vmatpush.bf16.msra.mxu0 %v545
  %791 = vmatpush.bf16.msra.mxu0 %v544
  %792 = vmatpush.bf16.msra.mxu0 %v543
  %793 = vmatpush.bf16.msra.mxu0 %v542
  %794 = vmatmul.bf16.gmra.mxu0 %v274
  %v795 = vpop.f32.mrf.mxu0
  %v796 = vadd.f32 %v747, %v795
  %v797 = vpop.f32.mrf.mxu0
  %v798 = vadd.f32 %v749, %v797
  %799 = vmatmul.bf16.gmra.mxu0 %v279
  %v800 = vpop.f32.mrf.mxu0
  %v801 = vadd.f32 %v752, %v800
  %v802 = vpop.f32.mrf.mxu0
  %v803 = vadd.f32 %v754, %v802
  %804 = vmatmul.bf16.gmra.mxu0 %v284
  %v805 = vpop.f32.mrf.mxu0
  %v806 = vadd.f32 %v757, %v805
  %v807 = vpop.f32.mrf.mxu0
  %v808 = vadd.f32 %v759, %v807
  %809 = vmatmul.bf16.gmra.mxu0 %v289
  %v810 = vpop.f32.mrf.mxu0
  %v811 = vadd.f32 %v762, %v810
  %v812 = vpop.f32.mrf.mxu0
  %v813 = vadd.f32 %v764, %v812
  %814 = vmatmul.bf16.gmra.mxu0 %v294
  %v815 = vpop.f32.mrf.mxu0
  %v816 = vadd.f32 %v767, %v815
  %v817 = vpop.f32.mrf.mxu0
  %v818 = vadd.f32 %v769, %v817
  %819 = vmatmul.bf16.gmra.mxu0 %v299
  %v820 = vpop.f32.mrf.mxu0
  %v821 = vadd.f32 %v772, %v820
  %v822 = vpop.f32.mrf.mxu0
  %v823 = vadd.f32 %v774, %v822
  %824 = vmatmul.bf16.gmra.mxu0 %v304
  %v825 = vpop.f32.mrf.mxu0
  %v826 = vadd.f32 %v777, %v825
  %v827 = vpop.f32.mrf.mxu0
  %v828 = vadd.f32 %v779, %v827
  %829 = vmatmul.bf16.gmra.mxu0 %v309
  %v830 = vpop.f32.mrf.mxu0
  %v831 = vadd.f32 %v782, %v830
  %v832 = vpop.f32.mrf.mxu0
  %v833 = vadd.f32 %v784, %v832
  %834 = vdwg.mxu0
  %835 = vst [vmem:[%s2] sm:$0xff] %v796
  %836 = vst [vmem:[%s2 + $0x8] sm:$0xff] %v798
  %837 = vst [vmem:[%s2 + $0x10] sm:$0xff] %v801
  %838 = vst [vmem:[%s2 + $0x18] sm:$0xff] %v803
  %839 = vst [vmem:[%s2 + $0x20] sm:$0xff] %v806
  %840 = vst [vmem:[%s2 + $0x28] sm:$0xff] %v808
  %841 = vst [vmem:[%s2 + $0x30] sm:$0xff] %v811
  %842 = vst [vmem:[%s2 + $0x38] sm:$0xff] %v813
  %843 = vst [vmem:[%s2 + $0x40] sm:$0xff] %v816
  %844 = vst [vmem:[%s2 + $0x48] sm:$0xff] %v818
  %845 = vst [vmem:[%s2 + $0x50] sm:$0xff] %v821
  %846 = vst [vmem:[%s2 + $0x58] sm:$0xff] %v823
  %847 = vst [vmem:[%s2 + $0x60] sm:$0xff] %v826
  %848 = vst [vmem:[%s2 + $0x68] sm:$0xff] %v828
  %849 = vst [vmem:[%s2 + $0x70] sm:$0xff] %v831
  %850 = vst [vmem:[%s2 + $0x78] sm:$0xff] %v833
  %p851 = scmp.eq.s32.totalorder 0, 0
  // Predicated region
  $region10: #{common_discriminator.11} parent=0 // pred_check
    %p852 = pneg %p851
  $region11: #{common_discriminator.11} parent=0 // pred_check_branch
    %854 = sbr.rel (%p852) target = $region13
  $region12: #{common_discriminator.11} parent=0 // pred_region
    %855 = vst [vmem:[%s3] sm:$0x1] 0.0
    %856 = vst [vmem:[%s4] sm:$0x1] 0.0
  $region13: #{common_discriminator.11} parent=0 // pred_fallthru
    _
  %v857 = vld [vmem:[%s3] sm:$0x1]
  %v858 = vadd.f32 %v796, %v798
  %v859 = vadd.f32 %v858, %v801
  %v860 = vadd.f32 %v859, %v803
  %v861 = vadd.f32 %v860, %v806
  %v862 = vadd.f32 %v861, %v808
  %v863 = vadd.f32 %v862, %v811
  %v864 = vadd.f32 %v863, %v813
  %v865 = vadd.f32 %v864, %v816
  %v866 = vadd.f32 %v865, %v818
  %v867 = vadd.f32 %v866, %v821
  %v868 = vadd.f32 %v867, %v823
  %v869 = vadd.f32 %v868, %v826
  %v870 = vadd.f32 %v869, %v828
  %v871 = vadd.f32 %v870, %v831
  %v872 = vadd.f32 %v871, %v833
  %v873 = vrot.slane %v872, 4
  %v874 = vadd.f32 %v872, %v873
  %v875 = vrot.slane %v874, 2
  %v876 = vadd.f32 %v874, %v875
  %v877 = vrot.slane %v876, 1
  %v878 = vadd.f32 %v876, %v877
  %v879 = vadd.f32 %v857, %v878
  %880 = vst [vmem:[%s3] sm:$0x1] %v879
  %v881 = vld [vmem:[%s4] sm:$0x1]
  %v882 = vmul.f32 %v796, %v796
  %v883 = vmul.f32 %v798, %v798
  %v884 = vmul.f32 %v801, %v801
  %v885 = vmul.f32 %v803, %v803
  %v886 = vmul.f32 %v806, %v806
  %v887 = vmul.f32 %v808, %v808
  %v888 = vmul.f32 %v811, %v811
  %v889 = vmul.f32 %v813, %v813
  %v890 = vmul.f32 %v816, %v816
  %v891 = vmul.f32 %v818, %v818
  %v892 = vmul.f32 %v821, %v821
  %v893 = vmul.f32 %v823, %v823
  %v894 = vmul.f32 %v826, %v826
  %v895 = vmul.f32 %v828, %v828
  %v896 = vmul.f32 %v831, %v831
  %v897 = vmul.f32 %v833, %v833
  %v898 = vadd.f32 %v882, %v883
  %v899 = vadd.f32 %v898, %v884
  %v900 = vadd.f32 %v899, %v885
  %v901 = vadd.f32 %v900, %v886
  %v902 = vadd.f32 %v901, %v887
  %v903 = vadd.f32 %v902, %v888
  %v904 = vadd.f32 %v903, %v889
  %v905 = vadd.f32 %v904, %v890
  %v906 = vadd.f32 %v905, %v891
  %v907 = vadd.f32 %v906, %v892
  %v908 = vadd.f32 %v907, %v893
  %v909 = vadd.f32 %v908, %v894
  %v910 = vadd.f32 %v909, %v895
  %v911 = vadd.f32 %v910, %v896
  %v912 = vadd.f32 %v911, %v897
  %v913 = vrot.slane %v912, 4
  %v914 = vadd.f32 %v912, %v913
  %v915 = vrot.slane %v914, 2
  %v916 = vadd.f32 %v914, %v915
  %v917 = vrot.slane %v916, 1
  %v918 = vadd.f32 %v916, %v917
  %v919 = vadd.f32 %v881, %v918
  %920 = vst [vmem:[%s4] sm:$0x1] %v919
  // Predicated region
  $region14: #{common_discriminator.11} parent=0 // pred_check
    _
  $region15: #{common_discriminator.11} parent=0 // pred_check_branch
    %922 = sbr.rel (0) target = $region17
  $region16: #{common_discriminator.11} parent=0 // pred_region
    _
  $region17: #{common_discriminator.11} parent=0 // pred_fallthru
    _
  // Predicated region
  $region18: #{common_discriminator.11} parent=0 // pred_check
    _
  $region19: #{common_discriminator.11} parent=0 // pred_check_branch
    %924 = sbr.rel (0) target = $region21
  $region20: #{common_discriminator.11} parent=0 // pred_region
    _
  $region21: #{common_discriminator.11} parent=0 // pred_fallthru
    _
  // Predicated region
  $region22: #{common_discriminator.11} parent=0 // pred_check
    _
  $region23: #{common_discriminator.11} parent=0 // pred_check_branch
    %926 = sbr.rel (0) target = $region25
  $region24: #{common_discriminator.11} parent=0 // pred_region
    _
  $region25: #{common_discriminator.11} parent=0 // pred_fallthru
    _
  // Predicated region
  $region26: #{common_discriminator.11} parent=0 // pred_check
    _
  $region27: #{common_discriminator.11} parent=0 // pred_check_branch
    %928 = sbr.rel (0) target = $region29
  $region28: #{common_discriminator.11} parent=0 // pred_region
    _
  $region29: #{common_discriminator.11} parent=0 // pred_fallthru
    _
  // Predicated region
  $region30: #{common_discriminator.11} parent=0 // pred_check
    _
  $region31: #{common_discriminator.11} parent=0 // pred_check_branch
    %930 = sbr.rel (0) target = $region33
  $region32: #{common_discriminator.11} parent=0 // pred_region
    _
  $region33: #{common_discriminator.11} parent=0 // pred_fallthru
    _
  // Predicated region
  $region34: #{common_discriminator.11} parent=0 // pred_check
    _
  $region35: #{common_discriminator.11} parent=0 // pred_check_branch
    %932 = sbr.rel (0) target = $region37
  $region36: #{common_discriminator.11} parent=0 // pred_region
    _
  $region37: #{common_discriminator.11} parent=0 // pred_fallthru
    _

// kernel: common_discriminator.12
$region0: #{common_discriminator.12}
  #allocation0 [shape = 'u32[]', space=smem, size = 0x4, offset = 0x4, fixed_abs, tag = 'smem constant byte address 0x4 - core index']
  #allocation1 [shape = 'u32[72,128]{1,0:T(1,128)}', space=vmem, size = 0x9000, scoped, tag = 'internal scratch']
  %s0 = inlined_call_operand.vmem [shape: f32[128,128], index: 0, kind: input, shape index: {}]
  %s1 = inlined_call_operand.vmem [shape: f32[1,128], index: 1, kind: input, shape index: {}]
  %s2 = inlined_call_operand.vmem [shape: f32[1,128], index: 2, kind: input, shape index: {}]
  %s3 = inlined_call_operand.vmem [shape: bf16[128,128], index: 3, kind: output, shape index: {}]
  %s4 = sld [smem:[#allocation0]]
  $region22: #{common_discriminator.12} parent=0
    _
  %s6 = ssub.s32 1, %s4
  %s7 = scalar_select 0, %s6, %s4
  // Predicated region
  $region2: #{common_discriminator.12} parent=0 // pred_check
    _
  $region3: #{common_discriminator.12} parent=0 // pred_check_branch
    %9 = sbr.rel (0) target = $region5
  $region4: #{common_discriminator.12} parent=0 // pred_region
    _
  $region5: #{common_discriminator.12} parent=0 // pred_fallthru
    _
  // Predicated region
  $region6: #{common_discriminator.12} parent=0 // pred_check
    _
  $region7: #{common_discriminator.12} parent=0 // pred_check_branch
    %11 = sbr.rel (0) target = $region9
  $region8: #{common_discriminator.12} parent=0 // pred_region
    _
  $region9: #{common_discriminator.12} parent=0 // pred_fallthru
    _
  // Predicated region
  $region10: #{common_discriminator.12} parent=0 // pred_check
    _
  $region11: #{common_discriminator.12} parent=0 // pred_check_branch
    %13 = sbr.rel (0) target = $region13
  $region12: #{common_discriminator.12} parent=0 // pred_region
    _
  $region13: #{common_discriminator.12} parent=0 // pred_fallthru
    _
  %v14 = vld [vmem:[%s0] sm:$0xff]
  %v15 = vld [vmem:[%s0 + $0x8] sm:$0xff]
  %v16 = vld [vmem:[%s0 + $0x10] sm:$0xff]
  %v17 = vld [vmem:[%s0 + $0x18] sm:$0xff]
  %v18 = vld [vmem:[%s0 + $0x20] sm:$0xff]
  %v19 = vld [vmem:[%s0 + $0x28] sm:$0xff]
  %v20 = vld [vmem:[%s0 + $0x30] sm:$0xff]
  %v21 = vld [vmem:[%s0 + $0x38] sm:$0xff]
  %v22 = vld [vmem:[%s0 + $0x40] sm:$0xff]
  %v23 = vld [vmem:[%s0 + $0x48] sm:$0xff]
  %v24 = vld [vmem:[%s0 + $0x50] sm:$0xff]
  %v25 = vld [vmem:[%s0 + $0x58] sm:$0xff]
  %v26 = vld [vmem:[%s0 + $0x60] sm:$0xff]
  %v27 = vld [vmem:[%s0 + $0x68] sm:$0xff]
  %v28 = vld [vmem:[%s0 + $0x70] sm:$0xff]
  %v29 = vld [vmem:[%s0 + $0x78] sm:$0xff]
  %v30 = vld [vmem:[%s1] sm:$0x1]
  %v32 = vperm.slane %v30, 0
  %v34 = vmul.f32 %v14, %v32
  %v35 = vmul.f32 %v15, %v32
  %v36 = vmul.f32 %v16, %v32
  %v37 = vmul.f32 %v17, %v32
  %v38 = vmul.f32 %v18, %v32
  %v39 = vmul.f32 %v19, %v32
  %v40 = vmul.f32 %v20, %v32
  %v41 = vmul.f32 %v21, %v32
  %v42 = vmul.f32 %v22, %v32
  %v43 = vmul.f32 %v23, %v32
  %v44 = vmul.f32 %v24, %v32
  %v45 = vmul.f32 %v25, %v32
  %v46 = vmul.f32 %v26, %v32
  %v47 = vmul.f32 %v27, %v32
  %v48 = vmul.f32 %v28, %v32
  %v49 = vmul.f32 %v29, %v32
  %v50 = vld [vmem:[%s2] sm:$0x1]
  %v52 = vperm.slane %v50, 0
  %v54 = vadd.f32 %v34, %v52
  %v55 = vadd.f32 %v35, %v52
  %v56 = vadd.f32 %v36, %v52
  %v57 = vadd.f32 %v37, %v52
  %v58 = vadd.f32 %v38, %v52
  %v59 = vadd.f32 %v39, %v52
  %v60 = vadd.f32 %v40, %v52
  %v61 = vadd.f32 %v41, %v52
  %v62 = vadd.f32 %v42, %v52
  %v63 = vadd.f32 %v43, %v52
  %v64 = vadd.f32 %v44, %v52
  %v65 = vadd.f32 %v45, %v52
  %v66 = vadd.f32 %v46, %v52
  %v67 = vadd.f32 %v47, %v52
  %v68 = vadd.f32 %v48, %v52
  %v69 = vadd.f32 %v49, %v52
  %v70 = vmax.f32 %v54, 0.0
  %v71 = vmax.f32 %v55, 0.0
  %v72 = vmax.f32 %v56, 0.0
  %v73 = vmax.f32 %v57, 0.0
  %v74 = vmax.f32 %v58, 0.0
  %v75 = vmax.f32 %v59, 0.0
  %v76 = vmax.f32 %v60, 0.0
  %v77 = vmax.f32 %v61, 0.0
  %v78 = vmax.f32 %v62, 0.0
  %v79 = vmax.f32 %v63, 0.0
  %v80 = vmax.f32 %v64, 0.0
  %v81 = vmax.f32 %v65, 0.0
  %v82 = vmax.f32 %v66, 0.0
  %v83 = vmax.f32 %v67, 0.0
  %v84 = vmax.f32 %v68, 0.0
  %v85 = vmax.f32 %v69, 0.0
  %v86 = vpack.c.bf16 %v70, %v70
  %v87 = vpack.c.bf16 %v71, %v71
  %v88 = vpack.c.bf16 %v72, %v72
  %v89 = vpack.c.bf16 %v73, %v73
  %v90 = vpack.c.bf16 %v74, %v74
  %v91 = vpack.c.bf16 %v75, %v75
  %v92 = vpack.c.bf16 %v76, %v76
  %v93 = vpack.c.bf16 %v77, %v77
  %v94 = vpack.c.bf16 %v78, %v78
  %v95 = vpack.c.bf16 %v79, %v79
  %v96 = vpack.c.bf16 %v80, %v80
  %v97 = vpack.c.bf16 %v81, %v81
  %v98 = vpack.c.bf16 %v82, %v82
  %v99 = vpack.c.bf16 %v83, %v83
  %v100 = vpack.c.bf16 %v84, %v84
  %v101 = vpack.c.bf16 %v85, %v85
  %102 = vst [vmem:[%s3] sm:$0xf] %v86
  %103 = vst [vmem:[%s3 + $0x4] sm:$0xf] %v87
  %104 = vst [vmem:[%s3 + $0x8] sm:$0xf] %v88
  %105 = vst [vmem:[%s3 + $0xc] sm:$0xf] %v89
  %106 = vst [vmem:[%s3 + $0x10] sm:$0xf] %v90
  %107 = vst [vmem:[%s3 + $0x14] sm:$0xf] %v91
  %108 = vst [vmem:[%s3 + $0x18] sm:$0xf] %v92
  %109 = vst [vmem:[%s3 + $0x1c] sm:$0xf] %v93
  %110 = vst [vmem:[%s3 + $0x20] sm:$0xf] %v94
  %111 = vst [vmem:[%s3 + $0x24] sm:$0xf] %v95
  %112 = vst [vmem:[%s3 + $0x28] sm:$0xf] %v96
  %113 = vst [vmem:[%s3 + $0x2c] sm:$0xf] %v97
  %114 = vst [vmem:[%s3 + $0x30] sm:$0xf] %v98
  %115 = vst [vmem:[%s3 + $0x34] sm:$0xf] %v99
  %116 = vst [vmem:[%s3 + $0x38] sm:$0xf] %v100
  %117 = vst [vmem:[%s3 + $0x3c] sm:$0xf] %v101
  // Predicated region
  $region14: #{common_discriminator.12} parent=0 // pred_check
    _
  $region15: #{common_discriminator.12} parent=0 // pred_check_branch
    %119 = sbr.rel (0) target = $region17
  $region16: #{common_discriminator.12} parent=0 // pred_region
    _
  $region17: #{common_discriminator.12} parent=0 // pred_fallthru
    _
  // Predicated region
  $region18: #{common_discriminator.12} parent=0 // pred_check
    _
  $region19: #{common_discriminator.12} parent=0 // pred_check_branch
    %121 = sbr.rel (0) target = $region21
  $region20: #{common_discriminator.12} parent=0 // pred_region
    _
  $region21: #{common_discriminator.12} parent=0 // pred_fallthru
    _

// kernel: common_discriminator.14
$region0: #{common_discriminator.14}
  #allocation0 [shape = 'u32[]', space=smem, size = 0x4, offset = 0x4, fixed_abs, tag = 'smem constant byte address 0x4 - core index']
  #allocation1 [shape = 'u32[72,128]{1,0:T(1,128)}', space=vmem, size = 0x9000, scoped, tag = 'internal scratch']
  %s0 = inlined_call_operand.vmem [shape: f32[32,256], index: 0, kind: input, shape index: {}]
  %s1 = inlined_call_operand.vmem [shape: f32[1,256], index: 1, kind: input, shape index: {}]
  %s2 = inlined_call_operand.vmem [shape: f32[1,256], index: 2, kind: input, shape index: {}]
  %s3 = inlined_call_operand.vmem [shape: bf16[32,256], index: 3, kind: output, shape index: {}]
  %s4 = sld [smem:[#allocation0]]
  $region22: #{common_discriminator.14} parent=0
    _
  %s6 = ssub.s32 1, %s4
  %s7 = scalar_select 0, %s6, %s4
  // Predicated region
  $region2: #{common_discriminator.14} parent=0 // pred_check
    _
  $region3: #{common_discriminator.14} parent=0 // pred_check_branch
    %9 = sbr.rel (0) target = $region5
  $region4: #{common_discriminator.14} parent=0 // pred_region
    _
  $region5: #{common_discriminator.14} parent=0 // pred_fallthru
    _
  // Predicated region
  $region6: #{common_discriminator.14} parent=0 // pred_check
    _
  $region7: #{common_discriminator.14} parent=0 // pred_check_branch
    %11 = sbr.rel (0) target = $region9
  $region8: #{common_discriminator.14} parent=0 // pred_region
    _
  $region9: #{common_discriminator.14} parent=0 // pred_fallthru
    _
  // Predicated region
  $region10: #{common_discriminator.14} parent=0 // pred_check
    _
  $region11: #{common_discriminator.14} parent=0 // pred_check_branch
    %13 = sbr.rel (0) target = $region13
  $region12: #{common_discriminator.14} parent=0 // pred_region
    _
  $region13: #{common_discriminator.14} parent=0 // pred_fallthru
    _
  %v14 = vld [vmem:[%s0] sm:$0xff]
  %v15 = vld [vmem:[%s0 + $0x8] sm:$0xff]
  %v16 = vld [vmem:[%s0 + $0x10] sm:$0xff]
  %v17 = vld [vmem:[%s0 + $0x18] sm:$0xff]
  %v18 = vld [vmem:[%s0 + $0x20] sm:$0xff]
  %v19 = vld [vmem:[%s0 + $0x28] sm:$0xff]
  %v20 = vld [vmem:[%s0 + $0x30] sm:$0xff]
  %v21 = vld [vmem:[%s0 + $0x38] sm:$0xff]
  %v22 = vld [vmem:[%s1] sm:$0x3]
  %v24 = vperm.slane %v22, 0
  %v25 = vperm.slane %v22, 1
  %v28 = vmul.f32 %v14, %v24
  %v29 = vmul.f32 %v15, %v25
  %v30 = vmul.f32 %v16, %v24
  %v31 = vmul.f32 %v17, %v25
  %v32 = vmul.f32 %v18, %v24
  %v33 = vmul.f32 %v19, %v25
  %v34 = vmul.f32 %v20, %v24
  %v35 = vmul.f32 %v21, %v25
  %v36 = vld [vmem:[%s2] sm:$0x3]
  %v38 = vperm.slane %v36, 0
  %v39 = vperm.slane %v36, 1
  %v42 = vadd.f32 %v28, %v38
  %v43 = vadd.f32 %v29, %v39
  %v44 = vadd.f32 %v30, %v38
  %v45 = vadd.f32 %v31, %v39
  %v46 = vadd.f32 %v32, %v38
  %v47 = vadd.f32 %v33, %v39
  %v48 = vadd.f32 %v34, %v38
  %v49 = vadd.f32 %v35, %v39
  %v50 = vmax.f32 %v42, 0.0
  %v51 = vmax.f32 %v43, 0.0
  %v52 = vmax.f32 %v44, 0.0
  %v53 = vmax.f32 %v45, 0.0
  %v54 = vmax.f32 %v46, 0.0
  %v55 = vmax.f32 %v47, 0.0
  %v56 = vmax.f32 %v48, 0.0
  %v57 = vmax.f32 %v49, 0.0
  %v58 = vpack.c.bf16 %v51, %v50
  %v59 = vpack.c.bf16 %v53, %v52
  %v60 = vpack.c.bf16 %v55, %v54
  %v61 = vpack.c.bf16 %v57, %v56
  %62 = vst [vmem:[%s3] sm:$0xff] %v58
  %63 = vst [vmem:[%s3 + $0x8] sm:$0xff] %v59
  %64 = vst [vmem:[%s3 + $0x10] sm:$0xff] %v60
  %65 = vst [vmem:[%s3 + $0x18] sm:$0xff] %v61
  // Predicated region
  $region14: #{common_discriminator.14} parent=0 // pred_check
    _
  $region15: #{common_discriminator.14} parent=0 // pred_check_branch
    %67 = sbr.rel (0) target = $region17
  $region16: #{common_discriminator.14} parent=0 // pred_region
    _
  $region17: #{common_discriminator.14} parent=0 // pred_fallthru
    _
  // Predicated region
  $region18: #{common_discriminator.14} parent=0 // pred_check
    _
  $region19: #{common_discriminator.14} parent=0 // pred_check_branch
    %69 = sbr.rel (0) target = $region21
  $region20: #{common_discriminator.14} parent=0 // pred_region
    _
  $region21: #{common_discriminator.14} parent=0 // pred_fallthru
    _

// kernel: common_discriminator.13
$region0: #{common_discriminator.13}
  #allocation0 [shape = 'u32[]', space=smem, size = 0x4, offset = 0x4, fixed_abs, tag = 'smem constant byte address 0x4 - core index']
  #allocation1 [shape = 'u32[72,128]{1,0:T(1,128)}', space=vmem, size = 0x9000, scoped, tag = 'internal scratch']
  %s0 = inlined_call_operand.vmem [shape: bf16[32,1152], index: 0, kind: input, shape index: {}]
  %s1 = inlined_call_operand.vmem [shape: bf16[1152,256], index: 1, kind: input, shape index: {}]
  %s2 = inlined_call_operand.vmem [shape: f32[32,256], index: 2, kind: output, shape index: {0}]
  %s3 = inlined_call_operand.vmem [shape: f32[1,256], index: 3, kind: output, shape index: {1}]
  %s4 = inlined_call_operand.vmem [shape: f32[1,256], index: 4, kind: output, shape index: {2}]
  %5 = xla_tuple %s2, %s3, %s4
  %s6 = sld [smem:[#allocation0]]
  $region38: #{common_discriminator.13} parent=0
    _
  %s8 = ssub.s32 1, %s6
  %s9 = scalar_select 0, %s8, %s6
  // Predicated region
  $region2: #{common_discriminator.13} parent=0 // pred_check
    _
  $region3: #{common_discriminator.13} parent=0 // pred_check_branch
    %11 = sbr.rel (0) target = $region5
  $region4: #{common_discriminator.13} parent=0 // pred_region
    _
  $region5: #{common_discriminator.13} parent=0 // pred_fallthru
    _
  // Predicated region
  $region6: #{common_discriminator.13} parent=0 // pred_check
    _
  $region7: #{common_discriminator.13} parent=0 // pred_check_branch
    %13 = sbr.rel (0) target = $region9
  $region8: #{common_discriminator.13} parent=0 // pred_region
    _
  $region9: #{common_discriminator.13} parent=0 // pred_fallthru
    _
  %v14 = vld [vmem:[%s0] sm:$0xff]
  %v15 = vld [vmem:[%s0 + $0x8] sm:$0xff]
  %v16 = vld [vmem:[%s0 + $0x10] sm:$0xff]
  %v17 = vld [vmem:[%s0 + $0x18] sm:$0xff]
  %v18 = vld [vmem:[%s0 + $0x20] sm:$0xf]
  %v19 = vld [vmem:[%s0 + $0x24] sm:$0xff]
  %v20 = vld [vmem:[%s0 + $0x2c] sm:$0xff]
  %v21 = vld [vmem:[%s0 + $0x34] sm:$0xff]
  %v22 = vld [vmem:[%s0 + $0x3c] sm:$0xff]
  %v23 = vld [vmem:[%s0 + $0x44] sm:$0xf]
  %v24 = vld [vmem:[%s0 + $0x48] sm:$0xff]
  %v25 = vld [vmem:[%s0 + $0x50] sm:$0xff]
  %v26 = vld [vmem:[%s0 + $0x58] sm:$0xff]
  %v27 = vld [vmem:[%s0 + $0x60] sm:$0xff]
  %v28 = vld [vmem:[%s0 + $0x68] sm:$0xf]
  %v29 = vld [vmem:[%s0 + $0x6c] sm:$0xff]
  %v30 = vld [vmem:[%s0 + $0x74] sm:$0xff]
  %v31 = vld [vmem:[%s0 + $0x7c] sm:$0xff]
  %v32 = vld [vmem:[%s0 + $0x84] sm:$0xff]
  %v33 = vld [vmem:[%s0 + $0x8c] sm:$0xf]
  %v34 = vld [vmem:[%s1] sm:$0xff]
  %v35 = vld [vmem:[%s1 + $0x8] sm:$0xff]
  %v36 = vld [vmem:[%s1 + $0x10] sm:$0xff]
  %v37 = vld [vmem:[%s1 + $0x18] sm:$0xff]
  %v38 = vld [vmem:[%s1 + $0x20] sm:$0xff]
  %v39 = vld [vmem:[%s1 + $0x28] sm:$0xff]
  %v40 = vld [vmem:[%s1 + $0x30] sm:$0xff]
  %v41 = vld [vmem:[%s1 + $0x38] sm:$0xff]
  %v42 = vld [vmem:[%s1 + $0x40] sm:$0xff]
  %v43 = vld [vmem:[%s1 + $0x48] sm:$0xff]
  %v44 = vld [vmem:[%s1 + $0x50] sm:$0xff]
  %v45 = vld [vmem:[%s1 + $0x58] sm:$0xff]
  %v46 = vld [vmem:[%s1 + $0x60] sm:$0xff]
  %v47 = vld [vmem:[%s1 + $0x68] sm:$0xff]
  %v48 = vld [vmem:[%s1 + $0x70] sm:$0xff]
  %v49 = vld [vmem:[%s1 + $0x78] sm:$0xff]
  %v50 = vld [vmem:[%s1 + $0x80] sm:$0xff]
  %v51 = vld [vmem:[%s1 + $0x88] sm:$0xff]
  %v52 = vld [vmem:[%s1 + $0x90] sm:$0xff]
  %v53 = vld [vmem:[%s1 + $0x98] sm:$0xff]
  %v54 = vld [vmem:[%s1 + $0xa0] sm:$0xff]
  %v55 = vld [vmem:[%s1 + $0xa8] sm:$0xff]
  %v56 = vld [vmem:[%s1 + $0xb0] sm:$0xff]
  %v57 = vld [vmem:[%s1 + $0xb8] sm:$0xff]
  %v58 = vld [vmem:[%s1 + $0xc0] sm:$0xff]
  %v59 = vld [vmem:[%s1 + $0xc8] sm:$0xff]
  %v60 = vld [vmem:[%s1 + $0xd0] sm:$0xff]
  %v61 = vld [vmem:[%s1 + $0xd8] sm:$0xff]
  %v62 = vld [vmem:[%s1 + $0xe0] sm:$0xff]
  %v63 = vld [vmem:[%s1 + $0xe8] sm:$0xff]
  %v64 = vld [vmem:[%s1 + $0xf0] sm:$0xff]
  %v65 = vld [vmem:[%s1 + $0xf8] sm:$0xff]
  %v66 = vld [vmem:[%s1 + $0x100] sm:$0xff]
  %v67 = vld [vmem:[%s1 + $0x108] sm:$0xff]
  %v68 = vld [vmem:[%s1 + $0x110] sm:$0xff]
  %v69 = vld [vmem:[%s1 + $0x118] sm:$0xff]
  %v70 = vld [vmem:[%s1 + $0x120] sm:$0xff]
  %v71 = vld [vmem:[%s1 + $0x128] sm:$0xff]
  %v72 = vld [vmem:[%s1 + $0x130] sm:$0xff]
  %v73 = vld [vmem:[%s1 + $0x138] sm:$0xff]
  %v74 = vld [vmem:[%s1 + $0x140] sm:$0xff]
  %v75 = vld [vmem:[%s1 + $0x148] sm:$0xff]
  %v76 = vld [vmem:[%s1 + $0x150] sm:$0xff]
  %v77 = vld [vmem:[%s1 + $0x158] sm:$0xff]
  %v78 = vld [vmem:[%s1 + $0x160] sm:$0xff]
  %v79 = vld [vmem:[%s1 + $0x168] sm:$0xff]
  %v80 = vld [vmem:[%s1 + $0x170] sm:$0xff]
  %v81 = vld [vmem:[%s1 + $0x178] sm:$0xff]
  %v82 = vld [vmem:[%s1 + $0x180] sm:$0xff]
  %v83 = vld [vmem:[%s1 + $0x188] sm:$0xff]
  %v84 = vld [vmem:[%s1 + $0x190] sm:$0xff]
  %v85 = vld [vmem:[%s1 + $0x198] sm:$0xff]
  %v86 = vld [vmem:[%s1 + $0x1a0] sm:$0xff]
  %v87 = vld [vmem:[%s1 + $0x1a8] sm:$0xff]
  %v88 = vld [vmem:[%s1 + $0x1b0] sm:$0xff]
  %v89 = vld [vmem:[%s1 + $0x1b8] sm:$0xff]
  %v90 = vld [vmem:[%s1 + $0x1c0] sm:$0xff]
  %v91 = vld [vmem:[%s1 + $0x1c8] sm:$0xff]
  %v92 = vld [vmem:[%s1 + $0x1d0] sm:$0xff]
  %v93 = vld [vmem:[%s1 + $0x1d8] sm:$0xff]
  %v94 = vld [vmem:[%s1 + $0x1e0] sm:$0xff]
  %v95 = vld [vmem:[%s1 + $0x1e8] sm:$0xff]
  %v96 = vld [vmem:[%s1 + $0x1f0] sm:$0xff]
  %v97 = vld [vmem:[%s1 + $0x1f8] sm:$0xff]
  %v98 = vld [vmem:[%s1 + $0x200] sm:$0xff]
  %v99 = vld [vmem:[%s1 + $0x208] sm:$0xff]
  %v100 = vld [vmem:[%s1 + $0x210] sm:$0xff]
  %v101 = vld [vmem:[%s1 + $0x218] sm:$0xff]
  %v102 = vld [vmem:[%s1 + $0x220] sm:$0xff]
  %v103 = vld [vmem:[%s1 + $0x228] sm:$0xff]
  %v104 = vld [vmem:[%s1 + $0x230] sm:$0xff]
  %v105 = vld [vmem:[%s1 + $0x238] sm:$0xff]
  %v106 = vld [vmem:[%s1 + $0x240] sm:$0xff]
  %v107 = vld [vmem:[%s1 + $0x248] sm:$0xff]
  %v108 = vld [vmem:[%s1 + $0x250] sm:$0xff]
  %v109 = vld [vmem:[%s1 + $0x258] sm:$0xff]
  %v110 = vld [vmem:[%s1 + $0x260] sm:$0xff]
  %v111 = vld [vmem:[%s1 + $0x268] sm:$0xff]
  %v112 = vld [vmem:[%s1 + $0x270] sm:$0xff]
  %v113 = vld [vmem:[%s1 + $0x278] sm:$0xff]
  %v114 = vld [vmem:[%s1 + $0x280] sm:$0xff]
  %v115 = vld [vmem:[%s1 + $0x288] sm:$0xff]
  %v116 = vld [vmem:[%s1 + $0x290] sm:$0xff]
  %v117 = vld [vmem:[%s1 + $0x298] sm:$0xff]
  %v118 = vld [vmem:[%s1 + $0x2a0] sm:$0xff]
  %v119 = vld [vmem:[%s1 + $0x2a8] sm:$0xff]
  %v120 = vld [vmem:[%s1 + $0x2b0] sm:$0xff]
  %v121 = vld [vmem:[%s1 + $0x2b8] sm:$0xff]
  %v122 = vld [vmem:[%s1 + $0x2c0] sm:$0xff]
  %v123 = vld [vmem:[%s1 + $0x2c8] sm:$0xff]
  %v124 = vld [vmem:[%s1 + $0x2d0] sm:$0xff]
  %v125 = vld [vmem:[%s1 + $0x2d8] sm:$0xff]
  %v126 = vld [vmem:[%s1 + $0x2e0] sm:$0xff]
  %v127 = vld [vmem:[%s1 + $0x2e8] sm:$0xff]
  %v128 = vld [vmem:[%s1 + $0x2f0] sm:$0xff]
  %v129 = vld [vmem:[%s1 + $0x2f8] sm:$0xff]
  %v130 = vld [vmem:[%s1 + $0x300] sm:$0xff]
  %v131 = vld [vmem:[%s1 + $0x308] sm:$0xff]
  %v132 = vld [vmem:[%s1 + $0x310] sm:$0xff]
  %v133 = vld [vmem:[%s1 + $0x318] sm:$0xff]
  %v134 = vld [vmem:[%s1 + $0x320] sm:$0xff]
  %v135 = vld [vmem:[%s1 + $0x328] sm:$0xff]
  %v136 = vld [vmem:[%s1 + $0x330] sm:$0xff]
  %v137 = vld [vmem:[%s1 + $0x338] sm:$0xff]
  %v138 = vld [vmem:[%s1 + $0x340] sm:$0xff]
  %v139 = vld [vmem:[%s1 + $0x348] sm:$0xff]
  %v140 = vld [vmem:[%s1 + $0x350] sm:$0xff]
  %v141 = vld [vmem:[%s1 + $0x358] sm:$0xff]
  %v142 = vld [vmem:[%s1 + $0x360] sm:$0xff]
  %v143 = vld [vmem:[%s1 + $0x368] sm:$0xff]
  %v144 = vld [vmem:[%s1 + $0x370] sm:$0xff]
  %v145 = vld [vmem:[%s1 + $0x378] sm:$0xff]
  %v146 = vld [vmem:[%s1 + $0x380] sm:$0xff]
  %v147 = vld [vmem:[%s1 + $0x388] sm:$0xff]
  %v148 = vld [vmem:[%s1 + $0x390] sm:$0xff]
  %v149 = vld [vmem:[%s1 + $0x398] sm:$0xff]
  %v150 = vld [vmem:[%s1 + $0x3a0] sm:$0xff]
  %v151 = vld [vmem:[%s1 + $0x3a8] sm:$0xff]
  %v152 = vld [vmem:[%s1 + $0x3b0] sm:$0xff]
  %v153 = vld [vmem:[%s1 + $0x3b8] sm:$0xff]
  %v154 = vld [vmem:[%s1 + $0x3c0] sm:$0xff]
  %v155 = vld [vmem:[%s1 + $0x3c8] sm:$0xff]
  %v156 = vld [vmem:[%s1 + $0x3d0] sm:$0xff]
  %v157 = vld [vmem:[%s1 + $0x3d8] sm:$0xff]
  %v158 = vld [vmem:[%s1 + $0x3e0] sm:$0xff]
  %v159 = vld [vmem:[%s1 + $0x3e8] sm:$0xff]
  %v160 = vld [vmem:[%s1 + $0x3f0] sm:$0xff]
  %v161 = vld [vmem:[%s1 + $0x3f8] sm:$0xff]
  %v162 = vld [vmem:[%s1 + $0x400] sm:$0xff]
  %v163 = vld [vmem:[%s1 + $0x408] sm:$0xff]
  %v164 = vld [vmem:[%s1 + $0x410] sm:$0xff]
  %v165 = vld [vmem:[%s1 + $0x418] sm:$0xff]
  %v166 = vld [vmem:[%s1 + $0x420] sm:$0xff]
  %v167 = vld [vmem:[%s1 + $0x428] sm:$0xff]
  %v168 = vld [vmem:[%s1 + $0x430] sm:$0xff]
  %v169 = vld [vmem:[%s1 + $0x438] sm:$0xff]
  %v170 = vld [vmem:[%s1 + $0x440] sm:$0xff]
  %v171 = vld [vmem:[%s1 + $0x448] sm:$0xff]
  %v172 = vld [vmem:[%s1 + $0x450] sm:$0xff]
  %v173 = vld [vmem:[%s1 + $0x458] sm:$0xff]
  %v174 = vld [vmem:[%s1 + $0x460] sm:$0xff]
  %v175 = vld [vmem:[%s1 + $0x468] sm:$0xff]
  %v176 = vld [vmem:[%s1 + $0x470] sm:$0xff]
  %v177 = vld [vmem:[%s1 + $0x478] sm:$0xff]
  %v198 = vunpack.c.l.b16 %v14
  %v199 = vunpack.c.h.b16 %v14
  %v200 = vunpack.c.l.b16 %v15
  %v201 = vunpack.c.h.b16 %v15
  %v202 = vunpack.c.l.b16 %v16
  %v203 = vunpack.c.h.b16 %v16
  %v204 = vunpack.c.l.b16 %v17
  %v205 = vunpack.c.h.b16 %v17
  %v206 = vunpack.c.l.b16 %v18
  %v207 = vunpack.c.l.b16 %v19
  %v208 = vunpack.c.h.b16 %v19
  %v209 = vunpack.c.l.b16 %v20
  %v210 = vunpack.c.h.b16 %v20
  %v211 = vunpack.c.l.b16 %v21
  %v212 = vunpack.c.h.b16 %v21
  %v213 = vunpack.c.l.b16 %v22
  %v214 = vunpack.c.h.b16 %v22
  %v215 = vunpack.c.l.b16 %v23
  %v216 = vunpack.c.l.b16 %v24
  %v217 = vunpack.c.h.b16 %v24
  %v218 = vunpack.c.l.b16 %v25
  %v219 = vunpack.c.h.b16 %v25
  %v220 = vunpack.c.l.b16 %v26
  %v221 = vunpack.c.h.b16 %v26
  %v222 = vunpack.c.l.b16 %v27
  %v223 = vunpack.c.h.b16 %v27
  %v224 = vunpack.c.l.b16 %v28
  %v225 = vunpack.c.l.b16 %v29
  %v226 = vunpack.c.h.b16 %v29
  %v227 = vunpack.c.l.b16 %v30
  %v228 = vunpack.c.h.b16 %v30
  %v229 = vunpack.c.l.b16 %v31
  %v230 = vunpack.c.h.b16 %v31
  %v231 = vunpack.c.l.b16 %v32
  %v232 = vunpack.c.h.b16 %v32
  %v233 = vunpack.c.l.b16 %v33
  %v234 = vpack.c.b16 %v207, %v198
  %v235 = vpack.c.b16 %v208, %v199
  %v236 = vpack.c.b16 %v209, %v200
  %v237 = vpack.c.b16 %v210, %v201
  %v238 = vpack.c.b16 %v211, %v202
  %v239 = vpack.c.b16 %v212, %v203
  %v240 = vpack.c.b16 %v213, %v204
  %v241 = vpack.c.b16 %v214, %v205
  %v242 = vpack.c.b16 %v215, %v206
  %v243 = vpack.c.b16 %v225, %v216
  %v244 = vpack.c.b16 %v226, %v217
  %v245 = vpack.c.b16 %v227, %v218
  %v246 = vpack.c.b16 %v228, %v219
  %v247 = vpack.c.b16 %v229, %v220
  %v248 = vpack.c.b16 %v230, %v221
  %v249 = vpack.c.b16 %v231, %v222
  %v250 = vpack.c.b16 %v232, %v223
  %v251 = vpack.c.b16 %v233, %v224
  %v414 = vunpack.c.l.b16 %v34
  %v415 = vunpack.c.h.b16 %v34
  %v416 = vunpack.c.l.b16 %v35
  %v417 = vunpack.c.h.b16 %v35
  %v418 = vunpack.c.l.b16 %v36
  %v419 = vunpack.c.h.b16 %v36
  %v420 = vunpack.c.l.b16 %v37
  %v421 = vunpack.c.h.b16 %v37
  %v422 = vunpack.c.l.b16 %v38
  %v423 = vunpack.c.h.b16 %v38
  %v424 = vunpack.c.l.b16 %v39
  %v425 = vunpack.c.h.b16 %v39
  %v426 = vunpack.c.l.b16 %v40
  %v427 = vunpack.c.h.b16 %v40
  %v428 = vunpack.c.l.b16 %v41
  %v429 = vunpack.c.h.b16 %v41
  %v430 = vunpack.c.l.b16 %v42
  %v431 = vunpack.c.h.b16 %v42
  %v432 = vunpack.c.l.b16 %v43
  %v433 = vunpack.c.h.b16 %v43
  %v434 = vunpack.c.l.b16 %v44
  %v435 = vunpack.c.h.b16 %v44
  %v436 = vunpack.c.l.b16 %v45
  %v437 = vunpack.c.h.b16 %v45
  %v438 = vunpack.c.l.b16 %v46
  %v439 = vunpack.c.h.b16 %v46
  %v440 = vunpack.c.l.b16 %v47
  %v441 = vunpack.c.h.b16 %v47
  %v442 = vunpack.c.l.b16 %v48
  %v443 = vunpack.c.h.b16 %v48
  %v444 = vunpack.c.l.b16 %v49
  %v445 = vunpack.c.h.b16 %v49
  %v446 = vunpack.c.l.b16 %v50
  %v447 = vunpack.c.h.b16 %v50
  %v448 = vunpack.c.l.b16 %v51
  %v449 = vunpack.c.h.b16 %v51
  %v450 = vunpack.c.l.b16 %v52
  %v451 = vunpack.c.h.b16 %v52
  %v452 = vunpack.c.l.b16 %v53
  %v453 = vunpack.c.h.b16 %v53
  %v454 = vunpack.c.l.b16 %v54
  %v455 = vunpack.c.h.b16 %v54
  %v456 = vunpack.c.l.b16 %v55
  %v457 = vunpack.c.h.b16 %v55
  %v458 = vunpack.c.l.b16 %v56
  %v459 = vunpack.c.h.b16 %v56
  %v460 = vunpack.c.l.b16 %v57
  %v461 = vunpack.c.h.b16 %v57
  %v462 = vunpack.c.l.b16 %v58
  %v463 = vunpack.c.h.b16 %v58
  %v464 = vunpack.c.l.b16 %v59
  %v465 = vunpack.c.h.b16 %v59
  %v466 = vunpack.c.l.b16 %v60
  %v467 = vunpack.c.h.b16 %v60
  %v468 = vunpack.c.l.b16 %v61
  %v469 = vunpack.c.h.b16 %v61
  %v470 = vunpack.c.l.b16 %v62
  %v471 = vunpack.c.h.b16 %v62
  %v472 = vunpack.c.l.b16 %v63
  %v473 = vunpack.c.h.b16 %v63
  %v474 = vunpack.c.l.b16 %v64
  %v475 = vunpack.c.h.b16 %v64
  %v476 = vunpack.c.l.b16 %v65
  %v477 = vunpack.c.h.b16 %v65
  %v478 = vunpack.c.l.b16 %v66
  %v479 = vunpack.c.h.b16 %v66
  %v480 = vunpack.c.l.b16 %v67
  %v481 = vunpack.c.h.b16 %v67
  %v482 = vunpack.c.l.b16 %v68
  %v483 = vunpack.c.h.b16 %v68
  %v484 = vunpack.c.l.b16 %v69
  %v485 = vunpack.c.h.b16 %v69
  %v486 = vunpack.c.l.b16 %v70
  %v487 = vunpack.c.h.b16 %v70
  %v488 = vunpack.c.l.b16 %v71
  %v489 = vunpack.c.h.b16 %v71
  %v490 = vunpack.c.l.b16 %v72
  %v491 = vunpack.c.h.b16 %v72
  %v492 = vunpack.c.l.b16 %v73
  %v493 = vunpack.c.h.b16 %v73
  %v494 = vunpack.c.l.b16 %v74
  %v495 = vunpack.c.h.b16 %v74
  %v496 = vunpack.c.l.b16 %v75
  %v497 = vunpack.c.h.b16 %v75
  %v498 = vunpack.c.l.b16 %v76
  %v499 = vunpack.c.h.b16 %v76
  %v500 = vunpack.c.l.b16 %v77
  %v501 = vunpack.c.h.b16 %v77
  %v502 = vunpack.c.l.b16 %v78
  %v503 = vunpack.c.h.b16 %v78
  %v504 = vunpack.c.l.b16 %v79
  %v505 = vunpack.c.h.b16 %v79
  %v506 = vunpack.c.l.b16 %v80
  %v507 = vunpack.c.h.b16 %v80
  %v508 = vunpack.c.l.b16 %v81
  %v509 = vunpack.c.h.b16 %v81
  %v510 = vunpack.c.l.b16 %v82
  %v511 = vunpack.c.h.b16 %v82
  %v512 = vunpack.c.l.b16 %v83
  %v513 = vunpack.c.h.b16 %v83
  %v514 = vunpack.c.l.b16 %v84
  %v515 = vunpack.c.h.b16 %v84
  %v516 = vunpack.c.l.b16 %v85
  %v517 = vunpack.c.h.b16 %v85
  %v518 = vunpack.c.l.b16 %v86
  %v519 = vunpack.c.h.b16 %v86
  %v520 = vunpack.c.l.b16 %v87
  %v521 = vunpack.c.h.b16 %v87
  %v522 = vunpack.c.l.b16 %v88
  %v523 = vunpack.c.h.b16 %v88
  %v524 = vunpack.c.l.b16 %v89
  %v525 = vunpack.c.h.b16 %v89
  %v526 = vunpack.c.l.b16 %v90
  %v527 = vunpack.c.h.b16 %v90
  %v528 = vunpack.c.l.b16 %v91
  %v529 = vunpack.c.h.b16 %v91
  %v530 = vunpack.c.l.b16 %v92
  %v531 = vunpack.c.h.b16 %v92
  %v532 = vunpack.c.l.b16 %v93
  %v533 = vunpack.c.h.b16 %v93
  %v534 = vunpack.c.l.b16 %v94
  %v535 = vunpack.c.h.b16 %v94
  %v536 = vunpack.c.l.b16 %v95
  %v537 = vunpack.c.h.b16 %v95
  %v538 = vunpack.c.l.b16 %v96
  %v539 = vunpack.c.h.b16 %v96
  %v540 = vunpack.c.l.b16 %v97
  %v541 = vunpack.c.h.b16 %v97
  %v542 = vunpack.c.l.b16 %v98
  %v543 = vunpack.c.h.b16 %v98
  %v544 = vunpack.c.l.b16 %v99
  %v545 = vunpack.c.h.b16 %v99
  %v546 = vunpack.c.l.b16 %v100
  %v547 = vunpack.c.h.b16 %v100
  %v548 = vunpack.c.l.b16 %v101
  %v549 = vunpack.c.h.b16 %v101
  %v550 = vunpack.c.l.b16 %v102
  %v551 = vunpack.c.h.b16 %v102
  %v552 = vunpack.c.l.b16 %v103
  %v553 = vunpack.c.h.b16 %v103
  %v554 = vunpack.c.l.b16 %v104
  %v555 = vunpack.c.h.b16 %v104
  %v556 = vunpack.c.l.b16 %v105
  %v557 = vunpack.c.h.b16 %v105
  %v558 = vunpack.c.l.b16 %v106
  %v559 = vunpack.c.h.b16 %v106
  %v560 = vunpack.c.l.b16 %v107
  %v561 = vunpack.c.h.b16 %v107
  %v562 = vunpack.c.l.b16 %v108
  %v563 = vunpack.c.h.b16 %v108
  %v564 = vunpack.c.l.b16 %v109
  %v565 = vunpack.c.h.b16 %v109
  %v566 = vunpack.c.l.b16 %v110
  %v567 = vunpack.c.h.b16 %v110
  %v568 = vunpack.c.l.b16 %v111
  %v569 = vunpack.c.h.b16 %v111
  %v570 = vunpack.c.l.b16 %v112
  %v571 = vunpack.c.h.b16 %v112
  %v572 = vunpack.c.l.b16 %v113
  %v573 = vunpack.c.h.b16 %v113
  %v574 = vunpack.c.l.b16 %v114
  %v575 = vunpack.c.h.b16 %v114
  %v576 = vunpack.c.l.b16 %v115
  %v577 = vunpack.c.h.b16 %v115
  %v578 = vunpack.c.l.b16 %v116
  %v579 = vunpack.c.h.b16 %v116
  %v580 = vunpack.c.l.b16 %v117
  %v581 = vunpack.c.h.b16 %v117
  %v582 = vunpack.c.l.b16 %v118
  %v583 = vunpack.c.h.b16 %v118
  %v584 = vunpack.c.l.b16 %v119
  %v585 = vunpack.c.h.b16 %v119
  %v586 = vunpack.c.l.b16 %v120
  %v587 = vunpack.c.h.b16 %v120
  %v588 = vunpack.c.l.b16 %v121
  %v589 = vunpack.c.h.b16 %v121
  %v590 = vunpack.c.l.b16 %v122
  %v591 = vunpack.c.h.b16 %v122
  %v592 = vunpack.c.l.b16 %v123
  %v593 = vunpack.c.h.b16 %v123
  %v594 = vunpack.c.l.b16 %v124
  %v595 = vunpack.c.h.b16 %v124
  %v596 = vunpack.c.l.b16 %v125
  %v597 = vunpack.c.h.b16 %v125
  %v598 = vunpack.c.l.b16 %v126
  %v599 = vunpack.c.h.b16 %v126
  %v600 = vunpack.c.l.b16 %v127
  %v601 = vunpack.c.h.b16 %v127
  %v602 = vunpack.c.l.b16 %v128
  %v603 = vunpack.c.h.b16 %v128
  %v604 = vunpack.c.l.b16 %v129
  %v605 = vunpack.c.h.b16 %v129
  %v606 = vunpack.c.l.b16 %v130
  %v607 = vunpack.c.h.b16 %v130
  %v608 = vunpack.c.l.b16 %v131
  %v609 = vunpack.c.h.b16 %v131
  %v610 = vunpack.c.l.b16 %v132
  %v611 = vunpack.c.h.b16 %v132
  %v612 = vunpack.c.l.b16 %v133
  %v613 = vunpack.c.h.b16 %v133
  %v614 = vunpack.c.l.b16 %v134
  %v615 = vunpack.c.h.b16 %v134
  %v616 = vunpack.c.l.b16 %v135
  %v617 = vunpack.c.h.b16 %v135
  %v618 = vunpack.c.l.b16 %v136
  %v619 = vunpack.c.h.b16 %v136
  %v620 = vunpack.c.l.b16 %v137
  %v621 = vunpack.c.h.b16 %v137
  %v622 = vunpack.c.l.b16 %v138
  %v623 = vunpack.c.h.b16 %v138
  %v624 = vunpack.c.l.b16 %v139
  %v625 = vunpack.c.h.b16 %v139
  %v626 = vunpack.c.l.b16 %v140
  %v627 = vunpack.c.h.b16 %v140
  %v628 = vunpack.c.l.b16 %v141
  %v629 = vunpack.c.h.b16 %v141
  %v630 = vunpack.c.l.b16 %v142
  %v631 = vunpack.c.h.b16 %v142
  %v632 = vunpack.c.l.b16 %v143
  %v633 = vunpack.c.h.b16 %v143
  %v634 = vunpack.c.l.b16 %v144
  %v635 = vunpack.c.h.b16 %v144
  %v636 = vunpack.c.l.b16 %v145
  %v637 = vunpack.c.h.b16 %v145
  %v638 = vunpack.c.l.b16 %v146
  %v639 = vunpack.c.h.b16 %v146
  %v640 = vunpack.c.l.b16 %v147
  %v641 = vunpack.c.h.b16 %v147
  %v642 = vunpack.c.l.b16 %v148
  %v643 = vunpack.c.h.b16 %v148
  %v644 = vunpack.c.l.b16 %v149
  %v645 = vunpack.c.h.b16 %v149
  %v646 = vunpack.c.l.b16 %v150
  %v647 = vunpack.c.h.b16 %v150
  %v648 = vunpack.c.l.b16 %v151
  %v649 = vunpack.c.h.b16 %v151
  %v650 = vunpack.c.l.b16 %v152
  %v651 = vunpack.c.h.b16 %v152
  %v652 = vunpack.c.l.b16 %v153
  %v653 = vunpack.c.h.b16 %v153
  %v654 = vunpack.c.l.b16 %v154
  %v655 = vunpack.c.h.b16 %v154
  %v656 = vunpack.c.l.b16 %v155
  %v657 = vunpack.c.h.b16 %v155
  %v658 = vunpack.c.l.b16 %v156
  %v659 = vunpack.c.h.b16 %v156
  %v660 = vunpack.c.l.b16 %v157
  %v661 = vunpack.c.h.b16 %v157
  %v662 = vunpack.c.l.b16 %v158
  %v663 = vunpack.c.h.b16 %v158
  %v664 = vunpack.c.l.b16 %v159
  %v665 = vunpack.c.h.b16 %v159
  %v666 = vunpack.c.l.b16 %v160
  %v667 = vunpack.c.h.b16 %v160
  %v668 = vunpack.c.l.b16 %v161
  %v669 = vunpack.c.h.b16 %v161
  %v670 = vunpack.c.l.b16 %v162
  %v671 = vunpack.c.h.b16 %v162
  %v672 = vunpack.c.l.b16 %v163
  %v673 = vunpack.c.h.b16 %v163
  %v674 = vunpack.c.l.b16 %v164
  %v675 = vunpack.c.h.b16 %v164
  %v676 = vunpack.c.l.b16 %v165
  %v677 = vunpack.c.h.b16 %v165
  %v678 = vunpack.c.l.b16 %v166
  %v679 = vunpack.c.h.b16 %v166
  %v680 = vunpack.c.l.b16 %v167
  %v681 = vunpack.c.h.b16 %v167
  %v682 = vunpack.c.l.b16 %v168
  %v683 = vunpack.c.h.b16 %v168
  %v684 = vunpack.c.l.b16 %v169
  %v685 = vunpack.c.h.b16 %v169
  %v686 = vunpack.c.l.b16 %v170
  %v687 = vunpack.c.h.b16 %v170
  %v688 = vunpack.c.l.b16 %v171
  %v689 = vunpack.c.h.b16 %v171
  %v690 = vunpack.c.l.b16 %v172
  %v691 = vunpack.c.h.b16 %v172
  %v692 = vunpack.c.l.b16 %v173
  %v693 = vunpack.c.h.b16 %v173
  %v694 = vunpack.c.l.b16 %v174
  %v695 = vunpack.c.h.b16 %v174
  %v696 = vunpack.c.l.b16 %v175
  %v697 = vunpack.c.h.b16 %v175
  %v698 = vunpack.c.l.b16 %v176
  %v699 = vunpack.c.h.b16 %v176
  %v700 = vunpack.c.l.b16 %v177
  %v701 = vunpack.c.h.b16 %v177
  %v702 = vpack.c.b16 %v416, %v414
  %v703 = vpack.c.b16 %v417, %v415
  %v704 = vpack.c.b16 %v420, %v418
  %v705 = vpack.c.b16 %v421, %v419
  %v706 = vpack.c.b16 %v424, %v422
  %v707 = vpack.c.b16 %v425, %v423
  %v708 = vpack.c.b16 %v428, %v426
  %v709 = vpack.c.b16 %v429, %v427
  %v710 = vpack.c.b16 %v432, %v430
  %v711 = vpack.c.b16 %v433, %v431
  %v712 = vpack.c.b16 %v436, %v434
  %v713 = vpack.c.b16 %v437, %v435
  %v714 = vpack.c.b16 %v440, %v438
  %v715 = vpack.c.b16 %v441, %v439
  %v716 = vpack.c.b16 %v444, %v442
  %v717 = vpack.c.b16 %v445, %v443
  %v718 = vpack.c.b16 %v448, %v446
  %v719 = vpack.c.b16 %v449, %v447
  %v720 = vpack.c.b16 %v452, %v450
  %v721 = vpack.c.b16 %v453, %v451
  %v722 = vpack.c.b16 %v456, %v454
  %v723 = vpack.c.b16 %v457, %v455
  %v724 = vpack.c.b16 %v460, %v458
  %v725 = vpack.c.b16 %v461, %v459
  %v726 = vpack.c.b16 %v464, %v462
  %v727 = vpack.c.b16 %v465, %v463
  %v728 = vpack.c.b16 %v468, %v466
  %v729 = vpack.c.b16 %v469, %v467
  %v730 = vpack.c.b16 %v472, %v470
  %v731 = vpack.c.b16 %v473, %v471
  %v732 = vpack.c.b16 %v476, %v474
  %v733 = vpack.c.b16 %v477, %v475
  %v734 = vpack.c.b16 %v480, %v478
  %v735 = vpack.c.b16 %v481, %v479
  %v736 = vpack.c.b16 %v484, %v482
  %v737 = vpack.c.b16 %v485, %v483
  %v738 = vpack.c.b16 %v488, %v486
  %v739 = vpack.c.b16 %v489, %v487
  %v740 = vpack.c.b16 %v492, %v490
  %v741 = vpack.c.b16 %v493, %v491
  %v742 = vpack.c.b16 %v496, %v494
  %v743 = vpack.c.b16 %v497, %v495
  %v744 = vpack.c.b16 %v500, %v498
  %v745 = vpack.c.b16 %v501, %v499
  %v746 = vpack.c.b16 %v504, %v502
  %v747 = vpack.c.b16 %v505, %v503
  %v748 = vpack.c.b16 %v508, %v506
  %v749 = vpack.c.b16 %v509, %v507
  %v750 = vpack.c.b16 %v512, %v510
  %v751 = vpack.c.b16 %v513, %v511
  %v752 = vpack.c.b16 %v516, %v514
  %v753 = vpack.c.b16 %v517, %v515
  %v754 = vpack.c.b16 %v520, %v518
  %v755 = vpack.c.b16 %v521, %v519
  %v756 = vpack.c.b16 %v524, %v522
  %v757 = vpack.c.b16 %v525, %v523
  %v758 = vpack.c.b16 %v528, %v526
  %v759 = vpack.c.b16 %v529, %v527
  %v760 = vpack.c.b16 %v532, %v530
  %v761 = vpack.c.b16 %v533, %v531
  %v762 = vpack.c.b16 %v536, %v534
  %v763 = vpack.c.b16 %v537, %v535
  %v764 = vpack.c.b16 %v540, %v538
  %v765 = vpack.c.b16 %v541, %v539
  %v766 = vpack.c.b16 %v544, %v542
  %v767 = vpack.c.b16 %v545, %v543
  %v768 = vpack.c.b16 %v548, %v546
  %v769 = vpack.c.b16 %v549, %v547
  %v770 = vpack.c.b16 %v552, %v550
  %v771 = vpack.c.b16 %v553, %v551
  %v772 = vpack.c.b16 %v556, %v554
  %v773 = vpack.c.b16 %v557, %v555
  %v774 = vpack.c.b16 %v560, %v558
  %v775 = vpack.c.b16 %v561, %v559
  %v776 = vpack.c.b16 %v564, %v562
  %v777 = vpack.c.b16 %v565, %v563
  %v778 = vpack.c.b16 %v568, %v566
  %v779 = vpack.c.b16 %v569, %v567
  %v780 = vpack.c.b16 %v572, %v570
  %v781 = vpack.c.b16 %v573, %v571
  %v782 = vpack.c.b16 %v576, %v574
  %v783 = vpack.c.b16 %v577, %v575
  %v784 = vpack.c.b16 %v580, %v578
  %v785 = vpack.c.b16 %v581, %v579
  %v786 = vpack.c.b16 %v584, %v582
  %v787 = vpack.c.b16 %v585, %v583
  %v788 = vpack.c.b16 %v588, %v586
  %v789 = vpack.c.b16 %v589, %v587
  %v790 = vpack.c.b16 %v592, %v590
  %v791 = vpack.c.b16 %v593, %v591
  %v792 = vpack.c.b16 %v596, %v594
  %v793 = vpack.c.b16 %v597, %v595
  %v794 = vpack.c.b16 %v600, %v598
  %v795 = vpack.c.b16 %v601, %v599
  %v796 = vpack.c.b16 %v604, %v602
  %v797 = vpack.c.b16 %v605, %v603
  %v798 = vpack.c.b16 %v608, %v606
  %v799 = vpack.c.b16 %v609, %v607
  %v800 = vpack.c.b16 %v612, %v610
  %v801 = vpack.c.b16 %v613, %v611
  %v802 = vpack.c.b16 %v616, %v614
  %v803 = vpack.c.b16 %v617, %v615
  %v804 = vpack.c.b16 %v620, %v618
  %v805 = vpack.c.b16 %v621, %v619
  %v806 = vpack.c.b16 %v624, %v622
  %v807 = vpack.c.b16 %v625, %v623
  %v808 = vpack.c.b16 %v628, %v626
  %v809 = vpack.c.b16 %v629, %v627
  %v810 = vpack.c.b16 %v632, %v630
  %v811 = vpack.c.b16 %v633, %v631
  %v812 = vpack.c.b16 %v636, %v634
  %v813 = vpack.c.b16 %v637, %v635
  %v814 = vpack.c.b16 %v640, %v638
  %v815 = vpack.c.b16 %v641, %v639
  %v816 = vpack.c.b16 %v644, %v642
  %v817 = vpack.c.b16 %v645, %v643
  %v818 = vpack.c.b16 %v648, %v646
  %v819 = vpack.c.b16 %v649, %v647
  %v820 = vpack.c.b16 %v652, %v650
  %v821 = vpack.c.b16 %v653, %v651
  %v822 = vpack.c.b16 %v656, %v654
  %v823 = vpack.c.b16 %v657, %v655
  %v824 = vpack.c.b16 %v660, %v658
  %v825 = vpack.c.b16 %v661, %v659
  %v826 = vpack.c.b16 %v664, %v662
  %v827 = vpack.c.b16 %v665, %v663
  %v828 = vpack.c.b16 %v668, %v666
  %v829 = vpack.c.b16 %v669, %v667
  %v830 = vpack.c.b16 %v672, %v670
  %v831 = vpack.c.b16 %v673, %v671
  %v832 = vpack.c.b16 %v676, %v674
  %v833 = vpack.c.b16 %v677, %v675
  %v834 = vpack.c.b16 %v680, %v678
  %v835 = vpack.c.b16 %v681, %v679
  %v836 = vpack.c.b16 %v684, %v682
  %v837 = vpack.c.b16 %v685, %v683
  %v838 = vpack.c.b16 %v688, %v686
  %v839 = vpack.c.b16 %v689, %v687
  %v840 = vpack.c.b16 %v692, %v690
  %v841 = vpack.c.b16 %v693, %v691
  %v842 = vpack.c.b16 %v696, %v694
  %v843 = vpack.c.b16 %v697, %v695
  %v844 = vpack.c.b16 %v700, %v698
  %v845 = vpack.c.b16 %v701, %v699
  %990 = vmatpush.bf16.msra.mxu0 %v716
  %991 = vmatpush.bf16.msra.mxu0 %v714
  %992 = vmatpush.bf16.msra.mxu0 %v712
  %993 = vmatpush.bf16.msra.mxu0 %v710
  %994 = vmatpush.bf16.msra.mxu0 %v708
  %995 = vmatpush.bf16.msra.mxu0 %v706
  %996 = vmatpush.bf16.msra.mxu0 %v704
  %997 = vmatpush.bf16.msra.mxu0 %v702
  %998 = vmatmul.bf16.gmra.mxu0 %v234
  %v999 = vpop.f32.mrf.mxu0
  %v1000 = vadd.f32 0.0, %v999
  %v1001 = vpop.f32.mrf.mxu0
  %v1002 = vadd.f32 0.0, %v1001
  %1003 = vmatmul.bf16.gmra.mxu0 %v243
  %v1004 = vpop.f32.mrf.mxu0
  %v1005 = vadd.f32 0.0, %v1004
  %v1006 = vpop.f32.mrf.mxu0
  %v1007 = vadd.f32 0.0, %v1006
  %1008 = vdwg.mxu0
  %1009 = vmatpush.bf16.msra.mxu0 %v732
  %1010 = vmatpush.bf16.msra.mxu0 %v730
  %1011 = vmatpush.bf16.msra.mxu0 %v728
  %1012 = vmatpush.bf16.msra.mxu0 %v726
  %1013 = vmatpush.bf16.msra.mxu0 %v724
  %1014 = vmatpush.bf16.msra.mxu0 %v722
  %1015 = vmatpush.bf16.msra.mxu0 %v720
  %1016 = vmatpush.bf16.msra.mxu0 %v718
  %1017 = vmatmul.bf16.gmra.mxu0 %v235
  %v1018 = vpop.f32.mrf.mxu0
  %v1019 = vadd.f32 %v1000, %v1018
  %v1020 = vpop.f32.mrf.mxu0
  %v1021 = vadd.f32 %v1002, %v1020
  %1022 = vmatmul.bf16.gmra.mxu0 %v244
  %v1023 = vpop.f32.mrf.mxu0
  %v1024 = vadd.f32 %v1005, %v1023
  %v1025 = vpop.f32.mrf.mxu0
  %v1026 = vadd.f32 %v1007, %v1025
  %1027 = vdwg.mxu0
  %1028 = vmatpush.bf16.msra.mxu0 %v748
  %1029 = vmatpush.bf16.msra.mxu0 %v746
  %1030 = vmatpush.bf16.msra.mxu0 %v744
  %1031 = vmatpush.bf16.msra.mxu0 %v742
  %1032 = vmatpush.bf16.msra.mxu0 %v740
  %1033 = vmatpush.bf16.msra.mxu0 %v738
  %1034 = vmatpush.bf16.msra.mxu0 %v736
  %1035 = vmatpush.bf16.msra.mxu0 %v734
  %1036 = vmatmul.bf16.gmra.mxu0 %v236
  %v1037 = vpop.f32.mrf.mxu0
  %v1038 = vadd.f32 %v1019, %v1037
  %v1039 = vpop.f32.mrf.mxu0
  %v1040 = vadd.f32 %v1021, %v1039
  %1041 = vmatmul.bf16.gmra.mxu0 %v245
  %v1042 = vpop.f32.mrf.mxu0
  %v1043 = vadd.f32 %v1024, %v1042
  %v1044 = vpop.f32.mrf.mxu0
  %v1045 = vadd.f32 %v1026, %v1044
  %1046 = vdwg.mxu0
  %1047 = vmatpush.bf16.msra.mxu0 %v764
  %1048 = vmatpush.bf16.msra.mxu0 %v762
  %1049 = vmatpush.bf16.msra.mxu0 %v760
  %1050 = vmatpush.bf16.msra.mxu0 %v758
  %1051 = vmatpush.bf16.msra.mxu0 %v756
  %1052 = vmatpush.bf16.msra.mxu0 %v754
  %1053 = vmatpush.bf16.msra.mxu0 %v752
  %1054 = vmatpush.bf16.msra.mxu0 %v750
  %1055 = vmatmul.bf16.gmra.mxu0 %v237
  %v1056 = vpop.f32.mrf.mxu0
  %v1057 = vadd.f32 %v1038, %v1056
  %v1058 = vpop.f32.mrf.mxu0
  %v1059 = vadd.f32 %v1040, %v1058
  %1060 = vmatmul.bf16.gmra.mxu0 %v246
  %v1061 = vpop.f32.mrf.mxu0
  %v1062 = vadd.f32 %v1043, %v1061
  %v1063 = vpop.f32.mrf.mxu0
  %v1064 = vadd.f32 %v1045, %v1063
  %1065 = vdwg.mxu0
  %1066 = vmatpush.bf16.msra.mxu0 %v780
  %1067 = vmatpush.bf16.msra.mxu0 %v778
  %1068 = vmatpush.bf16.msra.mxu0 %v776
  %1069 = vmatpush.bf16.msra.mxu0 %v774
  %1070 = vmatpush.bf16.msra.mxu0 %v772
  %1071 = vmatpush.bf16.msra.mxu0 %v770
  %1072 = vmatpush.bf16.msra.mxu0 %v768
  %1073 = vmatpush.bf16.msra.mxu0 %v766
  %1074 = vmatmul.bf16.gmra.mxu0 %v238
  %v1075 = vpop.f32.mrf.mxu0
  %v1076 = vadd.f32 %v1057, %v1075
  %v1077 = vpop.f32.mrf.mxu0
  %v1078 = vadd.f32 %v1059, %v1077
  %1079 = vmatmul.bf16.gmra.mxu0 %v247
  %v1080 = vpop.f32.mrf.mxu0
  %v1081 = vadd.f32 %v1062, %v1080
  %v1082 = vpop.f32.mrf.mxu0
  %v1083 = vadd.f32 %v1064, %v1082
  %1084 = vdwg.mxu0
  %1085 = vmatpush.bf16.msra.mxu0 %v796
  %1086 = vmatpush.bf16.msra.mxu0 %v794
  %1087 = vmatpush.bf16.msra.mxu0 %v792
  %1088 = vmatpush.bf16.msra.mxu0 %v790
  %1089 = vmatpush.bf16.msra.mxu0 %v788
  %1090 = vmatpush.bf16.msra.mxu0 %v786
  %1091 = vmatpush.bf16.msra.mxu0 %v784
  %1092 = vmatpush.bf16.msra.mxu0 %v782
  %1093 = vmatmul.bf16.gmra.mxu0 %v239
  %v1094 = vpop.f32.mrf.mxu0
  %v1095 = vadd.f32 %v1076, %v1094
  %v1096 = vpop.f32.mrf.mxu0
  %v1097 = vadd.f32 %v1078, %v1096
  %1098 = vmatmul.bf16.gmra.mxu0 %v248
  %v1099 = vpop.f32.mrf.mxu0
  %v1100 = vadd.f32 %v1081, %v1099
  %v1101 = vpop.f32.mrf.mxu0
  %v1102 = vadd.f32 %v1083, %v1101
  %1103 = vdwg.mxu0
  %1104 = vmatpush.bf16.msra.mxu0 %v812
  %1105 = vmatpush.bf16.msra.mxu0 %v810
  %1106 = vmatpush.bf16.msra.mxu0 %v808
  %1107 = vmatpush.bf16.msra.mxu0 %v806
  %1108 = vmatpush.bf16.msra.mxu0 %v804
  %1109 = vmatpush.bf16.msra.mxu0 %v802
  %1110 = vmatpush.bf16.msra.mxu0 %v800
  %1111 = vmatpush.bf16.msra.mxu0 %v798
  %1112 = vmatmul.bf16.gmra.mxu0 %v240
  %v1113 = vpop.f32.mrf.mxu0
  %v1114 = vadd.f32 %v1095, %v1113
  %v1115 = vpop.f32.mrf.mxu0
  %v1116 = vadd.f32 %v1097, %v1115
  %1117 = vmatmul.bf16.gmra.mxu0 %v249
  %v1118 = vpop.f32.mrf.mxu0
  %v1119 = vadd.f32 %v1100, %v1118
  %v1120 = vpop.f32.mrf.mxu0
  %v1121 = vadd.f32 %v1102, %v1120
  %1122 = vdwg.mxu0
  %1123 = vmatpush.bf16.msra.mxu0 %v828
  %1124 = vmatpush.bf16.msra.mxu0 %v826
  %1125 = vmatpush.bf16.msra.mxu0 %v824
  %1126 = vmatpush.bf16.msra.mxu0 %v822
  %1127 = vmatpush.bf16.msra.mxu0 %v820
  %1128 = vmatpush.bf16.msra.mxu0 %v818
  %1129 = vmatpush.bf16.msra.mxu0 %v816
  %1130 = vmatpush.bf16.msra.mxu0 %v814
  %1131 = vmatmul.bf16.gmra.mxu0 %v241
  %v1132 = vpop.f32.mrf.mxu0
  %v1133 = vadd.f32 %v1114, %v1132
  %v1134 = vpop.f32.mrf.mxu0
  %v1135 = vadd.f32 %v1116, %v1134
  %1136 = vmatmul.bf16.gmra.mxu0 %v250
  %v1137 = vpop.f32.mrf.mxu0
  %v1138 = vadd.f32 %v1119, %v1137
  %v1139 = vpop.f32.mrf.mxu0
  %v1140 = vadd.f32 %v1121, %v1139
  %1141 = vdwg.mxu0
  %1142 = vmatpush.bf16.msra.mxu0 %v844
  %1143 = vmatpush.bf16.msra.mxu0 %v842
  %1144 = vmatpush.bf16.msra.mxu0 %v840
  %1145 = vmatpush.bf16.msra.mxu0 %v838
  %1146 = vmatpush.bf16.msra.mxu0 %v836
  %1147 = vmatpush.bf16.msra.mxu0 %v834
  %1148 = vmatpush.bf16.msra.mxu0 %v832
  %1149 = vmatpush.bf16.msra.mxu0 %v830
  %1150 = vmatmul.bf16.gmra.mxu0 %v242
  %v1151 = vpop.f32.mrf.mxu0
  %v1152 = vadd.f32 %v1133, %v1151
  %v1153 = vpop.f32.mrf.mxu0
  %v1154 = vadd.f32 %v1135, %v1153
  %1155 = vmatmul.bf16.gmra.mxu0 %v251
  %v1156 = vpop.f32.mrf.mxu0
  %v1157 = vadd.f32 %v1138, %v1156
  %v1158 = vpop.f32.mrf.mxu0
  %v1159 = vadd.f32 %v1140, %v1158
  %1160 = vdwg.mxu0
  %1161 = vmatpush.bf16.msra.mxu0 %v717
  %1162 = vmatpush.bf16.msra.mxu0 %v715
  %1163 = vmatpush.bf16.msra.mxu0 %v713
  %1164 = vmatpush.bf16.msra.mxu0 %v711
  %1165 = vmatpush.bf16.msra.mxu0 %v709
  %1166 = vmatpush.bf16.msra.mxu0 %v707
  %1167 = vmatpush.bf16.msra.mxu0 %v705
  %1168 = vmatpush.bf16.msra.mxu0 %v703
  %1169 = vmatmul.bf16.gmra.mxu0 %v234
  %v1170 = vpop.f32.mrf.mxu0
  %v1171 = vadd.f32 0.0, %v1170
  %v1172 = vpop.f32.mrf.mxu0
  %v1173 = vadd.f32 0.0, %v1172
  %1174 = vmatmul.bf16.gmra.mxu0 %v243
  %v1175 = vpop.f32.mrf.mxu0
  %v1176 = vadd.f32 0.0, %v1175
  %v1177 = vpop.f32.mrf.mxu0
  %v1178 = vadd.f32 0.0, %v1177
  %1179 = vdwg.mxu0
  %1180 = vmatpush.bf16.msra.mxu0 %v733
  %1181 = vmatpush.bf16.msra.mxu0 %v731
  %1182 = vmatpush.bf16.msra.mxu0 %v729
  %1183 = vmatpush.bf16.msra.mxu0 %v727
  %1184 = vmatpush.bf16.msra.mxu0 %v725
  %1185 = vmatpush.bf16.msra.mxu0 %v723
  %1186 = vmatpush.bf16.msra.mxu0 %v721
  %1187 = vmatpush.bf16.msra.mxu0 %v719
  %1188 = vmatmul.bf16.gmra.mxu0 %v235
  %v1189 = vpop.f32.mrf.mxu0
  %v1190 = vadd.f32 %v1171, %v1189
  %v1191 = vpop.f32.mrf.mxu0
  %v1192 = vadd.f32 %v1173, %v1191
  %1193 = vmatmul.bf16.gmra.mxu0 %v244
  %v1194 = vpop.f32.mrf.mxu0
  %v1195 = vadd.f32 %v1176, %v1194
  %v1196 = vpop.f32.mrf.mxu0
  %v1197 = vadd.f32 %v1178, %v1196
  %1198 = vdwg.mxu0
  %1199 = vmatpush.bf16.msra.mxu0 %v749
  %1200 = vmatpush.bf16.msra.mxu0 %v747
  %1201 = vmatpush.bf16.msra.mxu0 %v745
  %1202 = vmatpush.bf16.msra.mxu0 %v743
  %1203 = vmatpush.bf16.msra.mxu0 %v741
  %1204 = vmatpush.bf16.msra.mxu0 %v739
  %1205 = vmatpush.bf16.msra.mxu0 %v737
  %1206 = vmatpush.bf16.msra.mxu0 %v735
  %1207 = vmatmul.bf16.gmra.mxu0 %v236
  %v1208 = vpop.f32.mrf.mxu0
  %v1209 = vadd.f32 %v1190, %v1208
  %v1210 = vpop.f32.mrf.mxu0
  %v1211 = vadd.f32 %v1192, %v1210
  %1212 = vmatmul.bf16.gmra.mxu0 %v245
  %v1213 = vpop.f32.mrf.mxu0
  %v1214 = vadd.f32 %v1195, %v1213
  %v1215 = vpop.f32.mrf.mxu0
  %v1216 = vadd.f32 %v1197, %v1215
  %1217 = vdwg.mxu0
  %1218 = vmatpush.bf16.msra.mxu0 %v765
  %1219 = vmatpush.bf16.msra.mxu0 %v763
  %1220 = vmatpush.bf16.msra.mxu0 %v761
  %1221 = vmatpush.bf16.msra.mxu0 %v759
  %1222 = vmatpush.bf16.msra.mxu0 %v757
  %1223 = vmatpush.bf16.msra.mxu0 %v755
  %1224 = vmatpush.bf16.msra.mxu0 %v753
  %1225 = vmatpush.bf16.msra.mxu0 %v751
  %1226 = vmatmul.bf16.gmra.mxu0 %v237
  %v1227 = vpop.f32.mrf.mxu0
  %v1228 = vadd.f32 %v1209, %v1227
  %v1229 = vpop.f32.mrf.mxu0
  %v1230 = vadd.f32 %v1211, %v1229
  %1231 = vmatmul.bf16.gmra.mxu0 %v246
  %v1232 = vpop.f32.mrf.mxu0
  %v1233 = vadd.f32 %v1214, %v1232
  %v1234 = vpop.f32.mrf.mxu0
  %v1235 = vadd.f32 %v1216, %v1234
  %1236 = vdwg.mxu0
  %1237 = vmatpush.bf16.msra.mxu0 %v781
  %1238 = vmatpush.bf16.msra.mxu0 %v779
  %1239 = vmatpush.bf16.msra.mxu0 %v777
  %1240 = vmatpush.bf16.msra.mxu0 %v775
  %1241 = vmatpush.bf16.msra.mxu0 %v773
  %1242 = vmatpush.bf16.msra.mxu0 %v771
  %1243 = vmatpush.bf16.msra.mxu0 %v769
  %1244 = vmatpush.bf16.msra.mxu0 %v767
  %1245 = vmatmul.bf16.gmra.mxu0 %v238
  %v1246 = vpop.f32.mrf.mxu0
  %v1247 = vadd.f32 %v1228, %v1246
  %v1248 = vpop.f32.mrf.mxu0
  %v1249 = vadd.f32 %v1230, %v1248
  %1250 = vmatmul.bf16.gmra.mxu0 %v247
  %v1251 = vpop.f32.mrf.mxu0
  %v1252 = vadd.f32 %v1233, %v1251
  %v1253 = vpop.f32.mrf.mxu0
  %v1254 = vadd.f32 %v1235, %v1253
  %1255 = vdwg.mxu0
  %1256 = vmatpush.bf16.msra.mxu0 %v797
  %1257 = vmatpush.bf16.msra.mxu0 %v795
  %1258 = vmatpush.bf16.msra.mxu0 %v793
  %1259 = vmatpush.bf16.msra.mxu0 %v791
  %1260 = vmatpush.bf16.msra.mxu0 %v789
  %1261 = vmatpush.bf16.msra.mxu0 %v787
  %1262 = vmatpush.bf16.msra.mxu0 %v785
  %1263 = vmatpush.bf16.msra.mxu0 %v783
  %1264 = vmatmul.bf16.gmra.mxu0 %v239
  %v1265 = vpop.f32.mrf.mxu0
  %v1266 = vadd.f32 %v1247, %v1265
  %v1267 = vpop.f32.mrf.mxu0
  %v1268 = vadd.f32 %v1249, %v1267
  %1269 = vmatmul.bf16.gmra.mxu0 %v248
  %v1270 = vpop.f32.mrf.mxu0
  %v1271 = vadd.f32 %v1252, %v1270
  %v1272 = vpop.f32.mrf.mxu0
  %v1273 = vadd.f32 %v1254, %v1272
  %1274 = vdwg.mxu0
  %1275 = vmatpush.bf16.msra.mxu0 %v813
  %1276 = vmatpush.bf16.msra.mxu0 %v811
  %1277 = vmatpush.bf16.msra.mxu0 %v809
  %1278 = vmatpush.bf16.msra.mxu0 %v807
  %1279 = vmatpush.bf16.msra.mxu0 %v805
  %1280 = vmatpush.bf16.msra.mxu0 %v803
  %1281 = vmatpush.bf16.msra.mxu0 %v801
  %1282 = vmatpush.bf16.msra.mxu0 %v799
  %1283 = vmatmul.bf16.gmra.mxu0 %v240
  %v1284 = vpop.f32.mrf.mxu0
  %v1285 = vadd.f32 %v1266, %v1284
  %v1286 = vpop.f32.mrf.mxu0
  %v1287 = vadd.f32 %v1268, %v1286
  %1288 = vmatmul.bf16.gmra.mxu0 %v249
  %v1289 = vpop.f32.mrf.mxu0
  %v1290 = vadd.f32 %v1271, %v1289
  %v1291 = vpop.f32.mrf.mxu0
  %v1292 = vadd.f32 %v1273, %v1291
  %1293 = vdwg.mxu0
  %1294 = vmatpush.bf16.msra.mxu0 %v829
  %1295 = vmatpush.bf16.msra.mxu0 %v827
  %1296 = vmatpush.bf16.msra.mxu0 %v825
  %1297 = vmatpush.bf16.msra.mxu0 %v823
  %1298 = vmatpush.bf16.msra.mxu0 %v821
  %1299 = vmatpush.bf16.msra.mxu0 %v819
  %1300 = vmatpush.bf16.msra.mxu0 %v817
  %1301 = vmatpush.bf16.msra.mxu0 %v815
  %1302 = vmatmul.bf16.gmra.mxu0 %v241
  %v1303 = vpop.f32.mrf.mxu0
  %v1304 = vadd.f32 %v1285, %v1303
  %v1305 = vpop.f32.mrf.mxu0
  %v1306 = vadd.f32 %v1287, %v1305
  %1307 = vmatmul.bf16.gmra.mxu0 %v250
  %v1308 = vpop.f32.mrf.mxu0
  %v1309 = vadd.f32 %v1290, %v1308
  %v1310 = vpop.f32.mrf.mxu0
  %v1311 = vadd.f32 %v1292, %v1310
  %1312 = vdwg.mxu0
  %1313 = vmatpush.bf16.msra.mxu0 %v845
  %1314 = vmatpush.bf16.msra.mxu0 %v843
  %1315 = vmatpush.bf16.msra.mxu0 %v841
  %1316 = vmatpush.bf16.msra.mxu0 %v839
  %1317 = vmatpush.bf16.msra.mxu0 %v837
  %1318 = vmatpush.bf16.msra.mxu0 %v835
  %1319 = vmatpush.bf16.msra.mxu0 %v833
  %1320 = vmatpush.bf16.msra.mxu0 %v831
  %1321 = vmatmul.bf16.gmra.mxu0 %v242
  %v1322 = vpop.f32.mrf.mxu0
  %v1323 = vadd.f32 %v1304, %v1322
  %v1324 = vpop.f32.mrf.mxu0
  %v1325 = vadd.f32 %v1306, %v1324
  %1326 = vmatmul.bf16.gmra.mxu0 %v251
  %v1327 = vpop.f32.mrf.mxu0
  %v1328 = vadd.f32 %v1309, %v1327
  %v1329 = vpop.f32.mrf.mxu0
  %v1330 = vadd.f32 %v1311, %v1329
  %1331 = vdwg.mxu0
  %1332 = vst [vmem:[%s2] sm:$0xff] %v1152
  %1333 = vst [vmem:[%s2 + $0x8] sm:$0xff] %v1323
  %1334 = vst [vmem:[%s2 + $0x10] sm:$0xff] %v1154
  %1335 = vst [vmem:[%s2 + $0x18] sm:$0xff] %v1325
  %1336 = vst [vmem:[%s2 + $0x20] sm:$0xff] %v1157
  %1337 = vst [vmem:[%s2 + $0x28] sm:$0xff] %v1328
  %1338 = vst [vmem:[%s2 + $0x30] sm:$0xff] %v1159
  %1339 = vst [vmem:[%s2 + $0x38] sm:$0xff] %v1330
  %p1340 = scmp.eq.s32.totalorder 0, 0
  // Predicated region
  $region10: #{common_discriminator.13} parent=0 // pred_check
    %p1341 = pneg %p1340
  $region11: #{common_discriminator.13} parent=0 // pred_check_branch
    %1343 = sbr.rel (%p1341) target = $region13
  $region12: #{common_discriminator.13} parent=0 // pred_region
    %v1344 = vlaneseq
    %vm1345 = vcmp.ge.s32.totalorder %v1344, 0
    %vm1346 = vcmp.lt.s32.totalorder %v1344, 256
    %vm1347 = vmand %vm1345, %vm1346
    %1348 = vst.msk [vmem:[%s3] sm:$0x3] %vm1347, 0.0
    %1349 = vst.msk [vmem:[%s4] sm:$0x3] %vm1347, 0.0
  $region13: #{common_discriminator.13} parent=0 // pred_fallthru
    _
  %v1350 = vld [vmem:[%s3] sm:$0x3]
  %v1351 = vadd.f32 %v1152, %v1154
  %v1352 = vadd.f32 %v1351, %v1157
  %v1353 = vadd.f32 %v1352, %v1159
  %v1354 = vrot.slane %v1353, 4
  %v1355 = vadd.f32 %v1353, %v1354
  %v1356 = vrot.slane %v1355, 2
  %v1357 = vadd.f32 %v1355, %v1356
  %v1358 = vrot.slane %v1357, 1
  %v1359 = vadd.f32 %v1357, %v1358
  %v1360 = vadd.f32 %v1323, %v1325
  %v1361 = vadd.f32 %v1360, %v1328
  %v1362 = vadd.f32 %v1361, %v1330
  %v1363 = vrot.slane %v1362, 4
  %v1364 = vadd.f32 %v1362, %v1363
  %v1365 = vrot.slane %v1364, 2
  %v1366 = vadd.f32 %v1364, %v1365
  %v1367 = vrot.slane %v1366, 1
  %v1368 = vadd.f32 %v1366, %v1367
  %v1371 = vrot.slane %v1368, 7
  %vm1372 = vcmask 1040384
  %v1373 = vsel %vm1372, %v1359, %v1371
  %v1375 = vadd.f32 %v1350, %v1373
  %v1376 = vlaneseq
  %vm1377 = vcmp.ge.s32.totalorder %v1376, 0
  %vm1378 = vcmp.lt.s32.totalorder %v1376, 256
  %vm1379 = vmand %vm1377, %vm1378
  %1380 = vst.msk [vmem:[%s3] sm:$0x3] %vm1379, %v1375
  %v1381 = vld [vmem:[%s4] sm:$0x3]
  %v1382 = vmul.f32 %v1152, %v1152
  %v1383 = vmul.f32 %v1323, %v1323
  %v1384 = vmul.f32 %v1154, %v1154
  %v1385 = vmul.f32 %v1325, %v1325
  %v1386 = vmul.f32 %v1157, %v1157
  %v1387 = vmul.f32 %v1328, %v1328
  %v1388 = vmul.f32 %v1159, %v1159
  %v1389 = vmul.f32 %v1330, %v1330
  %v1390 = vadd.f32 %v1382, %v1384
  %v1391 = vadd.f32 %v1390, %v1386
  %v1392 = vadd.f32 %v1391, %v1388
  %v1393 = vrot.slane %v1392, 4
  %v1394 = vadd.f32 %v1392, %v1393
  %v1395 = vrot.slane %v1394, 2
  %v1396 = vadd.f32 %v1394, %v1395
  %v1397 = vrot.slane %v1396, 1
  %v1398 = vadd.f32 %v1396, %v1397
  %v1399 = vadd.f32 %v1383, %v1385
  %v1400 = vadd.f32 %v1399, %v1387
  %v1401 = vadd.f32 %v1400, %v1389
  %v1402 = vrot.slane %v1401, 4
  %v1403 = vadd.f32 %v1401, %v1402
  %v1404 = vrot.slane %v1403, 2
  %v1405 = vadd.f32 %v1403, %v1404
  %v1406 = vrot.slane %v1405, 1
  %v1407 = vadd.f32 %v1405, %v1406
  %v1410 = vrot.slane %v1407, 7
  %v1411 = vsel %vm1372, %v1398, %v1410
  %v1413 = vadd.f32 %v1381, %v1411
  %1414 = vst.msk [vmem:[%s4] sm:$0x3] %vm1379, %v1413
  // Predicated region
  $region14: #{common_discriminator.13} parent=0 // pred_check
    _
  $region15: #{common_discriminator.13} parent=0 // pred_check_branch
    %1416 = sbr.rel (0) target = $region17
  $region16: #{common_discriminator.13} parent=0 // pred_region
    _
  $region17: #{common_discriminator.13} parent=0 // pred_fallthru
    _
  // Predicated region
  $region18: #{common_discriminator.13} parent=0 // pred_check
    _
  $region19: #{common_discriminator.13} parent=0 // pred_check_branch
    %1418 = sbr.rel (0) target = $region21
  $region20: #{common_discriminator.13} parent=0 // pred_region
    _
  $region21: #{common_discriminator.13} parent=0 // pred_fallthru
    _
  // Predicated region
  $region22: #{common_discriminator.13} parent=0 // pred_check
    _
  $region23: #{common_discriminator.13} parent=0 // pred_check_branch
    %1420 = sbr.rel (0) target = $region25
  $region24: #{common_discriminator.13} parent=0 // pred_region
    _
  $region25: #{common_discriminator.13} parent=0 // pred_fallthru
    _
  // Predicated region
  $region26: #{common_discriminator.13} parent=0 // pred_check
    _
  $region27: #{common_discriminator.13} parent=0 // pred_check_branch
    %1422 = sbr.rel (0) target = $region29
  $region28: #{common_discriminator.13} parent=0 // pred_region
    _
  $region29: #{common_discriminator.13} parent=0 // pred_fallthru
    _
  // Predicated region
  $region30: #{common_discriminator.13} parent=0 // pred_check
    _
  $region31: #{common_discriminator.13} parent=0 // pred_check_branch
    %1424 = sbr.rel (0) target = $region33
  $region32: #{common_discriminator.13} parent=0 // pred_region
    _
  $region33: #{common_discriminator.13} parent=0 // pred_fallthru
    _
  // Predicated region
  $region34: #{common_discriminator.13} parent=0 // pred_check
    _
  $region35: #{common_discriminator.13} parent=0 // pred_check_branch
    %1426 = sbr.rel (0) target = $region37
  $region36: #{common_discriminator.13} parent=0 // pred_region
    _
  $region37: #{common_discriminator.13} parent=0 // pred_fallthru
    _

// kernel: common_discriminator.17
$region0: #{common_discriminator.17}
  #allocation0 [shape = 'u32[]', space=smem, size = 0x4, offset = 0x4, fixed_abs, tag = 'smem constant byte address 0x4 - core index']
  #allocation1 [shape = 'u32[72,128]{1,0:T(1,128)}', space=vmem, size = 0x9000, scoped, tag = 'internal scratch']
  #allocation2 [shape = 'f32[2,512]{1,0:T(2,128)}', space=vmem, size = 0x1000, scoped, tag = 'scratch operand']
  #allocation3 [shape = 'f32[1,1]{1,0:T(1,128)S(1)}', space=vmem, size = 0x200, scoped, tag = 'scoped memory for common_discriminator.17']
  %s0 = inlined_call_operand.vmem [shape: bf16[2,8,512], index: 0, kind: input, shape index: {}]
  %s1 = inlined_call_operand.vmem [shape: f32[1,512], index: 1, kind: input, shape index: {}]
  %s2 = inlined_call_operand.<no memory space> [shape: f32[1,1], index: 2, kind: input, shape index: {}]
  %s3 = inlined_call_operand.vmem [shape: f32[2,1], index: 3, kind: output, shape index: {}]
  %s4 = sld [smem:[#allocation0]]
  $region30: #{common_discriminator.17} parent=0
    _
  %s6 = ssub.s32 1, %s4
  %s7 = scalar_select 0, %s6, %s4
  %v8 = vstv %s2
  %9 = vst [vmem:[#allocation3] sm:$0x1] %v8
  // Predicated region
  $region2: #{common_discriminator.17} parent=0 // pred_check
    _
  $region3: #{common_discriminator.17} parent=0 // pred_check_branch
    %11 = sbr.rel (0) target = $region5
  $region4: #{common_discriminator.17} parent=0 // pred_region
    _
  $region5: #{common_discriminator.17} parent=0 // pred_fallthru
    _
  // Predicated region
  $region6: #{common_discriminator.17} parent=0 // pred_check
    _
  $region7: #{common_discriminator.17} parent=0 // pred_check_branch
    %13 = sbr.rel (0) target = $region9
  $region8: #{common_discriminator.17} parent=0 // pred_region
    _
  $region9: #{common_discriminator.17} parent=0 // pred_fallthru
    _
  // Predicated region
  $region10: #{common_discriminator.17} parent=0 // pred_check
    _
  $region11: #{common_discriminator.17} parent=0 // pred_check_branch
    %15 = sbr.rel (0) target = $region13
  $region12: #{common_discriminator.17} parent=0 // pred_region
    _
  $region13: #{common_discriminator.17} parent=0 // pred_fallthru
    _
  %p16 = scmp.eq.s32.totalorder 0, 0
  // Predicated region
  $region14: #{common_discriminator.17} parent=0 // pred_check
    %p17 = pneg %p16
  $region15: #{common_discriminator.17} parent=0 // pred_check_branch
    %19 = sbr.rel (%p17) target = $region17
  $region16: #{common_discriminator.17} parent=0 // pred_region
    %20 = vst [vmem:[#allocation2] sm:$0xff] 0.0
  $region17: #{common_discriminator.17} parent=0 // pred_fallthru
    _
  %v21 = vld [vmem:[#allocation2] sm:$0xff]
  %v22 = vld [vmem:[%s0] sm:$0xff]
  %v23 = vld [vmem:[%s0 + $0x8] sm:$0xff]
  %v24 = vld [vmem:[%s0 + $0x10] sm:$0xff]
  %v25 = vld [vmem:[%s0 + $0x18] sm:$0xff]
  %v26 = vunpack.c.l.bf16 %v22
  %v27 = vunpack.c.h.bf16 %v22
  %v28 = vunpack.c.l.bf16 %v23
  %v29 = vunpack.c.h.bf16 %v23
  %v30 = vunpack.c.l.bf16 %v24
  %v31 = vunpack.c.h.bf16 %v24
  %v32 = vunpack.c.l.bf16 %v25
  %v33 = vunpack.c.h.bf16 %v25
  %v34 = vrot.slane %v26, 4
  %v35 = vadd.f32 %v26, %v34
  %v36 = vrot.slane %v35, 2
  %v37 = vadd.f32 %v35, %v36
  %v38 = vrot.slane %v37, 1
  %v39 = vadd.f32 %v37, %v38
  %v40 = vrot.slane %v27, 4
  %v41 = vadd.f32 %v27, %v40
  %v42 = vrot.slane %v41, 2
  %v43 = vadd.f32 %v41, %v42
  %v44 = vrot.slane %v43, 1
  %v45 = vadd.f32 %v43, %v44
  %v46 = vrot.slane %v28, 4
  %v47 = vadd.f32 %v28, %v46
  %v48 = vrot.slane %v47, 2
  %v49 = vadd.f32 %v47, %v48
  %v50 = vrot.slane %v49, 1
  %v51 = vadd.f32 %v49, %v50
  %v52 = vrot.slane %v29, 4
  %v53 = vadd.f32 %v29, %v52
  %v54 = vrot.slane %v53, 2
  %v55 = vadd.f32 %v53, %v54
  %v56 = vrot.slane %v55, 1
  %v57 = vadd.f32 %v55, %v56
  %v58 = vrot.slane %v30, 4
  %v59 = vadd.f32 %v30, %v58
  %v60 = vrot.slane %v59, 2
  %v61 = vadd.f32 %v59, %v60
  %v62 = vrot.slane %v61, 1
  %v63 = vadd.f32 %v61, %v62
  %v64 = vrot.slane %v31, 4
  %v65 = vadd.f32 %v31, %v64
  %v66 = vrot.slane %v65, 2
  %v67 = vadd.f32 %v65, %v66
  %v68 = vrot.slane %v67, 1
  %v69 = vadd.f32 %v67, %v68
  %v70 = vrot.slane %v32, 4
  %v71 = vadd.f32 %v32, %v70
  %v72 = vrot.slane %v71, 2
  %v73 = vadd.f32 %v71, %v72
  %v74 = vrot.slane %v73, 1
  %v75 = vadd.f32 %v73, %v74
  %v76 = vrot.slane %v33, 4
  %v77 = vadd.f32 %v33, %v76
  %v78 = vrot.slane %v77, 2
  %v79 = vadd.f32 %v77, %v78
  %v80 = vrot.slane %v79, 1
  %v81 = vadd.f32 %v79, %v80
  %v90 = vrot.slane %v45, 6
  %v91 = vrot.slane %v51, 4
  %v92 = vrot.slane %v57, 2
  %v93 = vrot.slane %v69, 6
  %v94 = vrot.slane %v75, 4
  %v95 = vrot.slane %v81, 2
  %vm96 = vcmask 1041408
  %v97 = vsel %vm96, %v39, %v90
  %vm98 = vcmask 1045508
  %v99 = vsel %vm98, %v91, %v92
  %vm100 = vcmask 1043456
  %v101 = vsel %vm100, %v97, %v99
  %v102 = vsel %vm96, %v63, %v93
  %v103 = vsel %vm98, %v94, %v95
  %v104 = vsel %vm100, %v102, %v103
  %vm105 = vcmask 1044484
  %v106 = vsel %vm105, %v101, %v101
  %vm107 = vcmask 1046534
  %v108 = vsel %vm107, %v101, %v106
  %v109 = vrot.slane %v104, 7
  %vm110 = vcmask 1041409
  %v111 = vsel %vm110, %v109, %v108
  %vm112 = vcmask 1043459
  %v113 = vsel %vm112, %v109, %v111
  %vm114 = vcmask 1045509
  %v115 = vsel %vm114, %v109, %v113
  %vm116 = vcmask 1047559
  %v117 = vsel %vm116, %v109, %v115
  %v119 = vadd.f32 %v21, %v117
  %120 = vst [vmem:[#allocation2] sm:$0xff] %v119
  // Predicated region
  $region18: #{common_discriminator.17} parent=0 // pred_check
    %p121 = pneg %p16
  $region19: #{common_discriminator.17} parent=0 // pred_check_branch
    %123 = sbr.rel (%p121) target = $region21
  $region20: #{common_discriminator.17} parent=0 // pred_region
    %v124 = vld [vmem:[#allocation2] sm:$0xff]
    %v125 = vmul.f32 %v124, 0.25
    %v126 = vld [vmem:[%s1] sm:$0xf]
    %v128 = vperm.slane %v126, 0
    %v129 = vperm.slane %v126, 1
    %v130 = vperm.slane %v126, 2
    %v131 = vperm.slane %v126, 3
    %v132 = vrot.slane %v129, 6
    %v133 = vrot.slane %v130, 4
    %v134 = vrot.slane %v131, 2
    %v135 = vsel %vm96, %v128, %v132
    %v136 = vsel %vm98, %v133, %v134
    %v137 = vsel %vm100, %v135, %v136
    %v139 = vmul.f32 %v125, %v137
    %141 = vst [vmem:[#allocation1] ss:$4 sm:$0xff] %v139
    %v142 = vld.sshfl [vmem:[#allocation1] sm:$0xff pattern:$0x73625140]
    %v143 = vld.sshfl [vmem:[#allocation1 + $0x8] sm:$0xff pattern:$0x73625140]
    %v144 = vld.sshfl [vmem:[#allocation1 + $0x10] sm:$0xff pattern:$0x73625140]
    %v145 = vld.sshfl [vmem:[#allocation1 + $0x18] sm:$0xff pattern:$0x73625140]
    %v150 = vsel %vm96, %v142, 0.0
    %v151 = vsel %vm96, %v143, 0.0
    %v152 = vadd.f32 %v150, %v151
    %v153 = vsel %vm96, %v144, 0.0
    %v154 = vadd.f32 %v152, %v153
    %v155 = vsel %vm96, %v145, 0.0
    %v156 = vadd.f32 %v154, %v155
    %157 = vadd.xlane.f32.xlu0 %v156
    %v158 = vpop.xlane.xlu0 %157
    %v159 = vld [vmem:[#allocation3] sm:$0x1]
    %v161 = vperm.slane %v159, 0
    %v163 = vadd.f32 %v158, %v161
    %v164 = vsub.f32 0.0, %v163
    %v165 = vmul.f32 %v164, 1.442695
    %v166 = vpow.pop %v165
    %v167 = vadd.f32 %v166, 1.0
    %v168 = vrcp.pop %v167
    %v169 = vmul.f32 %v167, %v168
    %v170 = vsub.f32 1.0, %v169
    %v171 = vmul.f32 %v168, %v170
    %v172 = vadd.f32 %v168, %v171
    %vm173 = vweird.f32 %v167
    %vm174 = vweird.f32 %v168
    %vm175 = vmor %vm173, %vm174
    %v176 = vsel %vm175, %v168, %v172
    %v177 = vand.u32 2147483647, %v167
    %vm178 = vcmp.eq.f32.partialorder %v177, 8.507059e+37
    %v179 = vand.u32 %v167, 2147483648
    %v180 = vor.u32 1.1754944e-38, %v179
    %v181 = vsel %vm178, %v180, %v176
    %v182 = vmul.f32 1.0, %v181
    %vm183 = vcmask 1024
    %184 = vst.msk [vmem:[%s3] sm:$0x3] %vm183, %v182
  $region21: #{common_discriminator.17} parent=0 // pred_fallthru
    _
  // Predicated region
  $region22: #{common_discriminator.17} parent=0 // pred_check
    _
  $region23: #{common_discriminator.17} parent=0 // pred_check_branch
    %186 = sbr.rel (0) target = $region25
  $region24: #{common_discriminator.17} parent=0 // pred_region
    _
  $region25: #{common_discriminator.17} parent=0 // pred_fallthru
    _
  // Predicated region
  $region26: #{common_discriminator.17} parent=0 // pred_check
    _
  $region27: #{common_discriminator.17} parent=0 // pred_check_branch
    %188 = sbr.rel (0) target = $region29
  $region28: #{common_discriminator.17} parent=0 // pred_region
    _
  $region29: #{common_discriminator.17} parent=0 // pred_fallthru
    _

// kernel: common_discriminator.16
$region0: #{common_discriminator.16}
  #allocation0 [shape = 'u32[]', space=smem, size = 0x4, offset = 0x4, fixed_abs, tag = 'smem constant byte address 0x4 - core index']
  #allocation1 [shape = 'u32[72,128]{1,0:T(1,128)}', space=vmem, size = 0x9000, scoped, tag = 'internal scratch']
  %s0 = inlined_call_operand.vmem [shape: f32[8,512], index: 0, kind: input, shape index: {}]
  %s1 = inlined_call_operand.vmem [shape: f32[1,512], index: 1, kind: input, shape index: {}]
  %s2 = inlined_call_operand.vmem [shape: f32[1,512], index: 2, kind: input, shape index: {}]
  %s3 = inlined_call_operand.vmem [shape: bf16[8,512], index: 3, kind: output, shape index: {}]
  %s4 = sld [smem:[#allocation0]]
  $region22: #{common_discriminator.16} parent=0
    _
  %s6 = ssub.s32 1, %s4
  %s7 = scalar_select 0, %s6, %s4
  // Predicated region
  $region2: #{common_discriminator.16} parent=0 // pred_check
    _
  $region3: #{common_discriminator.16} parent=0 // pred_check_branch
    %9 = sbr.rel (0) target = $region5
  $region4: #{common_discriminator.16} parent=0 // pred_region
    _
  $region5: #{common_discriminator.16} parent=0 // pred_fallthru
    _
  // Predicated region
  $region6: #{common_discriminator.16} parent=0 // pred_check
    _
  $region7: #{common_discriminator.16} parent=0 // pred_check_branch
    %11 = sbr.rel (0) target = $region9
  $region8: #{common_discriminator.16} parent=0 // pred_region
    _
  $region9: #{common_discriminator.16} parent=0 // pred_fallthru
    _
  // Predicated region
  $region10: #{common_discriminator.16} parent=0 // pred_check
    _
  $region11: #{common_discriminator.16} parent=0 // pred_check_branch
    %13 = sbr.rel (0) target = $region13
  $region12: #{common_discriminator.16} parent=0 // pred_region
    _
  $region13: #{common_discriminator.16} parent=0 // pred_fallthru
    _
  %v14 = vld [vmem:[%s0] sm:$0xff]
  %v15 = vld [vmem:[%s0 + $0x8] sm:$0xff]
  %v16 = vld [vmem:[%s0 + $0x10] sm:$0xff]
  %v17 = vld [vmem:[%s0 + $0x18] sm:$0xff]
  %v18 = vld [vmem:[%s1] sm:$0xf]
  %v20 = vperm.slane %v18, 0
  %v21 = vperm.slane %v18, 1
  %v22 = vperm.slane %v18, 2
  %v23 = vperm.slane %v18, 3
  %v28 = vmul.f32 %v14, %v20
  %v29 = vmul.f32 %v15, %v21
  %v30 = vmul.f32 %v16, %v22
  %v31 = vmul.f32 %v17, %v23
  %v32 = vld [vmem:[%s2] sm:$0xf]
  %v34 = vperm.slane %v32, 0
  %v35 = vperm.slane %v32, 1
  %v36 = vperm.slane %v32, 2
  %v37 = vperm.slane %v32, 3
  %v42 = vadd.f32 %v28, %v34
  %v43 = vadd.f32 %v29, %v35
  %v44 = vadd.f32 %v30, %v36
  %v45 = vadd.f32 %v31, %v37
  %v46 = vmax.f32 %v42, 0.0
  %v47 = vmax.f32 %v43, 0.0
  %v48 = vmax.f32 %v44, 0.0
  %v49 = vmax.f32 %v45, 0.0
  %v50 = vpack.c.bf16 %v47, %v46
  %v51 = vpack.c.bf16 %v49, %v48
  %52 = vst [vmem:[%s3] sm:$0xff] %v50
  %53 = vst [vmem:[%s3 + $0x8] sm:$0xff] %v51
  // Predicated region
  $region14: #{common_discriminator.16} parent=0 // pred_check
    _
  $region15: #{common_discriminator.16} parent=0 // pred_check_branch
    %55 = sbr.rel (0) target = $region17
  $region16: #{common_discriminator.16} parent=0 // pred_region
    _
  $region17: #{common_discriminator.16} parent=0 // pred_fallthru
    _
  // Predicated region
  $region18: #{common_discriminator.16} parent=0 // pred_check
    _
  $region19: #{common_discriminator.16} parent=0 // pred_check_branch
    %57 = sbr.rel (0) target = $region21
  $region20: #{common_discriminator.16} parent=0 // pred_region
    _
  $region21: #{common_discriminator.16} parent=0 // pred_fallthru
    _

// kernel: common_discriminator.15
$region0: #{common_discriminator.15}
  #allocation0 [shape = 'u32[]', space=smem, size = 0x4, offset = 0x4, fixed_abs, tag = 'smem constant byte address 0x4 - core index']
  #allocation1 [shape = 'u32[72,128]{1,0:T(1,128)}', space=vmem, size = 0x9000, scoped, tag = 'internal scratch']
  %s0 = inlined_call_operand.vmem [shape: bf16[8,2304], index: 0, kind: input, shape index: {}]
  %s1 = inlined_call_operand.vmem [shape: bf16[2304,512], index: 1, kind: input, shape index: {}]
  %s2 = inlined_call_operand.vmem [shape: f32[8,512], index: 2, kind: output, shape index: {0}]
  %s3 = inlined_call_operand.vmem [shape: f32[1,512], index: 3, kind: output, shape index: {1}]
  %s4 = inlined_call_operand.vmem [shape: f32[1,512], index: 4, kind: output, shape index: {2}]
  %5 = xla_tuple %s2, %s3, %s4
  %s6 = sld [smem:[#allocation0]]
  $region38: #{common_discriminator.15} parent=0
    _
  %s8 = ssub.s32 1, %s6
  %s9 = scalar_select 0, %s8, %s6
  // Predicated region
  $region2: #{common_discriminator.15} parent=0 // pred_check
    _
  $region3: #{common_discriminator.15} parent=0 // pred_check_branch
    %11 = sbr.rel (0) target = $region5
  $region4: #{common_discriminator.15} parent=0 // pred_region
    _
  $region5: #{common_discriminator.15} parent=0 // pred_fallthru
    _
  // Predicated region
  $region6: #{common_discriminator.15} parent=0 // pred_check
    _
  $region7: #{common_discriminator.15} parent=0 // pred_check_branch
    %13 = sbr.rel (0) target = $region9
  $region8: #{common_discriminator.15} parent=0 // pred_region
    _
  $region9: #{common_discriminator.15} parent=0 // pred_fallthru
    _
  %v14 = vld [vmem:[%s0] sm:$0xff]
  %v15 = vld [vmem:[%s0 + $0x8] sm:$0xff]
  %v16 = vld [vmem:[%s0 + $0x10] sm:$0xff]
  %v17 = vld [vmem:[%s0 + $0x18] sm:$0xff]
  %v18 = vld [vmem:[%s0 + $0x20] sm:$0xff]
  %v19 = vld [vmem:[%s0 + $0x28] sm:$0xff]
  %v20 = vld [vmem:[%s0 + $0x30] sm:$0xff]
  %v21 = vld [vmem:[%s0 + $0x38] sm:$0xff]
  %v22 = vld [vmem:[%s0 + $0x40] sm:$0xff]
  %v23 = vld [vmem:[%s1] sm:$0xff]
  %v24 = vld [vmem:[%s1 + $0x8] sm:$0xff]
  %v25 = vld [vmem:[%s1 + $0x10] sm:$0xff]
  %v26 = vld [vmem:[%s1 + $0x18] sm:$0xff]
  %v27 = vld [vmem:[%s1 + $0x20] sm:$0xff]
  %v28 = vld [vmem:[%s1 + $0x28] sm:$0xff]
  %v29 = vld [vmem:[%s1 + $0x30] sm:$0xff]
  %v30 = vld [vmem:[%s1 + $0x38] sm:$0xff]
  %v31 = vld [vmem:[%s1 + $0x40] sm:$0xff]
  %v32 = vld [vmem:[%s1 + $0x48] sm:$0xff]
  %v33 = vld [vmem:[%s1 + $0x50] sm:$0xff]
  %v34 = vld [vmem:[%s1 + $0x58] sm:$0xff]
  %v35 = vld [vmem:[%s1 + $0x60] sm:$0xff]
  %v36 = vld [vmem:[%s1 + $0x68] sm:$0xff]
  %v37 = vld [vmem:[%s1 + $0x70] sm:$0xff]
  %v38 = vld [vmem:[%s1 + $0x78] sm:$0xff]
  %v39 = vld [vmem:[%s1 + $0x80] sm:$0xff]
  %v40 = vld [vmem:[%s1 + $0x88] sm:$0xff]
  %v41 = vld [vmem:[%s1 + $0x90] sm:$0xff]
  %v42 = vld [vmem:[%s1 + $0x98] sm:$0xff]
  %v43 = vld [vmem:[%s1 + $0xa0] sm:$0xff]
  %v44 = vld [vmem:[%s1 + $0xa8] sm:$0xff]
  %v45 = vld [vmem:[%s1 + $0xb0] sm:$0xff]
  %v46 = vld [vmem:[%s1 + $0xb8] sm:$0xff]
  %v47 = vld [vmem:[%s1 + $0xc0] sm:$0xff]
  %v48 = vld [vmem:[%s1 + $0xc8] sm:$0xff]
  %v49 = vld [vmem:[%s1 + $0xd0] sm:$0xff]
  %v50 = vld [vmem:[%s1 + $0xd8] sm:$0xff]
  %v51 = vld [vmem:[%s1 + $0xe0] sm:$0xff]
  %v52 = vld [vmem:[%s1 + $0xe8] sm:$0xff]
  %v53 = vld [vmem:[%s1 + $0xf0] sm:$0xff]
  %v54 = vld [vmem:[%s1 + $0xf8] sm:$0xff]
  %v55 = vld [vmem:[%s1 + $0x100] sm:$0xff]
  %v56 = vld [vmem:[%s1 + $0x108] sm:$0xff]
  %v57 = vld [vmem:[%s1 + $0x110] sm:$0xff]
  %v58 = vld [vmem:[%s1 + $0x118] sm:$0xff]
  %v59 = vld [vmem:[%s1 + $0x120] sm:$0xff]
  %v60 = vld [vmem:[%s1 + $0x128] sm:$0xff]
  %v61 = vld [vmem:[%s1 + $0x130] sm:$0xff]
  %v62 = vld [vmem:[%s1 + $0x138] sm:$0xff]
  %v63 = vld [vmem:[%s1 + $0x140] sm:$0xff]
  %v64 = vld [vmem:[%s1 + $0x148] sm:$0xff]
  %v65 = vld [vmem:[%s1 + $0x150] sm:$0xff]
  %v66 = vld [vmem:[%s1 + $0x158] sm:$0xff]
  %v67 = vld [vmem:[%s1 + $0x160] sm:$0xff]
  %v68 = vld [vmem:[%s1 + $0x168] sm:$0xff]
  %v69 = vld [vmem:[%s1 + $0x170] sm:$0xff]
  %v70 = vld [vmem:[%s1 + $0x178] sm:$0xff]
  %v71 = vld [vmem:[%s1 + $0x180] sm:$0xff]
  %v72 = vld [vmem:[%s1 + $0x188] sm:$0xff]
  %v73 = vld [vmem:[%s1 + $0x190] sm:$0xff]
  %v74 = vld [vmem:[%s1 + $0x198] sm:$0xff]
  %v75 = vld [vmem:[%s1 + $0x1a0] sm:$0xff]
  %v76 = vld [vmem:[%s1 + $0x1a8] sm:$0xff]
  %v77 = vld [vmem:[%s1 + $0x1b0] sm:$0xff]
  %v78 = vld [vmem:[%s1 + $0x1b8] sm:$0xff]
  %v79 = vld [vmem:[%s1 + $0x1c0] sm:$0xff]
  %v80 = vld [vmem:[%s1 + $0x1c8] sm:$0xff]
  %v81 = vld [vmem:[%s1 + $0x1d0] sm:$0xff]
  %v82 = vld [vmem:[%s1 + $0x1d8] sm:$0xff]
  %v83 = vld [vmem:[%s1 + $0x1e0] sm:$0xff]
  %v84 = vld [vmem:[%s1 + $0x1e8] sm:$0xff]
  %v85 = vld [vmem:[%s1 + $0x1f0] sm:$0xff]
  %v86 = vld [vmem:[%s1 + $0x1f8] sm:$0xff]
  %v87 = vld [vmem:[%s1 + $0x200] sm:$0xff]
  %v88 = vld [vmem:[%s1 + $0x208] sm:$0xff]
  %v89 = vld [vmem:[%s1 + $0x210] sm:$0xff]
  %v90 = vld [vmem:[%s1 + $0x218] sm:$0xff]
  %v91 = vld [vmem:[%s1 + $0x220] sm:$0xff]
  %v92 = vld [vmem:[%s1 + $0x228] sm:$0xff]
  %v93 = vld [vmem:[%s1 + $0x230] sm:$0xff]
  %v94 = vld [vmem:[%s1 + $0x238] sm:$0xff]
  %v95 = vld [vmem:[%s1 + $0x240] sm:$0xff]
  %v96 = vld [vmem:[%s1 + $0x248] sm:$0xff]
  %v97 = vld [vmem:[%s1 + $0x250] sm:$0xff]
  %v98 = vld [vmem:[%s1 + $0x258] sm:$0xff]
  %v99 = vld [vmem:[%s1 + $0x260] sm:$0xff]
  %v100 = vld [vmem:[%s1 + $0x268] sm:$0xff]
  %v101 = vld [vmem:[%s1 + $0x270] sm:$0xff]
  %v102 = vld [vmem:[%s1 + $0x278] sm:$0xff]
  %v103 = vld [vmem:[%s1 + $0x280] sm:$0xff]
  %v104 = vld [vmem:[%s1 + $0x288] sm:$0xff]
  %v105 = vld [vmem:[%s1 + $0x290] sm:$0xff]
  %v106 = vld [vmem:[%s1 + $0x298] sm:$0xff]
  %v107 = vld [vmem:[%s1 + $0x2a0] sm:$0xff]
  %v108 = vld [vmem:[%s1 + $0x2a8] sm:$0xff]
  %v109 = vld [vmem:[%s1 + $0x2b0] sm:$0xff]
  %v110 = vld [vmem:[%s1 + $0x2b8] sm:$0xff]
  %v111 = vld [vmem:[%s1 + $0x2c0] sm:$0xff]
  %v112 = vld [vmem:[%s1 + $0x2c8] sm:$0xff]
  %v113 = vld [vmem:[%s1 + $0x2d0] sm:$0xff]
  %v114 = vld [vmem:[%s1 + $0x2d8] sm:$0xff]
  %v115 = vld [vmem:[%s1 + $0x2e0] sm:$0xff]
  %v116 = vld [vmem:[%s1 + $0x2e8] sm:$0xff]
  %v117 = vld [vmem:[%s1 + $0x2f0] sm:$0xff]
  %v118 = vld [vmem:[%s1 + $0x2f8] sm:$0xff]
  %v119 = vld [vmem:[%s1 + $0x300] sm:$0xff]
  %v120 = vld [vmem:[%s1 + $0x308] sm:$0xff]
  %v121 = vld [vmem:[%s1 + $0x310] sm:$0xff]
  %v122 = vld [vmem:[%s1 + $0x318] sm:$0xff]
  %v123 = vld [vmem:[%s1 + $0x320] sm:$0xff]
  %v124 = vld [vmem:[%s1 + $0x328] sm:$0xff]
  %v125 = vld [vmem:[%s1 + $0x330] sm:$0xff]
  %v126 = vld [vmem:[%s1 + $0x338] sm:$0xff]
  %v127 = vld [vmem:[%s1 + $0x340] sm:$0xff]
  %v128 = vld [vmem:[%s1 + $0x348] sm:$0xff]
  %v129 = vld [vmem:[%s1 + $0x350] sm:$0xff]
  %v130 = vld [vmem:[%s1 + $0x358] sm:$0xff]
  %v131 = vld [vmem:[%s1 + $0x360] sm:$0xff]
  %v132 = vld [vmem:[%s1 + $0x368] sm:$0xff]
  %v133 = vld [vmem:[%s1 + $0x370] sm:$0xff]
  %v134 = vld [vmem:[%s1 + $0x378] sm:$0xff]
  %v135 = vld [vmem:[%s1 + $0x380] sm:$0xff]
  %v136 = vld [vmem:[%s1 + $0x388] sm:$0xff]
  %v137 = vld [vmem:[%s1 + $0x390] sm:$0xff]
  %v138 = vld [vmem:[%s1 + $0x398] sm:$0xff]
  %v139 = vld [vmem:[%s1 + $0x3a0] sm:$0xff]
  %v140 = vld [vmem:[%s1 + $0x3a8] sm:$0xff]
  %v141 = vld [vmem:[%s1 + $0x3b0] sm:$0xff]
  %v142 = vld [vmem:[%s1 + $0x3b8] sm:$0xff]
  %v143 = vld [vmem:[%s1 + $0x3c0] sm:$0xff]
  %v144 = vld [vmem:[%s1 + $0x3c8] sm:$0xff]
  %v145 = vld [vmem:[%s1 + $0x3d0] sm:$0xff]
  %v146 = vld [vmem:[%s1 + $0x3d8] sm:$0xff]
  %v147 = vld [vmem:[%s1 + $0x3e0] sm:$0xff]
  %v148 = vld [vmem:[%s1 + $0x3e8] sm:$0xff]
  %v149 = vld [vmem:[%s1 + $0x3f0] sm:$0xff]
  %v150 = vld [vmem:[%s1 + $0x3f8] sm:$0xff]
  %v151 = vld [vmem:[%s1 + $0x400] sm:$0xff]
  %v152 = vld [vmem:[%s1 + $0x408] sm:$0xff]
  %v153 = vld [vmem:[%s1 + $0x410] sm:$0xff]
  %v154 = vld [vmem:[%s1 + $0x418] sm:$0xff]
  %v155 = vld [vmem:[%s1 + $0x420] sm:$0xff]
  %v156 = vld [vmem:[%s1 + $0x428] sm:$0xff]
  %v157 = vld [vmem:[%s1 + $0x430] sm:$0xff]
  %v158 = vld [vmem:[%s1 + $0x438] sm:$0xff]
  %v159 = vld [vmem:[%s1 + $0x440] sm:$0xff]
  %v160 = vld [vmem:[%s1 + $0x448] sm:$0xff]
  %v161 = vld [vmem:[%s1 + $0x450] sm:$0xff]
  %v162 = vld [vmem:[%s1 + $0x458] sm:$0xff]
  %v163 = vld [vmem:[%s1 + $0x460] sm:$0xff]
  %v164 = vld [vmem:[%s1 + $0x468] sm:$0xff]
  %v165 = vld [vmem:[%s1 + $0x470] sm:$0xff]
  %v166 = vld [vmem:[%s1 + $0x478] sm:$0xff]
  %v167 = vld [vmem:[%s1 + $0x480] sm:$0xff]
  %v168 = vld [vmem:[%s1 + $0x488] sm:$0xff]
  %v169 = vld [vmem:[%s1 + $0x490] sm:$0xff]
  %v170 = vld [vmem:[%s1 + $0x498] sm:$0xff]
  %v171 = vld [vmem:[%s1 + $0x4a0] sm:$0xff]
  %v172 = vld [vmem:[%s1 + $0x4a8] sm:$0xff]
  %v173 = vld [vmem:[%s1 + $0x4b0] sm:$0xff]
  %v174 = vld [vmem:[%s1 + $0x4b8] sm:$0xff]
  %v175 = vld [vmem:[%s1 + $0x4c0] sm:$0xff]
  %v176 = vld [vmem:[%s1 + $0x4c8] sm:$0xff]
  %v177 = vld [vmem:[%s1 + $0x4d0] sm:$0xff]
  %v178 = vld [vmem:[%s1 + $0x4d8] sm:$0xff]
  %v179 = vld [vmem:[%s1 + $0x4e0] sm:$0xff]
  %v180 = vld [vmem:[%s1 + $0x4e8] sm:$0xff]
  %v181 = vld [vmem:[%s1 + $0x4f0] sm:$0xff]
  %v182 = vld [vmem:[%s1 + $0x4f8] sm:$0xff]
  %v183 = vld [vmem:[%s1 + $0x500] sm:$0xff]
  %v184 = vld [vmem:[%s1 + $0x508] sm:$0xff]
  %v185 = vld [vmem:[%s1 + $0x510] sm:$0xff]
  %v186 = vld [vmem:[%s1 + $0x518] sm:$0xff]
  %v187 = vld [vmem:[%s1 + $0x520] sm:$0xff]
  %v188 = vld [vmem:[%s1 + $0x528] sm:$0xff]
  %v189 = vld [vmem:[%s1 + $0x530] sm:$0xff]
  %v190 = vld [vmem:[%s1 + $0x538] sm:$0xff]
  %v191 = vld [vmem:[%s1 + $0x540] sm:$0xff]
  %v192 = vld [vmem:[%s1 + $0x548] sm:$0xff]
  %v193 = vld [vmem:[%s1 + $0x550] sm:$0xff]
  %v194 = vld [vmem:[%s1 + $0x558] sm:$0xff]
  %v195 = vld [vmem:[%s1 + $0x560] sm:$0xff]
  %v196 = vld [vmem:[%s1 + $0x568] sm:$0xff]
  %v197 = vld [vmem:[%s1 + $0x570] sm:$0xff]
  %v198 = vld [vmem:[%s1 + $0x578] sm:$0xff]
  %v199 = vld [vmem:[%s1 + $0x580] sm:$0xff]
  %v200 = vld [vmem:[%s1 + $0x588] sm:$0xff]
  %v201 = vld [vmem:[%s1 + $0x590] sm:$0xff]
  %v202 = vld [vmem:[%s1 + $0x598] sm:$0xff]
  %v203 = vld [vmem:[%s1 + $0x5a0] sm:$0xff]
  %v204 = vld [vmem:[%s1 + $0x5a8] sm:$0xff]
  %v205 = vld [vmem:[%s1 + $0x5b0] sm:$0xff]
  %v206 = vld [vmem:[%s1 + $0x5b8] sm:$0xff]
  %v207 = vld [vmem:[%s1 + $0x5c0] sm:$0xff]
  %v208 = vld [vmem:[%s1 + $0x5c8] sm:$0xff]
  %v209 = vld [vmem:[%s1 + $0x5d0] sm:$0xff]
  %v210 = vld [vmem:[%s1 + $0x5d8] sm:$0xff]
  %v211 = vld [vmem:[%s1 + $0x5e0] sm:$0xff]
  %v212 = vld [vmem:[%s1 + $0x5e8] sm:$0xff]
  %v213 = vld [vmem:[%s1 + $0x5f0] sm:$0xff]
  %v214 = vld [vmem:[%s1 + $0x5f8] sm:$0xff]
  %v215 = vld [vmem:[%s1 + $0x600] sm:$0xff]
  %v216 = vld [vmem:[%s1 + $0x608] sm:$0xff]
  %v217 = vld [vmem:[%s1 + $0x610] sm:$0xff]
  %v218 = vld [vmem:[%s1 + $0x618] sm:$0xff]
  %v219 = vld [vmem:[%s1 + $0x620] sm:$0xff]
  %v220 = vld [vmem:[%s1 + $0x628] sm:$0xff]
  %v221 = vld [vmem:[%s1 + $0x630] sm:$0xff]
  %v222 = vld [vmem:[%s1 + $0x638] sm:$0xff]
  %v223 = vld [vmem:[%s1 + $0x640] sm:$0xff]
  %v224 = vld [vmem:[%s1 + $0x648] sm:$0xff]
  %v225 = vld [vmem:[%s1 + $0x650] sm:$0xff]
  %v226 = vld [vmem:[%s1 + $0x658] sm:$0xff]
  %v227 = vld [vmem:[%s1 + $0x660] sm:$0xff]
  %v228 = vld [vmem:[%s1 + $0x668] sm:$0xff]
  %v229 = vld [vmem:[%s1 + $0x670] sm:$0xff]
  %v230 = vld [vmem:[%s1 + $0x678] sm:$0xff]
  %v231 = vld [vmem:[%s1 + $0x680] sm:$0xff]
  %v232 = vld [vmem:[%s1 + $0x688] sm:$0xff]
  %v233 = vld [vmem:[%s1 + $0x690] sm:$0xff]
  %v234 = vld [vmem:[%s1 + $0x698] sm:$0xff]
  %v235 = vld [vmem:[%s1 + $0x6a0] sm:$0xff]
  %v236 = vld [vmem:[%s1 + $0x6a8] sm:$0xff]
  %v237 = vld [vmem:[%s1 + $0x6b0] sm:$0xff]
  %v238 = vld [vmem:[%s1 + $0x6b8] sm:$0xff]
  %v239 = vld [vmem:[%s1 + $0x6c0] sm:$0xff]
  %v240 = vld [vmem:[%s1 + $0x6c8] sm:$0xff]
  %v241 = vld [vmem:[%s1 + $0x6d0] sm:$0xff]
  %v242 = vld [vmem:[%s1 + $0x6d8] sm:$0xff]
  %v243 = vld [vmem:[%s1 + $0x6e0] sm:$0xff]
  %v244 = vld [vmem:[%s1 + $0x6e8] sm:$0xff]
  %v245 = vld [vmem:[%s1 + $0x6f0] sm:$0xff]
  %v246 = vld [vmem:[%s1 + $0x6f8] sm:$0xff]
  %v247 = vld [vmem:[%s1 + $0x700] sm:$0xff]
  %v248 = vld [vmem:[%s1 + $0x708] sm:$0xff]
  %v249 = vld [vmem:[%s1 + $0x710] sm:$0xff]
  %v250 = vld [vmem:[%s1 + $0x718] sm:$0xff]
  %v251 = vld [vmem:[%s1 + $0x720] sm:$0xff]
  %v252 = vld [vmem:[%s1 + $0x728] sm:$0xff]
  %v253 = vld [vmem:[%s1 + $0x730] sm:$0xff]
  %v254 = vld [vmem:[%s1 + $0x738] sm:$0xff]
  %v255 = vld [vmem:[%s1 + $0x740] sm:$0xff]
  %v256 = vld [vmem:[%s1 + $0x748] sm:$0xff]
  %v257 = vld [vmem:[%s1 + $0x750] sm:$0xff]
  %v258 = vld [vmem:[%s1 + $0x758] sm:$0xff]
  %v259 = vld [vmem:[%s1 + $0x760] sm:$0xff]
  %v260 = vld [vmem:[%s1 + $0x768] sm:$0xff]
  %v261 = vld [vmem:[%s1 + $0x770] sm:$0xff]
  %v262 = vld [vmem:[%s1 + $0x778] sm:$0xff]
  %v263 = vld [vmem:[%s1 + $0x780] sm:$0xff]
  %v264 = vld [vmem:[%s1 + $0x788] sm:$0xff]
  %v265 = vld [vmem:[%s1 + $0x790] sm:$0xff]
  %v266 = vld [vmem:[%s1 + $0x798] sm:$0xff]
  %v267 = vld [vmem:[%s1 + $0x7a0] sm:$0xff]
  %v268 = vld [vmem:[%s1 + $0x7a8] sm:$0xff]
  %v269 = vld [vmem:[%s1 + $0x7b0] sm:$0xff]
  %v270 = vld [vmem:[%s1 + $0x7b8] sm:$0xff]
  %v271 = vld [vmem:[%s1 + $0x7c0] sm:$0xff]
  %v272 = vld [vmem:[%s1 + $0x7c8] sm:$0xff]
  %v273 = vld [vmem:[%s1 + $0x7d0] sm:$0xff]
  %v274 = vld [vmem:[%s1 + $0x7d8] sm:$0xff]
  %v275 = vld [vmem:[%s1 + $0x7e0] sm:$0xff]
  %v276 = vld [vmem:[%s1 + $0x7e8] sm:$0xff]
  %v277 = vld [vmem:[%s1 + $0x7f0] sm:$0xff]
  %v278 = vld [vmem:[%s1 + $0x7f8] sm:$0xff]
  %v279 = vld [vmem:[%s1 + $0x800] sm:$0xff]
  %v280 = vld [vmem:[%s1 + $0x808] sm:$0xff]
  %v281 = vld [vmem:[%s1 + $0x810] sm:$0xff]
  %v282 = vld [vmem:[%s1 + $0x818] sm:$0xff]
  %v283 = vld [vmem:[%s1 + $0x820] sm:$0xff]
  %v284 = vld [vmem:[%s1 + $0x828] sm:$0xff]
  %v285 = vld [vmem:[%s1 + $0x830] sm:$0xff]
  %v286 = vld [vmem:[%s1 + $0x838] sm:$0xff]
  %v287 = vld [vmem:[%s1 + $0x840] sm:$0xff]
  %v288 = vld [vmem:[%s1 + $0x848] sm:$0xff]
  %v289 = vld [vmem:[%s1 + $0x850] sm:$0xff]
  %v290 = vld [vmem:[%s1 + $0x858] sm:$0xff]
  %v291 = vld [vmem:[%s1 + $0x860] sm:$0xff]
  %v292 = vld [vmem:[%s1 + $0x868] sm:$0xff]
  %v293 = vld [vmem:[%s1 + $0x870] sm:$0xff]
  %v294 = vld [vmem:[%s1 + $0x878] sm:$0xff]
  %v295 = vld [vmem:[%s1 + $0x880] sm:$0xff]
  %v296 = vld [vmem:[%s1 + $0x888] sm:$0xff]
  %v297 = vld [vmem:[%s1 + $0x890] sm:$0xff]
  %v298 = vld [vmem:[%s1 + $0x898] sm:$0xff]
  %v299 = vld [vmem:[%s1 + $0x8a0] sm:$0xff]
  %v300 = vld [vmem:[%s1 + $0x8a8] sm:$0xff]
  %v301 = vld [vmem:[%s1 + $0x8b0] sm:$0xff]
  %v302 = vld [vmem:[%s1 + $0x8b8] sm:$0xff]
  %v303 = vld [vmem:[%s1 + $0x8c0] sm:$0xff]
  %v304 = vld [vmem:[%s1 + $0x8c8] sm:$0xff]
  %v305 = vld [vmem:[%s1 + $0x8d0] sm:$0xff]
  %v306 = vld [vmem:[%s1 + $0x8d8] sm:$0xff]
  %v307 = vld [vmem:[%s1 + $0x8e0] sm:$0xff]
  %v308 = vld [vmem:[%s1 + $0x8e8] sm:$0xff]
  %v309 = vld [vmem:[%s1 + $0x8f0] sm:$0xff]
  %v310 = vld [vmem:[%s1 + $0x8f8] sm:$0xff]
  %v311 = vld [vmem:[%s1 + $0x900] sm:$0xff]
  %v312 = vld [vmem:[%s1 + $0x908] sm:$0xff]
  %v313 = vld [vmem:[%s1 + $0x910] sm:$0xff]
  %v314 = vld [vmem:[%s1 + $0x918] sm:$0xff]
  %v315 = vld [vmem:[%s1 + $0x920] sm:$0xff]
  %v316 = vld [vmem:[%s1 + $0x928] sm:$0xff]
  %v317 = vld [vmem:[%s1 + $0x930] sm:$0xff]
  %v318 = vld [vmem:[%s1 + $0x938] sm:$0xff]
  %v319 = vld [vmem:[%s1 + $0x940] sm:$0xff]
  %v320 = vld [vmem:[%s1 + $0x948] sm:$0xff]
  %v321 = vld [vmem:[%s1 + $0x950] sm:$0xff]
  %v322 = vld [vmem:[%s1 + $0x958] sm:$0xff]
  %v323 = vld [vmem:[%s1 + $0x960] sm:$0xff]
  %v324 = vld [vmem:[%s1 + $0x968] sm:$0xff]
  %v325 = vld [vmem:[%s1 + $0x970] sm:$0xff]
  %v326 = vld [vmem:[%s1 + $0x978] sm:$0xff]
  %v327 = vld [vmem:[%s1 + $0x980] sm:$0xff]
  %v328 = vld [vmem:[%s1 + $0x988] sm:$0xff]
  %v329 = vld [vmem:[%s1 + $0x990] sm:$0xff]
  %v330 = vld [vmem:[%s1 + $0x998] sm:$0xff]
  %v331 = vld [vmem:[%s1 + $0x9a0] sm:$0xff]
  %v332 = vld [vmem:[%s1 + $0x9a8] sm:$0xff]
  %v333 = vld [vmem:[%s1 + $0x9b0] sm:$0xff]
  %v334 = vld [vmem:[%s1 + $0x9b8] sm:$0xff]
  %v335 = vld [vmem:[%s1 + $0x9c0] sm:$0xff]
  %v336 = vld [vmem:[%s1 + $0x9c8] sm:$0xff]
  %v337 = vld [vmem:[%s1 + $0x9d0] sm:$0xff]
  %v338 = vld [vmem:[%s1 + $0x9d8] sm:$0xff]
  %v339 = vld [vmem:[%s1 + $0x9e0] sm:$0xff]
  %v340 = vld [vmem:[%s1 + $0x9e8] sm:$0xff]
  %v341 = vld [vmem:[%s1 + $0x9f0] sm:$0xff]
  %v342 = vld [vmem:[%s1 + $0x9f8] sm:$0xff]
  %v343 = vld [vmem:[%s1 + $0xa00] sm:$0xff]
  %v344 = vld [vmem:[%s1 + $0xa08] sm:$0xff]
  %v345 = vld [vmem:[%s1 + $0xa10] sm:$0xff]
  %v346 = vld [vmem:[%s1 + $0xa18] sm:$0xff]
  %v347 = vld [vmem:[%s1 + $0xa20] sm:$0xff]
  %v348 = vld [vmem:[%s1 + $0xa28] sm:$0xff]
  %v349 = vld [vmem:[%s1 + $0xa30] sm:$0xff]
  %v350 = vld [vmem:[%s1 + $0xa38] sm:$0xff]
  %v351 = vld [vmem:[%s1 + $0xa40] sm:$0xff]
  %v352 = vld [vmem:[%s1 + $0xa48] sm:$0xff]
  %v353 = vld [vmem:[%s1 + $0xa50] sm:$0xff]
  %v354 = vld [vmem:[%s1 + $0xa58] sm:$0xff]
  %v355 = vld [vmem:[%s1 + $0xa60] sm:$0xff]
  %v356 = vld [vmem:[%s1 + $0xa68] sm:$0xff]
  %v357 = vld [vmem:[%s1 + $0xa70] sm:$0xff]
  %v358 = vld [vmem:[%s1 + $0xa78] sm:$0xff]
  %v359 = vld [vmem:[%s1 + $0xa80] sm:$0xff]
  %v360 = vld [vmem:[%s1 + $0xa88] sm:$0xff]
  %v361 = vld [vmem:[%s1 + $0xa90] sm:$0xff]
  %v362 = vld [vmem:[%s1 + $0xa98] sm:$0xff]
  %v363 = vld [vmem:[%s1 + $0xaa0] sm:$0xff]
  %v364 = vld [vmem:[%s1 + $0xaa8] sm:$0xff]
  %v365 = vld [vmem:[%s1 + $0xab0] sm:$0xff]
  %v366 = vld [vmem:[%s1 + $0xab8] sm:$0xff]
  %v367 = vld [vmem:[%s1 + $0xac0] sm:$0xff]
  %v368 = vld [vmem:[%s1 + $0xac8] sm:$0xff]
  %v369 = vld [vmem:[%s1 + $0xad0] sm:$0xff]
  %v370 = vld [vmem:[%s1 + $0xad8] sm:$0xff]
  %v371 = vld [vmem:[%s1 + $0xae0] sm:$0xff]
  %v372 = vld [vmem:[%s1 + $0xae8] sm:$0xff]
  %v373 = vld [vmem:[%s1 + $0xaf0] sm:$0xff]
  %v374 = vld [vmem:[%s1 + $0xaf8] sm:$0xff]
  %v375 = vld [vmem:[%s1 + $0xb00] sm:$0xff]
  %v376 = vld [vmem:[%s1 + $0xb08] sm:$0xff]
  %v377 = vld [vmem:[%s1 + $0xb10] sm:$0xff]
  %v378 = vld [vmem:[%s1 + $0xb18] sm:$0xff]
  %v379 = vld [vmem:[%s1 + $0xb20] sm:$0xff]
  %v380 = vld [vmem:[%s1 + $0xb28] sm:$0xff]
  %v381 = vld [vmem:[%s1 + $0xb30] sm:$0xff]
  %v382 = vld [vmem:[%s1 + $0xb38] sm:$0xff]
  %v383 = vld [vmem:[%s1 + $0xb40] sm:$0xff]
  %v384 = vld [vmem:[%s1 + $0xb48] sm:$0xff]
  %v385 = vld [vmem:[%s1 + $0xb50] sm:$0xff]
  %v386 = vld [vmem:[%s1 + $0xb58] sm:$0xff]
  %v387 = vld [vmem:[%s1 + $0xb60] sm:$0xff]
  %v388 = vld [vmem:[%s1 + $0xb68] sm:$0xff]
  %v389 = vld [vmem:[%s1 + $0xb70] sm:$0xff]
  %v390 = vld [vmem:[%s1 + $0xb78] sm:$0xff]
  %v391 = vld [vmem:[%s1 + $0xb80] sm:$0xff]
  %v392 = vld [vmem:[%s1 + $0xb88] sm:$0xff]
  %v393 = vld [vmem:[%s1 + $0xb90] sm:$0xff]
  %v394 = vld [vmem:[%s1 + $0xb98] sm:$0xff]
  %v395 = vld [vmem:[%s1 + $0xba0] sm:$0xff]
  %v396 = vld [vmem:[%s1 + $0xba8] sm:$0xff]
  %v397 = vld [vmem:[%s1 + $0xbb0] sm:$0xff]
  %v398 = vld [vmem:[%s1 + $0xbb8] sm:$0xff]
  %v399 = vld [vmem:[%s1 + $0xbc0] sm:$0xff]
  %v400 = vld [vmem:[%s1 + $0xbc8] sm:$0xff]
  %v401 = vld [vmem:[%s1 + $0xbd0] sm:$0xff]
  %v402 = vld [vmem:[%s1 + $0xbd8] sm:$0xff]
  %v403 = vld [vmem:[%s1 + $0xbe0] sm:$0xff]
  %v404 = vld [vmem:[%s1 + $0xbe8] sm:$0xff]
  %v405 = vld [vmem:[%s1 + $0xbf0] sm:$0xff]
  %v406 = vld [vmem:[%s1 + $0xbf8] sm:$0xff]
  %v407 = vld [vmem:[%s1 + $0xc00] sm:$0xff]
  %v408 = vld [vmem:[%s1 + $0xc08] sm:$0xff]
  %v409 = vld [vmem:[%s1 + $0xc10] sm:$0xff]
  %v410 = vld [vmem:[%s1 + $0xc18] sm:$0xff]
  %v411 = vld [vmem:[%s1 + $0xc20] sm:$0xff]
  %v412 = vld [vmem:[%s1 + $0xc28] sm:$0xff]
  %v413 = vld [vmem:[%s1 + $0xc30] sm:$0xff]
  %v414 = vld [vmem:[%s1 + $0xc38] sm:$0xff]
  %v415 = vld [vmem:[%s1 + $0xc40] sm:$0xff]
  %v416 = vld [vmem:[%s1 + $0xc48] sm:$0xff]
  %v417 = vld [vmem:[%s1 + $0xc50] sm:$0xff]
  %v418 = vld [vmem:[%s1 + $0xc58] sm:$0xff]
  %v419 = vld [vmem:[%s1 + $0xc60] sm:$0xff]
  %v420 = vld [vmem:[%s1 + $0xc68] sm:$0xff]
  %v421 = vld [vmem:[%s1 + $0xc70] sm:$0xff]
  %v422 = vld [vmem:[%s1 + $0xc78] sm:$0xff]
  %v423 = vld [vmem:[%s1 + $0xc80] sm:$0xff]
  %v424 = vld [vmem:[%s1 + $0xc88] sm:$0xff]
  %v425 = vld [vmem:[%s1 + $0xc90] sm:$0xff]
  %v426 = vld [vmem:[%s1 + $0xc98] sm:$0xff]
  %v427 = vld [vmem:[%s1 + $0xca0] sm:$0xff]
  %v428 = vld [vmem:[%s1 + $0xca8] sm:$0xff]
  %v429 = vld [vmem:[%s1 + $0xcb0] sm:$0xff]
  %v430 = vld [vmem:[%s1 + $0xcb8] sm:$0xff]
  %v431 = vld [vmem:[%s1 + $0xcc0] sm:$0xff]
  %v432 = vld [vmem:[%s1 + $0xcc8] sm:$0xff]
  %v433 = vld [vmem:[%s1 + $0xcd0] sm:$0xff]
  %v434 = vld [vmem:[%s1 + $0xcd8] sm:$0xff]
  %v435 = vld [vmem:[%s1 + $0xce0] sm:$0xff]
  %v436 = vld [vmem:[%s1 + $0xce8] sm:$0xff]
  %v437 = vld [vmem:[%s1 + $0xcf0] sm:$0xff]
  %v438 = vld [vmem:[%s1 + $0xcf8] sm:$0xff]
  %v439 = vld [vmem:[%s1 + $0xd00] sm:$0xff]
  %v440 = vld [vmem:[%s1 + $0xd08] sm:$0xff]
  %v441 = vld [vmem:[%s1 + $0xd10] sm:$0xff]
  %v442 = vld [vmem:[%s1 + $0xd18] sm:$0xff]
  %v443 = vld [vmem:[%s1 + $0xd20] sm:$0xff]
  %v444 = vld [vmem:[%s1 + $0xd28] sm:$0xff]
  %v445 = vld [vmem:[%s1 + $0xd30] sm:$0xff]
  %v446 = vld [vmem:[%s1 + $0xd38] sm:$0xff]
  %v447 = vld [vmem:[%s1 + $0xd40] sm:$0xff]
  %v448 = vld [vmem:[%s1 + $0xd48] sm:$0xff]
  %v449 = vld [vmem:[%s1 + $0xd50] sm:$0xff]
  %v450 = vld [vmem:[%s1 + $0xd58] sm:$0xff]
  %v451 = vld [vmem:[%s1 + $0xd60] sm:$0xff]
  %v452 = vld [vmem:[%s1 + $0xd68] sm:$0xff]
  %v453 = vld [vmem:[%s1 + $0xd70] sm:$0xff]
  %v454 = vld [vmem:[%s1 + $0xd78] sm:$0xff]
  %v455 = vld [vmem:[%s1 + $0xd80] sm:$0xff]
  %v456 = vld [vmem:[%s1 + $0xd88] sm:$0xff]
  %v457 = vld [vmem:[%s1 + $0xd90] sm:$0xff]
  %v458 = vld [vmem:[%s1 + $0xd98] sm:$0xff]
  %v459 = vld [vmem:[%s1 + $0xda0] sm:$0xff]
  %v460 = vld [vmem:[%s1 + $0xda8] sm:$0xff]
  %v461 = vld [vmem:[%s1 + $0xdb0] sm:$0xff]
  %v462 = vld [vmem:[%s1 + $0xdb8] sm:$0xff]
  %v463 = vld [vmem:[%s1 + $0xdc0] sm:$0xff]
  %v464 = vld [vmem:[%s1 + $0xdc8] sm:$0xff]
  %v465 = vld [vmem:[%s1 + $0xdd0] sm:$0xff]
  %v466 = vld [vmem:[%s1 + $0xdd8] sm:$0xff]
  %v467 = vld [vmem:[%s1 + $0xde0] sm:$0xff]
  %v468 = vld [vmem:[%s1 + $0xde8] sm:$0xff]
  %v469 = vld [vmem:[%s1 + $0xdf0] sm:$0xff]
  %v470 = vld [vmem:[%s1 + $0xdf8] sm:$0xff]
  %v471 = vld [vmem:[%s1 + $0xe00] sm:$0xff]
  %v472 = vld [vmem:[%s1 + $0xe08] sm:$0xff]
  %v473 = vld [vmem:[%s1 + $0xe10] sm:$0xff]
  %v474 = vld [vmem:[%s1 + $0xe18] sm:$0xff]
  %v475 = vld [vmem:[%s1 + $0xe20] sm:$0xff]
  %v476 = vld [vmem:[%s1 + $0xe28] sm:$0xff]
  %v477 = vld [vmem:[%s1 + $0xe30] sm:$0xff]
  %v478 = vld [vmem:[%s1 + $0xe38] sm:$0xff]
  %v479 = vld [vmem:[%s1 + $0xe40] sm:$0xff]
  %v480 = vld [vmem:[%s1 + $0xe48] sm:$0xff]
  %v481 = vld [vmem:[%s1 + $0xe50] sm:$0xff]
  %v482 = vld [vmem:[%s1 + $0xe58] sm:$0xff]
  %v483 = vld [vmem:[%s1 + $0xe60] sm:$0xff]
  %v484 = vld [vmem:[%s1 + $0xe68] sm:$0xff]
  %v485 = vld [vmem:[%s1 + $0xe70] sm:$0xff]
  %v486 = vld [vmem:[%s1 + $0xe78] sm:$0xff]
  %v487 = vld [vmem:[%s1 + $0xe80] sm:$0xff]
  %v488 = vld [vmem:[%s1 + $0xe88] sm:$0xff]
  %v489 = vld [vmem:[%s1 + $0xe90] sm:$0xff]
  %v490 = vld [vmem:[%s1 + $0xe98] sm:$0xff]
  %v491 = vld [vmem:[%s1 + $0xea0] sm:$0xff]
  %v492 = vld [vmem:[%s1 + $0xea8] sm:$0xff]
  %v493 = vld [vmem:[%s1 + $0xeb0] sm:$0xff]
  %v494 = vld [vmem:[%s1 + $0xeb8] sm:$0xff]
  %v495 = vld [vmem:[%s1 + $0xec0] sm:$0xff]
  %v496 = vld [vmem:[%s1 + $0xec8] sm:$0xff]
  %v497 = vld [vmem:[%s1 + $0xed0] sm:$0xff]
  %v498 = vld [vmem:[%s1 + $0xed8] sm:$0xff]
  %v499 = vld [vmem:[%s1 + $0xee0] sm:$0xff]
  %v500 = vld [vmem:[%s1 + $0xee8] sm:$0xff]
  %v501 = vld [vmem:[%s1 + $0xef0] sm:$0xff]
  %v502 = vld [vmem:[%s1 + $0xef8] sm:$0xff]
  %v503 = vld [vmem:[%s1 + $0xf00] sm:$0xff]
  %v504 = vld [vmem:[%s1 + $0xf08] sm:$0xff]
  %v505 = vld [vmem:[%s1 + $0xf10] sm:$0xff]
  %v506 = vld [vmem:[%s1 + $0xf18] sm:$0xff]
  %v507 = vld [vmem:[%s1 + $0xf20] sm:$0xff]
  %v508 = vld [vmem:[%s1 + $0xf28] sm:$0xff]
  %v509 = vld [vmem:[%s1 + $0xf30] sm:$0xff]
  %v510 = vld [vmem:[%s1 + $0xf38] sm:$0xff]
  %v511 = vld [vmem:[%s1 + $0xf40] sm:$0xff]
  %v512 = vld [vmem:[%s1 + $0xf48] sm:$0xff]
  %v513 = vld [vmem:[%s1 + $0xf50] sm:$0xff]
  %v514 = vld [vmem:[%s1 + $0xf58] sm:$0xff]
  %v515 = vld [vmem:[%s1 + $0xf60] sm:$0xff]
  %v516 = vld [vmem:[%s1 + $0xf68] sm:$0xff]
  %v517 = vld [vmem:[%s1 + $0xf70] sm:$0xff]
  %v518 = vld [vmem:[%s1 + $0xf78] sm:$0xff]
  %v519 = vld [vmem:[%s1 + $0xf80] sm:$0xff]
  %v520 = vld [vmem:[%s1 + $0xf88] sm:$0xff]
  %v521 = vld [vmem:[%s1 + $0xf90] sm:$0xff]
  %v522 = vld [vmem:[%s1 + $0xf98] sm:$0xff]
  %v523 = vld [vmem:[%s1 + $0xfa0] sm:$0xff]
  %v524 = vld [vmem:[%s1 + $0xfa8] sm:$0xff]
  %v525 = vld [vmem:[%s1 + $0xfb0] sm:$0xff]
  %v526 = vld [vmem:[%s1 + $0xfb8] sm:$0xff]
  %v527 = vld [vmem:[%s1 + $0xfc0] sm:$0xff]
  %v528 = vld [vmem:[%s1 + $0xfc8] sm:$0xff]
  %v529 = vld [vmem:[%s1 + $0xfd0] sm:$0xff]
  %v530 = vld [vmem:[%s1 + $0xfd8] sm:$0xff]
  %v531 = vld [vmem:[%s1 + $0xfe0] sm:$0xff]
  %v532 = vld [vmem:[%s1 + $0xfe8] sm:$0xff]
  %v533 = vld [vmem:[%s1 + $0xff0] sm:$0xff]
  %v534 = vld [vmem:[%s1 + $0xff8] sm:$0xff]
  %v535 = vld [vmem:[%s1 + $0x1000] sm:$0xff]
  %v536 = vld [vmem:[%s1 + $0x1008] sm:$0xff]
  %v537 = vld [vmem:[%s1 + $0x1010] sm:$0xff]
  %v538 = vld [vmem:[%s1 + $0x1018] sm:$0xff]
  %v539 = vld [vmem:[%s1 + $0x1020] sm:$0xff]
  %v540 = vld [vmem:[%s1 + $0x1028] sm:$0xff]
  %v541 = vld [vmem:[%s1 + $0x1030] sm:$0xff]
  %v542 = vld [vmem:[%s1 + $0x1038] sm:$0xff]
  %v543 = vld [vmem:[%s1 + $0x1040] sm:$0xff]
  %v544 = vld [vmem:[%s1 + $0x1048] sm:$0xff]
  %v545 = vld [vmem:[%s1 + $0x1050] sm:$0xff]
  %v546 = vld [vmem:[%s1 + $0x1058] sm:$0xff]
  %v547 = vld [vmem:[%s1 + $0x1060] sm:$0xff]
  %v548 = vld [vmem:[%s1 + $0x1068] sm:$0xff]
  %v549 = vld [vmem:[%s1 + $0x1070] sm:$0xff]
  %v550 = vld [vmem:[%s1 + $0x1078] sm:$0xff]
  %v551 = vld [vmem:[%s1 + $0x1080] sm:$0xff]
  %v552 = vld [vmem:[%s1 + $0x1088] sm:$0xff]
  %v553 = vld [vmem:[%s1 + $0x1090] sm:$0xff]
  %v554 = vld [vmem:[%s1 + $0x1098] sm:$0xff]
  %v555 = vld [vmem:[%s1 + $0x10a0] sm:$0xff]
  %v556 = vld [vmem:[%s1 + $0x10a8] sm:$0xff]
  %v557 = vld [vmem:[%s1 + $0x10b0] sm:$0xff]
  %v558 = vld [vmem:[%s1 + $0x10b8] sm:$0xff]
  %v559 = vld [vmem:[%s1 + $0x10c0] sm:$0xff]
  %v560 = vld [vmem:[%s1 + $0x10c8] sm:$0xff]
  %v561 = vld [vmem:[%s1 + $0x10d0] sm:$0xff]
  %v562 = vld [vmem:[%s1 + $0x10d8] sm:$0xff]
  %v563 = vld [vmem:[%s1 + $0x10e0] sm:$0xff]
  %v564 = vld [vmem:[%s1 + $0x10e8] sm:$0xff]
  %v565 = vld [vmem:[%s1 + $0x10f0] sm:$0xff]
  %v566 = vld [vmem:[%s1 + $0x10f8] sm:$0xff]
  %v567 = vld [vmem:[%s1 + $0x1100] sm:$0xff]
  %v568 = vld [vmem:[%s1 + $0x1108] sm:$0xff]
  %v569 = vld [vmem:[%s1 + $0x1110] sm:$0xff]
  %v570 = vld [vmem:[%s1 + $0x1118] sm:$0xff]
  %v571 = vld [vmem:[%s1 + $0x1120] sm:$0xff]
  %v572 = vld [vmem:[%s1 + $0x1128] sm:$0xff]
  %v573 = vld [vmem:[%s1 + $0x1130] sm:$0xff]
  %v574 = vld [vmem:[%s1 + $0x1138] sm:$0xff]
  %v575 = vld [vmem:[%s1 + $0x1140] sm:$0xff]
  %v576 = vld [vmem:[%s1 + $0x1148] sm:$0xff]
  %v577 = vld [vmem:[%s1 + $0x1150] sm:$0xff]
  %v578 = vld [vmem:[%s1 + $0x1158] sm:$0xff]
  %v579 = vld [vmem:[%s1 + $0x1160] sm:$0xff]
  %v580 = vld [vmem:[%s1 + $0x1168] sm:$0xff]
  %v581 = vld [vmem:[%s1 + $0x1170] sm:$0xff]
  %v582 = vld [vmem:[%s1 + $0x1178] sm:$0xff]
  %v583 = vld [vmem:[%s1 + $0x1180] sm:$0xff]
  %v584 = vld [vmem:[%s1 + $0x1188] sm:$0xff]
  %v585 = vld [vmem:[%s1 + $0x1190] sm:$0xff]
  %v586 = vld [vmem:[%s1 + $0x1198] sm:$0xff]
  %v587 = vld [vmem:[%s1 + $0x11a0] sm:$0xff]
  %v588 = vld [vmem:[%s1 + $0x11a8] sm:$0xff]
  %v589 = vld [vmem:[%s1 + $0x11b0] sm:$0xff]
  %v590 = vld [vmem:[%s1 + $0x11b8] sm:$0xff]
  %v591 = vld [vmem:[%s1 + $0x11c0] sm:$0xff]
  %v592 = vld [vmem:[%s1 + $0x11c8] sm:$0xff]
  %v593 = vld [vmem:[%s1 + $0x11d0] sm:$0xff]
  %v594 = vld [vmem:[%s1 + $0x11d8] sm:$0xff]
  %v595 = vld [vmem:[%s1 + $0x11e0] sm:$0xff]
  %v596 = vld [vmem:[%s1 + $0x11e8] sm:$0xff]
  %v597 = vld [vmem:[%s1 + $0x11f0] sm:$0xff]
  %v598 = vld [vmem:[%s1 + $0x11f8] sm:$0xff]
  %v608 = vunpack.c.l.b16 %v14
  %v609 = vunpack.c.h.b16 %v14
  %v610 = vunpack.c.l.b16 %v15
  %v611 = vunpack.c.h.b16 %v15
  %v612 = vunpack.c.l.b16 %v16
  %v613 = vunpack.c.h.b16 %v16
  %v614 = vunpack.c.l.b16 %v17
  %v615 = vunpack.c.h.b16 %v17
  %v616 = vunpack.c.l.b16 %v18
  %v617 = vunpack.c.h.b16 %v18
  %v618 = vunpack.c.l.b16 %v19
  %v619 = vunpack.c.h.b16 %v19
  %v620 = vunpack.c.l.b16 %v20
  %v621 = vunpack.c.h.b16 %v20
  %v622 = vunpack.c.l.b16 %v21
  %v623 = vunpack.c.h.b16 %v21
  %v624 = vunpack.c.l.b16 %v22
  %v625 = vunpack.c.h.b16 %v22
  %v626 = vpack.c.b16 %v608, %v608
  %v627 = vpack.c.b16 %v609, %v609
  %v628 = vpack.c.b16 %v610, %v610
  %v629 = vpack.c.b16 %v611, %v611
  %v630 = vpack.c.b16 %v612, %v612
  %v631 = vpack.c.b16 %v613, %v613
  %v632 = vpack.c.b16 %v614, %v614
  %v633 = vpack.c.b16 %v615, %v615
  %v634 = vpack.c.b16 %v616, %v616
  %v635 = vpack.c.b16 %v617, %v617
  %v636 = vpack.c.b16 %v618, %v618
  %v637 = vpack.c.b16 %v619, %v619
  %v638 = vpack.c.b16 %v620, %v620
  %v639 = vpack.c.b16 %v621, %v621
  %v640 = vpack.c.b16 %v622, %v622
  %v641 = vpack.c.b16 %v623, %v623
  %v642 = vpack.c.b16 %v624, %v624
  %v643 = vpack.c.b16 %v625, %v625
  %v1238 = vunpack.c.l.b16 %v23
  %v1239 = vunpack.c.h.b16 %v23
  %v1240 = vunpack.c.l.b16 %v24
  %v1241 = vunpack.c.h.b16 %v24
  %v1242 = vunpack.c.l.b16 %v25
  %v1243 = vunpack.c.h.b16 %v25
  %v1244 = vunpack.c.l.b16 %v26
  %v1245 = vunpack.c.h.b16 %v26
  %v1246 = vunpack.c.l.b16 %v27
  %v1247 = vunpack.c.h.b16 %v27
  %v1248 = vunpack.c.l.b16 %v28
  %v1249 = vunpack.c.h.b16 %v28
  %v1250 = vunpack.c.l.b16 %v29
  %v1251 = vunpack.c.h.b16 %v29
  %v1252 = vunpack.c.l.b16 %v30
  %v1253 = vunpack.c.h.b16 %v30
  %v1254 = vunpack.c.l.b16 %v31
  %v1255 = vunpack.c.h.b16 %v31
  %v1256 = vunpack.c.l.b16 %v32
  %v1257 = vunpack.c.h.b16 %v32
  %v1258 = vunpack.c.l.b16 %v33
  %v1259 = vunpack.c.h.b16 %v33
  %v1260 = vunpack.c.l.b16 %v34
  %v1261 = vunpack.c.h.b16 %v34
  %v1262 = vunpack.c.l.b16 %v35
  %v1263 = vunpack.c.h.b16 %v35
  %v1264 = vunpack.c.l.b16 %v36
  %v1265 = vunpack.c.h.b16 %v36
  %v1266 = vunpack.c.l.b16 %v37
  %v1267 = vunpack.c.h.b16 %v37
  %v1268 = vunpack.c.l.b16 %v38
  %v1269 = vunpack.c.h.b16 %v38
  %v1270 = vunpack.c.l.b16 %v39
  %v1271 = vunpack.c.h.b16 %v39
  %v1272 = vunpack.c.l.b16 %v40
  %v1273 = vunpack.c.h.b16 %v40
  %v1274 = vunpack.c.l.b16 %v41
  %v1275 = vunpack.c.h.b16 %v41
  %v1276 = vunpack.c.l.b16 %v42
  %v1277 = vunpack.c.h.b16 %v42
  %v1278 = vunpack.c.l.b16 %v43
  %v1279 = vunpack.c.h.b16 %v43
  %v1280 = vunpack.c.l.b16 %v44
  %v1281 = vunpack.c.h.b16 %v44
  %v1282 = vunpack.c.l.b16 %v45
  %v1283 = vunpack.c.h.b16 %v45
  %v1284 = vunpack.c.l.b16 %v46
  %v1285 = vunpack.c.h.b16 %v46
  %v1286 = vunpack.c.l.b16 %v47
  %v1287 = vunpack.c.h.b16 %v47
  %v1288 = vunpack.c.l.b16 %v48
  %v1289 = vunpack.c.h.b16 %v48
  %v1290 = vunpack.c.l.b16 %v49
  %v1291 = vunpack.c.h.b16 %v49
  %v1292 = vunpack.c.l.b16 %v50
  %v1293 = vunpack.c.h.b16 %v50
  %v1294 = vunpack.c.l.b16 %v51
  %v1295 = vunpack.c.h.b16 %v51
  %v1296 = vunpack.c.l.b16 %v52
  %v1297 = vunpack.c.h.b16 %v52
  %v1298 = vunpack.c.l.b16 %v53
  %v1299 = vunpack.c.h.b16 %v53
  %v1300 = vunpack.c.l.b16 %v54
  %v1301 = vunpack.c.h.b16 %v54
  %v1302 = vunpack.c.l.b16 %v55
  %v1303 = vunpack.c.h.b16 %v55
  %v1304 = vunpack.c.l.b16 %v56
  %v1305 = vunpack.c.h.b16 %v56
  %v1306 = vunpack.c.l.b16 %v57
  %v1307 = vunpack.c.h.b16 %v57
  %v1308 = vunpack.c.l.b16 %v58
  %v1309 = vunpack.c.h.b16 %v58
  %v1310 = vunpack.c.l.b16 %v59
  %v1311 = vunpack.c.h.b16 %v59
  %v1312 = vunpack.c.l.b16 %v60
  %v1313 = vunpack.c.h.b16 %v60
  %v1314 = vunpack.c.l.b16 %v61
  %v1315 = vunpack.c.h.b16 %v61
  %v1316 = vunpack.c.l.b16 %v62
  %v1317 = vunpack.c.h.b16 %v62
  %v1318 = vunpack.c.l.b16 %v63
  %v1319 = vunpack.c.h.b16 %v63
  %v1320 = vunpack.c.l.b16 %v64
  %v1321 = vunpack.c.h.b16 %v64
  %v1322 = vunpack.c.l.b16 %v65
  %v1323 = vunpack.c.h.b16 %v65
  %v1324 = vunpack.c.l.b16 %v66
  %v1325 = vunpack.c.h.b16 %v66
  %v1326 = vunpack.c.l.b16 %v67
  %v1327 = vunpack.c.h.b16 %v67
  %v1328 = vunpack.c.l.b16 %v68
  %v1329 = vunpack.c.h.b16 %v68
  %v1330 = vunpack.c.l.b16 %v69
  %v1331 = vunpack.c.h.b16 %v69
  %v1332 = vunpack.c.l.b16 %v70
  %v1333 = vunpack.c.h.b16 %v70
  %v1334 = vunpack.c.l.b16 %v71
  %v1335 = vunpack.c.h.b16 %v71
  %v1336 = vunpack.c.l.b16 %v72
  %v1337 = vunpack.c.h.b16 %v72
  %v1338 = vunpack.c.l.b16 %v73
  %v1339 = vunpack.c.h.b16 %v73
  %v1340 = vunpack.c.l.b16 %v74
  %v1341 = vunpack.c.h.b16 %v74
  %v1342 = vunpack.c.l.b16 %v75
  %v1343 = vunpack.c.h.b16 %v75
  %v1344 = vunpack.c.l.b16 %v76
  %v1345 = vunpack.c.h.b16 %v76
  %v1346 = vunpack.c.l.b16 %v77
  %v1347 = vunpack.c.h.b16 %v77
  %v1348 = vunpack.c.l.b16 %v78
  %v1349 = vunpack.c.h.b16 %v78
  %v1350 = vunpack.c.l.b16 %v79
  %v1351 = vunpack.c.h.b16 %v79
  %v1352 = vunpack.c.l.b16 %v80
  %v1353 = vunpack.c.h.b16 %v80
  %v1354 = vunpack.c.l.b16 %v81
  %v1355 = vunpack.c.h.b16 %v81
  %v1356 = vunpack.c.l.b16 %v82
  %v1357 = vunpack.c.h.b16 %v82
  %v1358 = vunpack.c.l.b16 %v83
  %v1359 = vunpack.c.h.b16 %v83
  %v1360 = vunpack.c.l.b16 %v84
  %v1361 = vunpack.c.h.b16 %v84
  %v1362 = vunpack.c.l.b16 %v85
  %v1363 = vunpack.c.h.b16 %v85
  %v1364 = vunpack.c.l.b16 %v86
  %v1365 = vunpack.c.h.b16 %v86
  %v1366 = vunpack.c.l.b16 %v87
  %v1367 = vunpack.c.h.b16 %v87
  %v1368 = vunpack.c.l.b16 %v88
  %v1369 = vunpack.c.h.b16 %v88
  %v1370 = vunpack.c.l.b16 %v89
  %v1371 = vunpack.c.h.b16 %v89
  %v1372 = vunpack.c.l.b16 %v90
  %v1373 = vunpack.c.h.b16 %v90
  %v1374 = vunpack.c.l.b16 %v91
  %v1375 = vunpack.c.h.b16 %v91
  %v1376 = vunpack.c.l.b16 %v92
  %v1377 = vunpack.c.h.b16 %v92
  %v1378 = vunpack.c.l.b16 %v93
  %v1379 = vunpack.c.h.b16 %v93
  %v1380 = vunpack.c.l.b16 %v94
  %v1381 = vunpack.c.h.b16 %v94
  %v1382 = vunpack.c.l.b16 %v95
  %v1383 = vunpack.c.h.b16 %v95
  %v1384 = vunpack.c.l.b16 %v96
  %v1385 = vunpack.c.h.b16 %v96
  %v1386 = vunpack.c.l.b16 %v97
  %v1387 = vunpack.c.h.b16 %v97
  %v1388 = vunpack.c.l.b16 %v98
  %v1389 = vunpack.c.h.b16 %v98
  %v1390 = vunpack.c.l.b16 %v99
  %v1391 = vunpack.c.h.b16 %v99
  %v1392 = vunpack.c.l.b16 %v100
  %v1393 = vunpack.c.h.b16 %v100
  %v1394 = vunpack.c.l.b16 %v101
  %v1395 = vunpack.c.h.b16 %v101
  %v1396 = vunpack.c.l.b16 %v102
  %v1397 = vunpack.c.h.b16 %v102
  %v1398 = vunpack.c.l.b16 %v103
  %v1399 = vunpack.c.h.b16 %v103
  %v1400 = vunpack.c.l.b16 %v104
  %v1401 = vunpack.c.h.b16 %v104
  %v1402 = vunpack.c.l.b16 %v105
  %v1403 = vunpack.c.h.b16 %v105
  %v1404 = vunpack.c.l.b16 %v106
  %v1405 = vunpack.c.h.b16 %v106
  %v1406 = vunpack.c.l.b16 %v107
  %v1407 = vunpack.c.h.b16 %v107
  %v1408 = vunpack.c.l.b16 %v108
  %v1409 = vunpack.c.h.b16 %v108
  %v1410 = vunpack.c.l.b16 %v109
  %v1411 = vunpack.c.h.b16 %v109
  %v1412 = vunpack.c.l.b16 %v110
  %v1413 = vunpack.c.h.b16 %v110
  %v1414 = vunpack.c.l.b16 %v111
  %v1415 = vunpack.c.h.b16 %v111
  %v1416 = vunpack.c.l.b16 %v112
  %v1417 = vunpack.c.h.b16 %v112
  %v1418 = vunpack.c.l.b16 %v113
  %v1419 = vunpack.c.h.b16 %v113
  %v1420 = vunpack.c.l.b16 %v114
  %v1421 = vunpack.c.h.b16 %v114
  %v1422 = vunpack.c.l.b16 %v115
  %v1423 = vunpack.c.h.b16 %v115
  %v1424 = vunpack.c.l.b16 %v116
  %v1425 = vunpack.c.h.b16 %v116
  %v1426 = vunpack.c.l.b16 %v117
  %v1427 = vunpack.c.h.b16 %v117
  %v1428 = vunpack.c.l.b16 %v118
  %v1429 = vunpack.c.h.b16 %v118
  %v1430 = vunpack.c.l.b16 %v119
  %v1431 = vunpack.c.h.b16 %v119
  %v1432 = vunpack.c.l.b16 %v120
  %v1433 = vunpack.c.h.b16 %v120
  %v1434 = vunpack.c.l.b16 %v121
  %v1435 = vunpack.c.h.b16 %v121
  %v1436 = vunpack.c.l.b16 %v122
  %v1437 = vunpack.c.h.b16 %v122
  %v1438 = vunpack.c.l.b16 %v123
  %v1439 = vunpack.c.h.b16 %v123
  %v1440 = vunpack.c.l.b16 %v124
  %v1441 = vunpack.c.h.b16 %v124
  %v1442 = vunpack.c.l.b16 %v125
  %v1443 = vunpack.c.h.b16 %v125
  %v1444 = vunpack.c.l.b16 %v126
  %v1445 = vunpack.c.h.b16 %v126
  %v1446 = vunpack.c.l.b16 %v127
  %v1447 = vunpack.c.h.b16 %v127
  %v1448 = vunpack.c.l.b16 %v128
  %v1449 = vunpack.c.h.b16 %v128
  %v1450 = vunpack.c.l.b16 %v129
  %v1451 = vunpack.c.h.b16 %v129
  %v1452 = vunpack.c.l.b16 %v130
  %v1453 = vunpack.c.h.b16 %v130
  %v1454 = vunpack.c.l.b16 %v131
  %v1455 = vunpack.c.h.b16 %v131
  %v1456 = vunpack.c.l.b16 %v132
  %v1457 = vunpack.c.h.b16 %v132
  %v1458 = vunpack.c.l.b16 %v133
  %v1459 = vunpack.c.h.b16 %v133
  %v1460 = vunpack.c.l.b16 %v134
  %v1461 = vunpack.c.h.b16 %v134
  %v1462 = vunpack.c.l.b16 %v135
  %v1463 = vunpack.c.h.b16 %v135
  %v1464 = vunpack.c.l.b16 %v136
  %v1465 = vunpack.c.h.b16 %v136
  %v1466 = vunpack.c.l.b16 %v137
  %v1467 = vunpack.c.h.b16 %v137
  %v1468 = vunpack.c.l.b16 %v138
  %v1469 = vunpack.c.h.b16 %v138
  %v1470 = vunpack.c.l.b16 %v139
  %v1471 = vunpack.c.h.b16 %v139
  %v1472 = vunpack.c.l.b16 %v140
  %v1473 = vunpack.c.h.b16 %v140
  %v1474 = vunpack.c.l.b16 %v141
  %v1475 = vunpack.c.h.b16 %v141
  %v1476 = vunpack.c.l.b16 %v142
  %v1477 = vunpack.c.h.b16 %v142
  %v1478 = vunpack.c.l.b16 %v143
  %v1479 = vunpack.c.h.b16 %v143
  %v1480 = vunpack.c.l.b16 %v144
  %v1481 = vunpack.c.h.b16 %v144
  %v1482 = vunpack.c.l.b16 %v145
  %v1483 = vunpack.c.h.b16 %v145
  %v1484 = vunpack.c.l.b16 %v146
  %v1485 = vunpack.c.h.b16 %v146
  %v1486 = vunpack.c.l.b16 %v147
  %v1487 = vunpack.c.h.b16 %v147
  %v1488 = vunpack.c.l.b16 %v148
  %v1489 = vunpack.c.h.b16 %v148
  %v1490 = vunpack.c.l.b16 %v149
  %v1491 = vunpack.c.h.b16 %v149
  %v1492 = vunpack.c.l.b16 %v150
  %v1493 = vunpack.c.h.b16 %v150
  %v1494 = vunpack.c.l.b16 %v151
  %v1495 = vunpack.c.h.b16 %v151
  %v1496 = vunpack.c.l.b16 %v152
  %v1497 = vunpack.c.h.b16 %v152
  %v1498 = vunpack.c.l.b16 %v153
  %v1499 = vunpack.c.h.b16 %v153
  %v1500 = vunpack.c.l.b16 %v154
  %v1501 = vunpack.c.h.b16 %v154
  %v1502 = vunpack.c.l.b16 %v155
  %v1503 = vunpack.c.h.b16 %v155
  %v1504 = vunpack.c.l.b16 %v156
  %v1505 = vunpack.c.h.b16 %v156
  %v1506 = vunpack.c.l.b16 %v157
  %v1507 = vunpack.c.h.b16 %v157
  %v1508 = vunpack.c.l.b16 %v158
  %v1509 = vunpack.c.h.b16 %v158
  %v1510 = vunpack.c.l.b16 %v159
  %v1511 = vunpack.c.h.b16 %v159
  %v1512 = vunpack.c.l.b16 %v160
  %v1513 = vunpack.c.h.b16 %v160
  %v1514 = vunpack.c.l.b16 %v161
  %v1515 = vunpack.c.h.b16 %v161
  %v1516 = vunpack.c.l.b16 %v162
  %v1517 = vunpack.c.h.b16 %v162
  %v1518 = vunpack.c.l.b16 %v163
  %v1519 = vunpack.c.h.b16 %v163
  %v1520 = vunpack.c.l.b16 %v164
  %v1521 = vunpack.c.h.b16 %v164
  %v1522 = vunpack.c.l.b16 %v165
  %v1523 = vunpack.c.h.b16 %v165
  %v1524 = vunpack.c.l.b16 %v166
  %v1525 = vunpack.c.h.b16 %v166
  %v1526 = vunpack.c.l.b16 %v167
  %v1527 = vunpack.c.h.b16 %v167
  %v1528 = vunpack.c.l.b16 %v168
  %v1529 = vunpack.c.h.b16 %v168
  %v1530 = vunpack.c.l.b16 %v169
  %v1531 = vunpack.c.h.b16 %v169
  %v1532 = vunpack.c.l.b16 %v170
  %v1533 = vunpack.c.h.b16 %v170
  %v1534 = vunpack.c.l.b16 %v171
  %v1535 = vunpack.c.h.b16 %v171
  %v1536 = vunpack.c.l.b16 %v172
  %v1537 = vunpack.c.h.b16 %v172
  %v1538 = vunpack.c.l.b16 %v173
  %v1539 = vunpack.c.h.b16 %v173
  %v1540 = vunpack.c.l.b16 %v174
  %v1541 = vunpack.c.h.b16 %v174
  %v1542 = vunpack.c.l.b16 %v175
  %v1543 = vunpack.c.h.b16 %v175
  %v1544 = vunpack.c.l.b16 %v176
  %v1545 = vunpack.c.h.b16 %v176
  %v1546 = vunpack.c.l.b16 %v177
  %v1547 = vunpack.c.h.b16 %v177
  %v1548 = vunpack.c.l.b16 %v178
  %v1549 = vunpack.c.h.b16 %v178
  %v1550 = vunpack.c.l.b16 %v179
  %v1551 = vunpack.c.h.b16 %v179
  %v1552 = vunpack.c.l.b16 %v180
  %v1553 = vunpack.c.h.b16 %v180
  %v1554 = vunpack.c.l.b16 %v181
  %v1555 = vunpack.c.h.b16 %v181
  %v1556 = vunpack.c.l.b16 %v182
  %v1557 = vunpack.c.h.b16 %v182
  %v1558 = vunpack.c.l.b16 %v183
  %v1559 = vunpack.c.h.b16 %v183
  %v1560 = vunpack.c.l.b16 %v184
  %v1561 = vunpack.c.h.b16 %v184
  %v1562 = vunpack.c.l.b16 %v185
  %v1563 = vunpack.c.h.b16 %v185
  %v1564 = vunpack.c.l.b16 %v186
  %v1565 = vunpack.c.h.b16 %v186
  %v1566 = vunpack.c.l.b16 %v187
  %v1567 = vunpack.c.h.b16 %v187
  %v1568 = vunpack.c.l.b16 %v188
  %v1569 = vunpack.c.h.b16 %v188
  %v1570 = vunpack.c.l.b16 %v189
  %v1571 = vunpack.c.h.b16 %v189
  %v1572 = vunpack.c.l.b16 %v190
  %v1573 = vunpack.c.h.b16 %v190
  %v1574 = vunpack.c.l.b16 %v191
  %v1575 = vunpack.c.h.b16 %v191
  %v1576 = vunpack.c.l.b16 %v192
  %v1577 = vunpack.c.h.b16 %v192
  %v1578 = vunpack.c.l.b16 %v193
  %v1579 = vunpack.c.h.b16 %v193
  %v1580 = vunpack.c.l.b16 %v194
  %v1581 = vunpack.c.h.b16 %v194
  %v1582 = vunpack.c.l.b16 %v195
  %v1583 = vunpack.c.h.b16 %v195
  %v1584 = vunpack.c.l.b16 %v196
  %v1585 = vunpack.c.h.b16 %v196
  %v1586 = vunpack.c.l.b16 %v197
  %v1587 = vunpack.c.h.b16 %v197
  %v1588 = vunpack.c.l.b16 %v198
  %v1589 = vunpack.c.h.b16 %v198
  %v1590 = vunpack.c.l.b16 %v199
  %v1591 = vunpack.c.h.b16 %v199
  %v1592 = vunpack.c.l.b16 %v200
  %v1593 = vunpack.c.h.b16 %v200
  %v1594 = vunpack.c.l.b16 %v201
  %v1595 = vunpack.c.h.b16 %v201
  %v1596 = vunpack.c.l.b16 %v202
  %v1597 = vunpack.c.h.b16 %v202
  %v1598 = vunpack.c.l.b16 %v203
  %v1599 = vunpack.c.h.b16 %v203
  %v1600 = vunpack.c.l.b16 %v204
  %v1601 = vunpack.c.h.b16 %v204
  %v1602 = vunpack.c.l.b16 %v205
  %v1603 = vunpack.c.h.b16 %v205
  %v1604 = vunpack.c.l.b16 %v206
  %v1605 = vunpack.c.h.b16 %v206
  %v1606 = vunpack.c.l.b16 %v207
  %v1607 = vunpack.c.h.b16 %v207
  %v1608 = vunpack.c.l.b16 %v208
  %v1609 = vunpack.c.h.b16 %v208
  %v1610 = vunpack.c.l.b16 %v209
  %v1611 = vunpack.c.h.b16 %v209
  %v1612 = vunpack.c.l.b16 %v210
  %v1613 = vunpack.c.h.b16 %v210
  %v1614 = vunpack.c.l.b16 %v211
  %v1615 = vunpack.c.h.b16 %v211
  %v1616 = vunpack.c.l.b16 %v212
  %v1617 = vunpack.c.h.b16 %v212
  %v1618 = vunpack.c.l.b16 %v213
  %v1619 = vunpack.c.h.b16 %v213
  %v1620 = vunpack.c.l.b16 %v214
  %v1621 = vunpack.c.h.b16 %v214
  %v1622 = vunpack.c.l.b16 %v215
  %v1623 = vunpack.c.h.b16 %v215
  %v1624 = vunpack.c.l.b16 %v216
  %v1625 = vunpack.c.h.b16 %v216
  %v1626 = vunpack.c.l.b16 %v217
  %v1627 = vunpack.c.h.b16 %v217
  %v1628 = vunpack.c.l.b16 %v218
  %v1629 = vunpack.c.h.b16 %v218
  %v1630 = vunpack.c.l.b16 %v219
  %v1631 = vunpack.c.h.b16 %v219
  %v1632 = vunpack.c.l.b16 %v220
  %v1633 = vunpack.c.h.b16 %v220
  %v1634 = vunpack.c.l.b16 %v221
  %v1635 = vunpack.c.h.b16 %v221
  %v1636 = vunpack.c.l.b16 %v222
  %v1637 = vunpack.c.h.b16 %v222
  %v1638 = vunpack.c.l.b16 %v223
  %v1639 = vunpack.c.h.b16 %v223
  %v1640 = vunpack.c.l.b16 %v224
  %v1641 = vunpack.c.h.b16 %v224
  %v1642 = vunpack.c.l.b16 %v225
  %v1643 = vunpack.c.h.b16 %v225
  %v1644 = vunpack.c.l.b16 %v226
  %v1645 = vunpack.c.h.b16 %v226
  %v1646 = vunpack.c.l.b16 %v227
  %v1647 = vunpack.c.h.b16 %v227
  %v1648 = vunpack.c.l.b16 %v228
  %v1649 = vunpack.c.h.b16 %v228
  %v1650 = vunpack.c.l.b16 %v229
  %v1651 = vunpack.c.h.b16 %v229
  %v1652 = vunpack.c.l.b16 %v230
  %v1653 = vunpack.c.h.b16 %v230
  %v1654 = vunpack.c.l.b16 %v231
  %v1655 = vunpack.c.h.b16 %v231
  %v1656 = vunpack.c.l.b16 %v232
  %v1657 = vunpack.c.h.b16 %v232
  %v1658 = vunpack.c.l.b16 %v233
  %v1659 = vunpack.c.h.b16 %v233
  %v1660 = vunpack.c.l.b16 %v234
  %v1661 = vunpack.c.h.b16 %v234
  %v1662 = vunpack.c.l.b16 %v235
  %v1663 = vunpack.c.h.b16 %v235
  %v1664 = vunpack.c.l.b16 %v236
  %v1665 = vunpack.c.h.b16 %v236
  %v1666 = vunpack.c.l.b16 %v237
  %v1667 = vunpack.c.h.b16 %v237
  %v1668 = vunpack.c.l.b16 %v238
  %v1669 = vunpack.c.h.b16 %v238
  %v1670 = vunpack.c.l.b16 %v239
  %v1671 = vunpack.c.h.b16 %v239
  %v1672 = vunpack.c.l.b16 %v240
  %v1673 = vunpack.c.h.b16 %v240
  %v1674 = vunpack.c.l.b16 %v241
  %v1675 = vunpack.c.h.b16 %v241
  %v1676 = vunpack.c.l.b16 %v242
  %v1677 = vunpack.c.h.b16 %v242
  %v1678 = vunpack.c.l.b16 %v243
  %v1679 = vunpack.c.h.b16 %v243
  %v1680 = vunpack.c.l.b16 %v244
  %v1681 = vunpack.c.h.b16 %v244
  %v1682 = vunpack.c.l.b16 %v245
  %v1683 = vunpack.c.h.b16 %v245
  %v1684 = vunpack.c.l.b16 %v246
  %v1685 = vunpack.c.h.b16 %v246
  %v1686 = vunpack.c.l.b16 %v247
  %v1687 = vunpack.c.h.b16 %v247
  %v1688 = vunpack.c.l.b16 %v248
  %v1689 = vunpack.c.h.b16 %v248
  %v1690 = vunpack.c.l.b16 %v249
  %v1691 = vunpack.c.h.b16 %v249
  %v1692 = vunpack.c.l.b16 %v250
  %v1693 = vunpack.c.h.b16 %v250
  %v1694 = vunpack.c.l.b16 %v251
  %v1695 = vunpack.c.h.b16 %v251
  %v1696 = vunpack.c.l.b16 %v252
  %v1697 = vunpack.c.h.b16 %v252
  %v1698 = vunpack.c.l.b16 %v253
  %v1699 = vunpack.c.h.b16 %v253
  %v1700 = vunpack.c.l.b16 %v254
  %v1701 = vunpack.c.h.b16 %v254
  %v1702 = vunpack.c.l.b16 %v255
  %v1703 = vunpack.c.h.b16 %v255
  %v1704 = vunpack.c.l.b16 %v256
  %v1705 = vunpack.c.h.b16 %v256
  %v1706 = vunpack.c.l.b16 %v257
  %v1707 = vunpack.c.h.b16 %v257
  %v1708 = vunpack.c.l.b16 %v258
  %v1709 = vunpack.c.h.b16 %v258
  %v1710 = vunpack.c.l.b16 %v259
  %v1711 = vunpack.c.h.b16 %v259
  %v1712 = vunpack.c.l.b16 %v260
  %v1713 = vunpack.c.h.b16 %v260
  %v1714 = vunpack.c.l.b16 %v261
  %v1715 = vunpack.c.h.b16 %v261
  %v1716 = vunpack.c.l.b16 %v262
  %v1717 = vunpack.c.h.b16 %v262
  %v1718 = vunpack.c.l.b16 %v263
  %v1719 = vunpack.c.h.b16 %v263
  %v1720 = vunpack.c.l.b16 %v264
  %v1721 = vunpack.c.h.b16 %v264
  %v1722 = vunpack.c.l.b16 %v265
  %v1723 = vunpack.c.h.b16 %v265
  %v1724 = vunpack.c.l.b16 %v266
  %v1725 = vunpack.c.h.b16 %v266
  %v1726 = vunpack.c.l.b16 %v267
  %v1727 = vunpack.c.h.b16 %v267
  %v1728 = vunpack.c.l.b16 %v268
  %v1729 = vunpack.c.h.b16 %v268
  %v1730 = vunpack.c.l.b16 %v269
  %v1731 = vunpack.c.h.b16 %v269
  %v1732 = vunpack.c.l.b16 %v270
  %v1733 = vunpack.c.h.b16 %v270
  %v1734 = vunpack.c.l.b16 %v271
  %v1735 = vunpack.c.h.b16 %v271
  %v1736 = vunpack.c.l.b16 %v272
  %v1737 = vunpack.c.h.b16 %v272
  %v1738 = vunpack.c.l.b16 %v273
  %v1739 = vunpack.c.h.b16 %v273
  %v1740 = vunpack.c.l.b16 %v274
  %v1741 = vunpack.c.h.b16 %v274
  %v1742 = vunpack.c.l.b16 %v275
  %v1743 = vunpack.c.h.b16 %v275
  %v1744 = vunpack.c.l.b16 %v276
  %v1745 = vunpack.c.h.b16 %v276
  %v1746 = vunpack.c.l.b16 %v277
  %v1747 = vunpack.c.h.b16 %v277
  %v1748 = vunpack.c.l.b16 %v278
  %v1749 = vunpack.c.h.b16 %v278
  %v1750 = vunpack.c.l.b16 %v279
  %v1751 = vunpack.c.h.b16 %v279
  %v1752 = vunpack.c.l.b16 %v280
  %v1753 = vunpack.c.h.b16 %v280
  %v1754 = vunpack.c.l.b16 %v281
  %v1755 = vunpack.c.h.b16 %v281
  %v1756 = vunpack.c.l.b16 %v282
  %v1757 = vunpack.c.h.b16 %v282
  %v1758 = vunpack.c.l.b16 %v283
  %v1759 = vunpack.c.h.b16 %v283
  %v1760 = vunpack.c.l.b16 %v284
  %v1761 = vunpack.c.h.b16 %v284
  %v1762 = vunpack.c.l.b16 %v285
  %v1763 = vunpack.c.h.b16 %v285
  %v1764 = vunpack.c.l.b16 %v286
  %v1765 = vunpack.c.h.b16 %v286
  %v1766 = vunpack.c.l.b16 %v287
  %v1767 = vunpack.c.h.b16 %v287
  %v1768 = vunpack.c.l.b16 %v288
  %v1769 = vunpack.c.h.b16 %v288
  %v1770 = vunpack.c.l.b16 %v289
  %v1771 = vunpack.c.h.b16 %v289
  %v1772 = vunpack.c.l.b16 %v290
  %v1773 = vunpack.c.h.b16 %v290
  %v1774 = vunpack.c.l.b16 %v291
  %v1775 = vunpack.c.h.b16 %v291
  %v1776 = vunpack.c.l.b16 %v292
  %v1777 = vunpack.c.h.b16 %v292
  %v1778 = vunpack.c.l.b16 %v293
  %v1779 = vunpack.c.h.b16 %v293
  %v1780 = vunpack.c.l.b16 %v294
  %v1781 = vunpack.c.h.b16 %v294
  %v1782 = vunpack.c.l.b16 %v295
  %v1783 = vunpack.c.h.b16 %v295
  %v1784 = vunpack.c.l.b16 %v296
  %v1785 = vunpack.c.h.b16 %v296
  %v1786 = vunpack.c.l.b16 %v297
  %v1787 = vunpack.c.h.b16 %v297
  %v1788 = vunpack.c.l.b16 %v298
  %v1789 = vunpack.c.h.b16 %v298
  %v1790 = vunpack.c.l.b16 %v299
  %v1791 = vunpack.c.h.b16 %v299
  %v1792 = vunpack.c.l.b16 %v300
  %v1793 = vunpack.c.h.b16 %v300
  %v1794 = vunpack.c.l.b16 %v301
  %v1795 = vunpack.c.h.b16 %v301
  %v1796 = vunpack.c.l.b16 %v302
  %v1797 = vunpack.c.h.b16 %v302
  %v1798 = vunpack.c.l.b16 %v303
  %v1799 = vunpack.c.h.b16 %v303
  %v1800 = vunpack.c.l.b16 %v304
  %v1801 = vunpack.c.h.b16 %v304
  %v1802 = vunpack.c.l.b16 %v305
  %v1803 = vunpack.c.h.b16 %v305
  %v1804 = vunpack.c.l.b16 %v306
  %v1805 = vunpack.c.h.b16 %v306
  %v1806 = vunpack.c.l.b16 %v307
  %v1807 = vunpack.c.h.b16 %v307
  %v1808 = vunpack.c.l.b16 %v308
  %v1809 = vunpack.c.h.b16 %v308
  %v1810 = vunpack.c.l.b16 %v309
  %v1811 = vunpack.c.h.b16 %v309
  %v1812 = vunpack.c.l.b16 %v310
  %v1813 = vunpack.c.h.b16 %v310
  %v1814 = vunpack.c.l.b16 %v311
  %v1815 = vunpack.c.h.b16 %v311
  %v1816 = vunpack.c.l.b16 %v312
  %v1817 = vunpack.c.h.b16 %v312
  %v1818 = vunpack.c.l.b16 %v313
  %v1819 = vunpack.c.h.b16 %v313
  %v1820 = vunpack.c.l.b16 %v314
  %v1821 = vunpack.c.h.b16 %v314
  %v1822 = vunpack.c.l.b16 %v315
  %v1823 = vunpack.c.h.b16 %v315
  %v1824 = vunpack.c.l.b16 %v316
  %v1825 = vunpack.c.h.b16 %v316
  %v1826 = vunpack.c.l.b16 %v317
  %v1827 = vunpack.c.h.b16 %v317
  %v1828 = vunpack.c.l.b16 %v318
  %v1829 = vunpack.c.h.b16 %v318
  %v1830 = vunpack.c.l.b16 %v319
  %v1831 = vunpack.c.h.b16 %v319
  %v1832 = vunpack.c.l.b16 %v320
  %v1833 = vunpack.c.h.b16 %v320
  %v1834 = vunpack.c.l.b16 %v321
  %v1835 = vunpack.c.h.b16 %v321
  %v1836 = vunpack.c.l.b16 %v322
  %v1837 = vunpack.c.h.b16 %v322
  %v1838 = vunpack.c.l.b16 %v323
  %v1839 = vunpack.c.h.b16 %v323
  %v1840 = vunpack.c.l.b16 %v324
  %v1841 = vunpack.c.h.b16 %v324
  %v1842 = vunpack.c.l.b16 %v325
  %v1843 = vunpack.c.h.b16 %v325
  %v1844 = vunpack.c.l.b16 %v326
  %v1845 = vunpack.c.h.b16 %v326
  %v1846 = vunpack.c.l.b16 %v327
  %v1847 = vunpack.c.h.b16 %v327
  %v1848 = vunpack.c.l.b16 %v328
  %v1849 = vunpack.c.h.b16 %v328
  %v1850 = vunpack.c.l.b16 %v329
  %v1851 = vunpack.c.h.b16 %v329
  %v1852 = vunpack.c.l.b16 %v330
  %v1853 = vunpack.c.h.b16 %v330
  %v1854 = vunpack.c.l.b16 %v331
  %v1855 = vunpack.c.h.b16 %v331
  %v1856 = vunpack.c.l.b16 %v332
  %v1857 = vunpack.c.h.b16 %v332
  %v1858 = vunpack.c.l.b16 %v333
  %v1859 = vunpack.c.h.b16 %v333
  %v1860 = vunpack.c.l.b16 %v334
  %v1861 = vunpack.c.h.b16 %v334
  %v1862 = vunpack.c.l.b16 %v335
  %v1863 = vunpack.c.h.b16 %v335
  %v1864 = vunpack.c.l.b16 %v336
  %v1865 = vunpack.c.h.b16 %v336
  %v1866 = vunpack.c.l.b16 %v337
  %v1867 = vunpack.c.h.b16 %v337
  %v1868 = vunpack.c.l.b16 %v338
  %v1869 = vunpack.c.h.b16 %v338
  %v1870 = vunpack.c.l.b16 %v339
  %v1871 = vunpack.c.h.b16 %v339
  %v1872 = vunpack.c.l.b16 %v340
  %v1873 = vunpack.c.h.b16 %v340
  %v1874 = vunpack.c.l.b16 %v341
  %v1875 = vunpack.c.h.b16 %v341
  %v1876 = vunpack.c.l.b16 %v342
  %v1877 = vunpack.c.h.b16 %v342
  %v1878 = vunpack.c.l.b16 %v343
  %v1879 = vunpack.c.h.b16 %v343
  %v1880 = vunpack.c.l.b16 %v344
  %v1881 = vunpack.c.h.b16 %v344
  %v1882 = vunpack.c.l.b16 %v345
  %v1883 = vunpack.c.h.b16 %v345
  %v1884 = vunpack.c.l.b16 %v346
  %v1885 = vunpack.c.h.b16 %v346
  %v1886 = vunpack.c.l.b16 %v347
  %v1887 = vunpack.c.h.b16 %v347
  %v1888 = vunpack.c.l.b16 %v348
  %v1889 = vunpack.c.h.b16 %v348
  %v1890 = vunpack.c.l.b16 %v349
  %v1891 = vunpack.c.h.b16 %v349
  %v1892 = vunpack.c.l.b16 %v350
  %v1893 = vunpack.c.h.b16 %v350
  %v1894 = vunpack.c.l.b16 %v351
  %v1895 = vunpack.c.h.b16 %v351
  %v1896 = vunpack.c.l.b16 %v352
  %v1897 = vunpack.c.h.b16 %v352
  %v1898 = vunpack.c.l.b16 %v353
  %v1899 = vunpack.c.h.b16 %v353
  %v1900 = vunpack.c.l.b16 %v354
  %v1901 = vunpack.c.h.b16 %v354
  %v1902 = vunpack.c.l.b16 %v355
  %v1903 = vunpack.c.h.b16 %v355
  %v1904 = vunpack.c.l.b16 %v356
  %v1905 = vunpack.c.h.b16 %v356
  %v1906 = vunpack.c.l.b16 %v357
  %v1907 = vunpack.c.h.b16 %v357
  %v1908 = vunpack.c.l.b16 %v358
  %v1909 = vunpack.c.h.b16 %v358
  %v1910 = vunpack.c.l.b16 %v359
  %v1911 = vunpack.c.h.b16 %v359
  %v1912 = vunpack.c.l.b16 %v360
  %v1913 = vunpack.c.h.b16 %v360
  %v1914 = vunpack.c.l.b16 %v361
  %v1915 = vunpack.c.h.b16 %v361
  %v1916 = vunpack.c.l.b16 %v362
  %v1917 = vunpack.c.h.b16 %v362
  %v1918 = vunpack.c.l.b16 %v363
  %v1919 = vunpack.c.h.b16 %v363
  %v1920 = vunpack.c.l.b16 %v364
  %v1921 = vunpack.c.h.b16 %v364
  %v1922 = vunpack.c.l.b16 %v365
  %v1923 = vunpack.c.h.b16 %v365
  %v1924 = vunpack.c.l.b16 %v366
  %v1925 = vunpack.c.h.b16 %v366
  %v1926 = vunpack.c.l.b16 %v367
  %v1927 = vunpack.c.h.b16 %v367
  %v1928 = vunpack.c.l.b16 %v368
  %v1929 = vunpack.c.h.b16 %v368
  %v1930 = vunpack.c.l.b16 %v369
  %v1931 = vunpack.c.h.b16 %v369
  %v1932 = vunpack.c.l.b16 %v370
  %v1933 = vunpack.c.h.b16 %v370
  %v1934 = vunpack.c.l.b16 %v371
  %v1935 = vunpack.c.h.b16 %v371
  %v1936 = vunpack.c.l.b16 %v372
  %v1937 = vunpack.c.h.b16 %v372
  %v1938 = vunpack.c.l.b16 %v373
  %v1939 = vunpack.c.h.b16 %v373
  %v1940 = vunpack.c.l.b16 %v374
  %v1941 = vunpack.c.h.b16 %v374
  %v1942 = vunpack.c.l.b16 %v375
  %v1943 = vunpack.c.h.b16 %v375
  %v1944 = vunpack.c.l.b16 %v376
  %v1945 = vunpack.c.h.b16 %v376
  %v1946 = vunpack.c.l.b16 %v377
  %v1947 = vunpack.c.h.b16 %v377
  %v1948 = vunpack.c.l.b16 %v378
  %v1949 = vunpack.c.h.b16 %v378
  %v1950 = vunpack.c.l.b16 %v379
  %v1951 = vunpack.c.h.b16 %v379
  %v1952 = vunpack.c.l.b16 %v380
  %v1953 = vunpack.c.h.b16 %v380
  %v1954 = vunpack.c.l.b16 %v381
  %v1955 = vunpack.c.h.b16 %v381
  %v1956 = vunpack.c.l.b16 %v382
  %v1957 = vunpack.c.h.b16 %v382
  %v1958 = vunpack.c.l.b16 %v383
  %v1959 = vunpack.c.h.b16 %v383
  %v1960 = vunpack.c.l.b16 %v384
  %v1961 = vunpack.c.h.b16 %v384
  %v1962 = vunpack.c.l.b16 %v385
  %v1963 = vunpack.c.h.b16 %v385
  %v1964 = vunpack.c.l.b16 %v386
  %v1965 = vunpack.c.h.b16 %v386
  %v1966 = vunpack.c.l.b16 %v387
  %v1967 = vunpack.c.h.b16 %v387
  %v1968 = vunpack.c.l.b16 %v388
  %v1969 = vunpack.c.h.b16 %v388
  %v1970 = vunpack.c.l.b16 %v389
  %v1971 = vunpack.c.h.b16 %v389
  %v1972 = vunpack.c.l.b16 %v390
  %v1973 = vunpack.c.h.b16 %v390
  %v1974 = vunpack.c.l.b16 %v391
  %v1975 = vunpack.c.h.b16 %v391
  %v1976 = vunpack.c.l.b16 %v392
  %v1977 = vunpack.c.h.b16 %v392
  %v1978 = vunpack.c.l.b16 %v393
  %v1979 = vunpack.c.h.b16 %v393
  %v1980 = vunpack.c.l.b16 %v394
  %v1981 = vunpack.c.h.b16 %v394
  %v1982 = vunpack.c.l.b16 %v395
  %v1983 = vunpack.c.h.b16 %v395
  %v1984 = vunpack.c.l.b16 %v396
  %v1985 = vunpack.c.h.b16 %v396
  %v1986 = vunpack.c.l.b16 %v397
  %v1987 = vunpack.c.h.b16 %v397
  %v1988 = vunpack.c.l.b16 %v398
  %v1989 = vunpack.c.h.b16 %v398
  %v1990 = vunpack.c.l.b16 %v399
  %v1991 = vunpack.c.h.b16 %v399
  %v1992 = vunpack.c.l.b16 %v400
  %v1993 = vunpack.c.h.b16 %v400
  %v1994 = vunpack.c.l.b16 %v401
  %v1995 = vunpack.c.h.b16 %v401
  %v1996 = vunpack.c.l.b16 %v402
  %v1997 = vunpack.c.h.b16 %v402
  %v1998 = vunpack.c.l.b16 %v403
  %v1999 = vunpack.c.h.b16 %v403
  %v2000 = vunpack.c.l.b16 %v404
  %v2001 = vunpack.c.h.b16 %v404
  %v2002 = vunpack.c.l.b16 %v405
  %v2003 = vunpack.c.h.b16 %v405
  %v2004 = vunpack.c.l.b16 %v406
  %v2005 = vunpack.c.h.b16 %v406
  %v2006 = vunpack.c.l.b16 %v407
  %v2007 = vunpack.c.h.b16 %v407
  %v2008 = vunpack.c.l.b16 %v408
  %v2009 = vunpack.c.h.b16 %v408
  %v2010 = vunpack.c.l.b16 %v409
  %v2011 = vunpack.c.h.b16 %v409
  %v2012 = vunpack.c.l.b16 %v410
  %v2013 = vunpack.c.h.b16 %v410
  %v2014 = vunpack.c.l.b16 %v411
  %v2015 = vunpack.c.h.b16 %v411
  %v2016 = vunpack.c.l.b16 %v412
  %v2017 = vunpack.c.h.b16 %v412
  %v2018 = vunpack.c.l.b16 %v413
  %v2019 = vunpack.c.h.b16 %v413
  %v2020 = vunpack.c.l.b16 %v414
  %v2021 = vunpack.c.h.b16 %v414
  %v2022 = vunpack.c.l.b16 %v415
  %v2023 = vunpack.c.h.b16 %v415
  %v2024 = vunpack.c.l.b16 %v416
  %v2025 = vunpack.c.h.b16 %v416
  %v2026 = vunpack.c.l.b16 %v417
  %v2027 = vunpack.c.h.b16 %v417
  %v2028 = vunpack.c.l.b16 %v418
  %v2029 = vunpack.c.h.b16 %v418
  %v2030 = vunpack.c.l.b16 %v419
  %v2031 = vunpack.c.h.b16 %v419
  %v2032 = vunpack.c.l.b16 %v420
  %v2033 = vunpack.c.h.b16 %v420
  %v2034 = vunpack.c.l.b16 %v421
  %v2035 = vunpack.c.h.b16 %v421
  %v2036 = vunpack.c.l.b16 %v422
  %v2037 = vunpack.c.h.b16 %v422
  %v2038 = vunpack.c.l.b16 %v423
  %v2039 = vunpack.c.h.b16 %v423
  %v2040 = vunpack.c.l.b16 %v424
  %v2041 = vunpack.c.h.b16 %v424
  %v2042 = vunpack.c.l.b16 %v425
  %v2043 = vunpack.c.h.b16 %v425
  %v2044 = vunpack.c.l.b16 %v426
  %v2045 = vunpack.c.h.b16 %v426
  %v2046 = vunpack.c.l.b16 %v427
  %v2047 = vunpack.c.h.b16 %v427
  %v2048 = vunpack.c.l.b16 %v428
  %v2049 = vunpack.c.h.b16 %v428
  %v2050 = vunpack.c.l.b16 %v429
  %v2051 = vunpack.c.h.b16 %v429
  %v2052 = vunpack.c.l.b16 %v430
  %v2053 = vunpack.c.h.b16 %v430
  %v2054 = vunpack.c.l.b16 %v431
  %v2055 = vunpack.c.h.b16 %v431
  %v2056 = vunpack.c.l.b16 %v432
  %v2057 = vunpack.c.h.b16 %v432
  %v2058 = vunpack.c.l.b16 %v433
  %v2059 = vunpack.c.h.b16 %v433
  %v2060 = vunpack.c.l.b16 %v434
  %v2061 = vunpack.c.h.b16 %v434
  %v2062 = vunpack.c.l.b16 %v435
  %v2063 = vunpack.c.h.b16 %v435
  %v2064 = vunpack.c.l.b16 %v436
  %v2065 = vunpack.c.h.b16 %v436
  %v2066 = vunpack.c.l.b16 %v437
  %v2067 = vunpack.c.h.b16 %v437
  %v2068 = vunpack.c.l.b16 %v438
  %v2069 = vunpack.c.h.b16 %v438
  %v2070 = vunpack.c.l.b16 %v439
  %v2071 = vunpack.c.h.b16 %v439
  %v2072 = vunpack.c.l.b16 %v440
  %v2073 = vunpack.c.h.b16 %v440
  %v2074 = vunpack.c.l.b16 %v441
  %v2075 = vunpack.c.h.b16 %v441
  %v2076 = vunpack.c.l.b16 %v442
  %v2077 = vunpack.c.h.b16 %v442
  %v2078 = vunpack.c.l.b16 %v443
  %v2079 = vunpack.c.h.b16 %v443
  %v2080 = vunpack.c.l.b16 %v444
  %v2081 = vunpack.c.h.b16 %v444
  %v2082 = vunpack.c.l.b16 %v445
  %v2083 = vunpack.c.h.b16 %v445
  %v2084 = vunpack.c.l.b16 %v446
  %v2085 = vunpack.c.h.b16 %v446
  %v2086 = vunpack.c.l.b16 %v447
  %v2087 = vunpack.c.h.b16 %v447
  %v2088 = vunpack.c.l.b16 %v448
  %v2089 = vunpack.c.h.b16 %v448
  %v2090 = vunpack.c.l.b16 %v449
  %v2091 = vunpack.c.h.b16 %v449
  %v2092 = vunpack.c.l.b16 %v450
  %v2093 = vunpack.c.h.b16 %v450
  %v2094 = vunpack.c.l.b16 %v451
  %v2095 = vunpack.c.h.b16 %v451
  %v2096 = vunpack.c.l.b16 %v452
  %v2097 = vunpack.c.h.b16 %v452
  %v2098 = vunpack.c.l.b16 %v453
  %v2099 = vunpack.c.h.b16 %v453
  %v2100 = vunpack.c.l.b16 %v454
  %v2101 = vunpack.c.h.b16 %v454
  %v2102 = vunpack.c.l.b16 %v455
  %v2103 = vunpack.c.h.b16 %v455
  %v2104 = vunpack.c.l.b16 %v456
  %v2105 = vunpack.c.h.b16 %v456
  %v2106 = vunpack.c.l.b16 %v457
  %v2107 = vunpack.c.h.b16 %v457
  %v2108 = vunpack.c.l.b16 %v458
  %v2109 = vunpack.c.h.b16 %v458
  %v2110 = vunpack.c.l.b16 %v459
  %v2111 = vunpack.c.h.b16 %v459
  %v2112 = vunpack.c.l.b16 %v460
  %v2113 = vunpack.c.h.b16 %v460
  %v2114 = vunpack.c.l.b16 %v461
  %v2115 = vunpack.c.h.b16 %v461
  %v2116 = vunpack.c.l.b16 %v462
  %v2117 = vunpack.c.h.b16 %v462
  %v2118 = vunpack.c.l.b16 %v463
  %v2119 = vunpack.c.h.b16 %v463
  %v2120 = vunpack.c.l.b16 %v464
  %v2121 = vunpack.c.h.b16 %v464
  %v2122 = vunpack.c.l.b16 %v465
  %v2123 = vunpack.c.h.b16 %v465
  %v2124 = vunpack.c.l.b16 %v466
  %v2125 = vunpack.c.h.b16 %v466
  %v2126 = vunpack.c.l.b16 %v467
  %v2127 = vunpack.c.h.b16 %v467
  %v2128 = vunpack.c.l.b16 %v468
  %v2129 = vunpack.c.h.b16 %v468
  %v2130 = vunpack.c.l.b16 %v469
  %v2131 = vunpack.c.h.b16 %v469
  %v2132 = vunpack.c.l.b16 %v470
  %v2133 = vunpack.c.h.b16 %v470
  %v2134 = vunpack.c.l.b16 %v471
  %v2135 = vunpack.c.h.b16 %v471
  %v2136 = vunpack.c.l.b16 %v472
  %v2137 = vunpack.c.h.b16 %v472
  %v2138 = vunpack.c.l.b16 %v473
  %v2139 = vunpack.c.h.b16 %v473
  %v2140 = vunpack.c.l.b16 %v474
  %v2141 = vunpack.c.h.b16 %v474
  %v2142 = vunpack.c.l.b16 %v475
  %v2143 = vunpack.c.h.b16 %v475
  %v2144 = vunpack.c.l.b16 %v476
  %v2145 = vunpack.c.h.b16 %v476
  %v2146 = vunpack.c.l.b16 %v477
  %v2147 = vunpack.c.h.b16 %v477
  %v2148 = vunpack.c.l.b16 %v478
  %v2149 = vunpack.c.h.b16 %v478
  %v2150 = vunpack.c.l.b16 %v479
  %v2151 = vunpack.c.h.b16 %v479
  %v2152 = vunpack.c.l.b16 %v480
  %v2153 = vunpack.c.h.b16 %v480
  %v2154 = vunpack.c.l.b16 %v481
  %v2155 = vunpack.c.h.b16 %v481
  %v2156 = vunpack.c.l.b16 %v482
  %v2157 = vunpack.c.h.b16 %v482
  %v2158 = vunpack.c.l.b16 %v483
  %v2159 = vunpack.c.h.b16 %v483
  %v2160 = vunpack.c.l.b16 %v484
  %v2161 = vunpack.c.h.b16 %v484
  %v2162 = vunpack.c.l.b16 %v485
  %v2163 = vunpack.c.h.b16 %v485
  %v2164 = vunpack.c.l.b16 %v486
  %v2165 = vunpack.c.h.b16 %v486
  %v2166 = vunpack.c.l.b16 %v487
  %v2167 = vunpack.c.h.b16 %v487
  %v2168 = vunpack.c.l.b16 %v488
  %v2169 = vunpack.c.h.b16 %v488
  %v2170 = vunpack.c.l.b16 %v489
  %v2171 = vunpack.c.h.b16 %v489
  %v2172 = vunpack.c.l.b16 %v490
  %v2173 = vunpack.c.h.b16 %v490
  %v2174 = vunpack.c.l.b16 %v491
  %v2175 = vunpack.c.h.b16 %v491
  %v2176 = vunpack.c.l.b16 %v492
  %v2177 = vunpack.c.h.b16 %v492
  %v2178 = vunpack.c.l.b16 %v493
  %v2179 = vunpack.c.h.b16 %v493
  %v2180 = vunpack.c.l.b16 %v494
  %v2181 = vunpack.c.h.b16 %v494
  %v2182 = vunpack.c.l.b16 %v495
  %v2183 = vunpack.c.h.b16 %v495
  %v2184 = vunpack.c.l.b16 %v496
  %v2185 = vunpack.c.h.b16 %v496
  %v2186 = vunpack.c.l.b16 %v497
  %v2187 = vunpack.c.h.b16 %v497
  %v2188 = vunpack.c.l.b16 %v498
  %v2189 = vunpack.c.h.b16 %v498
  %v2190 = vunpack.c.l.b16 %v499
  %v2191 = vunpack.c.h.b16 %v499
  %v2192 = vunpack.c.l.b16 %v500
  %v2193 = vunpack.c.h.b16 %v500
  %v2194 = vunpack.c.l.b16 %v501
  %v2195 = vunpack.c.h.b16 %v501
  %v2196 = vunpack.c.l.b16 %v502
  %v2197 = vunpack.c.h.b16 %v502
  %v2198 = vunpack.c.l.b16 %v503
  %v2199 = vunpack.c.h.b16 %v503
  %v2200 = vunpack.c.l.b16 %v504
  %v2201 = vunpack.c.h.b16 %v504
  %v2202 = vunpack.c.l.b16 %v505
  %v2203 = vunpack.c.h.b16 %v505
  %v2204 = vunpack.c.l.b16 %v506
  %v2205 = vunpack.c.h.b16 %v506
  %v2206 = vunpack.c.l.b16 %v507
  %v2207 = vunpack.c.h.b16 %v507
  %v2208 = vunpack.c.l.b16 %v508
  %v2209 = vunpack.c.h.b16 %v508
  %v2210 = vunpack.c.l.b16 %v509
  %v2211 = vunpack.c.h.b16 %v509
  %v2212 = vunpack.c.l.b16 %v510
  %v2213 = vunpack.c.h.b16 %v510
  %v2214 = vunpack.c.l.b16 %v511
  %v2215 = vunpack.c.h.b16 %v511
  %v2216 = vunpack.c.l.b16 %v512
  %v2217 = vunpack.c.h.b16 %v512
  %v2218 = vunpack.c.l.b16 %v513
  %v2219 = vunpack.c.h.b16 %v513
  %v2220 = vunpack.c.l.b16 %v514
  %v2221 = vunpack.c.h.b16 %v514
  %v2222 = vunpack.c.l.b16 %v515
  %v2223 = vunpack.c.h.b16 %v515
  %v2224 = vunpack.c.l.b16 %v516
  %v2225 = vunpack.c.h.b16 %v516
  %v2226 = vunpack.c.l.b16 %v517
  %v2227 = vunpack.c.h.b16 %v517
  %v2228 = vunpack.c.l.b16 %v518
  %v2229 = vunpack.c.h.b16 %v518
  %v2230 = vunpack.c.l.b16 %v519
  %v2231 = vunpack.c.h.b16 %v519
  %v2232 = vunpack.c.l.b16 %v520
  %v2233 = vunpack.c.h.b16 %v520
  %v2234 = vunpack.c.l.b16 %v521
  %v2235 = vunpack.c.h.b16 %v521
  %v2236 = vunpack.c.l.b16 %v522
  %v2237 = vunpack.c.h.b16 %v522
  %v2238 = vunpack.c.l.b16 %v523
  %v2239 = vunpack.c.h.b16 %v523
  %v2240 = vunpack.c.l.b16 %v524
  %v2241 = vunpack.c.h.b16 %v524
  %v2242 = vunpack.c.l.b16 %v525
  %v2243 = vunpack.c.h.b16 %v525
  %v2244 = vunpack.c.l.b16 %v526
  %v2245 = vunpack.c.h.b16 %v526
  %v2246 = vunpack.c.l.b16 %v527
  %v2247 = vunpack.c.h.b16 %v527
  %v2248 = vunpack.c.l.b16 %v528
  %v2249 = vunpack.c.h.b16 %v528
  %v2250 = vunpack.c.l.b16 %v529
  %v2251 = vunpack.c.h.b16 %v529
  %v2252 = vunpack.c.l.b16 %v530
  %v2253 = vunpack.c.h.b16 %v530
  %v2254 = vunpack.c.l.b16 %v531
  %v2255 = vunpack.c.h.b16 %v531
  %v2256 = vunpack.c.l.b16 %v532
  %v2257 = vunpack.c.h.b16 %v532
  %v2258 = vunpack.c.l.b16 %v533
  %v2259 = vunpack.c.h.b16 %v533
  %v2260 = vunpack.c.l.b16 %v534
  %v2261 = vunpack.c.h.b16 %v534
  %v2262 = vunpack.c.l.b16 %v535
  %v2263 = vunpack.c.h.b16 %v535
  %v2264 = vunpack.c.l.b16 %v536
  %v2265 = vunpack.c.h.b16 %v536
  %v2266 = vunpack.c.l.b16 %v537
  %v2267 = vunpack.c.h.b16 %v537
  %v2268 = vunpack.c.l.b16 %v538
  %v2269 = vunpack.c.h.b16 %v538
  %v2270 = vunpack.c.l.b16 %v539
  %v2271 = vunpack.c.h.b16 %v539
  %v2272 = vunpack.c.l.b16 %v540
  %v2273 = vunpack.c.h.b16 %v540
  %v2274 = vunpack.c.l.b16 %v541
  %v2275 = vunpack.c.h.b16 %v541
  %v2276 = vunpack.c.l.b16 %v542
  %v2277 = vunpack.c.h.b16 %v542
  %v2278 = vunpack.c.l.b16 %v543
  %v2279 = vunpack.c.h.b16 %v543
  %v2280 = vunpack.c.l.b16 %v544
  %v2281 = vunpack.c.h.b16 %v544
  %v2282 = vunpack.c.l.b16 %v545
  %v2283 = vunpack.c.h.b16 %v545
  %v2284 = vunpack.c.l.b16 %v546
  %v2285 = vunpack.c.h.b16 %v546
  %v2286 = vunpack.c.l.b16 %v547
  %v2287 = vunpack.c.h.b16 %v547
  %v2288 = vunpack.c.l.b16 %v548
  %v2289 = vunpack.c.h.b16 %v548
  %v2290 = vunpack.c.l.b16 %v549
  %v2291 = vunpack.c.h.b16 %v549
  %v2292 = vunpack.c.l.b16 %v550
  %v2293 = vunpack.c.h.b16 %v550
  %v2294 = vunpack.c.l.b16 %v551
  %v2295 = vunpack.c.h.b16 %v551
  %v2296 = vunpack.c.l.b16 %v552
  %v2297 = vunpack.c.h.b16 %v552
  %v2298 = vunpack.c.l.b16 %v553
  %v2299 = vunpack.c.h.b16 %v553
  %v2300 = vunpack.c.l.b16 %v554
  %v2301 = vunpack.c.h.b16 %v554
  %v2302 = vunpack.c.l.b16 %v555
  %v2303 = vunpack.c.h.b16 %v555
  %v2304 = vunpack.c.l.b16 %v556
  %v2305 = vunpack.c.h.b16 %v556
  %v2306 = vunpack.c.l.b16 %v557
  %v2307 = vunpack.c.h.b16 %v557
  %v2308 = vunpack.c.l.b16 %v558
  %v2309 = vunpack.c.h.b16 %v558
  %v2310 = vunpack.c.l.b16 %v559
  %v2311 = vunpack.c.h.b16 %v559
  %v2312 = vunpack.c.l.b16 %v560
  %v2313 = vunpack.c.h.b16 %v560
  %v2314 = vunpack.c.l.b16 %v561
  %v2315 = vunpack.c.h.b16 %v561
  %v2316 = vunpack.c.l.b16 %v562
  %v2317 = vunpack.c.h.b16 %v562
  %v2318 = vunpack.c.l.b16 %v563
  %v2319 = vunpack.c.h.b16 %v563
  %v2320 = vunpack.c.l.b16 %v564
  %v2321 = vunpack.c.h.b16 %v564
  %v2322 = vunpack.c.l.b16 %v565
  %v2323 = vunpack.c.h.b16 %v565
  %v2324 = vunpack.c.l.b16 %v566
  %v2325 = vunpack.c.h.b16 %v566
  %v2326 = vunpack.c.l.b16 %v567
  %v2327 = vunpack.c.h.b16 %v567
  %v2328 = vunpack.c.l.b16 %v568
  %v2329 = vunpack.c.h.b16 %v568
  %v2330 = vunpack.c.l.b16 %v569
  %v2331 = vunpack.c.h.b16 %v569
  %v2332 = vunpack.c.l.b16 %v570
  %v2333 = vunpack.c.h.b16 %v570
  %v2334 = vunpack.c.l.b16 %v571
  %v2335 = vunpack.c.h.b16 %v571
  %v2336 = vunpack.c.l.b16 %v572
  %v2337 = vunpack.c.h.b16 %v572
  %v2338 = vunpack.c.l.b16 %v573
  %v2339 = vunpack.c.h.b16 %v573
  %v2340 = vunpack.c.l.b16 %v574
  %v2341 = vunpack.c.h.b16 %v574
  %v2342 = vunpack.c.l.b16 %v575
  %v2343 = vunpack.c.h.b16 %v575
  %v2344 = vunpack.c.l.b16 %v576
  %v2345 = vunpack.c.h.b16 %v576
  %v2346 = vunpack.c.l.b16 %v577
  %v2347 = vunpack.c.h.b16 %v577
  %v2348 = vunpack.c.l.b16 %v578
  %v2349 = vunpack.c.h.b16 %v578
  %v2350 = vunpack.c.l.b16 %v579
  %v2351 = vunpack.c.h.b16 %v579
  %v2352 = vunpack.c.l.b16 %v580
  %v2353 = vunpack.c.h.b16 %v580
  %v2354 = vunpack.c.l.b16 %v581
  %v2355 = vunpack.c.h.b16 %v581
  %v2356 = vunpack.c.l.b16 %v582
  %v2357 = vunpack.c.h.b16 %v582
  %v2358 = vunpack.c.l.b16 %v583
  %v2359 = vunpack.c.h.b16 %v583
  %v2360 = vunpack.c.l.b16 %v584
  %v2361 = vunpack.c.h.b16 %v584
  %v2362 = vunpack.c.l.b16 %v585
  %v2363 = vunpack.c.h.b16 %v585
  %v2364 = vunpack.c.l.b16 %v586
  %v2365 = vunpack.c.h.b16 %v586
  %v2366 = vunpack.c.l.b16 %v587
  %v2367 = vunpack.c.h.b16 %v587
  %v2368 = vunpack.c.l.b16 %v588
  %v2369 = vunpack.c.h.b16 %v588
  %v2370 = vunpack.c.l.b16 %v589
  %v2371 = vunpack.c.h.b16 %v589
  %v2372 = vunpack.c.l.b16 %v590
  %v2373 = vunpack.c.h.b16 %v590
  %v2374 = vunpack.c.l.b16 %v591
  %v2375 = vunpack.c.h.b16 %v591
  %v2376 = vunpack.c.l.b16 %v592
  %v2377 = vunpack.c.h.b16 %v592
  %v2378 = vunpack.c.l.b16 %v593
  %v2379 = vunpack.c.h.b16 %v593
  %v2380 = vunpack.c.l.b16 %v594
  %v2381 = vunpack.c.h.b16 %v594
  %v2382 = vunpack.c.l.b16 %v595
  %v2383 = vunpack.c.h.b16 %v595
  %v2384 = vunpack.c.l.b16 %v596
  %v2385 = vunpack.c.h.b16 %v596
  %v2386 = vunpack.c.l.b16 %v597
  %v2387 = vunpack.c.h.b16 %v597
  %v2388 = vunpack.c.l.b16 %v598
  %v2389 = vunpack.c.h.b16 %v598
  %v2390 = vpack.c.b16 %v1242, %v1238
  %v2391 = vpack.c.b16 %v1243, %v1239
  %v2392 = vpack.c.b16 %v1244, %v1240
  %v2393 = vpack.c.b16 %v1245, %v1241
  %v2394 = vpack.c.b16 %v1250, %v1246
  %v2395 = vpack.c.b16 %v1251, %v1247
  %v2396 = vpack.c.b16 %v1252, %v1248
  %v2397 = vpack.c.b16 %v1253, %v1249
  %v2398 = vpack.c.b16 %v1258, %v1254
  %v2399 = vpack.c.b16 %v1259, %v1255
  %v2400 = vpack.c.b16 %v1260, %v1256
  %v2401 = vpack.c.b16 %v1261, %v1257
  %v2402 = vpack.c.b16 %v1266, %v1262
  %v2403 = vpack.c.b16 %v1267, %v1263
  %v2404 = vpack.c.b16 %v1268, %v1264
  %v2405 = vpack.c.b16 %v1269, %v1265
  %v2406 = vpack.c.b16 %v1274, %v1270
  %v2407 = vpack.c.b16 %v1275, %v1271
  %v2408 = vpack.c.b16 %v1276, %v1272
  %v2409 = vpack.c.b16 %v1277, %v1273
  %v2410 = vpack.c.b16 %v1282, %v1278
  %v2411 = vpack.c.b16 %v1283, %v1279
  %v2412 = vpack.c.b16 %v1284, %v1280
  %v2413 = vpack.c.b16 %v1285, %v1281
  %v2414 = vpack.c.b16 %v1290, %v1286
  %v2415 = vpack.c.b16 %v1291, %v1287
  %v2416 = vpack.c.b16 %v1292, %v1288
  %v2417 = vpack.c.b16 %v1293, %v1289
  %v2418 = vpack.c.b16 %v1298, %v1294
  %v2419 = vpack.c.b16 %v1299, %v1295
  %v2420 = vpack.c.b16 %v1300, %v1296
  %v2421 = vpack.c.b16 %v1301, %v1297
  %v2422 = vpack.c.b16 %v1306, %v1302
  %v2423 = vpack.c.b16 %v1307, %v1303
  %v2424 = vpack.c.b16 %v1308, %v1304
  %v2425 = vpack.c.b16 %v1309, %v1305
  %v2426 = vpack.c.b16 %v1314, %v1310
  %v2427 = vpack.c.b16 %v1315, %v1311
  %v2428 = vpack.c.b16 %v1316, %v1312
  %v2429 = vpack.c.b16 %v1317, %v1313
  %v2430 = vpack.c.b16 %v1322, %v1318
  %v2431 = vpack.c.b16 %v1323, %v1319
  %v2432 = vpack.c.b16 %v1324, %v1320
  %v2433 = vpack.c.b16 %v1325, %v1321
  %v2434 = vpack.c.b16 %v1330, %v1326
  %v2435 = vpack.c.b16 %v1331, %v1327
  %v2436 = vpack.c.b16 %v1332, %v1328
  %v2437 = vpack.c.b16 %v1333, %v1329
  %v2438 = vpack.c.b16 %v1338, %v1334
  %v2439 = vpack.c.b16 %v1339, %v1335
  %v2440 = vpack.c.b16 %v1340, %v1336
  %v2441 = vpack.c.b16 %v1341, %v1337
  %v2442 = vpack.c.b16 %v1346, %v1342
  %v2443 = vpack.c.b16 %v1347, %v1343
  %v2444 = vpack.c.b16 %v1348, %v1344
  %v2445 = vpack.c.b16 %v1349, %v1345
  %v2446 = vpack.c.b16 %v1354, %v1350
  %v2447 = vpack.c.b16 %v1355, %v1351
  %v2448 = vpack.c.b16 %v1356, %v1352
  %v2449 = vpack.c.b16 %v1357, %v1353
  %v2450 = vpack.c.b16 %v1362, %v1358
  %v2451 = vpack.c.b16 %v1363, %v1359
  %v2452 = vpack.c.b16 %v1364, %v1360
  %v2453 = vpack.c.b16 %v1365, %v1361
  %v2454 = vpack.c.b16 %v1370, %v1366
  %v2455 = vpack.c.b16 %v1371, %v1367
  %v2456 = vpack.c.b16 %v1372, %v1368
  %v2457 = vpack.c.b16 %v1373, %v1369
  %v2458 = vpack.c.b16 %v1378, %v1374
  %v2459 = vpack.c.b16 %v1379, %v1375
  %v2460 = vpack.c.b16 %v1380, %v1376
  %v2461 = vpack.c.b16 %v1381, %v1377
  %v2462 = vpack.c.b16 %v1386, %v1382
  %v2463 = vpack.c.b16 %v1387, %v1383
  %v2464 = vpack.c.b16 %v1388, %v1384
  %v2465 = vpack.c.b16 %v1389, %v1385
  %v2466 = vpack.c.b16 %v1394, %v1390
  %v2467 = vpack.c.b16 %v1395, %v1391
  %v2468 = vpack.c.b16 %v1396, %v1392
  %v2469 = vpack.c.b16 %v1397, %v1393
  %v2470 = vpack.c.b16 %v1402, %v1398
  %v2471 = vpack.c.b16 %v1403, %v1399
  %v2472 = vpack.c.b16 %v1404, %v1400
  %v2473 = vpack.c.b16 %v1405, %v1401
  %v2474 = vpack.c.b16 %v1410, %v1406
  %v2475 = vpack.c.b16 %v1411, %v1407
  %v2476 = vpack.c.b16 %v1412, %v1408
  %v2477 = vpack.c.b16 %v1413, %v1409
  %v2478 = vpack.c.b16 %v1418, %v1414
  %v2479 = vpack.c.b16 %v1419, %v1415
  %v2480 = vpack.c.b16 %v1420, %v1416
  %v2481 = vpack.c.b16 %v1421, %v1417
  %v2482 = vpack.c.b16 %v1426, %v1422
  %v2483 = vpack.c.b16 %v1427, %v1423
  %v2484 = vpack.c.b16 %v1428, %v1424
  %v2485 = vpack.c.b16 %v1429, %v1425
  %v2486 = vpack.c.b16 %v1434, %v1430
  %v2487 = vpack.c.b16 %v1435, %v1431
  %v2488 = vpack.c.b16 %v1436, %v1432
  %v2489 = vpack.c.b16 %v1437, %v1433
  %v2490 = vpack.c.b16 %v1442, %v1438
  %v2491 = vpack.c.b16 %v1443, %v1439
  %v2492 = vpack.c.b16 %v1444, %v1440
  %v2493 = vpack.c.b16 %v1445, %v1441
  %v2494 = vpack.c.b16 %v1450, %v1446
  %v2495 = vpack.c.b16 %v1451, %v1447
  %v2496 = vpack.c.b16 %v1452, %v1448
  %v2497 = vpack.c.b16 %v1453, %v1449
  %v2498 = vpack.c.b16 %v1458, %v1454
  %v2499 = vpack.c.b16 %v1459, %v1455
  %v2500 = vpack.c.b16 %v1460, %v1456
  %v2501 = vpack.c.b16 %v1461, %v1457
  %v2502 = vpack.c.b16 %v1466, %v1462
  %v2503 = vpack.c.b16 %v1467, %v1463
  %v2504 = vpack.c.b16 %v1468, %v1464
  %v2505 = vpack.c.b16 %v1469, %v1465
  %v2506 = vpack.c.b16 %v1474, %v1470
  %v2507 = vpack.c.b16 %v1475, %v1471
  %v2508 = vpack.c.b16 %v1476, %v1472
  %v2509 = vpack.c.b16 %v1477, %v1473
  %v2510 = vpack.c.b16 %v1482, %v1478
  %v2511 = vpack.c.b16 %v1483, %v1479
  %v2512 = vpack.c.b16 %v1484, %v1480
  %v2513 = vpack.c.b16 %v1485, %v1481
  %v2514 = vpack.c.b16 %v1490, %v1486
  %v2515 = vpack.c.b16 %v1491, %v1487
  %v2516 = vpack.c.b16 %v1492, %v1488
  %v2517 = vpack.c.b16 %v1493, %v1489
  %v2518 = vpack.c.b16 %v1498, %v1494
  %v2519 = vpack.c.b16 %v1499, %v1495
  %v2520 = vpack.c.b16 %v1500, %v1496
  %v2521 = vpack.c.b16 %v1501, %v1497
  %v2522 = vpack.c.b16 %v1506, %v1502
  %v2523 = vpack.c.b16 %v1507, %v1503
  %v2524 = vpack.c.b16 %v1508, %v1504
  %v2525 = vpack.c.b16 %v1509, %v1505
  %v2526 = vpack.c.b16 %v1514, %v1510
  %v2527 = vpack.c.b16 %v1515, %v1511
  %v2528 = vpack.c.b16 %v1516, %v1512
  %v2529 = vpack.c.b16 %v1517, %v1513
  %v2530 = vpack.c.b16 %v1522, %v1518
  %v2531 = vpack.c.b16 %v1523, %v1519
  %v2532 = vpack.c.b16 %v1524, %v1520
  %v2533 = vpack.c.b16 %v1525, %v1521
  %v2534 = vpack.c.b16 %v1530, %v1526
  %v2535 = vpack.c.b16 %v1531, %v1527
  %v2536 = vpack.c.b16 %v1532, %v1528
  %v2537 = vpack.c.b16 %v1533, %v1529
  %v2538 = vpack.c.b16 %v1538, %v1534
  %v2539 = vpack.c.b16 %v1539, %v1535
  %v2540 = vpack.c.b16 %v1540, %v1536
  %v2541 = vpack.c.b16 %v1541, %v1537
  %v2542 = vpack.c.b16 %v1546, %v1542
  %v2543 = vpack.c.b16 %v1547, %v1543
  %v2544 = vpack.c.b16 %v1548, %v1544
  %v2545 = vpack.c.b16 %v1549, %v1545
  %v2546 = vpack.c.b16 %v1554, %v1550
  %v2547 = vpack.c.b16 %v1555, %v1551
  %v2548 = vpack.c.b16 %v1556, %v1552
  %v2549 = vpack.c.b16 %v1557, %v1553
  %v2550 = vpack.c.b16 %v1562, %v1558
  %v2551 = vpack.c.b16 %v1563, %v1559
  %v2552 = vpack.c.b16 %v1564, %v1560
  %v2553 = vpack.c.b16 %v1565, %v1561
  %v2554 = vpack.c.b16 %v1570, %v1566
  %v2555 = vpack.c.b16 %v1571, %v1567
  %v2556 = vpack.c.b16 %v1572, %v1568
  %v2557 = vpack.c.b16 %v1573, %v1569
  %v2558 = vpack.c.b16 %v1578, %v1574
  %v2559 = vpack.c.b16 %v1579, %v1575
  %v2560 = vpack.c.b16 %v1580, %v1576
  %v2561 = vpack.c.b16 %v1581, %v1577
  %v2562 = vpack.c.b16 %v1586, %v1582
  %v2563 = vpack.c.b16 %v1587, %v1583
  %v2564 = vpack.c.b16 %v1588, %v1584
  %v2565 = vpack.c.b16 %v1589, %v1585
  %v2566 = vpack.c.b16 %v1594, %v1590
  %v2567 = vpack.c.b16 %v1595, %v1591
  %v2568 = vpack.c.b16 %v1596, %v1592
  %v2569 = vpack.c.b16 %v1597, %v1593
  %v2570 = vpack.c.b16 %v1602, %v1598
  %v2571 = vpack.c.b16 %v1603, %v1599
  %v2572 = vpack.c.b16 %v1604, %v1600
  %v2573 = vpack.c.b16 %v1605, %v1601
  %v2574 = vpack.c.b16 %v1610, %v1606
  %v2575 = vpack.c.b16 %v1611, %v1607
  %v2576 = vpack.c.b16 %v1612, %v1608
  %v2577 = vpack.c.b16 %v1613, %v1609
  %v2578 = vpack.c.b16 %v1618, %v1614
  %v2579 = vpack.c.b16 %v1619, %v1615
  %v2580 = vpack.c.b16 %v1620, %v1616
  %v2581 = vpack.c.b16 %v1621, %v1617
  %v2582 = vpack.c.b16 %v1626, %v1622
  %v2583 = vpack.c.b16 %v1627, %v1623
  %v2584 = vpack.c.b16 %v1628, %v1624
  %v2585 = vpack.c.b16 %v1629, %v1625
  %v2586 = vpack.c.b16 %v1634, %v1630
  %v2587 = vpack.c.b16 %v1635, %v1631
  %v2588 = vpack.c.b16 %v1636, %v1632
  %v2589 = vpack.c.b16 %v1637, %v1633
  %v2590 = vpack.c.b16 %v1642, %v1638
  %v2591 = vpack.c.b16 %v1643, %v1639
  %v2592 = vpack.c.b16 %v1644, %v1640
  %v2593 = vpack.c.b16 %v1645, %v1641
  %v2594 = vpack.c.b16 %v1650, %v1646
  %v2595 = vpack.c.b16 %v1651, %v1647
  %v2596 = vpack.c.b16 %v1652, %v1648
  %v2597 = vpack.c.b16 %v1653, %v1649
  %v2598 = vpack.c.b16 %v1658, %v1654
  %v2599 = vpack.c.b16 %v1659, %v1655
  %v2600 = vpack.c.b16 %v1660, %v1656
  %v2601 = vpack.c.b16 %v1661, %v1657
  %v2602 = vpack.c.b16 %v1666, %v1662
  %v2603 = vpack.c.b16 %v1667, %v1663
  %v2604 = vpack.c.b16 %v1668, %v1664
  %v2605 = vpack.c.b16 %v1669, %v1665
  %v2606 = vpack.c.b16 %v1674, %v1670
  %v2607 = vpack.c.b16 %v1675, %v1671
  %v2608 = vpack.c.b16 %v1676, %v1672
  %v2609 = vpack.c.b16 %v1677, %v1673
  %v2610 = vpack.c.b16 %v1682, %v1678
  %v2611 = vpack.c.b16 %v1683, %v1679
  %v2612 = vpack.c.b16 %v1684, %v1680
  %v2613 = vpack.c.b16 %v1685, %v1681
  %v2614 = vpack.c.b16 %v1690, %v1686
  %v2615 = vpack.c.b16 %v1691, %v1687
  %v2616 = vpack.c.b16 %v1692, %v1688
  %v2617 = vpack.c.b16 %v1693, %v1689
  %v2618 = vpack.c.b16 %v1698, %v1694
  %v2619 = vpack.c.b16 %v1699, %v1695
  %v2620 = vpack.c.b16 %v1700, %v1696
  %v2621 = vpack.c.b16 %v1701, %v1697
  %v2622 = vpack.c.b16 %v1706, %v1702
  %v2623 = vpack.c.b16 %v1707, %v1703
  %v2624 = vpack.c.b16 %v1708, %v1704
  %v2625 = vpack.c.b16 %v1709, %v1705
  %v2626 = vpack.c.b16 %v1714, %v1710
  %v2627 = vpack.c.b16 %v1715, %v1711
  %v2628 = vpack.c.b16 %v1716, %v1712
  %v2629 = vpack.c.b16 %v1717, %v1713
  %v2630 = vpack.c.b16 %v1722, %v1718
  %v2631 = vpack.c.b16 %v1723, %v1719
  %v2632 = vpack.c.b16 %v1724, %v1720
  %v2633 = vpack.c.b16 %v1725, %v1721
  %v2634 = vpack.c.b16 %v1730, %v1726
  %v2635 = vpack.c.b16 %v1731, %v1727
  %v2636 = vpack.c.b16 %v1732, %v1728
  %v2637 = vpack.c.b16 %v1733, %v1729
  %v2638 = vpack.c.b16 %v1738, %v1734
  %v2639 = vpack.c.b16 %v1739, %v1735
  %v2640 = vpack.c.b16 %v1740, %v1736
  %v2641 = vpack.c.b16 %v1741, %v1737
  %v2642 = vpack.c.b16 %v1746, %v1742
  %v2643 = vpack.c.b16 %v1747, %v1743
  %v2644 = vpack.c.b16 %v1748, %v1744
  %v2645 = vpack.c.b16 %v1749, %v1745
  %v2646 = vpack.c.b16 %v1754, %v1750
  %v2647 = vpack.c.b16 %v1755, %v1751
  %v2648 = vpack.c.b16 %v1756, %v1752
  %v2649 = vpack.c.b16 %v1757, %v1753
  %v2650 = vpack.c.b16 %v1762, %v1758
  %v2651 = vpack.c.b16 %v1763, %v1759
  %v2652 = vpack.c.b16 %v1764, %v1760
  %v2653 = vpack.c.b16 %v1765, %v1761
  %v2654 = vpack.c.b16 %v1770, %v1766
  %v2655 = vpack.c.b16 %v1771, %v1767
  %v2656 = vpack.c.b16 %v1772, %v1768
  %v2657 = vpack.c.b16 %v1773, %v1769
  %v2658 = vpack.c.b16 %v1778, %v1774
  %v2659 = vpack.c.b16 %v1779, %v1775
  %v2660 = vpack.c.b16 %v1780, %v1776
  %v2661 = vpack.c.b16 %v1781, %v1777
  %v2662 = vpack.c.b16 %v1786, %v1782
  %v2663 = vpack.c.b16 %v1787, %v1783
  %v2664 = vpack.c.b16 %v1788, %v1784
  %v2665 = vpack.c.b16 %v1789, %v1785
  %v2666 = vpack.c.b16 %v1794, %v1790
  %v2667 = vpack.c.b16 %v1795, %v1791
  %v2668 = vpack.c.b16 %v1796, %v1792
  %v2669 = vpack.c.b16 %v1797, %v1793
  %v2670 = vpack.c.b16 %v1802, %v1798
  %v2671 = vpack.c.b16 %v1803, %v1799
  %v2672 = vpack.c.b16 %v1804, %v1800
  %v2673 = vpack.c.b16 %v1805, %v1801
  %v2674 = vpack.c.b16 %v1810, %v1806
  %v2675 = vpack.c.b16 %v1811, %v1807
  %v2676 = vpack.c.b16 %v1812, %v1808
  %v2677 = vpack.c.b16 %v1813, %v1809
  %v2678 = vpack.c.b16 %v1818, %v1814
  %v2679 = vpack.c.b16 %v1819, %v1815
  %v2680 = vpack.c.b16 %v1820, %v1816
  %v2681 = vpack.c.b16 %v1821, %v1817
  %v2682 = vpack.c.b16 %v1826, %v1822
  %v2683 = vpack.c.b16 %v1827, %v1823
  %v2684 = vpack.c.b16 %v1828, %v1824
  %v2685 = vpack.c.b16 %v1829, %v1825
  %v2686 = vpack.c.b16 %v1834, %v1830
  %v2687 = vpack.c.b16 %v1835, %v1831
  %v2688 = vpack.c.b16 %v1836, %v1832
  %v2689 = vpack.c.b16 %v1837, %v1833
  %v2690 = vpack.c.b16 %v1842, %v1838
  %v2691 = vpack.c.b16 %v1843, %v1839
  %v2692 = vpack.c.b16 %v1844, %v1840
  %v2693 = vpack.c.b16 %v1845, %v1841
  %v2694 = vpack.c.b16 %v1850, %v1846
  %v2695 = vpack.c.b16 %v1851, %v1847
  %v2696 = vpack.c.b16 %v1852, %v1848
  %v2697 = vpack.c.b16 %v1853, %v1849
  %v2698 = vpack.c.b16 %v1858, %v1854
  %v2699 = vpack.c.b16 %v1859, %v1855
  %v2700 = vpack.c.b16 %v1860, %v1856
  %v2701 = vpack.c.b16 %v1861, %v1857
  %v2702 = vpack.c.b16 %v1866, %v1862
  %v2703 = vpack.c.b16 %v1867, %v1863
  %v2704 = vpack.c.b16 %v1868, %v1864
  %v2705 = vpack.c.b16 %v1869, %v1865
  %v2706 = vpack.c.b16 %v1874, %v1870
  %v2707 = vpack.c.b16 %v1875, %v1871
  %v2708 = vpack.c.b16 %v1876, %v1872
  %v2709 = vpack.c.b16 %v1877, %v1873
  %v2710 = vpack.c.b16 %v1882, %v1878
  %v2711 = vpack.c.b16 %v1883, %v1879
  %v2712 = vpack.c.b16 %v1884, %v1880
  %v2713 = vpack.c.b16 %v1885, %v1881
  %v2714 = vpack.c.b16 %v1890, %v1886
  %v2715 = vpack.c.b16 %v1891, %v1887
  %v2716 = vpack.c.b16 %v1892, %v1888
  %v2717 = vpack.c.b16 %v1893, %v1889
  %v2718 = vpack.c.b16 %v1898, %v1894
  %v2719 = vpack.c.b16 %v1899, %v1895
  %v2720 = vpack.c.b16 %v1900, %v1896
  %v2721 = vpack.c.b16 %v1901, %v1897
  %v2722 = vpack.c.b16 %v1906, %v1902
  %v2723 = vpack.c.b16 %v1907, %v1903
  %v2724 = vpack.c.b16 %v1908, %v1904
  %v2725 = vpack.c.b16 %v1909, %v1905
  %v2726 = vpack.c.b16 %v1914, %v1910
  %v2727 = vpack.c.b16 %v1915, %v1911
  %v2728 = vpack.c.b16 %v1916, %v1912
  %v2729 = vpack.c.b16 %v1917, %v1913
  %v2730 = vpack.c.b16 %v1922, %v1918
  %v2731 = vpack.c.b16 %v1923, %v1919
  %v2732 = vpack.c.b16 %v1924, %v1920
  %v2733 = vpack.c.b16 %v1925, %v1921
  %v2734 = vpack.c.b16 %v1930, %v1926
  %v2735 = vpack.c.b16 %v1931, %v1927
  %v2736 = vpack.c.b16 %v1932, %v1928
  %v2737 = vpack.c.b16 %v1933, %v1929
  %v2738 = vpack.c.b16 %v1938, %v1934
  %v2739 = vpack.c.b16 %v1939, %v1935
  %v2740 = vpack.c.b16 %v1940, %v1936
  %v2741 = vpack.c.b16 %v1941, %v1937
  %v2742 = vpack.c.b16 %v1946, %v1942
  %v2743 = vpack.c.b16 %v1947, %v1943
  %v2744 = vpack.c.b16 %v1948, %v1944
  %v2745 = vpack.c.b16 %v1949, %v1945
  %v2746 = vpack.c.b16 %v1954, %v1950
  %v2747 = vpack.c.b16 %v1955, %v1951
  %v2748 = vpack.c.b16 %v1956, %v1952
  %v2749 = vpack.c.b16 %v1957, %v1953
  %v2750 = vpack.c.b16 %v1962, %v1958
  %v2751 = vpack.c.b16 %v1963, %v1959
  %v2752 = vpack.c.b16 %v1964, %v1960
  %v2753 = vpack.c.b16 %v1965, %v1961
  %v2754 = vpack.c.b16 %v1970, %v1966
  %v2755 = vpack.c.b16 %v1971, %v1967
  %v2756 = vpack.c.b16 %v1972, %v1968
  %v2757 = vpack.c.b16 %v1973, %v1969
  %v2758 = vpack.c.b16 %v1978, %v1974
  %v2759 = vpack.c.b16 %v1979, %v1975
  %v2760 = vpack.c.b16 %v1980, %v1976
  %v2761 = vpack.c.b16 %v1981, %v1977
  %v2762 = vpack.c.b16 %v1986, %v1982
  %v2763 = vpack.c.b16 %v1987, %v1983
  %v2764 = vpack.c.b16 %v1988, %v1984
  %v2765 = vpack.c.b16 %v1989, %v1985
  %v2766 = vpack.c.b16 %v1994, %v1990
  %v2767 = vpack.c.b16 %v1995, %v1991
  %v2768 = vpack.c.b16 %v1996, %v1992
  %v2769 = vpack.c.b16 %v1997, %v1993
  %v2770 = vpack.c.b16 %v2002, %v1998
  %v2771 = vpack.c.b16 %v2003, %v1999
  %v2772 = vpack.c.b16 %v2004, %v2000
  %v2773 = vpack.c.b16 %v2005, %v2001
  %v2774 = vpack.c.b16 %v2010, %v2006
  %v2775 = vpack.c.b16 %v2011, %v2007
  %v2776 = vpack.c.b16 %v2012, %v2008
  %v2777 = vpack.c.b16 %v2013, %v2009
  %v2778 = vpack.c.b16 %v2018, %v2014
  %v2779 = vpack.c.b16 %v2019, %v2015
  %v2780 = vpack.c.b16 %v2020, %v2016
  %v2781 = vpack.c.b16 %v2021, %v2017
  %v2782 = vpack.c.b16 %v2026, %v2022
  %v2783 = vpack.c.b16 %v2027, %v2023
  %v2784 = vpack.c.b16 %v2028, %v2024
  %v2785 = vpack.c.b16 %v2029, %v2025
  %v2786 = vpack.c.b16 %v2034, %v2030
  %v2787 = vpack.c.b16 %v2035, %v2031
  %v2788 = vpack.c.b16 %v2036, %v2032
  %v2789 = vpack.c.b16 %v2037, %v2033
  %v2790 = vpack.c.b16 %v2042, %v2038
  %v2791 = vpack.c.b16 %v2043, %v2039
  %v2792 = vpack.c.b16 %v2044, %v2040
  %v2793 = vpack.c.b16 %v2045, %v2041
  %v2794 = vpack.c.b16 %v2050, %v2046
  %v2795 = vpack.c.b16 %v2051, %v2047
  %v2796 = vpack.c.b16 %v2052, %v2048
  %v2797 = vpack.c.b16 %v2053, %v2049
  %v2798 = vpack.c.b16 %v2058, %v2054
  %v2799 = vpack.c.b16 %v2059, %v2055
  %v2800 = vpack.c.b16 %v2060, %v2056
  %v2801 = vpack.c.b16 %v2061, %v2057
  %v2802 = vpack.c.b16 %v2066, %v2062
  %v2803 = vpack.c.b16 %v2067, %v2063
  %v2804 = vpack.c.b16 %v2068, %v2064
  %v2805 = vpack.c.b16 %v2069, %v2065
  %v2806 = vpack.c.b16 %v2074, %v2070
  %v2807 = vpack.c.b16 %v2075, %v2071
  %v2808 = vpack.c.b16 %v2076, %v2072
  %v2809 = vpack.c.b16 %v2077, %v2073
  %v2810 = vpack.c.b16 %v2082, %v2078
  %v2811 = vpack.c.b16 %v2083, %v2079
  %v2812 = vpack.c.b16 %v2084, %v2080
  %v2813 = vpack.c.b16 %v2085, %v2081
  %v2814 = vpack.c.b16 %v2090, %v2086
  %v2815 = vpack.c.b16 %v2091, %v2087
  %v2816 = vpack.c.b16 %v2092, %v2088
  %v2817 = vpack.c.b16 %v2093, %v2089
  %v2818 = vpack.c.b16 %v2098, %v2094
  %v2819 = vpack.c.b16 %v2099, %v2095
  %v2820 = vpack.c.b16 %v2100, %v2096
  %v2821 = vpack.c.b16 %v2101, %v2097
  %v2822 = vpack.c.b16 %v2106, %v2102
  %v2823 = vpack.c.b16 %v2107, %v2103
  %v2824 = vpack.c.b16 %v2108, %v2104
  %v2825 = vpack.c.b16 %v2109, %v2105
  %v2826 = vpack.c.b16 %v2114, %v2110
  %v2827 = vpack.c.b16 %v2115, %v2111
  %v2828 = vpack.c.b16 %v2116, %v2112
  %v2829 = vpack.c.b16 %v2117, %v2113
  %v2830 = vpack.c.b16 %v2122, %v2118
  %v2831 = vpack.c.b16 %v2123, %v2119
  %v2832 = vpack.c.b16 %v2124, %v2120
  %v2833 = vpack.c.b16 %v2125, %v2121
  %v2834 = vpack.c.b16 %v2130, %v2126
  %v2835 = vpack.c.b16 %v2131, %v2127
  %v2836 = vpack.c.b16 %v2132, %v2128
  %v2837 = vpack.c.b16 %v2133, %v2129
  %v2838 = vpack.c.b16 %v2138, %v2134
  %v2839 = vpack.c.b16 %v2139, %v2135
  %v2840 = vpack.c.b16 %v2140, %v2136
  %v2841 = vpack.c.b16 %v2141, %v2137
  %v2842 = vpack.c.b16 %v2146, %v2142
  %v2843 = vpack.c.b16 %v2147, %v2143
  %v2844 = vpack.c.b16 %v2148, %v2144
  %v2845 = vpack.c.b16 %v2149, %v2145
  %v2846 = vpack.c.b16 %v2154, %v2150
  %v2847 = vpack.c.b16 %v2155, %v2151
  %v2848 = vpack.c.b16 %v2156, %v2152
  %v2849 = vpack.c.b16 %v2157, %v2153
  %v2850 = vpack.c.b16 %v2162, %v2158
  %v2851 = vpack.c.b16 %v2163, %v2159
  %v2852 = vpack.c.b16 %v2164, %v2160
  %v2853 = vpack.c.b16 %v2165, %v2161
  %v2854 = vpack.c.b16 %v2170, %v2166
  %v2855 = vpack.c.b16 %v2171, %v2167
  %v2856 = vpack.c.b16 %v2172, %v2168
  %v2857 = vpack.c.b16 %v2173, %v2169
  %v2858 = vpack.c.b16 %v2178, %v2174
  %v2859 = vpack.c.b16 %v2179, %v2175
  %v2860 = vpack.c.b16 %v2180, %v2176
  %v2861 = vpack.c.b16 %v2181, %v2177
  %v2862 = vpack.c.b16 %v2186, %v2182
  %v2863 = vpack.c.b16 %v2187, %v2183
  %v2864 = vpack.c.b16 %v2188, %v2184
  %v2865 = vpack.c.b16 %v2189, %v2185
  %v2866 = vpack.c.b16 %v2194, %v2190
  %v2867 = vpack.c.b16 %v2195, %v2191
  %v2868 = vpack.c.b16 %v2196, %v2192
  %v2869 = vpack.c.b16 %v2197, %v2193
  %v2870 = vpack.c.b16 %v2202, %v2198
  %v2871 = vpack.c.b16 %v2203, %v2199
  %v2872 = vpack.c.b16 %v2204, %v2200
  %v2873 = vpack.c.b16 %v2205, %v2201
  %v2874 = vpack.c.b16 %v2210, %v2206
  %v2875 = vpack.c.b16 %v2211, %v2207
  %v2876 = vpack.c.b16 %v2212, %v2208
  %v2877 = vpack.c.b16 %v2213, %v2209
  %v2878 = vpack.c.b16 %v2218, %v2214
  %v2879 = vpack.c.b16 %v2219, %v2215
  %v2880 = vpack.c.b16 %v2220, %v2216
  %v2881 = vpack.c.b16 %v2221, %v2217
  %v2882 = vpack.c.b16 %v2226, %v2222
  %v2883 = vpack.c.b16 %v2227, %v2223
  %v2884 = vpack.c.b16 %v2228, %v2224
  %v2885 = vpack.c.b16 %v2229, %v2225
  %v2886 = vpack.c.b16 %v2234, %v2230
  %v2887 = vpack.c.b16 %v2235, %v2231
  %v2888 = vpack.c.b16 %v2236, %v2232
  %v2889 = vpack.c.b16 %v2237, %v2233
  %v2890 = vpack.c.b16 %v2242, %v2238
  %v2891 = vpack.c.b16 %v2243, %v2239
  %v2892 = vpack.c.b16 %v2244, %v2240
  %v2893 = vpack.c.b16 %v2245, %v2241
  %v2894 = vpack.c.b16 %v2250, %v2246
  %v2895 = vpack.c.b16 %v2251, %v2247
  %v2896 = vpack.c.b16 %v2252, %v2248
  %v2897 = vpack.c.b16 %v2253, %v2249
  %v2898 = vpack.c.b16 %v2258, %v2254
  %v2899 = vpack.c.b16 %v2259, %v2255
  %v2900 = vpack.c.b16 %v2260, %v2256
  %v2901 = vpack.c.b16 %v2261, %v2257
  %v2902 = vpack.c.b16 %v2266, %v2262
  %v2903 = vpack.c.b16 %v2267, %v2263
  %v2904 = vpack.c.b16 %v2268, %v2264
  %v2905 = vpack.c.b16 %v2269, %v2265
  %v2906 = vpack.c.b16 %v2274, %v2270
  %v2907 = vpack.c.b16 %v2275, %v2271
  %v2908 = vpack.c.b16 %v2276, %v2272
  %v2909 = vpack.c.b16 %v2277, %v2273
  %v2910 = vpack.c.b16 %v2282, %v2278
  %v2911 = vpack.c.b16 %v2283, %v2279
  %v2912 = vpack.c.b16 %v2284, %v2280
  %v2913 = vpack.c.b16 %v2285, %v2281
  %v2914 = vpack.c.b16 %v2290, %v2286
  %v2915 = vpack.c.b16 %v2291, %v2287
  %v2916 = vpack.c.b16 %v2292, %v2288
  %v2917 = vpack.c.b16 %v2293, %v2289
  %v2918 = vpack.c.b16 %v2298, %v2294
  %v2919 = vpack.c.b16 %v2299, %v2295
  %v2920 = vpack.c.b16 %v2300, %v2296
  %v2921 = vpack.c.b16 %v2301, %v2297
  %v2922 = vpack.c.b16 %v2306, %v2302
  %v2923 = vpack.c.b16 %v2307, %v2303
  %v2924 = vpack.c.b16 %v2308, %v2304
  %v2925 = vpack.c.b16 %v2309, %v2305
  %v2926 = vpack.c.b16 %v2314, %v2310
  %v2927 = vpack.c.b16 %v2315, %v2311
  %v2928 = vpack.c.b16 %v2316, %v2312
  %v2929 = vpack.c.b16 %v2317, %v2313
  %v2930 = vpack.c.b16 %v2322, %v2318
  %v2931 = vpack.c.b16 %v2323, %v2319
  %v2932 = vpack.c.b16 %v2324, %v2320
  %v2933 = vpack.c.b16 %v2325, %v2321
  %v2934 = vpack.c.b16 %v2330, %v2326
  %v2935 = vpack.c.b16 %v2331, %v2327
  %v2936 = vpack.c.b16 %v2332, %v2328
  %v2937 = vpack.c.b16 %v2333, %v2329
  %v2938 = vpack.c.b16 %v2338, %v2334
  %v2939 = vpack.c.b16 %v2339, %v2335
  %v2940 = vpack.c.b16 %v2340, %v2336
  %v2941 = vpack.c.b16 %v2341, %v2337
  %v2942 = vpack.c.b16 %v2346, %v2342
  %v2943 = vpack.c.b16 %v2347, %v2343
  %v2944 = vpack.c.b16 %v2348, %v2344
  %v2945 = vpack.c.b16 %v2349, %v2345
  %v2946 = vpack.c.b16 %v2354, %v2350
  %v2947 = vpack.c.b16 %v2355, %v2351
  %v2948 = vpack.c.b16 %v2356, %v2352
  %v2949 = vpack.c.b16 %v2357, %v2353
  %v2950 = vpack.c.b16 %v2362, %v2358
  %v2951 = vpack.c.b16 %v2363, %v2359
  %v2952 = vpack.c.b16 %v2364, %v2360
  %v2953 = vpack.c.b16 %v2365, %v2361
  %v2954 = vpack.c.b16 %v2370, %v2366
  %v2955 = vpack.c.b16 %v2371, %v2367
  %v2956 = vpack.c.b16 %v2372, %v2368
  %v2957 = vpack.c.b16 %v2373, %v2369
  %v2958 = vpack.c.b16 %v2378, %v2374
  %v2959 = vpack.c.b16 %v2379, %v2375
  %v2960 = vpack.c.b16 %v2380, %v2376
  %v2961 = vpack.c.b16 %v2381, %v2377
  %v2962 = vpack.c.b16 %v2386, %v2382
  %v2963 = vpack.c.b16 %v2387, %v2383
  %v2964 = vpack.c.b16 %v2388, %v2384
  %v2965 = vpack.c.b16 %v2389, %v2385
  %3542 = vmatpush.bf16.msra.mxu0 %v2418
  %3543 = vmatpush.bf16.msra.mxu0 %v2414
  %3544 = vmatpush.bf16.msra.mxu0 %v2410
  %3545 = vmatpush.bf16.msra.mxu0 %v2406
  %3546 = vmatpush.bf16.msra.mxu0 %v2402
  %3547 = vmatpush.bf16.msra.mxu0 %v2398
  %3548 = vmatpush.bf16.msra.mxu0 %v2394
  %3549 = vmatpush.bf16.msra.mxu0 %v2390
  %3550 = vmatmul.bf16.gmra.mxu0 %v626
  %v3551 = vpop.f32.mrf.mxu0
  %v3552 = vadd.f32 0.0, %v3551
  %v3553 = vpop.f32.mrf.mxu0
  %3554 = vdwg.mxu0
  %3555 = vmatpush.bf16.msra.mxu0 %v2450
  %3556 = vmatpush.bf16.msra.mxu0 %v2446
  %3557 = vmatpush.bf16.msra.mxu0 %v2442
  %3558 = vmatpush.bf16.msra.mxu0 %v2438
  %3559 = vmatpush.bf16.msra.mxu0 %v2434
  %3560 = vmatpush.bf16.msra.mxu0 %v2430
  %3561 = vmatpush.bf16.msra.mxu0 %v2426
  %3562 = vmatpush.bf16.msra.mxu0 %v2422
  %3563 = vmatmul.bf16.gmra.mxu0 %v627
  %v3564 = vpop.f32.mrf.mxu0
  %v3565 = vadd.f32 %v3552, %v3564
  %v3566 = vpop.f32.mrf.mxu0
  %3567 = vdwg.mxu0
  %3568 = vmatpush.bf16.msra.mxu0 %v2482
  %3569 = vmatpush.bf16.msra.mxu0 %v2478
  %3570 = vmatpush.bf16.msra.mxu0 %v2474
  %3571 = vmatpush.bf16.msra.mxu0 %v2470
  %3572 = vmatpush.bf16.msra.mxu0 %v2466
  %3573 = vmatpush.bf16.msra.mxu0 %v2462
  %3574 = vmatpush.bf16.msra.mxu0 %v2458
  %3575 = vmatpush.bf16.msra.mxu0 %v2454
  %3576 = vmatmul.bf16.gmra.mxu0 %v628
  %v3577 = vpop.f32.mrf.mxu0
  %v3578 = vadd.f32 %v3565, %v3577
  %v3579 = vpop.f32.mrf.mxu0
  %3580 = vdwg.mxu0
  %3581 = vmatpush.bf16.msra.mxu0 %v2514
  %3582 = vmatpush.bf16.msra.mxu0 %v2510
  %3583 = vmatpush.bf16.msra.mxu0 %v2506
  %3584 = vmatpush.bf16.msra.mxu0 %v2502
  %3585 = vmatpush.bf16.msra.mxu0 %v2498
  %3586 = vmatpush.bf16.msra.mxu0 %v2494
  %3587 = vmatpush.bf16.msra.mxu0 %v2490
  %3588 = vmatpush.bf16.msra.mxu0 %v2486
  %3589 = vmatmul.bf16.gmra.mxu0 %v629
  %v3590 = vpop.f32.mrf.mxu0
  %v3591 = vadd.f32 %v3578, %v3590
  %v3592 = vpop.f32.mrf.mxu0
  %3593 = vdwg.mxu0
  %3594 = vmatpush.bf16.msra.mxu0 %v2546
  %3595 = vmatpush.bf16.msra.mxu0 %v2542
  %3596 = vmatpush.bf16.msra.mxu0 %v2538
  %3597 = vmatpush.bf16.msra.mxu0 %v2534
  %3598 = vmatpush.bf16.msra.mxu0 %v2530
  %3599 = vmatpush.bf16.msra.mxu0 %v2526
  %3600 = vmatpush.bf16.msra.mxu0 %v2522
  %3601 = vmatpush.bf16.msra.mxu0 %v2518
  %3602 = vmatmul.bf16.gmra.mxu0 %v630
  %v3603 = vpop.f32.mrf.mxu0
  %v3604 = vadd.f32 %v3591, %v3603
  %v3605 = vpop.f32.mrf.mxu0
  %3606 = vdwg.mxu0
  %3607 = vmatpush.bf16.msra.mxu0 %v2578
  %3608 = vmatpush.bf16.msra.mxu0 %v2574
  %3609 = vmatpush.bf16.msra.mxu0 %v2570
  %3610 = vmatpush.bf16.msra.mxu0 %v2566
  %3611 = vmatpush.bf16.msra.mxu0 %v2562
  %3612 = vmatpush.bf16.msra.mxu0 %v2558
  %3613 = vmatpush.bf16.msra.mxu0 %v2554
  %3614 = vmatpush.bf16.msra.mxu0 %v2550
  %3615 = vmatmul.bf16.gmra.mxu0 %v631
  %v3616 = vpop.f32.mrf.mxu0
  %v3617 = vadd.f32 %v3604, %v3616
  %v3618 = vpop.f32.mrf.mxu0
  %3619 = vdwg.mxu0
  %3620 = vmatpush.bf16.msra.mxu0 %v2610
  %3621 = vmatpush.bf16.msra.mxu0 %v2606
  %3622 = vmatpush.bf16.msra.mxu0 %v2602
  %3623 = vmatpush.bf16.msra.mxu0 %v2598
  %3624 = vmatpush.bf16.msra.mxu0 %v2594
  %3625 = vmatpush.bf16.msra.mxu0 %v2590
  %3626 = vmatpush.bf16.msra.mxu0 %v2586
  %3627 = vmatpush.bf16.msra.mxu0 %v2582
  %3628 = vmatmul.bf16.gmra.mxu0 %v632
  %v3629 = vpop.f32.mrf.mxu0
  %v3630 = vadd.f32 %v3617, %v3629
  %v3631 = vpop.f32.mrf.mxu0
  %3632 = vdwg.mxu0
  %3633 = vmatpush.bf16.msra.mxu0 %v2642
  %3634 = vmatpush.bf16.msra.mxu0 %v2638
  %3635 = vmatpush.bf16.msra.mxu0 %v2634
  %3636 = vmatpush.bf16.msra.mxu0 %v2630
  %3637 = vmatpush.bf16.msra.mxu0 %v2626
  %3638 = vmatpush.bf16.msra.mxu0 %v2622
  %3639 = vmatpush.bf16.msra.mxu0 %v2618
  %3640 = vmatpush.bf16.msra.mxu0 %v2614
  %3641 = vmatmul.bf16.gmra.mxu0 %v633
  %v3642 = vpop.f32.mrf.mxu0
  %v3643 = vadd.f32 %v3630, %v3642
  %v3644 = vpop.f32.mrf.mxu0
  %3645 = vdwg.mxu0
  %3646 = vmatpush.bf16.msra.mxu0 %v2674
  %3647 = vmatpush.bf16.msra.mxu0 %v2670
  %3648 = vmatpush.bf16.msra.mxu0 %v2666
  %3649 = vmatpush.bf16.msra.mxu0 %v2662
  %3650 = vmatpush.bf16.msra.mxu0 %v2658
  %3651 = vmatpush.bf16.msra.mxu0 %v2654
  %3652 = vmatpush.bf16.msra.mxu0 %v2650
  %3653 = vmatpush.bf16.msra.mxu0 %v2646
  %3654 = vmatmul.bf16.gmra.mxu0 %v634
  %v3655 = vpop.f32.mrf.mxu0
  %v3656 = vadd.f32 %v3643, %v3655
  %v3657 = vpop.f32.mrf.mxu0
  %3658 = vdwg.mxu0
  %3659 = vmatpush.bf16.msra.mxu0 %v2706
  %3660 = vmatpush.bf16.msra.mxu0 %v2702
  %3661 = vmatpush.bf16.msra.mxu0 %v2698
  %3662 = vmatpush.bf16.msra.mxu0 %v2694
  %3663 = vmatpush.bf16.msra.mxu0 %v2690
  %3664 = vmatpush.bf16.msra.mxu0 %v2686
  %3665 = vmatpush.bf16.msra.mxu0 %v2682
  %3666 = vmatpush.bf16.msra.mxu0 %v2678
  %3667 = vmatmul.bf16.gmra.mxu0 %v635
  %v3668 = vpop.f32.mrf.mxu0
  %v3669 = vadd.f32 %v3656, %v3668
  %v3670 = vpop.f32.mrf.mxu0
  %3671 = vdwg.mxu0
  %3672 = vmatpush.bf16.msra.mxu0 %v2738
  %3673 = vmatpush.bf16.msra.mxu0 %v2734
  %3674 = vmatpush.bf16.msra.mxu0 %v2730
  %3675 = vmatpush.bf16.msra.mxu0 %v2726
  %3676 = vmatpush.bf16.msra.mxu0 %v2722
  %3677 = vmatpush.bf16.msra.mxu0 %v2718
  %3678 = vmatpush.bf16.msra.mxu0 %v2714
  %3679 = vmatpush.bf16.msra.mxu0 %v2710
  %3680 = vmatmul.bf16.gmra.mxu0 %v636
  %v3681 = vpop.f32.mrf.mxu0
  %v3682 = vadd.f32 %v3669, %v3681
  %v3683 = vpop.f32.mrf.mxu0
  %3684 = vdwg.mxu0
  %3685 = vmatpush.bf16.msra.mxu0 %v2770
  %3686 = vmatpush.bf16.msra.mxu0 %v2766
  %3687 = vmatpush.bf16.msra.mxu0 %v2762
  %3688 = vmatpush.bf16.msra.mxu0 %v2758
  %3689 = vmatpush.bf16.msra.mxu0 %v2754
  %3690 = vmatpush.bf16.msra.mxu0 %v2750
  %3691 = vmatpush.bf16.msra.mxu0 %v2746
  %3692 = vmatpush.bf16.msra.mxu0 %v2742
  %3693 = vmatmul.bf16.gmra.mxu0 %v637
  %v3694 = vpop.f32.mrf.mxu0
  %v3695 = vadd.f32 %v3682, %v3694
  %v3696 = vpop.f32.mrf.mxu0
  %3697 = vdwg.mxu0
  %3698 = vmatpush.bf16.msra.mxu0 %v2802
  %3699 = vmatpush.bf16.msra.mxu0 %v2798
  %3700 = vmatpush.bf16.msra.mxu0 %v2794
  %3701 = vmatpush.bf16.msra.mxu0 %v2790
  %3702 = vmatpush.bf16.msra.mxu0 %v2786
  %3703 = vmatpush.bf16.msra.mxu0 %v2782
  %3704 = vmatpush.bf16.msra.mxu0 %v2778
  %3705 = vmatpush.bf16.msra.mxu0 %v2774
  %3706 = vmatmul.bf16.gmra.mxu0 %v638
  %v3707 = vpop.f32.mrf.mxu0
  %v3708 = vadd.f32 %v3695, %v3707
  %v3709 = vpop.f32.mrf.mxu0
  %3710 = vdwg.mxu0
  %3711 = vmatpush.bf16.msra.mxu0 %v2834
  %3712 = vmatpush.bf16.msra.mxu0 %v2830
  %3713 = vmatpush.bf16.msra.mxu0 %v2826
  %3714 = vmatpush.bf16.msra.mxu0 %v2822
  %3715 = vmatpush.bf16.msra.mxu0 %v2818
  %3716 = vmatpush.bf16.msra.mxu0 %v2814
  %3717 = vmatpush.bf16.msra.mxu0 %v2810
  %3718 = vmatpush.bf16.msra.mxu0 %v2806
  %3719 = vmatmul.bf16.gmra.mxu0 %v639
  %v3720 = vpop.f32.mrf.mxu0
  %v3721 = vadd.f32 %v3708, %v3720
  %v3722 = vpop.f32.mrf.mxu0
  %3723 = vdwg.mxu0
  %3724 = vmatpush.bf16.msra.mxu0 %v2866
  %3725 = vmatpush.bf16.msra.mxu0 %v2862
  %3726 = vmatpush.bf16.msra.mxu0 %v2858
  %3727 = vmatpush.bf16.msra.mxu0 %v2854
  %3728 = vmatpush.bf16.msra.mxu0 %v2850
  %3729 = vmatpush.bf16.msra.mxu0 %v2846
  %3730 = vmatpush.bf16.msra.mxu0 %v2842
  %3731 = vmatpush.bf16.msra.mxu0 %v2838
  %3732 = vmatmul.bf16.gmra.mxu0 %v640
  %v3733 = vpop.f32.mrf.mxu0
  %v3734 = vadd.f32 %v3721, %v3733
  %v3735 = vpop.f32.mrf.mxu0
  %3736 = vdwg.mxu0
  %3737 = vmatpush.bf16.msra.mxu0 %v2898
  %3738 = vmatpush.bf16.msra.mxu0 %v2894
  %3739 = vmatpush.bf16.msra.mxu0 %v2890
  %3740 = vmatpush.bf16.msra.mxu0 %v2886
  %3741 = vmatpush.bf16.msra.mxu0 %v2882
  %3742 = vmatpush.bf16.msra.mxu0 %v2878
  %3743 = vmatpush.bf16.msra.mxu0 %v2874
  %3744 = vmatpush.bf16.msra.mxu0 %v2870
  %3745 = vmatmul.bf16.gmra.mxu0 %v641
  %v3746 = vpop.f32.mrf.mxu0
  %v3747 = vadd.f32 %v3734, %v3746
  %v3748 = vpop.f32.mrf.mxu0
  %3749 = vdwg.mxu0
  %3750 = vmatpush.bf16.msra.mxu0 %v2930
  %3751 = vmatpush.bf16.msra.mxu0 %v2926
  %3752 = vmatpush.bf16.msra.mxu0 %v2922
  %3753 = vmatpush.bf16.msra.mxu0 %v2918
  %3754 = vmatpush.bf16.msra.mxu0 %v2914
  %3755 = vmatpush.bf16.msra.mxu0 %v2910
  %3756 = vmatpush.bf16.msra.mxu0 %v2906
  %3757 = vmatpush.bf16.msra.mxu0 %v2902
  %3758 = vmatmul.bf16.gmra.mxu0 %v642
  %v3759 = vpop.f32.mrf.mxu0
  %v3760 = vadd.f32 %v3747, %v3759
  %v3761 = vpop.f32.mrf.mxu0
  %3762 = vdwg.mxu0
  %3763 = vmatpush.bf16.msra.mxu0 %v2962
  %3764 = vmatpush.bf16.msra.mxu0 %v2958
  %3765 = vmatpush.bf16.msra.mxu0 %v2954
  %3766 = vmatpush.bf16.msra.mxu0 %v2950
  %3767 = vmatpush.bf16.msra.mxu0 %v2946
  %3768 = vmatpush.bf16.msra.mxu0 %v2942
  %3769 = vmatpush.bf16.msra.mxu0 %v2938
  %3770 = vmatpush.bf16.msra.mxu0 %v2934
  %3771 = vmatmul.bf16.gmra.mxu0 %v643
  %v3772 = vpop.f32.mrf.mxu0
  %v3773 = vadd.f32 %v3760, %v3772
  %v3774 = vpop.f32.mrf.mxu0
  %3775 = vdwg.mxu0
  %3776 = vmatpush.bf16.msra.mxu0 %v2419
  %3777 = vmatpush.bf16.msra.mxu0 %v2415
  %3778 = vmatpush.bf16.msra.mxu0 %v2411
  %3779 = vmatpush.bf16.msra.mxu0 %v2407
  %3780 = vmatpush.bf16.msra.mxu0 %v2403
  %3781 = vmatpush.bf16.msra.mxu0 %v2399
  %3782 = vmatpush.bf16.msra.mxu0 %v2395
  %3783 = vmatpush.bf16.msra.mxu0 %v2391
  %3784 = vmatmul.bf16.gmra.mxu0 %v626
  %v3785 = vpop.f32.mrf.mxu0
  %v3786 = vadd.f32 0.0, %v3785
  %v3787 = vpop.f32.mrf.mxu0
  %3788 = vdwg.mxu0
  %3789 = vmatpush.bf16.msra.mxu0 %v2451
  %3790 = vmatpush.bf16.msra.mxu0 %v2447
  %3791 = vmatpush.bf16.msra.mxu0 %v2443
  %3792 = vmatpush.bf16.msra.mxu0 %v2439
  %3793 = vmatpush.bf16.msra.mxu0 %v2435
  %3794 = vmatpush.bf16.msra.mxu0 %v2431
  %3795 = vmatpush.bf16.msra.mxu0 %v2427
  %3796 = vmatpush.bf16.msra.mxu0 %v2423
  %3797 = vmatmul.bf16.gmra.mxu0 %v627
  %v3798 = vpop.f32.mrf.mxu0
  %v3799 = vadd.f32 %v3786, %v3798
  %v3800 = vpop.f32.mrf.mxu0
  %3801 = vdwg.mxu0
  %3802 = vmatpush.bf16.msra.mxu0 %v2483
  %3803 = vmatpush.bf16.msra.mxu0 %v2479
  %3804 = vmatpush.bf16.msra.mxu0 %v2475
  %3805 = vmatpush.bf16.msra.mxu0 %v2471
  %3806 = vmatpush.bf16.msra.mxu0 %v2467
  %3807 = vmatpush.bf16.msra.mxu0 %v2463
  %3808 = vmatpush.bf16.msra.mxu0 %v2459
  %3809 = vmatpush.bf16.msra.mxu0 %v2455
  %3810 = vmatmul.bf16.gmra.mxu0 %v628
  %v3811 = vpop.f32.mrf.mxu0
  %v3812 = vadd.f32 %v3799, %v3811
  %v3813 = vpop.f32.mrf.mxu0
  %3814 = vdwg.mxu0
  %3815 = vmatpush.bf16.msra.mxu0 %v2515
  %3816 = vmatpush.bf16.msra.mxu0 %v2511
  %3817 = vmatpush.bf16.msra.mxu0 %v2507
  %3818 = vmatpush.bf16.msra.mxu0 %v2503
  %3819 = vmatpush.bf16.msra.mxu0 %v2499
  %3820 = vmatpush.bf16.msra.mxu0 %v2495
  %3821 = vmatpush.bf16.msra.mxu0 %v2491
  %3822 = vmatpush.bf16.msra.mxu0 %v2487
  %3823 = vmatmul.bf16.gmra.mxu0 %v629
  %v3824 = vpop.f32.mrf.mxu0
  %v3825 = vadd.f32 %v3812, %v3824
  %v3826 = vpop.f32.mrf.mxu0
  %3827 = vdwg.mxu0
  %3828 = vmatpush.bf16.msra.mxu0 %v2547
  %3829 = vmatpush.bf16.msra.mxu0 %v2543
  %3830 = vmatpush.bf16.msra.mxu0 %v2539
  %3831 = vmatpush.bf16.msra.mxu0 %v2535
  %3832 = vmatpush.bf16.msra.mxu0 %v2531
  %3833 = vmatpush.bf16.msra.mxu0 %v2527
  %3834 = vmatpush.bf16.msra.mxu0 %v2523
  %3835 = vmatpush.bf16.msra.mxu0 %v2519
  %3836 = vmatmul.bf16.gmra.mxu0 %v630
  %v3837 = vpop.f32.mrf.mxu0
  %v3838 = vadd.f32 %v3825, %v3837
  %v3839 = vpop.f32.mrf.mxu0
  %3840 = vdwg.mxu0
  %3841 = vmatpush.bf16.msra.mxu0 %v2579
  %3842 = vmatpush.bf16.msra.mxu0 %v2575
  %3843 = vmatpush.bf16.msra.mxu0 %v2571
  %3844 = vmatpush.bf16.msra.mxu0 %v2567
  %3845 = vmatpush.bf16.msra.mxu0 %v2563
  %3846 = vmatpush.bf16.msra.mxu0 %v2559
  %3847 = vmatpush.bf16.msra.mxu0 %v2555
  %3848 = vmatpush.bf16.msra.mxu0 %v2551
  %3849 = vmatmul.bf16.gmra.mxu0 %v631
  %v3850 = vpop.f32.mrf.mxu0
  %v3851 = vadd.f32 %v3838, %v3850
  %v3852 = vpop.f32.mrf.mxu0
  %3853 = vdwg.mxu0
  %3854 = vmatpush.bf16.msra.mxu0 %v2611
  %3855 = vmatpush.bf16.msra.mxu0 %v2607
  %3856 = vmatpush.bf16.msra.mxu0 %v2603
  %3857 = vmatpush.bf16.msra.mxu0 %v2599
  %3858 = vmatpush.bf16.msra.mxu0 %v2595
  %3859 = vmatpush.bf16.msra.mxu0 %v2591
  %3860 = vmatpush.bf16.msra.mxu0 %v2587
  %3861 = vmatpush.bf16.msra.mxu0 %v2583
  %3862 = vmatmul.bf16.gmra.mxu0 %v632
  %v3863 = vpop.f32.mrf.mxu0
  %v3864 = vadd.f32 %v3851, %v3863
  %v3865 = vpop.f32.mrf.mxu0
  %3866 = vdwg.mxu0
  %3867 = vmatpush.bf16.msra.mxu0 %v2643
  %3868 = vmatpush.bf16.msra.mxu0 %v2639
  %3869 = vmatpush.bf16.msra.mxu0 %v2635
  %3870 = vmatpush.bf16.msra.mxu0 %v2631
  %3871 = vmatpush.bf16.msra.mxu0 %v2627
  %3872 = vmatpush.bf16.msra.mxu0 %v2623
  %3873 = vmatpush.bf16.msra.mxu0 %v2619
  %3874 = vmatpush.bf16.msra.mxu0 %v2615
  %3875 = vmatmul.bf16.gmra.mxu0 %v633
  %v3876 = vpop.f32.mrf.mxu0
  %v3877 = vadd.f32 %v3864, %v3876
  %v3878 = vpop.f32.mrf.mxu0
  %3879 = vdwg.mxu0
  %3880 = vmatpush.bf16.msra.mxu0 %v2675
  %3881 = vmatpush.bf16.msra.mxu0 %v2671
  %3882 = vmatpush.bf16.msra.mxu0 %v2667
  %3883 = vmatpush.bf16.msra.mxu0 %v2663
  %3884 = vmatpush.bf16.msra.mxu0 %v2659
  %3885 = vmatpush.bf16.msra.mxu0 %v2655
  %3886 = vmatpush.bf16.msra.mxu0 %v2651
  %3887 = vmatpush.bf16.msra.mxu0 %v2647
  %3888 = vmatmul.bf16.gmra.mxu0 %v634
  %v3889 = vpop.f32.mrf.mxu0
  %v3890 = vadd.f32 %v3877, %v3889
  %v3891 = vpop.f32.mrf.mxu0
  %3892 = vdwg.mxu0
  %3893 = vmatpush.bf16.msra.mxu0 %v2707
  %3894 = vmatpush.bf16.msra.mxu0 %v2703
  %3895 = vmatpush.bf16.msra.mxu0 %v2699
  %3896 = vmatpush.bf16.msra.mxu0 %v2695
  %3897 = vmatpush.bf16.msra.mxu0 %v2691
  %3898 = vmatpush.bf16.msra.mxu0 %v2687
  %3899 = vmatpush.bf16.msra.mxu0 %v2683
  %3900 = vmatpush.bf16.msra.mxu0 %v2679
  %3901 = vmatmul.bf16.gmra.mxu0 %v635
  %v3902 = vpop.f32.mrf.mxu0
  %v3903 = vadd.f32 %v3890, %v3902
  %v3904 = vpop.f32.mrf.mxu0
  %3905 = vdwg.mxu0
  %3906 = vmatpush.bf16.msra.mxu0 %v2739
  %3907 = vmatpush.bf16.msra.mxu0 %v2735
  %3908 = vmatpush.bf16.msra.mxu0 %v2731
  %3909 = vmatpush.bf16.msra.mxu0 %v2727
  %3910 = vmatpush.bf16.msra.mxu0 %v2723
  %3911 = vmatpush.bf16.msra.mxu0 %v2719
  %3912 = vmatpush.bf16.msra.mxu0 %v2715
  %3913 = vmatpush.bf16.msra.mxu0 %v2711
  %3914 = vmatmul.bf16.gmra.mxu0 %v636
  %v3915 = vpop.f32.mrf.mxu0
  %v3916 = vadd.f32 %v3903, %v3915
  %v3917 = vpop.f32.mrf.mxu0
  %3918 = vdwg.mxu0
  %3919 = vmatpush.bf16.msra.mxu0 %v2771
  %3920 = vmatpush.bf16.msra.mxu0 %v2767
  %3921 = vmatpush.bf16.msra.mxu0 %v2763
  %3922 = vmatpush.bf16.msra.mxu0 %v2759
  %3923 = vmatpush.bf16.msra.mxu0 %v2755
  %3924 = vmatpush.bf16.msra.mxu0 %v2751
  %3925 = vmatpush.bf16.msra.mxu0 %v2747
  %3926 = vmatpush.bf16.msra.mxu0 %v2743
  %3927 = vmatmul.bf16.gmra.mxu0 %v637
  %v3928 = vpop.f32.mrf.mxu0
  %v3929 = vadd.f32 %v3916, %v3928
  %v3930 = vpop.f32.mrf.mxu0
  %3931 = vdwg.mxu0
  %3932 = vmatpush.bf16.msra.mxu0 %v2803
  %3933 = vmatpush.bf16.msra.mxu0 %v2799
  %3934 = vmatpush.bf16.msra.mxu0 %v2795
  %3935 = vmatpush.bf16.msra.mxu0 %v2791
  %3936 = vmatpush.bf16.msra.mxu0 %v2787
  %3937 = vmatpush.bf16.msra.mxu0 %v2783
  %3938 = vmatpush.bf16.msra.mxu0 %v2779
  %3939 = vmatpush.bf16.msra.mxu0 %v2775
  %3940 = vmatmul.bf16.gmra.mxu0 %v638
  %v3941 = vpop.f32.mrf.mxu0
  %v3942 = vadd.f32 %v3929, %v3941
  %v3943 = vpop.f32.mrf.mxu0
  %3944 = vdwg.mxu0
  %3945 = vmatpush.bf16.msra.mxu0 %v2835
  %3946 = vmatpush.bf16.msra.mxu0 %v2831
  %3947 = vmatpush.bf16.msra.mxu0 %v2827
  %3948 = vmatpush.bf16.msra.mxu0 %v2823
  %3949 = vmatpush.bf16.msra.mxu0 %v2819
  %3950 = vmatpush.bf16.msra.mxu0 %v2815
  %3951 = vmatpush.bf16.msra.mxu0 %v2811
  %3952 = vmatpush.bf16.msra.mxu0 %v2807
  %3953 = vmatmul.bf16.gmra.mxu0 %v639
  %v3954 = vpop.f32.mrf.mxu0
  %v3955 = vadd.f32 %v3942, %v3954
  %v3956 = vpop.f32.mrf.mxu0
  %3957 = vdwg.mxu0
  %3958 = vmatpush.bf16.msra.mxu0 %v2867
  %3959 = vmatpush.bf16.msra.mxu0 %v2863
  %3960 = vmatpush.bf16.msra.mxu0 %v2859
  %3961 = vmatpush.bf16.msra.mxu0 %v2855
  %3962 = vmatpush.bf16.msra.mxu0 %v2851
  %3963 = vmatpush.bf16.msra.mxu0 %v2847
  %3964 = vmatpush.bf16.msra.mxu0 %v2843
  %3965 = vmatpush.bf16.msra.mxu0 %v2839
  %3966 = vmatmul.bf16.gmra.mxu0 %v640
  %v3967 = vpop.f32.mrf.mxu0
  %v3968 = vadd.f32 %v3955, %v3967
  %v3969 = vpop.f32.mrf.mxu0
  %3970 = vdwg.mxu0
  %3971 = vmatpush.bf16.msra.mxu0 %v2899
  %3972 = vmatpush.bf16.msra.mxu0 %v2895
  %3973 = vmatpush.bf16.msra.mxu0 %v2891
  %3974 = vmatpush.bf16.msra.mxu0 %v2887
  %3975 = vmatpush.bf16.msra.mxu0 %v2883
  %3976 = vmatpush.bf16.msra.mxu0 %v2879
  %3977 = vmatpush.bf16.msra.mxu0 %v2875
  %3978 = vmatpush.bf16.msra.mxu0 %v2871
  %3979 = vmatmul.bf16.gmra.mxu0 %v641
  %v3980 = vpop.f32.mrf.mxu0
  %v3981 = vadd.f32 %v3968, %v3980
  %v3982 = vpop.f32.mrf.mxu0
  %3983 = vdwg.mxu0
  %3984 = vmatpush.bf16.msra.mxu0 %v2931
  %3985 = vmatpush.bf16.msra.mxu0 %v2927
  %3986 = vmatpush.bf16.msra.mxu0 %v2923
  %3987 = vmatpush.bf16.msra.mxu0 %v2919
  %3988 = vmatpush.bf16.msra.mxu0 %v2915
  %3989 = vmatpush.bf16.msra.mxu0 %v2911
  %3990 = vmatpush.bf16.msra.mxu0 %v2907
  %3991 = vmatpush.bf16.msra.mxu0 %v2903
  %3992 = vmatmul.bf16.gmra.mxu0 %v642
  %v3993 = vpop.f32.mrf.mxu0
  %v3994 = vadd.f32 %v3981, %v3993
  %v3995 = vpop.f32.mrf.mxu0
  %3996 = vdwg.mxu0
  %3997 = vmatpush.bf16.msra.mxu0 %v2963
  %3998 = vmatpush.bf16.msra.mxu0 %v2959
  %3999 = vmatpush.bf16.msra.mxu0 %v2955
  %4000 = vmatpush.bf16.msra.mxu0 %v2951
  %4001 = vmatpush.bf16.msra.mxu0 %v2947
  %4002 = vmatpush.bf16.msra.mxu0 %v2943
  %4003 = vmatpush.bf16.msra.mxu0 %v2939
  %4004 = vmatpush.bf16.msra.mxu0 %v2935
  %4005 = vmatmul.bf16.gmra.mxu0 %v643
  %v4006 = vpop.f32.mrf.mxu0
  %v4007 = vadd.f32 %v3994, %v4006
  %v4008 = vpop.f32.mrf.mxu0
  %4009 = vdwg.mxu0
  %4010 = vmatpush.bf16.msra.mxu0 %v2420
  %4011 = vmatpush.bf16.msra.mxu0 %v2416
  %4012 = vmatpush.bf16.msra.mxu0 %v2412
  %4013 = vmatpush.bf16.msra.mxu0 %v2408
  %4014 = vmatpush.bf16.msra.mxu0 %v2404
  %4015 = vmatpush.bf16.msra.mxu0 %v2400
  %4016 = vmatpush.bf16.msra.mxu0 %v2396
  %4017 = vmatpush.bf16.msra.mxu0 %v2392
  %4018 = vmatmul.bf16.gmra.mxu0 %v626
  %v4019 = vpop.f32.mrf.mxu0
  %v4020 = vadd.f32 0.0, %v4019
  %v4021 = vpop.f32.mrf.mxu0
  %4022 = vdwg.mxu0
  %4023 = vmatpush.bf16.msra.mxu0 %v2452
  %4024 = vmatpush.bf16.msra.mxu0 %v2448
  %4025 = vmatpush.bf16.msra.mxu0 %v2444
  %4026 = vmatpush.bf16.msra.mxu0 %v2440
  %4027 = vmatpush.bf16.msra.mxu0 %v2436
  %4028 = vmatpush.bf16.msra.mxu0 %v2432
  %4029 = vmatpush.bf16.msra.mxu0 %v2428
  %4030 = vmatpush.bf16.msra.mxu0 %v2424
  %4031 = vmatmul.bf16.gmra.mxu0 %v627
  %v4032 = vpop.f32.mrf.mxu0
  %v4033 = vadd.f32 %v4020, %v4032
  %v4034 = vpop.f32.mrf.mxu0
  %4035 = vdwg.mxu0
  %4036 = vmatpush.bf16.msra.mxu0 %v2484
  %4037 = vmatpush.bf16.msra.mxu0 %v2480
  %4038 = vmatpush.bf16.msra.mxu0 %v2476
  %4039 = vmatpush.bf16.msra.mxu0 %v2472
  %4040 = vmatpush.bf16.msra.mxu0 %v2468
  %4041 = vmatpush.bf16.msra.mxu0 %v2464
  %4042 = vmatpush.bf16.msra.mxu0 %v2460
  %4043 = vmatpush.bf16.msra.mxu0 %v2456
  %4044 = vmatmul.bf16.gmra.mxu0 %v628
  %v4045 = vpop.f32.mrf.mxu0
  %v4046 = vadd.f32 %v4033, %v4045
  %v4047 = vpop.f32.mrf.mxu0
  %4048 = vdwg.mxu0
  %4049 = vmatpush.bf16.msra.mxu0 %v2516
  %4050 = vmatpush.bf16.msra.mxu0 %v2512
  %4051 = vmatpush.bf16.msra.mxu0 %v2508
  %4052 = vmatpush.bf16.msra.mxu0 %v2504
  %4053 = vmatpush.bf16.msra.mxu0 %v2500
  %4054 = vmatpush.bf16.msra.mxu0 %v2496
  %4055 = vmatpush.bf16.msra.mxu0 %v2492
  %4056 = vmatpush.bf16.msra.mxu0 %v2488
  %4057 = vmatmul.bf16.gmra.mxu0 %v629
  %v4058 = vpop.f32.mrf.mxu0
  %v4059 = vadd.f32 %v4046, %v4058
  %v4060 = vpop.f32.mrf.mxu0
  %4061 = vdwg.mxu0
  %4062 = vmatpush.bf16.msra.mxu0 %v2548
  %4063 = vmatpush.bf16.msra.mxu0 %v2544
  %4064 = vmatpush.bf16.msra.mxu0 %v2540
  %4065 = vmatpush.bf16.msra.mxu0 %v2536
  %4066 = vmatpush.bf16.msra.mxu0 %v2532
  %4067 = vmatpush.bf16.msra.mxu0 %v2528
  %4068 = vmatpush.bf16.msra.mxu0 %v2524
  %4069 = vmatpush.bf16.msra.mxu0 %v2520
  %4070 = vmatmul.bf16.gmra.mxu0 %v630
  %v4071 = vpop.f32.mrf.mxu0
  %v4072 = vadd.f32 %v4059, %v4071
  %v4073 = vpop.f32.mrf.mxu0
  %4074 = vdwg.mxu0
  %4075 = vmatpush.bf16.msra.mxu0 %v2580
  %4076 = vmatpush.bf16.msra.mxu0 %v2576
  %4077 = vmatpush.bf16.msra.mxu0 %v2572
  %4078 = vmatpush.bf16.msra.mxu0 %v2568
  %4079 = vmatpush.bf16.msra.mxu0 %v2564
  %4080 = vmatpush.bf16.msra.mxu0 %v2560
  %4081 = vmatpush.bf16.msra.mxu0 %v2556
  %4082 = vmatpush.bf16.msra.mxu0 %v2552
  %4083 = vmatmul.bf16.gmra.mxu0 %v631
  %v4084 = vpop.f32.mrf.mxu0
  %v4085 = vadd.f32 %v4072, %v4084
  %v4086 = vpop.f32.mrf.mxu0
  %4087 = vdwg.mxu0
  %4088 = vmatpush.bf16.msra.mxu0 %v2612
  %4089 = vmatpush.bf16.msra.mxu0 %v2608
  %4090 = vmatpush.bf16.msra.mxu0 %v2604
  %4091 = vmatpush.bf16.msra.mxu0 %v2600
  %4092 = vmatpush.bf16.msra.mxu0 %v2596
  %4093 = vmatpush.bf16.msra.mxu0 %v2592
  %4094 = vmatpush.bf16.msra.mxu0 %v2588
  %4095 = vmatpush.bf16.msra.mxu0 %v2584
  %4096 = vmatmul.bf16.gmra.mxu0 %v632
  %v4097 = vpop.f32.mrf.mxu0
  %v4098 = vadd.f32 %v4085, %v4097
  %v4099 = vpop.f32.mrf.mxu0
  %4100 = vdwg.mxu0
  %4101 = vmatpush.bf16.msra.mxu0 %v2644
  %4102 = vmatpush.bf16.msra.mxu0 %v2640
  %4103 = vmatpush.bf16.msra.mxu0 %v2636
  %4104 = vmatpush.bf16.msra.mxu0 %v2632
  %4105 = vmatpush.bf16.msra.mxu0 %v2628
  %4106 = vmatpush.bf16.msra.mxu0 %v2624
  %4107 = vmatpush.bf16.msra.mxu0 %v2620
  %4108 = vmatpush.bf16.msra.mxu0 %v2616
  %4109 = vmatmul.bf16.gmra.mxu0 %v633
  %v4110 = vpop.f32.mrf.mxu0
  %v4111 = vadd.f32 %v4098, %v4110
  %v4112 = vpop.f32.mrf.mxu0
  %4113 = vdwg.mxu0
  %4114 = vmatpush.bf16.msra.mxu0 %v2676
  %4115 = vmatpush.bf16.msra.mxu0 %v2672
  %4116 = vmatpush.bf16.msra.mxu0 %v2668
  %4117 = vmatpush.bf16.msra.mxu0 %v2664
  %4118 = vmatpush.bf16.msra.mxu0 %v2660
  %4119 = vmatpush.bf16.msra.mxu0 %v2656
  %4120 = vmatpush.bf16.msra.mxu0 %v2652
  %4121 = vmatpush.bf16.msra.mxu0 %v2648
  %4122 = vmatmul.bf16.gmra.mxu0 %v634
  %v4123 = vpop.f32.mrf.mxu0
  %v4124 = vadd.f32 %v4111, %v4123
  %v4125 = vpop.f32.mrf.mxu0
  %4126 = vdwg.mxu0
  %4127 = vmatpush.bf16.msra.mxu0 %v2708
  %4128 = vmatpush.bf16.msra.mxu0 %v2704
  %4129 = vmatpush.bf16.msra.mxu0 %v2700
  %4130 = vmatpush.bf16.msra.mxu0 %v2696
  %4131 = vmatpush.bf16.msra.mxu0 %v2692
  %4132 = vmatpush.bf16.msra.mxu0 %v2688
  %4133 = vmatpush.bf16.msra.mxu0 %v2684
  %4134 = vmatpush.bf16.msra.mxu0 %v2680
  %4135 = vmatmul.bf16.gmra.mxu0 %v635
  %v4136 = vpop.f32.mrf.mxu0
  %v4137 = vadd.f32 %v4124, %v4136
  %v4138 = vpop.f32.mrf.mxu0
  %4139 = vdwg.mxu0
  %4140 = vmatpush.bf16.msra.mxu0 %v2740
  %4141 = vmatpush.bf16.msra.mxu0 %v2736
  %4142 = vmatpush.bf16.msra.mxu0 %v2732
  %4143 = vmatpush.bf16.msra.mxu0 %v2728
  %4144 = vmatpush.bf16.msra.mxu0 %v2724
  %4145 = vmatpush.bf16.msra.mxu0 %v2720
  %4146 = vmatpush.bf16.msra.mxu0 %v2716
  %4147 = vmatpush.bf16.msra.mxu0 %v2712
  %4148 = vmatmul.bf16.gmra.mxu0 %v636
  %v4149 = vpop.f32.mrf.mxu0
  %v4150 = vadd.f32 %v4137, %v4149
  %v4151 = vpop.f32.mrf.mxu0
  %4152 = vdwg.mxu0
  %4153 = vmatpush.bf16.msra.mxu0 %v2772
  %4154 = vmatpush.bf16.msra.mxu0 %v2768
  %4155 = vmatpush.bf16.msra.mxu0 %v2764
  %4156 = vmatpush.bf16.msra.mxu0 %v2760
  %4157 = vmatpush.bf16.msra.mxu0 %v2756
  %4158 = vmatpush.bf16.msra.mxu0 %v2752
  %4159 = vmatpush.bf16.msra.mxu0 %v2748
  %4160 = vmatpush.bf16.msra.mxu0 %v2744
  %4161 = vmatmul.bf16.gmra.mxu0 %v637
  %v4162 = vpop.f32.mrf.mxu0
  %v4163 = vadd.f32 %v4150, %v4162
  %v4164 = vpop.f32.mrf.mxu0
  %4165 = vdwg.mxu0
  %4166 = vmatpush.bf16.msra.mxu0 %v2804
  %4167 = vmatpush.bf16.msra.mxu0 %v2800
  %4168 = vmatpush.bf16.msra.mxu0 %v2796
  %4169 = vmatpush.bf16.msra.mxu0 %v2792
  %4170 = vmatpush.bf16.msra.mxu0 %v2788
  %4171 = vmatpush.bf16.msra.mxu0 %v2784
  %4172 = vmatpush.bf16.msra.mxu0 %v2780
  %4173 = vmatpush.bf16.msra.mxu0 %v2776
  %4174 = vmatmul.bf16.gmra.mxu0 %v638
  %v4175 = vpop.f32.mrf.mxu0
  %v4176 = vadd.f32 %v4163, %v4175
  %v4177 = vpop.f32.mrf.mxu0
  %4178 = vdwg.mxu0
  %4179 = vmatpush.bf16.msra.mxu0 %v2836
  %4180 = vmatpush.bf16.msra.mxu0 %v2832
  %4181 = vmatpush.bf16.msra.mxu0 %v2828
  %4182 = vmatpush.bf16.msra.mxu0 %v2824
  %4183 = vmatpush.bf16.msra.mxu0 %v2820
  %4184 = vmatpush.bf16.msra.mxu0 %v2816
  %4185 = vmatpush.bf16.msra.mxu0 %v2812
  %4186 = vmatpush.bf16.msra.mxu0 %v2808
  %4187 = vmatmul.bf16.gmra.mxu0 %v639
  %v4188 = vpop.f32.mrf.mxu0
  %v4189 = vadd.f32 %v4176, %v4188
  %v4190 = vpop.f32.mrf.mxu0
  %4191 = vdwg.mxu0
  %4192 = vmatpush.bf16.msra.mxu0 %v2868
  %4193 = vmatpush.bf16.msra.mxu0 %v2864
  %4194 = vmatpush.bf16.msra.mxu0 %v2860
  %4195 = vmatpush.bf16.msra.mxu0 %v2856
  %4196 = vmatpush.bf16.msra.mxu0 %v2852
  %4197 = vmatpush.bf16.msra.mxu0 %v2848
  %4198 = vmatpush.bf16.msra.mxu0 %v2844
  %4199 = vmatpush.bf16.msra.mxu0 %v2840
  %4200 = vmatmul.bf16.gmra.mxu0 %v640
  %v4201 = vpop.f32.mrf.mxu0
  %v4202 = vadd.f32 %v4189, %v4201
  %v4203 = vpop.f32.mrf.mxu0
  %4204 = vdwg.mxu0
  %4205 = vmatpush.bf16.msra.mxu0 %v2900
  %4206 = vmatpush.bf16.msra.mxu0 %v2896
  %4207 = vmatpush.bf16.msra.mxu0 %v2892
  %4208 = vmatpush.bf16.msra.mxu0 %v2888
  %4209 = vmatpush.bf16.msra.mxu0 %v2884
  %4210 = vmatpush.bf16.msra.mxu0 %v2880
  %4211 = vmatpush.bf16.msra.mxu0 %v2876
  %4212 = vmatpush.bf16.msra.mxu0 %v2872
  %4213 = vmatmul.bf16.gmra.mxu0 %v641
  %v4214 = vpop.f32.mrf.mxu0
  %v4215 = vadd.f32 %v4202, %v4214
  %v4216 = vpop.f32.mrf.mxu0
  %4217 = vdwg.mxu0
  %4218 = vmatpush.bf16.msra.mxu0 %v2932
  %4219 = vmatpush.bf16.msra.mxu0 %v2928
  %4220 = vmatpush.bf16.msra.mxu0 %v2924
  %4221 = vmatpush.bf16.msra.mxu0 %v2920
  %4222 = vmatpush.bf16.msra.mxu0 %v2916
  %4223 = vmatpush.bf16.msra.mxu0 %v2912
  %4224 = vmatpush.bf16.msra.mxu0 %v2908
  %4225 = vmatpush.bf16.msra.mxu0 %v2904
  %4226 = vmatmul.bf16.gmra.mxu0 %v642
  %v4227 = vpop.f32.mrf.mxu0
  %v4228 = vadd.f32 %v4215, %v4227
  %v4229 = vpop.f32.mrf.mxu0
  %4230 = vdwg.mxu0
  %4231 = vmatpush.bf16.msra.mxu0 %v2964
  %4232 = vmatpush.bf16.msra.mxu0 %v2960
  %4233 = vmatpush.bf16.msra.mxu0 %v2956
  %4234 = vmatpush.bf16.msra.mxu0 %v2952
  %4235 = vmatpush.bf16.msra.mxu0 %v2948
  %4236 = vmatpush.bf16.msra.mxu0 %v2944
  %4237 = vmatpush.bf16.msra.mxu0 %v2940
  %4238 = vmatpush.bf16.msra.mxu0 %v2936
  %4239 = vmatmul.bf16.gmra.mxu0 %v643
  %v4240 = vpop.f32.mrf.mxu0
  %v4241 = vadd.f32 %v4228, %v4240
  %v4242 = vpop.f32.mrf.mxu0
  %4243 = vdwg.mxu0
  %4244 = vmatpush.bf16.msra.mxu0 %v2421
  %4245 = vmatpush.bf16.msra.mxu0 %v2417
  %4246 = vmatpush.bf16.msra.mxu0 %v2413
  %4247 = vmatpush.bf16.msra.mxu0 %v2409
  %4248 = vmatpush.bf16.msra.mxu0 %v2405
  %4249 = vmatpush.bf16.msra.mxu0 %v2401
  %4250 = vmatpush.bf16.msra.mxu0 %v2397
  %4251 = vmatpush.bf16.msra.mxu0 %v2393
  %4252 = vmatmul.bf16.gmra.mxu0 %v626
  %v4253 = vpop.f32.mrf.mxu0
  %v4254 = vadd.f32 0.0, %v4253
  %v4255 = vpop.f32.mrf.mxu0
  %4256 = vdwg.mxu0
  %4257 = vmatpush.bf16.msra.mxu0 %v2453
  %4258 = vmatpush.bf16.msra.mxu0 %v2449
  %4259 = vmatpush.bf16.msra.mxu0 %v2445
  %4260 = vmatpush.bf16.msra.mxu0 %v2441
  %4261 = vmatpush.bf16.msra.mxu0 %v2437
  %4262 = vmatpush.bf16.msra.mxu0 %v2433
  %4263 = vmatpush.bf16.msra.mxu0 %v2429
  %4264 = vmatpush.bf16.msra.mxu0 %v2425
  %4265 = vmatmul.bf16.gmra.mxu0 %v627
  %v4266 = vpop.f32.mrf.mxu0
  %v4267 = vadd.f32 %v4254, %v4266
  %v4268 = vpop.f32.mrf.mxu0
  %4269 = vdwg.mxu0
  %4270 = vmatpush.bf16.msra.mxu0 %v2485
  %4271 = vmatpush.bf16.msra.mxu0 %v2481
  %4272 = vmatpush.bf16.msra.mxu0 %v2477
  %4273 = vmatpush.bf16.msra.mxu0 %v2473
  %4274 = vmatpush.bf16.msra.mxu0 %v2469
  %4275 = vmatpush.bf16.msra.mxu0 %v2465
  %4276 = vmatpush.bf16.msra.mxu0 %v2461
  %4277 = vmatpush.bf16.msra.mxu0 %v2457
  %4278 = vmatmul.bf16.gmra.mxu0 %v628
  %v4279 = vpop.f32.mrf.mxu0
  %v4280 = vadd.f32 %v4267, %v4279
  %v4281 = vpop.f32.mrf.mxu0
  %4282 = vdwg.mxu0
  %4283 = vmatpush.bf16.msra.mxu0 %v2517
  %4284 = vmatpush.bf16.msra.mxu0 %v2513
  %4285 = vmatpush.bf16.msra.mxu0 %v2509
  %4286 = vmatpush.bf16.msra.mxu0 %v2505
  %4287 = vmatpush.bf16.msra.mxu0 %v2501
  %4288 = vmatpush.bf16.msra.mxu0 %v2497
  %4289 = vmatpush.bf16.msra.mxu0 %v2493
  %4290 = vmatpush.bf16.msra.mxu0 %v2489
  %4291 = vmatmul.bf16.gmra.mxu0 %v629
  %v4292 = vpop.f32.mrf.mxu0
  %v4293 = vadd.f32 %v4280, %v4292
  %v4294 = vpop.f32.mrf.mxu0
  %4295 = vdwg.mxu0
  %4296 = vmatpush.bf16.msra.mxu0 %v2549
  %4297 = vmatpush.bf16.msra.mxu0 %v2545
  %4298 = vmatpush.bf16.msra.mxu0 %v2541
  %4299 = vmatpush.bf16.msra.mxu0 %v2537
  %4300 = vmatpush.bf16.msra.mxu0 %v2533
  %4301 = vmatpush.bf16.msra.mxu0 %v2529
  %4302 = vmatpush.bf16.msra.mxu0 %v2525
  %4303 = vmatpush.bf16.msra.mxu0 %v2521
  %4304 = vmatmul.bf16.gmra.mxu0 %v630
  %v4305 = vpop.f32.mrf.mxu0
  %v4306 = vadd.f32 %v4293, %v4305
  %v4307 = vpop.f32.mrf.mxu0
  %4308 = vdwg.mxu0
  %4309 = vmatpush.bf16.msra.mxu0 %v2581
  %4310 = vmatpush.bf16.msra.mxu0 %v2577
  %4311 = vmatpush.bf16.msra.mxu0 %v2573
  %4312 = vmatpush.bf16.msra.mxu0 %v2569
  %4313 = vmatpush.bf16.msra.mxu0 %v2565
  %4314 = vmatpush.bf16.msra.mxu0 %v2561
  %4315 = vmatpush.bf16.msra.mxu0 %v2557
  %4316 = vmatpush.bf16.msra.mxu0 %v2553
  %4317 = vmatmul.bf16.gmra.mxu0 %v631
  %v4318 = vpop.f32.mrf.mxu0
  %v4319 = vadd.f32 %v4306, %v4318
  %v4320 = vpop.f32.mrf.mxu0
  %4321 = vdwg.mxu0
  %4322 = vmatpush.bf16.msra.mxu0 %v2613
  %4323 = vmatpush.bf16.msra.mxu0 %v2609
  %4324 = vmatpush.bf16.msra.mxu0 %v2605
  %4325 = vmatpush.bf16.msra.mxu0 %v2601
  %4326 = vmatpush.bf16.msra.mxu0 %v2597
  %4327 = vmatpush.bf16.msra.mxu0 %v2593
  %4328 = vmatpush.bf16.msra.mxu0 %v2589
  %4329 = vmatpush.bf16.msra.mxu0 %v2585
  %4330 = vmatmul.bf16.gmra.mxu0 %v632
  %v4331 = vpop.f32.mrf.mxu0
  %v4332 = vadd.f32 %v4319, %v4331
  %v4333 = vpop.f32.mrf.mxu0
  %4334 = vdwg.mxu0
  %4335 = vmatpush.bf16.msra.mxu0 %v2645
  %4336 = vmatpush.bf16.msra.mxu0 %v2641
  %4337 = vmatpush.bf16.msra.mxu0 %v2637
  %4338 = vmatpush.bf16.msra.mxu0 %v2633
  %4339 = vmatpush.bf16.msra.mxu0 %v2629
  %4340 = vmatpush.bf16.msra.mxu0 %v2625
  %4341 = vmatpush.bf16.msra.mxu0 %v2621
  %4342 = vmatpush.bf16.msra.mxu0 %v2617
  %4343 = vmatmul.bf16.gmra.mxu0 %v633
  %v4344 = vpop.f32.mrf.mxu0
  %v4345 = vadd.f32 %v4332, %v4344
  %v4346 = vpop.f32.mrf.mxu0
  %4347 = vdwg.mxu0
  %4348 = vmatpush.bf16.msra.mxu0 %v2677
  %4349 = vmatpush.bf16.msra.mxu0 %v2673
  %4350 = vmatpush.bf16.msra.mxu0 %v2669
  %4351 = vmatpush.bf16.msra.mxu0 %v2665
  %4352 = vmatpush.bf16.msra.mxu0 %v2661
  %4353 = vmatpush.bf16.msra.mxu0 %v2657
  %4354 = vmatpush.bf16.msra.mxu0 %v2653
  %4355 = vmatpush.bf16.msra.mxu0 %v2649
  %4356 = vmatmul.bf16.gmra.mxu0 %v634
  %v4357 = vpop.f32.mrf.mxu0
  %v4358 = vadd.f32 %v4345, %v4357
  %v4359 = vpop.f32.mrf.mxu0
  %4360 = vdwg.mxu0
  %4361 = vmatpush.bf16.msra.mxu0 %v2709
  %4362 = vmatpush.bf16.msra.mxu0 %v2705
  %4363 = vmatpush.bf16.msra.mxu0 %v2701
  %4364 = vmatpush.bf16.msra.mxu0 %v2697
  %4365 = vmatpush.bf16.msra.mxu0 %v2693
  %4366 = vmatpush.bf16.msra.mxu0 %v2689
  %4367 = vmatpush.bf16.msra.mxu0 %v2685
  %4368 = vmatpush.bf16.msra.mxu0 %v2681
  %4369 = vmatmul.bf16.gmra.mxu0 %v635
  %v4370 = vpop.f32.mrf.mxu0
  %v4371 = vadd.f32 %v4358, %v4370
  %v4372 = vpop.f32.mrf.mxu0
  %4373 = vdwg.mxu0
  %4374 = vmatpush.bf16.msra.mxu0 %v2741
  %4375 = vmatpush.bf16.msra.mxu0 %v2737
  %4376 = vmatpush.bf16.msra.mxu0 %v2733
  %4377 = vmatpush.bf16.msra.mxu0 %v2729
  %4378 = vmatpush.bf16.msra.mxu0 %v2725
  %4379 = vmatpush.bf16.msra.mxu0 %v2721
  %4380 = vmatpush.bf16.msra.mxu0 %v2717
  %4381 = vmatpush.bf16.msra.mxu0 %v2713
  %4382 = vmatmul.bf16.gmra.mxu0 %v636
  %v4383 = vpop.f32.mrf.mxu0
  %v4384 = vadd.f32 %v4371, %v4383
  %v4385 = vpop.f32.mrf.mxu0
  %4386 = vdwg.mxu0
  %4387 = vmatpush.bf16.msra.mxu0 %v2773
  %4388 = vmatpush.bf16.msra.mxu0 %v2769
  %4389 = vmatpush.bf16.msra.mxu0 %v2765
  %4390 = vmatpush.bf16.msra.mxu0 %v2761
  %4391 = vmatpush.bf16.msra.mxu0 %v2757
  %4392 = vmatpush.bf16.msra.mxu0 %v2753
  %4393 = vmatpush.bf16.msra.mxu0 %v2749
  %4394 = vmatpush.bf16.msra.mxu0 %v2745
  %4395 = vmatmul.bf16.gmra.mxu0 %v637
  %v4396 = vpop.f32.mrf.mxu0
  %v4397 = vadd.f32 %v4384, %v4396
  %v4398 = vpop.f32.mrf.mxu0
  %4399 = vdwg.mxu0
  %4400 = vmatpush.bf16.msra.mxu0 %v2805
  %4401 = vmatpush.bf16.msra.mxu0 %v2801
  %4402 = vmatpush.bf16.msra.mxu0 %v2797
  %4403 = vmatpush.bf16.msra.mxu0 %v2793
  %4404 = vmatpush.bf16.msra.mxu0 %v2789
  %4405 = vmatpush.bf16.msra.mxu0 %v2785
  %4406 = vmatpush.bf16.msra.mxu0 %v2781
  %4407 = vmatpush.bf16.msra.mxu0 %v2777
  %4408 = vmatmul.bf16.gmra.mxu0 %v638
  %v4409 = vpop.f32.mrf.mxu0
  %v4410 = vadd.f32 %v4397, %v4409
  %v4411 = vpop.f32.mrf.mxu0
  %4412 = vdwg.mxu0
  %4413 = vmatpush.bf16.msra.mxu0 %v2837
  %4414 = vmatpush.bf16.msra.mxu0 %v2833
  %4415 = vmatpush.bf16.msra.mxu0 %v2829
  %4416 = vmatpush.bf16.msra.mxu0 %v2825
  %4417 = vmatpush.bf16.msra.mxu0 %v2821
  %4418 = vmatpush.bf16.msra.mxu0 %v2817
  %4419 = vmatpush.bf16.msra.mxu0 %v2813
  %4420 = vmatpush.bf16.msra.mxu0 %v2809
  %4421 = vmatmul.bf16.gmra.mxu0 %v639
  %v4422 = vpop.f32.mrf.mxu0
  %v4423 = vadd.f32 %v4410, %v4422
  %v4424 = vpop.f32.mrf.mxu0
  %4425 = vdwg.mxu0
  %4426 = vmatpush.bf16.msra.mxu0 %v2869
  %4427 = vmatpush.bf16.msra.mxu0 %v2865
  %4428 = vmatpush.bf16.msra.mxu0 %v2861
  %4429 = vmatpush.bf16.msra.mxu0 %v2857
  %4430 = vmatpush.bf16.msra.mxu0 %v2853
  %4431 = vmatpush.bf16.msra.mxu0 %v2849
  %4432 = vmatpush.bf16.msra.mxu0 %v2845
  %4433 = vmatpush.bf16.msra.mxu0 %v2841
  %4434 = vmatmul.bf16.gmra.mxu0 %v640
  %v4435 = vpop.f32.mrf.mxu0
  %v4436 = vadd.f32 %v4423, %v4435
  %v4437 = vpop.f32.mrf.mxu0
  %4438 = vdwg.mxu0
  %4439 = vmatpush.bf16.msra.mxu0 %v2901
  %4440 = vmatpush.bf16.msra.mxu0 %v2897
  %4441 = vmatpush.bf16.msra.mxu0 %v2893
  %4442 = vmatpush.bf16.msra.mxu0 %v2889
  %4443 = vmatpush.bf16.msra.mxu0 %v2885
  %4444 = vmatpush.bf16.msra.mxu0 %v2881
  %4445 = vmatpush.bf16.msra.mxu0 %v2877
  %4446 = vmatpush.bf16.msra.mxu0 %v2873
  %4447 = vmatmul.bf16.gmra.mxu0 %v641
  %v4448 = vpop.f32.mrf.mxu0
  %v4449 = vadd.f32 %v4436, %v4448
  %v4450 = vpop.f32.mrf.mxu0
  %4451 = vdwg.mxu0
  %4452 = vmatpush.bf16.msra.mxu0 %v2933
  %4453 = vmatpush.bf16.msra.mxu0 %v2929
  %4454 = vmatpush.bf16.msra.mxu0 %v2925
  %4455 = vmatpush.bf16.msra.mxu0 %v2921
  %4456 = vmatpush.bf16.msra.mxu0 %v2917
  %4457 = vmatpush.bf16.msra.mxu0 %v2913
  %4458 = vmatpush.bf16.msra.mxu0 %v2909
  %4459 = vmatpush.bf16.msra.mxu0 %v2905
  %4460 = vmatmul.bf16.gmra.mxu0 %v642
  %v4461 = vpop.f32.mrf.mxu0
  %v4462 = vadd.f32 %v4449, %v4461
  %v4463 = vpop.f32.mrf.mxu0
  %4464 = vdwg.mxu0
  %4465 = vmatpush.bf16.msra.mxu0 %v2965
  %4466 = vmatpush.bf16.msra.mxu0 %v2961
  %4467 = vmatpush.bf16.msra.mxu0 %v2957
  %4468 = vmatpush.bf16.msra.mxu0 %v2953
  %4469 = vmatpush.bf16.msra.mxu0 %v2949
  %4470 = vmatpush.bf16.msra.mxu0 %v2945
  %4471 = vmatpush.bf16.msra.mxu0 %v2941
  %4472 = vmatpush.bf16.msra.mxu0 %v2937
  %4473 = vmatmul.bf16.gmra.mxu0 %v643
  %v4474 = vpop.f32.mrf.mxu0
  %v4475 = vadd.f32 %v4462, %v4474
  %v4476 = vpop.f32.mrf.mxu0
  %4477 = vdwg.mxu0
  %4478 = vst [vmem:[%s2] sm:$0xff] %v3773
  %4479 = vst [vmem:[%s2 + $0x8] sm:$0xff] %v4007
  %4480 = vst [vmem:[%s2 + $0x10] sm:$0xff] %v4241
  %4481 = vst [vmem:[%s2 + $0x18] sm:$0xff] %v4475
  %p4482 = scmp.eq.s32.totalorder 0, 0
  // Predicated region
  $region10: #{common_discriminator.15} parent=0 // pred_check
    %p4483 = pneg %p4482
  $region11: #{common_discriminator.15} parent=0 // pred_check_branch
    %4485 = sbr.rel (%p4483) target = $region13
  $region12: #{common_discriminator.15} parent=0 // pred_region
    %v4486 = vlaneseq
    %vm4487 = vcmp.ge.s32.totalorder %v4486, 0
    %vm4488 = vcmp.lt.s32.totalorder %v4486, 512
    %vm4489 = vmand %vm4487, %vm4488
    %4490 = vst.msk [vmem:[%s3] sm:$0xf] %vm4489, 0.0
    %4491 = vst.msk [vmem:[%s4] sm:$0xf] %vm4489, 0.0
  $region13: #{common_discriminator.15} parent=0 // pred_fallthru
    _
  %v4492 = vld [vmem:[%s3] sm:$0xf]
  %v4493 = vrot.slane %v3773, 4
  %v4494 = vadd.f32 %v3773, %v4493
  %v4495 = vrot.slane %v4494, 2
  %v4496 = vadd.f32 %v4494, %v4495
  %v4497 = vrot.slane %v4496, 1
  %v4498 = vadd.f32 %v4496, %v4497
  %v4499 = vrot.slane %v4007, 4
  %v4500 = vadd.f32 %v4007, %v4499
  %v4501 = vrot.slane %v4500, 2
  %v4502 = vadd.f32 %v4500, %v4501
  %v4503 = vrot.slane %v4502, 1
  %v4504 = vadd.f32 %v4502, %v4503
  %v4505 = vrot.slane %v4241, 4
  %v4506 = vadd.f32 %v4241, %v4505
  %v4507 = vrot.slane %v4506, 2
  %v4508 = vadd.f32 %v4506, %v4507
  %v4509 = vrot.slane %v4508, 1
  %v4510 = vadd.f32 %v4508, %v4509
  %v4511 = vrot.slane %v4475, 4
  %v4512 = vadd.f32 %v4475, %v4511
  %v4513 = vrot.slane %v4512, 2
  %v4514 = vadd.f32 %v4512, %v4513
  %v4515 = vrot.slane %v4514, 1
  %v4516 = vadd.f32 %v4514, %v4515
  %v4521 = vrot.slane %v4504, 7
  %v4522 = vrot.slane %v4510, 6
  %v4523 = vrot.slane %v4516, 5
  %vm4524 = vcmask 1040384
  %v4525 = vsel %vm4524, %v4498, %v4521
  %vm4526 = vcmask 1042434
  %v4527 = vsel %vm4526, %v4522, %v4523
  %vm4528 = vcmask 1041408
  %v4529 = vsel %vm4528, %v4525, %v4527
  %v4531 = vadd.f32 %v4492, %v4529
  %v4532 = vlaneseq
  %vm4533 = vcmp.ge.s32.totalorder %v4532, 0
  %vm4534 = vcmp.lt.s32.totalorder %v4532, 512
  %vm4535 = vmand %vm4533, %vm4534
  %4536 = vst.msk [vmem:[%s3] sm:$0xf] %vm4535, %v4531
  %v4537 = vld [vmem:[%s4] sm:$0xf]
  %v4538 = vmul.f32 %v3773, %v3773
  %v4539 = vmul.f32 %v4007, %v4007
  %v4540 = vmul.f32 %v4241, %v4241
  %v4541 = vmul.f32 %v4475, %v4475
  %v4542 = vrot.slane %v4538, 4
  %v4543 = vadd.f32 %v4538, %v4542
  %v4544 = vrot.slane %v4543, 2
  %v4545 = vadd.f32 %v4543, %v4544
  %v4546 = vrot.slane %v4545, 1
  %v4547 = vadd.f32 %v4545, %v4546
  %v4548 = vrot.slane %v4539, 4
  %v4549 = vadd.f32 %v4539, %v4548
  %v4550 = vrot.slane %v4549, 2
  %v4551 = vadd.f32 %v4549, %v4550
  %v4552 = vrot.slane %v4551, 1
  %v4553 = vadd.f32 %v4551, %v4552
  %v4554 = vrot.slane %v4540, 4
  %v4555 = vadd.f32 %v4540, %v4554
  %v4556 = vrot.slane %v4555, 2
  %v4557 = vadd.f32 %v4555, %v4556
  %v4558 = vrot.slane %v4557, 1
  %v4559 = vadd.f32 %v4557, %v4558
  %v4560 = vrot.slane %v4541, 4
  %v4561 = vadd.f32 %v4541, %v4560
  %v4562 = vrot.slane %v4561, 2
  %v4563 = vadd.f32 %v4561, %v4562
  %v4564 = vrot.slane %v4563, 1
  %v4565 = vadd.f32 %v4563, %v4564
  %v4570 = vrot.slane %v4553, 7
  %v4571 = vrot.slane %v4559, 6
  %v4572 = vrot.slane %v4565, 5
  %v4573 = vsel %vm4524, %v4547, %v4570
  %v4574 = vsel %vm4526, %v4571, %v4572
  %v4575 = vsel %vm4528, %v4573, %v4574
  %v4577 = vadd.f32 %v4537, %v4575
  %4578 = vst.msk [vmem:[%s4] sm:$0xf] %vm4535, %v4577
  // Predicated region
  $region14: #{common_discriminator.15} parent=0 // pred_check
    _
  $region15: #{common_discriminator.15} parent=0 // pred_check_branch
    %4580 = sbr.rel (0) target = $region17
  $region16: #{common_discriminator.15} parent=0 // pred_region
    _
  $region17: #{common_discriminator.15} parent=0 // pred_fallthru
    _
  // Predicated region
  $region18: #{common_discriminator.15} parent=0 // pred_check
    _
  $region19: #{common_discriminator.15} parent=0 // pred_check_branch
    %4582 = sbr.rel (0) target = $region21
  $region20: #{common_discriminator.15} parent=0 // pred_region
    _
  $region21: #{common_discriminator.15} parent=0 // pred_fallthru
    _
  // Predicated region
  $region22: #{common_discriminator.15} parent=0 // pred_check
    _
  $region23: #{common_discriminator.15} parent=0 // pred_check_branch
    %4584 = sbr.rel (0) target = $region25
  $region24: #{common_discriminator.15} parent=0 // pred_region
    _
  $region25: #{common_discriminator.15} parent=0 // pred_fallthru
    _
  // Predicated region
  $region26: #{common_discriminator.15} parent=0 // pred_check
    _
  $region27: #{common_discriminator.15} parent=0 // pred_check_branch
    %4586 = sbr.rel (0) target = $region29
  $region28: #{common_discriminator.15} parent=0 // pred_region
    _
  $region29: #{common_discriminator.15} parent=0 // pred_fallthru
    _
  // Predicated region
  $region30: #{common_discriminator.15} parent=0 // pred_check
    _
  $region31: #{common_discriminator.15} parent=0 // pred_check_branch
    %4588 = sbr.rel (0) target = $region33
  $region32: #{common_discriminator.15} parent=0 // pred_region
    _
  $region33: #{common_discriminator.15} parent=0 // pred_fallthru
    _
  // Predicated region
  $region34: #{common_discriminator.15} parent=0 // pred_check
    _
  $region35: #{common_discriminator.15} parent=0 // pred_check_branch
    %4590 = sbr.rel (0) target = $region37
  $region36: #{common_discriminator.15} parent=0 // pred_region
    _
  $region37: #{common_discriminator.15} parent=0 // pred_fallthru
    _

</llo_original>
